<compile_context>
chip_gen: v5e
topology: v5e:2x2
jax: 0.10.0
libtpu: 0.0.40
codegen_flags: <defaults>
</compile_context>

<pallas_src>
import functools

import jax
import jax.numpy as jnp
from jax import lax
from jax.experimental import pallas as pl
from jax.experimental.pallas import tpu as pltpu

EPS = 1e-5  # nn.InstanceNorm2d default eps


# ---------------------------------------------------------------------------
# Fully fused encoder kernel (B batch elements per grid step)
# ---------------------------------------------------------------------------
def _encoder_kernel(x_ref, masks_ref, seg_ref, segt_ref,
                    w1_ref, w11_ref, w12_ref, w21_ref, w22_ref,
                    wdn_ref, w2_ref, o_ref, *, H, W, B):
    """Fused Encoder forward for one block of B batch elements.

    Activations are lane-dense (C, B*HW): sample b occupies lanes
    [b*HW, (b+1)*HW).  3x3 weights arrive pre-stacked as (Cout, 9*Cin) with
    K index = (ky*3 + kx)*Cin + cin (see _stack_conv_weight).
    """
    HW = H * W
    BHW = B * HW
    inv_hw = 1.0 / float(HW)

    masks = masks_ref[...]          # (9, B*HW) f32 border masks (centre = ones)
    seg = seg_ref[...]              # (B*HW, B)  f32 per-sample indicator
    segt = segt_ref[...]            # (B, B*HW)  f32 its transpose

    def conv3x3(x, w_ref):
        """x: (Cin, B*HW) f32, w_ref: (Cout, 9*Cin) bf16 -> (Cout, B*HW) f32."""
        taps = []
        for dy in (-1, 0, 1):
            for dx in (-1, 0, 1):
                t = (dy + 1) * 3 + (dx + 1)
                off = dy * W + dx            # flat source offset of this tap
                if off == 0:
                    tap = x                  # centre tap: always valid
                else:
                    # pltpu.roll follows jnp.roll semantics
                    # (out[i] = in[(i - shift) % n]); we need out[p] = in[p+off],
                    # hence shift = -off (mod B*HW to stay non-negative).
                    tap = pltpu.roll(x, (-off) % BHW, axis=1)
                    # Mask zero-pads the image border AND kills cross-sample
                    # leakage from the roll wrapping over the packed batch.
                    tap = tap * masks[t:t + 1, :]
                taps.append(tap)
        # Stack taps along sublanes -> single K = 9*Cin MXU matmul.
        stacked = jnp.concatenate(taps, axis=0)                 # (9*Cin, B*HW)
        return jnp.dot(w_ref[...], stacked.astype(jnp.bfloat16),
                       preferred_element_type=jnp.float32)

    def instance_norm(a, relu):
        # InstanceNorm2d(affine=False, track_running_stats=False): per
        # (sample, channel) stats over H*W, biased variance, eps=1e-5.
        # Independent sum / sum-of-squares + per-sample broadcast are tiny
        # matmuls against the segment indicator (runs on the idle MXU; no
        # cross-lane reductions or (C,B,HW) relayouts).
        s1 = jnp.dot(a, seg, preferred_element_type=jnp.float32)      # (C, B)
        s2 = jnp.dot(a * a, seg, preferred_element_type=jnp.float32)  # (C, B)
        mean = s1 * inv_hw
        var = jnp.maximum(s2 * inv_hw - mean * mean, 0.0)
        inv_std = lax.rsqrt(var + EPS)
        scale = jnp.dot(inv_std, segt, preferred_element_type=jnp.float32)
        shift = jnp.dot(-mean * inv_std, segt, preferred_element_type=jnp.float32)
        y = a * scale + shift
        return jnp.maximum(y, 0.0) if relu else y

    x = x_ref[...]                                       # (Cin_pad, B*HW) f32

    # x = relu1(norm1(conv1(x)))
    h = instance_norm(conv3x3(x, w1_ref), relu=True)

    # layer1: ResidualBlock(half, half, 'instance', stride=1)
    y = instance_norm(conv3x3(h, w11_ref), relu=True)
    y = instance_norm(conv3x3(y, w12_ref), relu=True)
    h = jnp.maximum(h + y, 0.0)                          # fused residual merge

    # layer2: ResidualBlock(half, output_dim, 'instance', stride=1)
    y = instance_norm(conv3x3(h, w21_ref), relu=True)
    y = instance_norm(conv3x3(y, w22_ref), relu=True)
    # TODO(synk): the reference ResidualBlock builds no downsample when
    # stride==1, so layer2's `x + y` (half vs output_dim channels) is a shape
    # error in the PyTorch module as written; we reuse the module's own
    # downsample pattern (1x1 conv + InstanceNorm) so the forward is runnable.
    skip = instance_norm(jnp.dot(wdn_ref[...], h.astype(jnp.bfloat16),
                                 preferred_element_type=jnp.float32),
                         relu=False)
    h = jnp.maximum(skip + y, 0.0)                       # fused residual merge

    # x = relu2(norm2(conv2(cat([x, input_x], dim=1)))): the channel concat is
    # a cheap sublane concat kept on-chip, and the whole conv2 is still one
    # stacked-tap matmul (weight Cin order = [layer2 output, padded input_x]).
    hcat = jnp.concatenate([h, x], axis=0)
    o_ref[...] = instance_norm(conv3x3(hcat, w2_ref), relu=True)


# ---------------------------------------------------------------------------
# Wrapper: NCHW in / NCHW out (matching the PyTorch module)
# ---------------------------------------------------------------------------
def encoder_forward(params, x_nchw, *, block_batch=4):
    """x_nchw: (N, input_dim, H, W) -> (N, output_dim, H, W)."""
    N, cin, H, W = x_nchw.shape
    HW = H * W
    cin_pad = params["conv1"].shape[1] // 9
    cout = params["conv2"].shape[0]
    assert cin <= cin_pad

    # Batch elements per grid step; keep >=2 grid steps when N > 1 so both
    # v7x TensorCores get work under dimension_semantics=("parallel",).
    B = max(1, min(block_batch, N))
    if N > 1 and -(-N // B) < 2:
        B = max(1, -(-N // 2))
    n_blocks = -(-N // B)
    npad = n_blocks * B
    bhw = B * HW
    if n_blocks > 1:
        assert bhw % 128 == 0, "B*H*W must be a multiple of 128 when grid > 1"

    # Zero-pad channels to a sublane-aligned count and batch to a multiple of
    # B, then lay out lane-dense: sample n occupies lanes [n*HW, (n+1)*HW).
    x = x_nchw.astype(jnp.float32)
    x = jnp.pad(x, ((0, npad - N), (0, cin_pad - cin), (0, 0), (0, 0)))
    x_flat = jnp.transpose(x.reshape(npad, cin_pad, HW),
                           (1, 0, 2)).reshape(cin_pad, npad * HW)

    # Constant per-block tables (VMEM-resident for the whole grid):
    #   masks: per-tap border/sample-boundary masks; seg/segt: per-sample
    #   indicator used for InstanceNorm stats + broadcast via the MXU.
    pos = jnp.arange(bhw, dtype=jnp.int32)
    row = (pos % HW) // W
    col = pos % W
    mask_rows = []
    for dy in (-1, 0, 1):
        for dx in (-1, 0, 1):
            m = jnp.ones((bhw,), jnp.bool_)
            if dy < 0:
                m &= row >= -dy
            if dy > 0:
                m &= row < H - dy
            if dx < 0:
                m &= col >= -dx
            if dx > 0:
                m &= col < W - dx
            mask_rows.append(m)
    masks = jnp.stack(mask_rows, axis=0).astype(jnp.float32)        # (9, B*HW)
    sample = pos // HW
    seg = (sample[:, None] ==
           jnp.arange(B, dtype=jnp.int32)[None, :]).astype(jnp.float32)  # (B*HW, B)
    segt = jnp.transpose(seg)                                             # (B, B*HW)

    weights = (params["conv1"], params["l1_conv1"], params["l1_conv2"],
               params["l2_conv1"], params["l2_conv2"], params["l2_down"],
               params["conv2"])

    def const_spec(a):
        zeros = (0,) * a.ndim
        return pl.BlockSpec(a.shape, lambda g: zeros)

    out = pl.pallas_call(
        functools.partial(_encoder_kernel, H=H, W=W, B=B),
        out_shape=jax.ShapeDtypeStruct((cout, npad * HW), jnp.float32),
        grid=(n_blocks,),
        in_specs=[pl.BlockSpec((cin_pad, bhw), lambda g: (0, g)),
                  const_spec(masks), const_spec(seg), const_spec(segt)]
                 + [const_spec(w) for w in weights],
        out_specs=pl.BlockSpec((cout, bhw), lambda g: (0, g)),
        compiler_params=pltpu.CompilerParams(
            dimension_semantics=("parallel",),
            # Explicit VMEM budget (v7x: 64 MiB physical / 32 MiB default
            # scoped).  With block_batch<=4 at output_dim=128, H=W=16, peak
            # residency (activations + the largest f32/bf16 tap stack) stays
            # well inside this.
            vmem_limit_bytes=32 * 1024 * 1024),
    )(x_flat, masks, seg, segt, *weights)

    out = jnp.transpose(out.reshape(cout, npad, HW), (1, 0, 2))[:N]
    return out.reshape(N, cout, H, W)


# ---------------------------------------------------------------------------
# Weights: PyTorch layout -> stacked-tap kernel layout
# ---------------------------------------------------------------------------
def _stack_conv_weight(w_pt, cin_pad=None):
    """(Cout, Cin, 3, 3) PyTorch conv weight -> (Cout, 9*Cin_pad) bf16.

    K index = (ky*3 + kx)*Cin_pad + cin — matches the kernel's tap-major
    concat.  Extra Cin rows (padding) are zero, so results are exact.
    A real checkpoint's conv2 weight (Cin = output_dim + input_dim, ordered
    [layer2 output, input_x]) maps through this with
    cin_pad = output_dim + cin_pad_of_input.
    """
    cout, cin, kh, kw = w_pt.shape
    if cin_pad is None:
        cin_pad = cin
    if cin_pad > cin:
        w_pt = jnp.pad(w_pt, ((0, 0), (0, cin_pad - cin), (0, 0), (0, 0)))
    w = jnp.transpose(w_pt, (0, 2, 3, 1)).reshape(cout, kh * kw * cin_pad)
    return w.astype(jnp.bfloat16)


def _kaiming_pt(key, cout, cin, k=3):
    """PyTorch-layout (Cout, Cin, k, k) kaiming_normal_(fan_out, relu) weight.

    Conv biases are omitted on purpose: every conv in this module is followed
    by an affine-free InstanceNorm2d, whose mean subtraction cancels them.
    """
    std = (2.0 / (k * k * cout)) ** 0.5
    return std * jax.random.normal(key, (cout, cin, k, k), jnp.float32)


def init_encoder_params(key, input_dim=3, output_dim=128):
    half = output_dim // 2
    cin_pad = max(8, -(-input_dim // 8) * 8)   # sublane-aligned input channels
    ks = jax.random.split(key, 7)
    return {
        "conv1":    _stack_conv_weight(_kaiming_pt(ks[0], half, input_dim), cin_pad),
        "l1_conv1": _stack_conv_weight(_kaiming_pt(ks[1], half, half)),
        "l1_conv2": _stack_conv_weight(_kaiming_pt(ks[2], half, half)),
        "l2_conv1": _stack_conv_weight(_kaiming_pt(ks[3], output_dim, half)),
        "l2_conv2": _stack_conv_weight(_kaiming_pt(ks[4], output_dim, output_dim)),
        # 1x1 downsample for layer2's skip path (see TODO(synk) in the kernel).
        "l2_down":  _kaiming_pt(ks[5], output_dim, half, k=1)[:, :, 0, 0]
                    .astype(jnp.bfloat16),
        # conv2 acts on cat([layer2_out, input_x]); input_x channels padded.
        "conv2":    _stack_conv_weight(
            _kaiming_pt(ks[6], output_dim, output_dim + input_dim),
            output_dim + cin_pad),
    }


if __name__ == "__main__":
    key = jax.random.PRNGKey(0)
    kp, kx = jax.random.split(key)

    input_dim, output_dim = 3, 32
    N, H, W = 4, 16, 16

    params = init_encoder_params(kp, input_dim, output_dim)
    x = jax.random.normal(kx, (N, input_dim, H, W), jnp.float32)

    fwd = jax.jit(functools.partial(encoder_forward, block_batch=2))
    out = jax.block_until_ready(fwd(params, x))

    assert out.shape == (N, output_dim, H, W), out.shape
    assert bool(jnp.all(jnp.isfinite(out)))
    assert bool(jnp.all(out >= 0.0))  # final ReLU
    print("KERNEL_OK")
</pallas_src>

<mosaic_0001>
module attributes {stable_mosaic.version = 11 : i64} {
  func.func @_encoder_kernel(%arg0: i32, %arg1: memref<8x512xf32, #tpu.memory_space<vmem>>, %arg2: memref<9x512xf32, #tpu.memory_space<vmem>>, %arg3: memref<512x2xf32, #tpu.memory_space<vmem>>, %arg4: memref<2x512xf32, #tpu.memory_space<vmem>>, %arg5: memref<16x72xbf16, #tpu.memory_space<vmem>>, %arg6: memref<16x144xbf16, #tpu.memory_space<vmem>>, %arg7: memref<16x144xbf16, #tpu.memory_space<vmem>>, %arg8: memref<32x144xbf16, #tpu.memory_space<vmem>>, %arg9: memref<32x288xbf16, #tpu.memory_space<vmem>>, %arg10: memref<32x16xbf16, #tpu.memory_space<vmem>>, %arg11: memref<32x360xbf16, #tpu.memory_space<vmem>>, %arg12: memref<32x512xf32, #tpu.memory_space<vmem>>) attributes {dimension_semantics = [#tpu.dimension_semantics<parallel>], iteration_bounds = array<i64: 2>, scalar_prefetch = 0 : i64, scratch_operands = 0 : i64, tpu.core_type = #tpu.core_type<tc>, window_params = [{transform_indices = @transform_0, window_bounds = array<i64: 8, 512>}, {pipeline_mode = #tpu.pipeline_mode<synchronous>, transform_indices = @transform_1, window_bounds = array<i64: 9, 512>}, {pipeline_mode = #tpu.pipeline_mode<synchronous>, transform_indices = @transform_2, window_bounds = array<i64: 512, 2>}, {pipeline_mode = #tpu.pipeline_mode<synchronous>, transform_indices = @transform_3, window_bounds = array<i64: 2, 512>}, {pipeline_mode = #tpu.pipeline_mode<synchronous>, transform_indices = @transform_4, window_bounds = array<i64: 16, 72>}, {pipeline_mode = #tpu.pipeline_mode<synchronous>, transform_indices = @transform_5, window_bounds = array<i64: 16, 144>}, {pipeline_mode = #tpu.pipeline_mode<synchronous>, transform_indices = @transform_6, window_bounds = array<i64: 16, 144>}, {pipeline_mode = #tpu.pipeline_mode<synchronous>, transform_indices = @transform_7, window_bounds = array<i64: 32, 144>}, {pipeline_mode = #tpu.pipeline_mode<synchronous>, transform_indices = @transform_8, window_bounds = array<i64: 32, 288>}, {pipeline_mode = #tpu.pipeline_mode<synchronous>, transform_indices = @transform_9, window_bounds = array<i64: 32, 16>}, {pipeline_mode = #tpu.pipeline_mode<synchronous>, transform_indices = @transform_10, window_bounds = array<i64: 32, 360>}, {transform_indices = @transform_11, window_bounds = array<i64: 32, 512>}]} {
    %c0 = arith.constant 0 : index
    %c0_0 = arith.constant 0 : index
    %0 = vector.load %arg2[%c0, %c0_0] : memref<9x512xf32, #tpu.memory_space<vmem>>, vector<9x512xf32>
    %c0_1 = arith.constant 0 : index
    %c0_2 = arith.constant 0 : index
    %1 = vector.load %arg3[%c0_1, %c0_2] : memref<512x2xf32, #tpu.memory_space<vmem>>, vector<512x2xf32>
    %c0_3 = arith.constant 0 : index
    %c0_4 = arith.constant 0 : index
    %2 = vector.load %arg4[%c0_3, %c0_4] : memref<2x512xf32, #tpu.memory_space<vmem>>, vector<2x512xf32>
    %c0_5 = arith.constant 0 : index
    %c0_6 = arith.constant 0 : index
    %3 = vector.load %arg1[%c0_5, %c0_6] : memref<8x512xf32, #tpu.memory_space<vmem>>, vector<8x512xf32>
    %c17_i32 = arith.constant 17 : i32
    %4 = tpu.dynamic_rotate %3 by %c17_i32 dim 1 : vector<8x512xf32>, i32 -> vector<8x512xf32>
    %5 = vector.extract_strided_slice %0 {offsets = [0, 0], sizes = [1, 512], strides = [1, 1]} : vector<9x512xf32> to vector<1x512xf32>
    %6 = vector.broadcast %5 : vector<1x512xf32> to vector<8x512xf32>
    %7 = arith.mulf %4, %6 : vector<8x512xf32>
    %c16_i32 = arith.constant 16 : i32
    %8 = tpu.dynamic_rotate %3 by %c16_i32 dim 1 : vector<8x512xf32>, i32 -> vector<8x512xf32>
    %9 = vector.extract_strided_slice %0 {offsets = [1, 0], sizes = [1, 512], strides = [1, 1]} : vector<9x512xf32> to vector<1x512xf32>
    %10 = vector.broadcast %9 : vector<1x512xf32> to vector<8x512xf32>
    %11 = arith.mulf %8, %10 : vector<8x512xf32>
    %c15_i32 = arith.constant 15 : i32
    %12 = tpu.dynamic_rotate %3 by %c15_i32 dim 1 : vector<8x512xf32>, i32 -> vector<8x512xf32>
    %13 = vector.extract_strided_slice %0 {offsets = [2, 0], sizes = [1, 512], strides = [1, 1]} : vector<9x512xf32> to vector<1x512xf32>
    %14 = vector.broadcast %13 : vector<1x512xf32> to vector<8x512xf32>
    %15 = arith.mulf %12, %14 : vector<8x512xf32>
    %c1_i32 = arith.constant 1 : i32
    %16 = tpu.dynamic_rotate %3 by %c1_i32 dim 1 : vector<8x512xf32>, i32 -> vector<8x512xf32>
    %17 = vector.extract_strided_slice %0 {offsets = [3, 0], sizes = [1, 512], strides = [1, 1]} : vector<9x512xf32> to vector<1x512xf32>
    %18 = vector.broadcast %17 : vector<1x512xf32> to vector<8x512xf32>
    %19 = arith.mulf %16, %18 : vector<8x512xf32>
    %c511_i32 = arith.constant 511 : i32
    %20 = tpu.dynamic_rotate %3 by %c511_i32 dim 1 : vector<8x512xf32>, i32 -> vector<8x512xf32>
    %21 = vector.extract_strided_slice %0 {offsets = [5, 0], sizes = [1, 512], strides = [1, 1]} : vector<9x512xf32> to vector<1x512xf32>
    %22 = vector.broadcast %21 : vector<1x512xf32> to vector<8x512xf32>
    %23 = arith.mulf %20, %22 : vector<8x512xf32>
    %c497_i32 = arith.constant 497 : i32
    %24 = tpu.dynamic_rotate %3 by %c497_i32 dim 1 : vector<8x512xf32>, i32 -> vector<8x512xf32>
    %25 = vector.extract_strided_slice %0 {offsets = [6, 0], sizes = [1, 512], strides = [1, 1]} : vector<9x512xf32> to vector<1x512xf32>
    %26 = vector.broadcast %25 : vector<1x512xf32> to vector<8x512xf32>
    %27 = arith.mulf %24, %26 : vector<8x512xf32>
    %c496_i32 = arith.constant 496 : i32
    %28 = tpu.dynamic_rotate %3 by %c496_i32 dim 1 : vector<8x512xf32>, i32 -> vector<8x512xf32>
    %29 = vector.extract_strided_slice %0 {offsets = [7, 0], sizes = [1, 512], strides = [1, 1]} : vector<9x512xf32> to vector<1x512xf32>
    %30 = vector.broadcast %29 : vector<1x512xf32> to vector<8x512xf32>
    %31 = arith.mulf %28, %30 : vector<8x512xf32>
    %c495_i32 = arith.constant 495 : i32
    %32 = tpu.dynamic_rotate %3 by %c495_i32 dim 1 : vector<8x512xf32>, i32 -> vector<8x512xf32>
    %33 = vector.extract_strided_slice %0 {offsets = [8, 0], sizes = [1, 512], strides = [1, 1]} : vector<9x512xf32> to vector<1x512xf32>
    %34 = vector.broadcast %33 : vector<1x512xf32> to vector<8x512xf32>
    %35 = arith.mulf %32, %34 : vector<8x512xf32>
    %36 = tpu.concatenate %7, %11, %15, %19, %3, %23, %27, %31, %35 in 0 : vector<8x512xf32>, vector<8x512xf32>, vector<8x512xf32>, vector<8x512xf32>, vector<8x512xf32>, vector<8x512xf32>, vector<8x512xf32>, vector<8x512xf32>, vector<8x512xf32> -> vector<72x512xf32>
    %c0_7 = arith.constant 0 : index
    %c0_8 = arith.constant 0 : index
    %37 = vector.load %arg5[%c0_7, %c0_8] : memref<16x72xbf16, #tpu.memory_space<vmem>>, vector<16x72xbf16>
    %38 = arith.truncf %36 : vector<72x512xf32> to vector<72x512xbf16>
    %cst = arith.constant dense<0.000000e+00> : vector<16x512xf32>
    %39 = tpu.matmul %37, %38, %cst {dimension_numbers = #tpu.dot_dimension_numbers<[1], [0], [0], [1], [0, 0, 1, 1], [], []>} : vector<16x72xbf16>, vector<72x512xbf16>, vector<16x512xf32> -> vector<16x512xf32>
    %cst_9 = arith.constant dense<0.000000e+00> : vector<16x2xf32>
    %40 = tpu.matmul %39, %1, %cst_9 {dimension_numbers = #tpu.dot_dimension_numbers<[1], [0], [0], [1], [0, 0, 1, 1], [], []>} : vector<16x512xf32>, vector<512x2xf32>, vector<16x2xf32> -> vector<16x2xf32>
    %41 = arith.mulf %39, %39 : vector<16x512xf32>
    %cst_10 = arith.constant dense<0.000000e+00> : vector<16x2xf32>
    %42 = tpu.matmul %41, %1, %cst_10 {dimension_numbers = #tpu.dot_dimension_numbers<[1], [0], [0], [1], [0, 0, 1, 1], [], []>} : vector<16x512xf32>, vector<512x2xf32>, vector<16x2xf32> -> vector<16x2xf32>
    %cst_11 = arith.constant 3.906250e-03 : f32
    %43 = vector.broadcast %cst_11 : f32 to vector<16x2xf32>
    %44 = arith.mulf %40, %43 : vector<16x2xf32>
    %cst_12 = arith.constant 3.906250e-03 : f32
    %45 = vector.broadcast %cst_12 : f32 to vector<16x2xf32>
    %46 = arith.mulf %42, %45 : vector<16x2xf32>
    %47 = arith.mulf %44, %44 : vector<16x2xf32>
    %48 = arith.subf %46, %47 : vector<16x2xf32>
    %cst_13 = arith.constant 0.000000e+00 : f32
    %49 = vector.broadcast %cst_13 : f32 to vector<16x2xf32>
    %50 = arith.maximumf %48, %49 : vector<16x2xf32>
    %cst_14 = arith.constant 9.99999974E-6 : f32
    %51 = vector.broadcast %cst_14 : f32 to vector<16x2xf32>
    %52 = arith.addf %50, %51 : vector<16x2xf32>
    %53 = math.rsqrt %52 : vector<16x2xf32>
    %cst_15 = arith.constant dense<0.000000e+00> : vector<16x512xf32>
    %54 = tpu.matmul %53, %2, %cst_15 {dimension_numbers = #tpu.dot_dimension_numbers<[1], [0], [0], [1], [0, 0, 1, 1], [], []>} : vector<16x2xf32>, vector<2x512xf32>, vector<16x512xf32> -> vector<16x512xf32>
    %cst_16 = arith.constant 0.000000e+00 : f32
    %55 = vector.broadcast %cst_16 : f32 to vector<16x2xf32>
    %56 = arith.subf %55, %44 : vector<16x2xf32>
    %57 = arith.mulf %56, %53 : vector<16x2xf32>
    %cst_17 = arith.constant dense<0.000000e+00> : vector<16x512xf32>
    %58 = tpu.matmul %57, %2, %cst_17 {dimension_numbers = #tpu.dot_dimension_numbers<[1], [0], [0], [1], [0, 0, 1, 1], [], []>} : vector<16x2xf32>, vector<2x512xf32>, vector<16x512xf32> -> vector<16x512xf32>
    %59 = arith.mulf %39, %54 : vector<16x512xf32>
    %60 = arith.addf %59, %58 : vector<16x512xf32>
    %cst_18 = arith.constant 0.000000e+00 : f32
    %61 = vector.broadcast %cst_18 : f32 to vector<16x512xf32>
    %62 = arith.maximumf %60, %61 : vector<16x512xf32>
    %c17_i32_19 = arith.constant 17 : i32
    %63 = tpu.dynamic_rotate %62 by %c17_i32_19 dim 1 : vector<16x512xf32>, i32 -> vector<16x512xf32>
    %64 = vector.extract_strided_slice %0 {offsets = [0, 0], sizes = [1, 512], strides = [1, 1]} : vector<9x512xf32> to vector<1x512xf32>
    %65 = vector.broadcast %64 : vector<1x512xf32> to vector<16x512xf32>
    %66 = arith.mulf %63, %65 : vector<16x512xf32>
    %c16_i32_20 = arith.constant 16 : i32
    %67 = tpu.dynamic_rotate %62 by %c16_i32_20 dim 1 : vector<16x512xf32>, i32 -> vector<16x512xf32>
    %68 = vector.extract_strided_slice %0 {offsets = [1, 0], sizes = [1, 512], strides = [1, 1]} : vector<9x512xf32> to vector<1x512xf32>
    %69 = vector.broadcast %68 : vector<1x512xf32> to vector<16x512xf32>
    %70 = arith.mulf %67, %69 : vector<16x512xf32>
    %c15_i32_21 = arith.constant 15 : i32
    %71 = tpu.dynamic_rotate %62 by %c15_i32_21 dim 1 : vector<16x512xf32>, i32 -> vector<16x512xf32>
    %72 = vector.extract_strided_slice %0 {offsets = [2, 0], sizes = [1, 512], strides = [1, 1]} : vector<9x512xf32> to vector<1x512xf32>
    %73 = vector.broadcast %72 : vector<1x512xf32> to vector<16x512xf32>
    %74 = arith.mulf %71, %73 : vector<16x512xf32>
    %c1_i32_22 = arith.constant 1 : i32
    %75 = tpu.dynamic_rotate %62 by %c1_i32_22 dim 1 : vector<16x512xf32>, i32 -> vector<16x512xf32>
    %76 = vector.extract_strided_slice %0 {offsets = [3, 0], sizes = [1, 512], strides = [1, 1]} : vector<9x512xf32> to vector<1x512xf32>
    %77 = vector.broadcast %76 : vector<1x512xf32> to vector<16x512xf32>
    %78 = arith.mulf %75, %77 : vector<16x512xf32>
    %c511_i32_23 = arith.constant 511 : i32
    %79 = tpu.dynamic_rotate %62 by %c511_i32_23 dim 1 : vector<16x512xf32>, i32 -> vector<16x512xf32>
    %80 = vector.extract_strided_slice %0 {offsets = [5, 0], sizes = [1, 512], strides = [1, 1]} : vector<9x512xf32> to vector<1x512xf32>
    %81 = vector.broadcast %80 : vector<1x512xf32> to vector<16x512xf32>
    %82 = arith.mulf %79, %81 : vector<16x512xf32>
    %c497_i32_24 = arith.constant 497 : i32
    %83 = tpu.dynamic_rotate %62 by %c497_i32_24 dim 1 : vector<16x512xf32>, i32 -> vector<16x512xf32>
    %84 = vector.extract_strided_slice %0 {offsets = [6, 0], sizes = [1, 512], strides = [1, 1]} : vector<9x512xf32> to vector<1x512xf32>
    %85 = vector.broadcast %84 : vector<1x512xf32> to vector<16x512xf32>
    %86 = arith.mulf %83, %85 : vector<16x512xf32>
    %c496_i32_25 = arith.constant 496 : i32
    %87 = tpu.dynamic_rotate %62 by %c496_i32_25 dim 1 : vector<16x512xf32>, i32 -> vector<16x512xf32>
    %88 = vector.extract_strided_slice %0 {offsets = [7, 0], sizes = [1, 512], strides = [1, 1]} : vector<9x512xf32> to vector<1x512xf32>
    %89 = vector.broadcast %88 : vector<1x512xf32> to vector<16x512xf32>
    %90 = arith.mulf %87, %89 : vector<16x512xf32>
    %c495_i32_26 = arith.constant 495 : i32
    %91 = tpu.dynamic_rotate %62 by %c495_i32_26 dim 1 : vector<16x512xf32>, i32 -> vector<16x512xf32>
    %92 = vector.extract_strided_slice %0 {offsets = [8, 0], sizes = [1, 512], strides = [1, 1]} : vector<9x512xf32> to vector<1x512xf32>
    %93 = vector.broadcast %92 : vector<1x512xf32> to vector<16x512xf32>
    %94 = arith.mulf %91, %93 : vector<16x512xf32>
    %95 = tpu.concatenate %66, %70, %74, %78, %62, %82, %86, %90, %94 in 0 : vector<16x512xf32>, vector<16x512xf32>, vector<16x512xf32>, vector<16x512xf32>, vector<16x512xf32>, vector<16x512xf32>, vector<16x512xf32>, vector<16x512xf32>, vector<16x512xf32> -> vector<144x512xf32>
    %c0_27 = arith.constant 0 : index
    %c0_28 = arith.constant 0 : index
    %96 = vector.load %arg6[%c0_27, %c0_28] : memref<16x144xbf16, #tpu.memory_space<vmem>>, vector<16x144xbf16>
    %97 = arith.truncf %95 : vector<144x512xf32> to vector<144x512xbf16>
    %cst_29 = arith.constant dense<0.000000e+00> : vector<16x512xf32>
    %98 = tpu.matmul %96, %97, %cst_29 {dimension_numbers = #tpu.dot_dimension_numbers<[1], [0], [0], [1], [0, 0, 1, 1], [], []>} : vector<16x144xbf16>, vector<144x512xbf16>, vector<16x512xf32> -> vector<16x512xf32>
    %cst_30 = arith.constant dense<0.000000e+00> : vector<16x2xf32>
    %99 = tpu.matmul %98, %1, %cst_30 {dimension_numbers = #tpu.dot_dimension_numbers<[1], [0], [0], [1], [0, 0, 1, 1], [], []>} : vector<16x512xf32>, vector<512x2xf32>, vector<16x2xf32> -> vector<16x2xf32>
    %100 = arith.mulf %98, %98 : vector<16x512xf32>
    %cst_31 = arith.constant dense<0.000000e+00> : vector<16x2xf32>
    %101 = tpu.matmul %100, %1, %cst_31 {dimension_numbers = #tpu.dot_dimension_numbers<[1], [0], [0], [1], [0, 0, 1, 1], [], []>} : vector<16x512xf32>, vector<512x2xf32>, vector<16x2xf32> -> vector<16x2xf32>
    %cst_32 = arith.constant 3.906250e-03 : f32
    %102 = vector.broadcast %cst_32 : f32 to vector<16x2xf32>
    %103 = arith.mulf %99, %102 : vector<16x2xf32>
    %cst_33 = arith.constant 3.906250e-03 : f32
    %104 = vector.broadcast %cst_33 : f32 to vector<16x2xf32>
    %105 = arith.mulf %101, %104 : vector<16x2xf32>
    %106 = arith.mulf %103, %103 : vector<16x2xf32>
    %107 = arith.subf %105, %106 : vector<16x2xf32>
    %cst_34 = arith.constant 0.000000e+00 : f32
    %108 = vector.broadcast %cst_34 : f32 to vector<16x2xf32>
    %109 = arith.maximumf %107, %108 : vector<16x2xf32>
    %cst_35 = arith.constant 9.99999974E-6 : f32
    %110 = vector.broadcast %cst_35 : f32 to vector<16x2xf32>
    %111 = arith.addf %109, %110 : vector<16x2xf32>
    %112 = math.rsqrt %111 : vector<16x2xf32>
    %cst_36 = arith.constant dense<0.000000e+00> : vector<16x512xf32>
    %113 = tpu.matmul %112, %2, %cst_36 {dimension_numbers = #tpu.dot_dimension_numbers<[1], [0], [0], [1], [0, 0, 1, 1], [], []>} : vector<16x2xf32>, vector<2x512xf32>, vector<16x512xf32> -> vector<16x512xf32>
    %cst_37 = arith.constant 0.000000e+00 : f32
    %114 = vector.broadcast %cst_37 : f32 to vector<16x2xf32>
    %115 = arith.subf %114, %103 : vector<16x2xf32>
    %116 = arith.mulf %115, %112 : vector<16x2xf32>
    %cst_38 = arith.constant dense<0.000000e+00> : vector<16x512xf32>
    %117 = tpu.matmul %116, %2, %cst_38 {dimension_numbers = #tpu.dot_dimension_numbers<[1], [0], [0], [1], [0, 0, 1, 1], [], []>} : vector<16x2xf32>, vector<2x512xf32>, vector<16x512xf32> -> vector<16x512xf32>
    %118 = arith.mulf %98, %113 : vector<16x512xf32>
    %119 = arith.addf %118, %117 : vector<16x512xf32>
    %cst_39 = arith.constant 0.000000e+00 : f32
    %120 = vector.broadcast %cst_39 : f32 to vector<16x512xf32>
    %121 = arith.maximumf %119, %120 : vector<16x512xf32>
    %c17_i32_40 = arith.constant 17 : i32
    %122 = tpu.dynamic_rotate %121 by %c17_i32_40 dim 1 : vector<16x512xf32>, i32 -> vector<16x512xf32>
    %123 = vector.extract_strided_slice %0 {offsets = [0, 0], sizes = [1, 512], strides = [1, 1]} : vector<9x512xf32> to vector<1x512xf32>
    %124 = vector.broadcast %123 : vector<1x512xf32> to vector<16x512xf32>
    %125 = arith.mulf %122, %124 : vector<16x512xf32>
    %c16_i32_41 = arith.constant 16 : i32
    %126 = tpu.dynamic_rotate %121 by %c16_i32_41 dim 1 : vector<16x512xf32>, i32 -> vector<16x512xf32>
    %127 = vector.extract_strided_slice %0 {offsets = [1, 0], sizes = [1, 512], strides = [1, 1]} : vector<9x512xf32> to vector<1x512xf32>
    %128 = vector.broadcast %127 : vector<1x512xf32> to vector<16x512xf32>
    %129 = arith.mulf %126, %128 : vector<16x512xf32>
    %c15_i32_42 = arith.constant 15 : i32
    %130 = tpu.dynamic_rotate %121 by %c15_i32_42 dim 1 : vector<16x512xf32>, i32 -> vector<16x512xf32>
    %131 = vector.extract_strided_slice %0 {offsets = [2, 0], sizes = [1, 512], strides = [1, 1]} : vector<9x512xf32> to vector<1x512xf32>
    %132 = vector.broadcast %131 : vector<1x512xf32> to vector<16x512xf32>
    %133 = arith.mulf %130, %132 : vector<16x512xf32>
    %c1_i32_43 = arith.constant 1 : i32
    %134 = tpu.dynamic_rotate %121 by %c1_i32_43 dim 1 : vector<16x512xf32>, i32 -> vector<16x512xf32>
    %135 = vector.extract_strided_slice %0 {offsets = [3, 0], sizes = [1, 512], strides = [1, 1]} : vector<9x512xf32> to vector<1x512xf32>
    %136 = vector.broadcast %135 : vector<1x512xf32> to vector<16x512xf32>
    %137 = arith.mulf %134, %136 : vector<16x512xf32>
    %c511_i32_44 = arith.constant 511 : i32
    %138 = tpu.dynamic_rotate %121 by %c511_i32_44 dim 1 : vector<16x512xf32>, i32 -> vector<16x512xf32>
    %139 = vector.extract_strided_slice %0 {offsets = [5, 0], sizes = [1, 512], strides = [1, 1]} : vector<9x512xf32> to vector<1x512xf32>
    %140 = vector.broadcast %139 : vector<1x512xf32> to vector<16x512xf32>
    %141 = arith.mulf %138, %140 : vector<16x512xf32>
    %c497_i32_45 = arith.constant 497 : i32
    %142 = tpu.dynamic_rotate %121 by %c497_i32_45 dim 1 : vector<16x512xf32>, i32 -> vector<16x512xf32>
    %143 = vector.extract_strided_slice %0 {offsets = [6, 0], sizes = [1, 512], strides = [1, 1]} : vector<9x512xf32> to vector<1x512xf32>
    %144 = vector.broadcast %143 : vector<1x512xf32> to vector<16x512xf32>
    %145 = arith.mulf %142, %144 : vector<16x512xf32>
    %c496_i32_46 = arith.constant 496 : i32
    %146 = tpu.dynamic_rotate %121 by %c496_i32_46 dim 1 : vector<16x512xf32>, i32 -> vector<16x512xf32>
    %147 = vector.extract_strided_slice %0 {offsets = [7, 0], sizes = [1, 512], strides = [1, 1]} : vector<9x512xf32> to vector<1x512xf32>
    %148 = vector.broadcast %147 : vector<1x512xf32> to vector<16x512xf32>
    %149 = arith.mulf %146, %148 : vector<16x512xf32>
    %c495_i32_47 = arith.constant 495 : i32
    %150 = tpu.dynamic_rotate %121 by %c495_i32_47 dim 1 : vector<16x512xf32>, i32 -> vector<16x512xf32>
    %151 = vector.extract_strided_slice %0 {offsets = [8, 0], sizes = [1, 512], strides = [1, 1]} : vector<9x512xf32> to vector<1x512xf32>
    %152 = vector.broadcast %151 : vector<1x512xf32> to vector<16x512xf32>
    %153 = arith.mulf %150, %152 : vector<16x512xf32>
    %154 = tpu.concatenate %125, %129, %133, %137, %121, %141, %145, %149, %153 in 0 : vector<16x512xf32>, vector<16x512xf32>, vector<16x512xf32>, vector<16x512xf32>, vector<16x512xf32>, vector<16x512xf32>, vector<16x512xf32>, vector<16x512xf32>, vector<16x512xf32> -> vector<144x512xf32>
    %c0_48 = arith.constant 0 : index
    %c0_49 = arith.constant 0 : index
    %155 = vector.load %arg7[%c0_48, %c0_49] : memref<16x144xbf16, #tpu.memory_space<vmem>>, vector<16x144xbf16>
    %156 = arith.truncf %154 : vector<144x512xf32> to vector<144x512xbf16>
    %cst_50 = arith.constant dense<0.000000e+00> : vector<16x512xf32>
    %157 = tpu.matmul %155, %156, %cst_50 {dimension_numbers = #tpu.dot_dimension_numbers<[1], [0], [0], [1], [0, 0, 1, 1], [], []>} : vector<16x144xbf16>, vector<144x512xbf16>, vector<16x512xf32> -> vector<16x512xf32>
    %cst_51 = arith.constant dense<0.000000e+00> : vector<16x2xf32>
    %158 = tpu.matmul %157, %1, %cst_51 {dimension_numbers = #tpu.dot_dimension_numbers<[1], [0], [0], [1], [0, 0, 1, 1], [], []>} : vector<16x512xf32>, vector<512x2xf32>, vector<16x2xf32> -> vector<16x2xf32>
    %159 = arith.mulf %157, %157 : vector<16x512xf32>
    %cst_52 = arith.constant dense<0.000000e+00> : vector<16x2xf32>
    %160 = tpu.matmul %159, %1, %cst_52 {dimension_numbers = #tpu.dot_dimension_numbers<[1], [0], [0], [1], [0, 0, 1, 1], [], []>} : vector<16x512xf32>, vector<512x2xf32>, vector<16x2xf32> -> vector<16x2xf32>
    %cst_53 = arith.constant 3.906250e-03 : f32
    %161 = vector.broadcast %cst_53 : f32 to vector<16x2xf32>
    %162 = arith.mulf %158, %161 : vector<16x2xf32>
    %cst_54 = arith.constant 3.906250e-03 : f32
    %163 = vector.broadcast %cst_54 : f32 to vector<16x2xf32>
    %164 = arith.mulf %160, %163 : vector<16x2xf32>
    %165 = arith.mulf %162, %162 : vector<16x2xf32>
    %166 = arith.subf %164, %165 : vector<16x2xf32>
    %cst_55 = arith.constant 0.000000e+00 : f32
    %167 = vector.broadcast %cst_55 : f32 to vector<16x2xf32>
    %168 = arith.maximumf %166, %167 : vector<16x2xf32>
    %cst_56 = arith.constant 9.99999974E-6 : f32
    %169 = vector.broadcast %cst_56 : f32 to vector<16x2xf32>
    %170 = arith.addf %168, %169 : vector<16x2xf32>
    %171 = math.rsqrt %170 : vector<16x2xf32>
    %cst_57 = arith.constant dense<0.000000e+00> : vector<16x512xf32>
    %172 = tpu.matmul %171, %2, %cst_57 {dimension_numbers = #tpu.dot_dimension_numbers<[1], [0], [0], [1], [0, 0, 1, 1], [], []>} : vector<16x2xf32>, vector<2x512xf32>, vector<16x512xf32> -> vector<16x512xf32>
    %cst_58 = arith.constant 0.000000e+00 : f32
    %173 = vector.broadcast %cst_58 : f32 to vector<16x2xf32>
    %174 = arith.subf %173, %162 : vector<16x2xf32>
    %175 = arith.mulf %174, %171 : vector<16x2xf32>
    %cst_59 = arith.constant dense<0.000000e+00> : vector<16x512xf32>
    %176 = tpu.matmul %175, %2, %cst_59 {dimension_numbers = #tpu.dot_dimension_numbers<[1], [0], [0], [1], [0, 0, 1, 1], [], []>} : vector<16x2xf32>, vector<2x512xf32>, vector<16x512xf32> -> vector<16x512xf32>
    %177 = arith.mulf %157, %172 : vector<16x512xf32>
    %178 = arith.addf %177, %176 : vector<16x512xf32>
    %cst_60 = arith.constant 0.000000e+00 : f32
    %179 = vector.broadcast %cst_60 : f32 to vector<16x512xf32>
    %180 = arith.maximumf %178, %179 : vector<16x512xf32>
    %181 = arith.addf %62, %180 : vector<16x512xf32>
    %cst_61 = arith.constant 0.000000e+00 : f32
    %182 = vector.broadcast %cst_61 : f32 to vector<16x512xf32>
    %183 = arith.maximumf %181, %182 : vector<16x512xf32>
    %c17_i32_62 = arith.constant 17 : i32
    %184 = tpu.dynamic_rotate %183 by %c17_i32_62 dim 1 : vector<16x512xf32>, i32 -> vector<16x512xf32>
    %185 = vector.extract_strided_slice %0 {offsets = [0, 0], sizes = [1, 512], strides = [1, 1]} : vector<9x512xf32> to vector<1x512xf32>
    %186 = vector.broadcast %185 : vector<1x512xf32> to vector<16x512xf32>
    %187 = arith.mulf %184, %186 : vector<16x512xf32>
    %c16_i32_63 = arith.constant 16 : i32
    %188 = tpu.dynamic_rotate %183 by %c16_i32_63 dim 1 : vector<16x512xf32>, i32 -> vector<16x512xf32>
    %189 = vector.extract_strided_slice %0 {offsets = [1, 0], sizes = [1, 512], strides = [1, 1]} : vector<9x512xf32> to vector<1x512xf32>
    %190 = vector.broadcast %189 : vector<1x512xf32> to vector<16x512xf32>
    %191 = arith.mulf %188, %190 : vector<16x512xf32>
    %c15_i32_64 = arith.constant 15 : i32
    %192 = tpu.dynamic_rotate %183 by %c15_i32_64 dim 1 : vector<16x512xf32>, i32 -> vector<16x512xf32>
    %193 = vector.extract_strided_slice %0 {offsets = [2, 0], sizes = [1, 512], strides = [1, 1]} : vector<9x512xf32> to vector<1x512xf32>
    %194 = vector.broadcast %193 : vector<1x512xf32> to vector<16x512xf32>
    %195 = arith.mulf %192, %194 : vector<16x512xf32>
    %c1_i32_65 = arith.constant 1 : i32
    %196 = tpu.dynamic_rotate %183 by %c1_i32_65 dim 1 : vector<16x512xf32>, i32 -> vector<16x512xf32>
    %197 = vector.extract_strided_slice %0 {offsets = [3, 0], sizes = [1, 512], strides = [1, 1]} : vector<9x512xf32> to vector<1x512xf32>
    %198 = vector.broadcast %197 : vector<1x512xf32> to vector<16x512xf32>
    %199 = arith.mulf %196, %198 : vector<16x512xf32>
    %c511_i32_66 = arith.constant 511 : i32
    %200 = tpu.dynamic_rotate %183 by %c511_i32_66 dim 1 : vector<16x512xf32>, i32 -> vector<16x512xf32>
    %201 = vector.extract_strided_slice %0 {offsets = [5, 0], sizes = [1, 512], strides = [1, 1]} : vector<9x512xf32> to vector<1x512xf32>
    %202 = vector.broadcast %201 : vector<1x512xf32> to vector<16x512xf32>
    %203 = arith.mulf %200, %202 : vector<16x512xf32>
    %c497_i32_67 = arith.constant 497 : i32
    %204 = tpu.dynamic_rotate %183 by %c497_i32_67 dim 1 : vector<16x512xf32>, i32 -> vector<16x512xf32>
    %205 = vector.extract_strided_slice %0 {offsets = [6, 0], sizes = [1, 512], strides = [1, 1]} : vector<9x512xf32> to vector<1x512xf32>
    %206 = vector.broadcast %205 : vector<1x512xf32> to vector<16x512xf32>
    %207 = arith.mulf %204, %206 : vector<16x512xf32>
    %c496_i32_68 = arith.constant 496 : i32
    %208 = tpu.dynamic_rotate %183 by %c496_i32_68 dim 1 : vector<16x512xf32>, i32 -> vector<16x512xf32>
    %209 = vector.extract_strided_slice %0 {offsets = [7, 0], sizes = [1, 512], strides = [1, 1]} : vector<9x512xf32> to vector<1x512xf32>
    %210 = vector.broadcast %209 : vector<1x512xf32> to vector<16x512xf32>
    %211 = arith.mulf %208, %210 : vector<16x512xf32>
    %c495_i32_69 = arith.constant 495 : i32
    %212 = tpu.dynamic_rotate %183 by %c495_i32_69 dim 1 : vector<16x512xf32>, i32 -> vector<16x512xf32>
    %213 = vector.extract_strided_slice %0 {offsets = [8, 0], sizes = [1, 512], strides = [1, 1]} : vector<9x512xf32> to vector<1x512xf32>
    %214 = vector.broadcast %213 : vector<1x512xf32> to vector<16x512xf32>
    %215 = arith.mulf %212, %214 : vector<16x512xf32>
    %216 = tpu.concatenate %187, %191, %195, %199, %183, %203, %207, %211, %215 in 0 : vector<16x512xf32>, vector<16x512xf32>, vector<16x512xf32>, vector<16x512xf32>, vector<16x512xf32>, vector<16x512xf32>, vector<16x512xf32>, vector<16x512xf32>, vector<16x512xf32> -> vector<144x512xf32>
    %c0_70 = arith.constant 0 : index
    %c0_71 = arith.constant 0 : index
    %217 = vector.load %arg8[%c0_70, %c0_71] : memref<32x144xbf16, #tpu.memory_space<vmem>>, vector<32x144xbf16>
    %218 = arith.truncf %216 : vector<144x512xf32> to vector<144x512xbf16>
    %cst_72 = arith.constant dense<0.000000e+00> : vector<32x512xf32>
    %219 = tpu.matmul %217, %218, %cst_72 {dimension_numbers = #tpu.dot_dimension_numbers<[1], [0], [0], [1], [0, 0, 1, 1], [], []>} : vector<32x144xbf16>, vector<144x512xbf16>, vector<32x512xf32> -> vector<32x512xf32>
    %cst_73 = arith.constant dense<0.000000e+00> : vector<32x2xf32>
    %220 = tpu.matmul %219, %1, %cst_73 {dimension_numbers = #tpu.dot_dimension_numbers<[1], [0], [0], [1], [0, 0, 1, 1], [], []>} : vector<32x512xf32>, vector<512x2xf32>, vector<32x2xf32> -> vector<32x2xf32>
    %221 = arith.mulf %219, %219 : vector<32x512xf32>
    %cst_74 = arith.constant dense<0.000000e+00> : vector<32x2xf32>
    %222 = tpu.matmul %221, %1, %cst_74 {dimension_numbers = #tpu.dot_dimension_numbers<[1], [0], [0], [1], [0, 0, 1, 1], [], []>} : vector<32x512xf32>, vector<512x2xf32>, vector<32x2xf32> -> vector<32x2xf32>
    %cst_75 = arith.constant 3.906250e-03 : f32
    %223 = vector.broadcast %cst_75 : f32 to vector<32x2xf32>
    %224 = arith.mulf %220, %223 : vector<32x2xf32>
    %cst_76 = arith.constant 3.906250e-03 : f32
    %225 = vector.broadcast %cst_76 : f32 to vector<32x2xf32>
    %226 = arith.mulf %222, %225 : vector<32x2xf32>
    %227 = arith.mulf %224, %224 : vector<32x2xf32>
    %228 = arith.subf %226, %227 : vector<32x2xf32>
    %cst_77 = arith.constant 0.000000e+00 : f32
    %229 = vector.broadcast %cst_77 : f32 to vector<32x2xf32>
    %230 = arith.maximumf %228, %229 : vector<32x2xf32>
    %cst_78 = arith.constant 9.99999974E-6 : f32
    %231 = vector.broadcast %cst_78 : f32 to vector<32x2xf32>
    %232 = arith.addf %230, %231 : vector<32x2xf32>
    %233 = math.rsqrt %232 : vector<32x2xf32>
    %cst_79 = arith.constant dense<0.000000e+00> : vector<32x512xf32>
    %234 = tpu.matmul %233, %2, %cst_79 {dimension_numbers = #tpu.dot_dimension_numbers<[1], [0], [0], [1], [0, 0, 1, 1], [], []>} : vector<32x2xf32>, vector<2x512xf32>, vector<32x512xf32> -> vector<32x512xf32>
    %cst_80 = arith.constant 0.000000e+00 : f32
    %235 = vector.broadcast %cst_80 : f32 to vector<32x2xf32>
    %236 = arith.subf %235, %224 : vector<32x2xf32>
    %237 = arith.mulf %236, %233 : vector<32x2xf32>
    %cst_81 = arith.constant dense<0.000000e+00> : vector<32x512xf32>
    %238 = tpu.matmul %237, %2, %cst_81 {dimension_numbers = #tpu.dot_dimension_numbers<[1], [0], [0], [1], [0, 0, 1, 1], [], []>} : vector<32x2xf32>, vector<2x512xf32>, vector<32x512xf32> -> vector<32x512xf32>
    %239 = arith.mulf %219, %234 : vector<32x512xf32>
    %240 = arith.addf %239, %238 : vector<32x512xf32>
    %cst_82 = arith.constant 0.000000e+00 : f32
    %241 = vector.broadcast %cst_82 : f32 to vector<32x512xf32>
    %242 = arith.maximumf %240, %241 : vector<32x512xf32>
    %c17_i32_83 = arith.constant 17 : i32
    %243 = tpu.dynamic_rotate %242 by %c17_i32_83 dim 1 : vector<32x512xf32>, i32 -> vector<32x512xf32>
    %244 = vector.extract_strided_slice %0 {offsets = [0, 0], sizes = [1, 512], strides = [1, 1]} : vector<9x512xf32> to vector<1x512xf32>
    %245 = vector.broadcast %244 : vector<1x512xf32> to vector<32x512xf32>
    %246 = arith.mulf %243, %245 : vector<32x512xf32>
    %c16_i32_84 = arith.constant 16 : i32
    %247 = tpu.dynamic_rotate %242 by %c16_i32_84 dim 1 : vector<32x512xf32>, i32 -> vector<32x512xf32>
    %248 = vector.extract_strided_slice %0 {offsets = [1, 0], sizes = [1, 512], strides = [1, 1]} : vector<9x512xf32> to vector<1x512xf32>
    %249 = vector.broadcast %248 : vector<1x512xf32> to vector<32x512xf32>
    %250 = arith.mulf %247, %249 : vector<32x512xf32>
    %c15_i32_85 = arith.constant 15 : i32
    %251 = tpu.dynamic_rotate %242 by %c15_i32_85 dim 1 : vector<32x512xf32>, i32 -> vector<32x512xf32>
    %252 = vector.extract_strided_slice %0 {offsets = [2, 0], sizes = [1, 512], strides = [1, 1]} : vector<9x512xf32> to vector<1x512xf32>
    %253 = vector.broadcast %252 : vector<1x512xf32> to vector<32x512xf32>
    %254 = arith.mulf %251, %253 : vector<32x512xf32>
    %c1_i32_86 = arith.constant 1 : i32
    %255 = tpu.dynamic_rotate %242 by %c1_i32_86 dim 1 : vector<32x512xf32>, i32 -> vector<32x512xf32>
    %256 = vector.extract_strided_slice %0 {offsets = [3, 0], sizes = [1, 512], strides = [1, 1]} : vector<9x512xf32> to vector<1x512xf32>
    %257 = vector.broadcast %256 : vector<1x512xf32> to vector<32x512xf32>
    %258 = arith.mulf %255, %257 : vector<32x512xf32>
    %c511_i32_87 = arith.constant 511 : i32
    %259 = tpu.dynamic_rotate %242 by %c511_i32_87 dim 1 : vector<32x512xf32>, i32 -> vector<32x512xf32>
    %260 = vector.extract_strided_slice %0 {offsets = [5, 0], sizes = [1, 512], strides = [1, 1]} : vector<9x512xf32> to vector<1x512xf32>
    %261 = vector.broadcast %260 : vector<1x512xf32> to vector<32x512xf32>
    %262 = arith.mulf %259, %261 : vector<32x512xf32>
    %c497_i32_88 = arith.constant 497 : i32
    %263 = tpu.dynamic_rotate %242 by %c497_i32_88 dim 1 : vector<32x512xf32>, i32 -> vector<32x512xf32>
    %264 = vector.extract_strided_slice %0 {offsets = [6, 0], sizes = [1, 512], strides = [1, 1]} : vector<9x512xf32> to vector<1x512xf32>
    %265 = vector.broadcast %264 : vector<1x512xf32> to vector<32x512xf32>
    %266 = arith.mulf %263, %265 : vector<32x512xf32>
    %c496_i32_89 = arith.constant 496 : i32
    %267 = tpu.dynamic_rotate %242 by %c496_i32_89 dim 1 : vector<32x512xf32>, i32 -> vector<32x512xf32>
    %268 = vector.extract_strided_slice %0 {offsets = [7, 0], sizes = [1, 512], strides = [1, 1]} : vector<9x512xf32> to vector<1x512xf32>
    %269 = vector.broadcast %268 : vector<1x512xf32> to vector<32x512xf32>
    %270 = arith.mulf %267, %269 : vector<32x512xf32>
    %c495_i32_90 = arith.constant 495 : i32
    %271 = tpu.dynamic_rotate %242 by %c495_i32_90 dim 1 : vector<32x512xf32>, i32 -> vector<32x512xf32>
    %272 = vector.extract_strided_slice %0 {offsets = [8, 0], sizes = [1, 512], strides = [1, 1]} : vector<9x512xf32> to vector<1x512xf32>
    %273 = vector.broadcast %272 : vector<1x512xf32> to vector<32x512xf32>
    %274 = arith.mulf %271, %273 : vector<32x512xf32>
    %275 = tpu.concatenate %246, %250, %254, %258, %242, %262, %266, %270, %274 in 0 : vector<32x512xf32>, vector<32x512xf32>, vector<32x512xf32>, vector<32x512xf32>, vector<32x512xf32>, vector<32x512xf32>, vector<32x512xf32>, vector<32x512xf32>, vector<32x512xf32> -> vector<288x512xf32>
    %c0_91 = arith.constant 0 : index
    %c0_92 = arith.constant 0 : index
    %276 = vector.load %arg9[%c0_91, %c0_92] : memref<32x288xbf16, #tpu.memory_space<vmem>>, vector<32x288xbf16>
    %277 = arith.truncf %275 : vector<288x512xf32> to vector<288x512xbf16>
    %cst_93 = arith.constant dense<0.000000e+00> : vector<32x512xf32>
    %278 = tpu.matmul %276, %277, %cst_93 {dimension_numbers = #tpu.dot_dimension_numbers<[1], [0], [0], [1], [0, 0, 1, 1], [], []>} : vector<32x288xbf16>, vector<288x512xbf16>, vector<32x512xf32> -> vector<32x512xf32>
    %cst_94 = arith.constant dense<0.000000e+00> : vector<32x2xf32>
    %279 = tpu.matmul %278, %1, %cst_94 {dimension_numbers = #tpu.dot_dimension_numbers<[1], [0], [0], [1], [0, 0, 1, 1], [], []>} : vector<32x512xf32>, vector<512x2xf32>, vector<32x2xf32> -> vector<32x2xf32>
    %280 = arith.mulf %278, %278 : vector<32x512xf32>
    %cst_95 = arith.constant dense<0.000000e+00> : vector<32x2xf32>
    %281 = tpu.matmul %280, %1, %cst_95 {dimension_numbers = #tpu.dot_dimension_numbers<[1], [0], [0], [1], [0, 0, 1, 1], [], []>} : vector<32x512xf32>, vector<512x2xf32>, vector<32x2xf32> -> vector<32x2xf32>
    %cst_96 = arith.constant 3.906250e-03 : f32
    %282 = vector.broadcast %cst_96 : f32 to vector<32x2xf32>
    %283 = arith.mulf %279, %282 : vector<32x2xf32>
    %cst_97 = arith.constant 3.906250e-03 : f32
    %284 = vector.broadcast %cst_97 : f32 to vector<32x2xf32>
    %285 = arith.mulf %281, %284 : vector<32x2xf32>
    %286 = arith.mulf %283, %283 : vector<32x2xf32>
    %287 = arith.subf %285, %286 : vector<32x2xf32>
    %cst_98 = arith.constant 0.000000e+00 : f32
    %288 = vector.broadcast %cst_98 : f32 to vector<32x2xf32>
    %289 = arith.maximumf %287, %288 : vector<32x2xf32>
    %cst_99 = arith.constant 9.99999974E-6 : f32
    %290 = vector.broadcast %cst_99 : f32 to vector<32x2xf32>
    %291 = arith.addf %289, %290 : vector<32x2xf32>
    %292 = math.rsqrt %291 : vector<32x2xf32>
    %cst_100 = arith.constant dense<0.000000e+00> : vector<32x512xf32>
    %293 = tpu.matmul %292, %2, %cst_100 {dimension_numbers = #tpu.dot_dimension_numbers<[1], [0], [0], [1], [0, 0, 1, 1], [], []>} : vector<32x2xf32>, vector<2x512xf32>, vector<32x512xf32> -> vector<32x512xf32>
    %cst_101 = arith.constant 0.000000e+00 : f32
    %294 = vector.broadcast %cst_101 : f32 to vector<32x2xf32>
    %295 = arith.subf %294, %283 : vector<32x2xf32>
    %296 = arith.mulf %295, %292 : vector<32x2xf32>
    %cst_102 = arith.constant dense<0.000000e+00> : vector<32x512xf32>
    %297 = tpu.matmul %296, %2, %cst_102 {dimension_numbers = #tpu.dot_dimension_numbers<[1], [0], [0], [1], [0, 0, 1, 1], [], []>} : vector<32x2xf32>, vector<2x512xf32>, vector<32x512xf32> -> vector<32x512xf32>
    %298 = arith.mulf %278, %293 : vector<32x512xf32>
    %299 = arith.addf %298, %297 : vector<32x512xf32>
    %cst_103 = arith.constant 0.000000e+00 : f32
    %300 = vector.broadcast %cst_103 : f32 to vector<32x512xf32>
    %301 = arith.maximumf %299, %300 : vector<32x512xf32>
    %c0_104 = arith.constant 0 : index
    %c0_105 = arith.constant 0 : index
    %302 = vector.load %arg10[%c0_104, %c0_105] : memref<32x16xbf16, #tpu.memory_space<vmem>>, vector<32x16xbf16>
    %303 = arith.truncf %183 : vector<16x512xf32> to vector<16x512xbf16>
    %cst_106 = arith.constant dense<0.000000e+00> : vector<32x512xf32>
    %304 = tpu.matmul %302, %303, %cst_106 {dimension_numbers = #tpu.dot_dimension_numbers<[1], [0], [0], [1], [0, 0, 1, 1], [], []>} : vector<32x16xbf16>, vector<16x512xbf16>, vector<32x512xf32> -> vector<32x512xf32>
    %cst_107 = arith.constant dense<0.000000e+00> : vector<32x2xf32>
    %305 = tpu.matmul %304, %1, %cst_107 {dimension_numbers = #tpu.dot_dimension_numbers<[1], [0], [0], [1], [0, 0, 1, 1], [], []>} : vector<32x512xf32>, vector<512x2xf32>, vector<32x2xf32> -> vector<32x2xf32>
    %306 = arith.mulf %304, %304 : vector<32x512xf32>
    %cst_108 = arith.constant dense<0.000000e+00> : vector<32x2xf32>
    %307 = tpu.matmul %306, %1, %cst_108 {dimension_numbers = #tpu.dot_dimension_numbers<[1], [0], [0], [1], [0, 0, 1, 1], [], []>} : vector<32x512xf32>, vector<512x2xf32>, vector<32x2xf32> -> vector<32x2xf32>
    %cst_109 = arith.constant 3.906250e-03 : f32
    %308 = vector.broadcast %cst_109 : f32 to vector<32x2xf32>
    %309 = arith.mulf %305, %308 : vector<32x2xf32>
    %cst_110 = arith.constant 3.906250e-03 : f32
    %310 = vector.broadcast %cst_110 : f32 to vector<32x2xf32>
    %311 = arith.mulf %307, %310 : vector<32x2xf32>
    %312 = arith.mulf %309, %309 : vector<32x2xf32>
    %313 = arith.subf %311, %312 : vector<32x2xf32>
    %cst_111 = arith.constant 0.000000e+00 : f32
    %314 = vector.broadcast %cst_111 : f32 to vector<32x2xf32>
    %315 = arith.maximumf %313, %314 : vector<32x2xf32>
    %cst_112 = arith.constant 9.99999974E-6 : f32
    %316 = vector.broadcast %cst_112 : f32 to vector<32x2xf32>
    %317 = arith.addf %315, %316 : vector<32x2xf32>
    %318 = math.rsqrt %317 : vector<32x2xf32>
    %cst_113 = arith.constant dense<0.000000e+00> : vector<32x512xf32>
    %319 = tpu.matmul %318, %2, %cst_113 {dimension_numbers = #tpu.dot_dimension_numbers<[1], [0], [0], [1], [0, 0, 1, 1], [], []>} : vector<32x2xf32>, vector<2x512xf32>, vector<32x512xf32> -> vector<32x512xf32>
    %cst_114 = arith.constant 0.000000e+00 : f32
    %320 = vector.broadcast %cst_114 : f32 to vector<32x2xf32>
    %321 = arith.subf %320, %309 : vector<32x2xf32>
    %322 = arith.mulf %321, %318 : vector<32x2xf32>
    %cst_115 = arith.constant dense<0.000000e+00> : vector<32x512xf32>
    %323 = tpu.matmul %322, %2, %cst_115 {dimension_numbers = #tpu.dot_dimension_numbers<[1], [0], [0], [1], [0, 0, 1, 1], [], []>} : vector<32x2xf32>, vector<2x512xf32>, vector<32x512xf32> -> vector<32x512xf32>
    %324 = arith.mulf %304, %319 : vector<32x512xf32>
    %325 = arith.addf %324, %323 : vector<32x512xf32>
    %326 = arith.addf %325, %301 : vector<32x512xf32>
    %cst_116 = arith.constant 0.000000e+00 : f32
    %327 = vector.broadcast %cst_116 : f32 to vector<32x512xf32>
    %328 = arith.maximumf %326, %327 : vector<32x512xf32>
    %329 = tpu.concatenate %328, %3 in 0 : vector<32x512xf32>, vector<8x512xf32> -> vector<40x512xf32>
    %c17_i32_117 = arith.constant 17 : i32
    %330 = tpu.dynamic_rotate %329 by %c17_i32_117 dim 1 : vector<40x512xf32>, i32 -> vector<40x512xf32>
    %331 = vector.extract_strided_slice %0 {offsets = [0, 0], sizes = [1, 512], strides = [1, 1]} : vector<9x512xf32> to vector<1x512xf32>
    %332 = vector.broadcast %331 : vector<1x512xf32> to vector<40x512xf32>
    %333 = arith.mulf %330, %332 : vector<40x512xf32>
    %c16_i32_118 = arith.constant 16 : i32
    %334 = tpu.dynamic_rotate %329 by %c16_i32_118 dim 1 : vector<40x512xf32>, i32 -> vector<40x512xf32>
    %335 = vector.extract_strided_slice %0 {offsets = [1, 0], sizes = [1, 512], strides = [1, 1]} : vector<9x512xf32> to vector<1x512xf32>
    %336 = vector.broadcast %335 : vector<1x512xf32> to vector<40x512xf32>
    %337 = arith.mulf %334, %336 : vector<40x512xf32>
    %c15_i32_119 = arith.constant 15 : i32
    %338 = tpu.dynamic_rotate %329 by %c15_i32_119 dim 1 : vector<40x512xf32>, i32 -> vector<40x512xf32>
    %339 = vector.extract_strided_slice %0 {offsets = [2, 0], sizes = [1, 512], strides = [1, 1]} : vector<9x512xf32> to vector<1x512xf32>
    %340 = vector.broadcast %339 : vector<1x512xf32> to vector<40x512xf32>
    %341 = arith.mulf %338, %340 : vector<40x512xf32>
    %c1_i32_120 = arith.constant 1 : i32
    %342 = tpu.dynamic_rotate %329 by %c1_i32_120 dim 1 : vector<40x512xf32>, i32 -> vector<40x512xf32>
    %343 = vector.extract_strided_slice %0 {offsets = [3, 0], sizes = [1, 512], strides = [1, 1]} : vector<9x512xf32> to vector<1x512xf32>
    %344 = vector.broadcast %343 : vector<1x512xf32> to vector<40x512xf32>
    %345 = arith.mulf %342, %344 : vector<40x512xf32>
    %c511_i32_121 = arith.constant 511 : i32
    %346 = tpu.dynamic_rotate %329 by %c511_i32_121 dim 1 : vector<40x512xf32>, i32 -> vector<40x512xf32>
    %347 = vector.extract_strided_slice %0 {offsets = [5, 0], sizes = [1, 512], strides = [1, 1]} : vector<9x512xf32> to vector<1x512xf32>
    %348 = vector.broadcast %347 : vector<1x512xf32> to vector<40x512xf32>
    %349 = arith.mulf %346, %348 : vector<40x512xf32>
    %c497_i32_122 = arith.constant 497 : i32
    %350 = tpu.dynamic_rotate %329 by %c497_i32_122 dim 1 : vector<40x512xf32>, i32 -> vector<40x512xf32>
    %351 = vector.extract_strided_slice %0 {offsets = [6, 0], sizes = [1, 512], strides = [1, 1]} : vector<9x512xf32> to vector<1x512xf32>
    %352 = vector.broadcast %351 : vector<1x512xf32> to vector<40x512xf32>
    %353 = arith.mulf %350, %352 : vector<40x512xf32>
    %c496_i32_123 = arith.constant 496 : i32
    %354 = tpu.dynamic_rotate %329 by %c496_i32_123 dim 1 : vector<40x512xf32>, i32 -> vector<40x512xf32>
    %355 = vector.extract_strided_slice %0 {offsets = [7, 0], sizes = [1, 512], strides = [1, 1]} : vector<9x512xf32> to vector<1x512xf32>
    %356 = vector.broadcast %355 : vector<1x512xf32> to vector<40x512xf32>
    %357 = arith.mulf %354, %356 : vector<40x512xf32>
    %c495_i32_124 = arith.constant 495 : i32
    %358 = tpu.dynamic_rotate %329 by %c495_i32_124 dim 1 : vector<40x512xf32>, i32 -> vector<40x512xf32>
    %359 = vector.extract_strided_slice %0 {offsets = [8, 0], sizes = [1, 512], strides = [1, 1]} : vector<9x512xf32> to vector<1x512xf32>
    %360 = vector.broadcast %359 : vector<1x512xf32> to vector<40x512xf32>
    %361 = arith.mulf %358, %360 : vector<40x512xf32>
    %362 = tpu.concatenate %333, %337, %341, %345, %329, %349, %353, %357, %361 in 0 : vector<40x512xf32>, vector<40x512xf32>, vector<40x512xf32>, vector<40x512xf32>, vector<40x512xf32>, vector<40x512xf32>, vector<40x512xf32>, vector<40x512xf32>, vector<40x512xf32> -> vector<360x512xf32>
    %c0_125 = arith.constant 0 : index
    %c0_126 = arith.constant 0 : index
    %363 = vector.load %arg11[%c0_125, %c0_126] : memref<32x360xbf16, #tpu.memory_space<vmem>>, vector<32x360xbf16>
    %364 = arith.truncf %362 : vector<360x512xf32> to vector<360x512xbf16>
    %cst_127 = arith.constant dense<0.000000e+00> : vector<32x512xf32>
    %365 = tpu.matmul %363, %364, %cst_127 {dimension_numbers = #tpu.dot_dimension_numbers<[1], [0], [0], [1], [0, 0, 1, 1], [], []>} : vector<32x360xbf16>, vector<360x512xbf16>, vector<32x512xf32> -> vector<32x512xf32>
    %cst_128 = arith.constant dense<0.000000e+00> : vector<32x2xf32>
    %366 = tpu.matmul %365, %1, %cst_128 {dimension_numbers = #tpu.dot_dimension_numbers<[1], [0], [0], [1], [0, 0, 1, 1], [], []>} : vector<32x512xf32>, vector<512x2xf32>, vector<32x2xf32> -> vector<32x2xf32>
    %367 = arith.mulf %365, %365 : vector<32x512xf32>
    %cst_129 = arith.constant dense<0.000000e+00> : vector<32x2xf32>
    %368 = tpu.matmul %367, %1, %cst_129 {dimension_numbers = #tpu.dot_dimension_numbers<[1], [0], [0], [1], [0, 0, 1, 1], [], []>} : vector<32x512xf32>, vector<512x2xf32>, vector<32x2xf32> -> vector<32x2xf32>
    %cst_130 = arith.constant 3.906250e-03 : f32
    %369 = vector.broadcast %cst_130 : f32 to vector<32x2xf32>
    %370 = arith.mulf %366, %369 : vector<32x2xf32>
    %cst_131 = arith.constant 3.906250e-03 : f32
    %371 = vector.broadcast %cst_131 : f32 to vector<32x2xf32>
    %372 = arith.mulf %368, %371 : vector<32x2xf32>
    %373 = arith.mulf %370, %370 : vector<32x2xf32>
    %374 = arith.subf %372, %373 : vector<32x2xf32>
    %cst_132 = arith.constant 0.000000e+00 : f32
    %375 = vector.broadcast %cst_132 : f32 to vector<32x2xf32>
    %376 = arith.maximumf %374, %375 : vector<32x2xf32>
    %cst_133 = arith.constant 9.99999974E-6 : f32
    %377 = vector.broadcast %cst_133 : f32 to vector<32x2xf32>
    %378 = arith.addf %376, %377 : vector<32x2xf32>
    %379 = math.rsqrt %378 : vector<32x2xf32>
    %cst_134 = arith.constant dense<0.000000e+00> : vector<32x512xf32>
    %380 = tpu.matmul %379, %2, %cst_134 {dimension_numbers = #tpu.dot_dimension_numbers<[1], [0], [0], [1], [0, 0, 1, 1], [], []>} : vector<32x2xf32>, vector<2x512xf32>, vector<32x512xf32> -> vector<32x512xf32>
    %cst_135 = arith.constant 0.000000e+00 : f32
    %381 = vector.broadcast %cst_135 : f32 to vector<32x2xf32>
    %382 = arith.subf %381, %370 : vector<32x2xf32>
    %383 = arith.mulf %382, %379 : vector<32x2xf32>
    %cst_136 = arith.constant dense<0.000000e+00> : vector<32x512xf32>
    %384 = tpu.matmul %383, %2, %cst_136 {dimension_numbers = #tpu.dot_dimension_numbers<[1], [0], [0], [1], [0, 0, 1, 1], [], []>} : vector<32x2xf32>, vector<2x512xf32>, vector<32x512xf32> -> vector<32x512xf32>
    %385 = arith.mulf %365, %380 : vector<32x512xf32>
    %386 = arith.addf %385, %384 : vector<32x512xf32>
    %cst_137 = arith.constant 0.000000e+00 : f32
    %387 = vector.broadcast %cst_137 : f32 to vector<32x512xf32>
    %388 = arith.maximumf %386, %387 : vector<32x512xf32>
    %c0_138 = arith.constant 0 : index
    %c0_139 = arith.constant 0 : index
    %389 = vector.load %arg12[%c0_138, %c0_139] : memref<32x512xf32, #tpu.memory_space<vmem>>, vector<32x512xf32>
    tpu.vector_store %arg12[%c0_138, %c0_139], %388 {strides = array<i32>} : memref<32x512xf32, #tpu.memory_space<vmem>>, vector<32x512xf32>,
    return
  }
  func.func @transform_0(%arg0: i32) -> (i32, i32) {
    %c0_i32 = arith.constant 0 : i32
    %c0_i32_0 = arith.constant 0 : i32
    return %c0_i32, %arg0 : i32, i32
  }
  func.func @transform_1(%arg0: i32) -> (i32, i32) {
    %c0_i32 = arith.constant 0 : i32
    %c0_i32_0 = arith.constant 0 : i32
    %c0_i32_1 = arith.constant 0 : i32
    return %c0_i32, %c0_i32_0 : i32, i32
  }
  func.func @transform_2(%arg0: i32) -> (i32, i32) {
    %c0_i32 = arith.constant 0 : i32
    %c0_i32_0 = arith.constant 0 : i32
    %c0_i32_1 = arith.constant 0 : i32
    return %c0_i32, %c0_i32_0 : i32, i32
  }
  func.func @transform_3(%arg0: i32) -> (i32, i32) {
    %c0_i32 = arith.constant 0 : i32
    %c0_i32_0 = arith.constant 0 : i32
    %c0_i32_1 = arith.constant 0 : i32
    return %c0_i32, %c0_i32_0 : i32, i32
  }
  func.func @transform_4(%arg0: i32) -> (i32, i32) {
    %c0_i32 = arith.constant 0 : i32
    %c0_i32_0 = arith.constant 0 : i32
    %c0_i32_1 = arith.constant 0 : i32
    return %c0_i32, %c0_i32_0 : i32, i32
  }
  func.func @transform_5(%arg0: i32) -> (i32, i32) {
    %c0_i32 = arith.constant 0 : i32
    %c0_i32_0 = arith.constant 0 : i32
    %c0_i32_1 = arith.constant 0 : i32
    return %c0_i32, %c0_i32_0 : i32, i32
  }
  func.func @transform_6(%arg0: i32) -> (i32, i32) {
    %c0_i32 = arith.constant 0 : i32
    %c0_i32_0 = arith.constant 0 : i32
    %c0_i32_1 = arith.constant 0 : i32
    return %c0_i32, %c0_i32_0 : i32, i32
  }
  func.func @transform_7(%arg0: i32) -> (i32, i32) {
    %c0_i32 = arith.constant 0 : i32
    %c0_i32_0 = arith.constant 0 : i32
    %c0_i32_1 = arith.constant 0 : i32
    return %c0_i32, %c0_i32_0 : i32, i32
  }
  func.func @transform_8(%arg0: i32) -> (i32, i32) {
    %c0_i32 = arith.constant 0 : i32
    %c0_i32_0 = arith.constant 0 : i32
    %c0_i32_1 = arith.constant 0 : i32
    return %c0_i32, %c0_i32_0 : i32, i32
  }
  func.func @transform_9(%arg0: i32) -> (i32, i32) {
    %c0_i32 = arith.constant 0 : i32
    %c0_i32_0 = arith.constant 0 : i32
    %c0_i32_1 = arith.constant 0 : i32
    return %c0_i32, %c0_i32_0 : i32, i32
  }
  func.func @transform_10(%arg0: i32) -> (i32, i32) {
    %c0_i32 = arith.constant 0 : i32
    %c0_i32_0 = arith.constant 0 : i32
    %c0_i32_1 = arith.constant 0 : i32
    return %c0_i32, %c0_i32_0 : i32, i32
  }
  func.func @transform_11(%arg0: i32) -> (i32, i32) {
    %c0_i32 = arith.constant 0 : i32
    %c0_i32_0 = arith.constant 0 : i32
    return %c0_i32, %arg0 : i32, i32
  }
}

</mosaic_0001>

<llo_original>
// kernel: encoder_forward.1
$region0: #{encoder_forward.1}
  #allocation0 [shape = 'u32[]', space=smem, size = 0x4, offset = 0x4, fixed_abs, tag = 'smem constant byte address 0x4 - core index']
  #allocation1 [shape = 'u32[72,128]{1,0:T(1,128)}', space=vmem, size = 0x9000, scoped, tag = 'internal scratch']
  %s0 = inlined_call_operand.vmem [shape: f32[8,1024], index: 0, kind: input, shape index: {}]
  %s1 = inlined_call_operand.vmem [shape: f32[9,512], index: 1, kind: input, shape index: {}]
  %s2 = inlined_call_operand.vmem [shape: f32[512,2], index: 2, kind: input, shape index: {}]
  %s3 = inlined_call_operand.vmem [shape: f32[2,512], index: 3, kind: input, shape index: {}]
  %s4 = inlined_call_operand.vmem [shape: bf16[16,72], index: 4, kind: input, shape index: {}]
  %s5 = inlined_call_operand.vmem [shape: bf16[16,144], index: 5, kind: input, shape index: {}]
  %s6 = inlined_call_operand.vmem [shape: bf16[16,144], index: 6, kind: input, shape index: {}]
  %s7 = inlined_call_operand.vmem [shape: bf16[32,144], index: 7, kind: input, shape index: {}]
  %s8 = inlined_call_operand.vmem [shape: bf16[32,288], index: 8, kind: input, shape index: {}]
  %s9 = inlined_call_operand.vmem [shape: bf16[32,16], index: 9, kind: input, shape index: {}]
  %s10 = inlined_call_operand.vmem [shape: bf16[32,360], index: 10, kind: input, shape index: {}]
  %s11 = inlined_call_operand.vmem [shape: f32[32,1024], index: 11, kind: output, shape index: {}]
  %s12 = sld [smem:[#allocation0]]
  $region96: #{encoder_forward.1} parent=0
    _
  %s14 = ssub.s32 1, %s12
  %s15 = scalar_select 0, %s14, %s12
  $region1: #{encoder_forward.1} parent=0
    #allocation2 [shape = 'u8[131072]{0}', space=vmem, size = 0x20000, scoped, tag = 'output window, operand 0']
    loop: start=0, step=1, limit=4
    $region2: #{encoder_forward.1} parent=1 // loop_pre_header
      _
    $region3: #{encoder_forward.1} parent=1 // loop_header
      %s17 = sphi 0, %s21
      %p18 = scmp.ge.s32.totalorder %s17, 4
      %s27 = sphi 0, %s29
      %s30 = sphi 0, %s27
      %s31 = sphi 0, %s30
      %s47 = sphi 0, %s31
      %s51 = sphi 0, %s51
      %s53 = sphi 0, %s51
      %s54 = sphi 0, %s53
      %s68 = sphi 0, %s54
      %s72 = sphi 0, %s72
      %s74 = sphi 0, %s72
      %s75 = sphi 0, %s74
      %s89 = sphi 0, %s75
      %s93 = sphi 0, %s93
      %s95 = sphi 0, %s93
      %s96 = sphi 0, %s95
      %s110 = sphi 0, %s96
      %s114 = sphi 0, %s114
      %s116 = sphi 0, %s114
      %s117 = sphi 0, %s116
      %s131 = sphi 0, %s117
      %s135 = sphi 0, %s135
      %s137 = sphi 0, %s135
      %s138 = sphi 0, %s137
      %s152 = sphi 0, %s138
      %s156 = sphi 0, %s156
      %s158 = sphi 0, %s156
      %s159 = sphi 0, %s158
      %s173 = sphi 0, %s159
      %s177 = sphi 0, %s177
      %s179 = sphi 0, %s177
      %s180 = sphi 0, %s179
      %s194 = sphi 0, %s180
      %s198 = sphi 0, %s198
      %s200 = sphi 0, %s198
      %s201 = sphi 0, %s200
      %s215 = sphi 0, %s201
      %s219 = sphi 0, %s219
      %s221 = sphi 0, %s219
      %s222 = sphi 0, %s221
      %s236 = sphi 0, %s222
      %s240 = sphi 0, %s240
      %s242 = sphi 0, %s240
      %s243 = sphi 0, %s242
      %s257 = sphi 0, %s243
      %s263 = sphi 0, %s265
      %s266 = sphi 0, %s263
      %s267 = sphi 0, %s266
      %s283 = sphi 0, %s267
    $region4: #{encoder_forward.1} parent=1 // loop_header_branch
      %20 = sbr.rel (%p18) target = $region8
    $region5: #{encoder_forward.1} parent=1 // loop_body
      %s22 = ssub.s32 %s17, 1
      %s23 = ssub.s32 %s17, 2
      %s24 = sadd.s32 %s17, 1
      %s25 = ssub.s32 %s17, %s24
      %p26 = scmp.eq.s32.totalorder %s25, 0
      %s28 = sadd.s32 %s27, 1
      %s29 = scalar_select %p26, %s27, %s28
      %p32 = pneg %p26
      %p33 = scmp.eq.s32.totalorder %s17, 1
      %p34 = por %p32, %p33
      %p35 = scmp.ne.s32.totalorder %s27, %s30
      %p36 = scmp.eq.s32.totalorder %s17, 0
      %p37 = por %p35, %p36
      %p38 = scmp.ne.s32.totalorder %s27, %s30
      %p39 = scmp.eq.s32.totalorder %s22, 1
      %p40 = por %p38, %p39
      %p41 = scmp.ne.s32.totalorder %s30, %s31
      %p42 = scmp.eq.s32.totalorder %s22, 0
      %p43 = por %p41, %p42
      %p44 = scmp.ne.s32.totalorder %s30, %s31
      %p45 = scmp.eq.s32.totalorder %s23, 1
      %p46 = por %p44, %p45
      %p48 = scmp.ne.s32.totalorder %s31, %s47
      %p49 = scmp.eq.s32.totalorder %s23, 0
      %p50 = por %p48, %p49
      %s52 = sadd.s32 %s51, 1
      %p55 = scmp.eq.s32.totalorder %s17, 1
      %p56 = scmp.ne.s32.totalorder %s51, %s53
      %p57 = scmp.eq.s32.totalorder %s17, 0
      %p58 = por %p56, %p57
      %p59 = scmp.ne.s32.totalorder %s51, %s53
      %p60 = scmp.eq.s32.totalorder %s22, 1
      %p61 = por %p59, %p60
      %p62 = scmp.ne.s32.totalorder %s53, %s54
      %p63 = scmp.eq.s32.totalorder %s22, 0
      %p64 = por %p62, %p63
      %p65 = scmp.ne.s32.totalorder %s53, %s54
      %p66 = scmp.eq.s32.totalorder %s23, 1
      %p67 = por %p65, %p66
      %p69 = scmp.ne.s32.totalorder %s54, %s68
      %p70 = scmp.eq.s32.totalorder %s23, 0
      %p71 = por %p69, %p70
      %s73 = sadd.s32 %s72, 1
      %p76 = scmp.eq.s32.totalorder %s17, 1
      %p77 = scmp.ne.s32.totalorder %s72, %s74
      %p78 = scmp.eq.s32.totalorder %s17, 0
      %p79 = por %p77, %p78
      %p80 = scmp.ne.s32.totalorder %s72, %s74
      %p81 = scmp.eq.s32.totalorder %s22, 1
      %p82 = por %p80, %p81
      %p83 = scmp.ne.s32.totalorder %s74, %s75
      %p84 = scmp.eq.s32.totalorder %s22, 0
      %p85 = por %p83, %p84
      %p86 = scmp.ne.s32.totalorder %s74, %s75
      %p87 = scmp.eq.s32.totalorder %s23, 1
      %p88 = por %p86, %p87
      %p90 = scmp.ne.s32.totalorder %s75, %s89
      %p91 = scmp.eq.s32.totalorder %s23, 0
      %p92 = por %p90, %p91
      %s94 = sadd.s32 %s93, 1
      %p97 = scmp.eq.s32.totalorder %s17, 1
      %p98 = scmp.ne.s32.totalorder %s93, %s95
      %p99 = scmp.eq.s32.totalorder %s17, 0
      %p100 = por %p98, %p99
      %p101 = scmp.ne.s32.totalorder %s93, %s95
      %p102 = scmp.eq.s32.totalorder %s22, 1
      %p103 = por %p101, %p102
      %p104 = scmp.ne.s32.totalorder %s95, %s96
      %p105 = scmp.eq.s32.totalorder %s22, 0
      %p106 = por %p104, %p105
      %p107 = scmp.ne.s32.totalorder %s95, %s96
      %p108 = scmp.eq.s32.totalorder %s23, 1
      %p109 = por %p107, %p108
      %p111 = scmp.ne.s32.totalorder %s96, %s110
      %p112 = scmp.eq.s32.totalorder %s23, 0
      %p113 = por %p111, %p112
      %s115 = sadd.s32 %s114, 1
      %p118 = scmp.eq.s32.totalorder %s17, 1
      %p119 = scmp.ne.s32.totalorder %s114, %s116
      %p120 = scmp.eq.s32.totalorder %s17, 0
      %p121 = por %p119, %p120
      %p122 = scmp.ne.s32.totalorder %s114, %s116
      %p123 = scmp.eq.s32.totalorder %s22, 1
      %p124 = por %p122, %p123
      %p125 = scmp.ne.s32.totalorder %s116, %s117
      %p126 = scmp.eq.s32.totalorder %s22, 0
      %p127 = por %p125, %p126
      %p128 = scmp.ne.s32.totalorder %s116, %s117
      %p129 = scmp.eq.s32.totalorder %s23, 1
      %p130 = por %p128, %p129
      %p132 = scmp.ne.s32.totalorder %s117, %s131
      %p133 = scmp.eq.s32.totalorder %s23, 0
      %p134 = por %p132, %p133
      %s136 = sadd.s32 %s135, 1
      %p139 = scmp.eq.s32.totalorder %s17, 1
      %p140 = scmp.ne.s32.totalorder %s135, %s137
      %p141 = scmp.eq.s32.totalorder %s17, 0
      %p142 = por %p140, %p141
      %p143 = scmp.ne.s32.totalorder %s135, %s137
      %p144 = scmp.eq.s32.totalorder %s22, 1
      %p145 = por %p143, %p144
      %p146 = scmp.ne.s32.totalorder %s137, %s138
      %p147 = scmp.eq.s32.totalorder %s22, 0
      %p148 = por %p146, %p147
      %p149 = scmp.ne.s32.totalorder %s137, %s138
      %p150 = scmp.eq.s32.totalorder %s23, 1
      %p151 = por %p149, %p150
      %p153 = scmp.ne.s32.totalorder %s138, %s152
      %p154 = scmp.eq.s32.totalorder %s23, 0
      %p155 = por %p153, %p154
      %s157 = sadd.s32 %s156, 1
      %p160 = scmp.eq.s32.totalorder %s17, 1
      %p161 = scmp.ne.s32.totalorder %s156, %s158
      %p162 = scmp.eq.s32.totalorder %s17, 0
      %p163 = por %p161, %p162
      %p164 = scmp.ne.s32.totalorder %s156, %s158
      %p165 = scmp.eq.s32.totalorder %s22, 1
      %p166 = por %p164, %p165
      %p167 = scmp.ne.s32.totalorder %s158, %s159
      %p168 = scmp.eq.s32.totalorder %s22, 0
      %p169 = por %p167, %p168
      %p170 = scmp.ne.s32.totalorder %s158, %s159
      %p171 = scmp.eq.s32.totalorder %s23, 1
      %p172 = por %p170, %p171
      %p174 = scmp.ne.s32.totalorder %s159, %s173
      %p175 = scmp.eq.s32.totalorder %s23, 0
      %p176 = por %p174, %p175
      %s178 = sadd.s32 %s177, 1
      %p181 = scmp.eq.s32.totalorder %s17, 1
      %p182 = scmp.ne.s32.totalorder %s177, %s179
      %p183 = scmp.eq.s32.totalorder %s17, 0
      %p184 = por %p182, %p183
      %p185 = scmp.ne.s32.totalorder %s177, %s179
      %p186 = scmp.eq.s32.totalorder %s22, 1
      %p187 = por %p185, %p186
      %p188 = scmp.ne.s32.totalorder %s179, %s180
      %p189 = scmp.eq.s32.totalorder %s22, 0
      %p190 = por %p188, %p189
      %p191 = scmp.ne.s32.totalorder %s179, %s180
      %p192 = scmp.eq.s32.totalorder %s23, 1
      %p193 = por %p191, %p192
      %p195 = scmp.ne.s32.totalorder %s180, %s194
      %p196 = scmp.eq.s32.totalorder %s23, 0
      %p197 = por %p195, %p196
      %s199 = sadd.s32 %s198, 1
      %p202 = scmp.eq.s32.totalorder %s17, 1
      %p203 = scmp.ne.s32.totalorder %s198, %s200
      %p204 = scmp.eq.s32.totalorder %s17, 0
      %p205 = por %p203, %p204
      %p206 = scmp.ne.s32.totalorder %s198, %s200
      %p207 = scmp.eq.s32.totalorder %s22, 1
      %p208 = por %p206, %p207
      %p209 = scmp.ne.s32.totalorder %s200, %s201
      %p210 = scmp.eq.s32.totalorder %s22, 0
      %p211 = por %p209, %p210
      %p212 = scmp.ne.s32.totalorder %s200, %s201
      %p213 = scmp.eq.s32.totalorder %s23, 1
      %p214 = por %p212, %p213
      %p216 = scmp.ne.s32.totalorder %s201, %s215
      %p217 = scmp.eq.s32.totalorder %s23, 0
      %p218 = por %p216, %p217
      %s220 = sadd.s32 %s219, 1
      %p223 = scmp.eq.s32.totalorder %s17, 1
      %p224 = scmp.ne.s32.totalorder %s219, %s221
      %p225 = scmp.eq.s32.totalorder %s17, 0
      %p226 = por %p224, %p225
      %p227 = scmp.ne.s32.totalorder %s219, %s221
      %p228 = scmp.eq.s32.totalorder %s22, 1
      %p229 = por %p227, %p228
      %p230 = scmp.ne.s32.totalorder %s221, %s222
      %p231 = scmp.eq.s32.totalorder %s22, 0
      %p232 = por %p230, %p231
      %p233 = scmp.ne.s32.totalorder %s221, %s222
      %p234 = scmp.eq.s32.totalorder %s23, 1
      %p235 = por %p233, %p234
      %p237 = scmp.ne.s32.totalorder %s222, %s236
      %p238 = scmp.eq.s32.totalorder %s23, 0
      %p239 = por %p237, %p238
      %s241 = sadd.s32 %s240, 1
      %p244 = scmp.eq.s32.totalorder %s17, 1
      %p245 = scmp.ne.s32.totalorder %s240, %s242
      %p246 = scmp.eq.s32.totalorder %s17, 0
      %p247 = por %p245, %p246
      %p248 = scmp.ne.s32.totalorder %s240, %s242
      %p249 = scmp.eq.s32.totalorder %s22, 1
      %p250 = por %p248, %p249
      %p251 = scmp.ne.s32.totalorder %s242, %s243
      %p252 = scmp.eq.s32.totalorder %s22, 0
      %p253 = por %p251, %p252
      %p254 = scmp.ne.s32.totalorder %s242, %s243
      %p255 = scmp.eq.s32.totalorder %s23, 1
      %p256 = por %p254, %p255
      %p258 = scmp.ne.s32.totalorder %s243, %s257
      %p259 = scmp.eq.s32.totalorder %s23, 0
      %p260 = por %p258, %p259
      %s261 = ssub.s32 %s17, %s24
      %p262 = scmp.eq.s32.totalorder %s261, 0
      %s264 = sadd.s32 %s263, 1
      %s265 = scalar_select %p262, %s263, %s264
      %p268 = pneg %p262
      %p269 = scmp.eq.s32.totalorder %s17, 1
      %p270 = por %p268, %p269
      %p271 = scmp.ne.s32.totalorder %s263, %s266
      %p272 = scmp.eq.s32.totalorder %s17, 0
      %p273 = por %p271, %p272
      %p274 = scmp.ne.s32.totalorder %s263, %s266
      %p275 = scmp.eq.s32.totalorder %s22, 1
      %p276 = por %p274, %p275
      %p277 = scmp.ne.s32.totalorder %s266, %s267
      %p278 = scmp.eq.s32.totalorder %s22, 0
      %p279 = por %p277, %p278
      %p280 = scmp.ne.s32.totalorder %s266, %s267
      %p281 = scmp.eq.s32.totalorder %s23, 1
      %p282 = por %p280, %p281
      %p284 = scmp.ne.s32.totalorder %s267, %s283
      %p285 = scmp.eq.s32.totalorder %s23, 0
      %p286 = por %p284, %p285
      %p287 = scmp.le.s32.totalorder 1, %s17
      %p288 = scmp.lt.s32.totalorder %s17, 3
      %p289 = pnand %p287, %p288
      %p290 = pneg %p289
      // Predicated region
      $region9: #{encoder_forward.1} parent=5 // pred_check
        _
      $region10: #{encoder_forward.1} parent=5 // pred_check_branch
        %292 = sbr.rel (%p289) target = $region12
      $region11: #{encoder_forward.1} parent=5 // pred_region
        %s293 = ssub.s32 %s17, 1
        // Predicated region
        $region13: #{encoder_forward.1} parent=11 // pred_check
          %p294 = pneg %p64
        $region14: #{encoder_forward.1} parent=11 // pred_check_branch
          %296 = sbr.rel (%p294) target = $region16
        $region15: #{encoder_forward.1} parent=11 // pred_region
          _
        $region16: #{encoder_forward.1} parent=11 // pred_fallthru
          _
        // Predicated region
        $region17: #{encoder_forward.1} parent=11 // pred_check
          %p297 = pneg %p85
        $region18: #{encoder_forward.1} parent=11 // pred_check_branch
          %299 = sbr.rel (%p297) target = $region20
        $region19: #{encoder_forward.1} parent=11 // pred_region
          _
        $region20: #{encoder_forward.1} parent=11 // pred_fallthru
          _
        // Predicated region
        $region21: #{encoder_forward.1} parent=11 // pred_check
          %p300 = pneg %p106
        $region22: #{encoder_forward.1} parent=11 // pred_check_branch
          %302 = sbr.rel (%p300) target = $region24
        $region23: #{encoder_forward.1} parent=11 // pred_region
          _
        $region24: #{encoder_forward.1} parent=11 // pred_fallthru
          _
        // Predicated region
        $region25: #{encoder_forward.1} parent=11 // pred_check
          %p303 = pneg %p127
        $region26: #{encoder_forward.1} parent=11 // pred_check_branch
          %305 = sbr.rel (%p303) target = $region28
        $region27: #{encoder_forward.1} parent=11 // pred_region
          _
        $region28: #{encoder_forward.1} parent=11 // pred_fallthru
          _
        // Predicated region
        $region29: #{encoder_forward.1} parent=11 // pred_check
          %p306 = pneg %p148
        $region30: #{encoder_forward.1} parent=11 // pred_check_branch
          %308 = sbr.rel (%p306) target = $region32
        $region31: #{encoder_forward.1} parent=11 // pred_region
          _
        $region32: #{encoder_forward.1} parent=11 // pred_fallthru
          _
        // Predicated region
        $region33: #{encoder_forward.1} parent=11 // pred_check
          %p309 = pneg %p169
        $region34: #{encoder_forward.1} parent=11 // pred_check_branch
          %311 = sbr.rel (%p309) target = $region36
        $region35: #{encoder_forward.1} parent=11 // pred_region
          _
        $region36: #{encoder_forward.1} parent=11 // pred_fallthru
          _
        // Predicated region
        $region37: #{encoder_forward.1} parent=11 // pred_check
          %p312 = pneg %p190
        $region38: #{encoder_forward.1} parent=11 // pred_check_branch
          %314 = sbr.rel (%p312) target = $region40
        $region39: #{encoder_forward.1} parent=11 // pred_region
          _
        $region40: #{encoder_forward.1} parent=11 // pred_fallthru
          _
        // Predicated region
        $region41: #{encoder_forward.1} parent=11 // pred_check
          %p315 = pneg %p211
        $region42: #{encoder_forward.1} parent=11 // pred_check_branch
          %317 = sbr.rel (%p315) target = $region44
        $region43: #{encoder_forward.1} parent=11 // pred_region
          _
        $region44: #{encoder_forward.1} parent=11 // pred_fallthru
          _
        // Predicated region
        $region45: #{encoder_forward.1} parent=11 // pred_check
          %p318 = pneg %p232
        $region46: #{encoder_forward.1} parent=11 // pred_check_branch
          %320 = sbr.rel (%p318) target = $region48
        $region47: #{encoder_forward.1} parent=11 // pred_region
          _
        $region48: #{encoder_forward.1} parent=11 // pred_fallthru
          _
        // Predicated region
        $region49: #{encoder_forward.1} parent=11 // pred_check
          %p321 = pneg %p253
        $region50: #{encoder_forward.1} parent=11 // pred_check_branch
          %323 = sbr.rel (%p321) target = $region52
        $region51: #{encoder_forward.1} parent=11 // pred_region
          _
        $region52: #{encoder_forward.1} parent=11 // pred_fallthru
          _
      $region12: #{encoder_forward.1} parent=5 // pred_fallthru
        _
      %p324 = scmp.lt.s32.totalorder %s17, 2
      // Predicated region
      $region53: #{encoder_forward.1} parent=5 // pred_check
        %p325 = pneg %p324
      $region54: #{encoder_forward.1} parent=5 // pred_check_branch
        %327 = sbr.rel (%p325) target = $region56
      $region55: #{encoder_forward.1} parent=5 // pred_region
        // Predicated region
        $region57: #{encoder_forward.1} parent=55 // pred_check
          %p328 = pneg %p37
        $region58: #{encoder_forward.1} parent=55 // pred_check_branch
          %330 = sbr.rel (%p328) target = $region60
        $region59: #{encoder_forward.1} parent=55 // pred_region
          %s331 = smul.u32 4, %s17
          %p332 = scmp.lt.s32.totalorder %s331, 7
          %s333 = scalar_select %p332, %s331, 7
          %s334 = smul.addr %s333, 8
          %s335 = scalar_lea.vmem %s0, %s334
          %s336 = smul.u32 4, %s17
        $region60: #{encoder_forward.1} parent=55 // pred_fallthru
          _
      $region56: #{encoder_forward.1} parent=5 // pred_fallthru
        _
      %p337 = scmp.le.s32.totalorder 1, %s17
      %p338 = scmp.lt.s32.totalorder %s17, 3
      %p339 = pnand %p337, %p338
      %p340 = pneg %p339
      // Predicated region
      $region61: #{encoder_forward.1} parent=5 // pred_check
        _
      $region62: #{encoder_forward.1} parent=5 // pred_check_branch
        %342 = sbr.rel (%p339) target = $region64
      $region63: #{encoder_forward.1} parent=5 // pred_region
        %s343 = ssub.s32 %s17, 1
        %s344 = smul.u32 4, %s22
        %p345 = scmp.lt.s32.totalorder %s344, 7
        %s346 = scalar_select %p345, %s344, 7
        %s347 = smul.addr %s346, 8
        %s348 = scalar_lea.vmem %s0, %s347
        %p349 = pneg %p43
        %p350 = pneg %p40
        %p351 = pneg %p64
        %p352 = pneg %p61
        %p353 = pneg %p85
        %p354 = pneg %p82
        %p355 = pneg %p106
        %p356 = pneg %p103
        %p357 = pneg %p127
        %p358 = pneg %p124
        %p359 = pneg %p148
        %p360 = pneg %p145
        %p361 = pneg %p169
        %p362 = pneg %p166
        %p363 = pneg %p190
        %p364 = pneg %p187
        %p365 = pneg %p211
        %p366 = pneg %p208
        %p367 = pneg %p232
        %p368 = pneg %p229
        %p369 = pneg %p253
        %p370 = pneg %p250
        %p371 = pneg %p279
        %p372 = pneg %p276
        %s373 = sand.u32 %s266, 1
        %s374 = sand.u32 %s266, 1
        %s375 = smul.addr %s374, 128
        %s376 = scalar_lea.vmem [#allocation2], %s375
        %s377 = smul.u32 4, %s22
        %p378 = scmp.lt.s32.totalorder %s377, 7
        %s379 = scalar_select %p378, %s377, 7
        %s380 = smul.addr %s379, 8
        %s381 = scalar_lea.vmem %s0, %s380
        %s382 = smul.u32 4, %s22
        %s383 = smul.u32 4, %s22
        %v385 = vld [vmem:[%s1] sm:$0xff]
        %v386 = vld [vmem:[%s1 + $0x8] sm:$0xff]
        %v387 = vld [vmem:[%s1 + $0x10] sm:$0xff]
        %v388 = vld [vmem:[%s1 + $0x18] sm:$0xff]
        %v389 = vld [vmem:[%s1 + $0x20] sm:$0x1]
        %v390 = vld [vmem:[%s1 + $0x28] sm:$0x1]
        %v391 = vld [vmem:[%s1 + $0x30] sm:$0x1]
        %v392 = vld [vmem:[%s1 + $0x38] sm:$0x1]
        %v393 = vld [vmem:[%s2] sm:$0xff]
        %v394 = vld [vmem:[%s2 + $0x8] sm:$0xff]
        %v395 = vld [vmem:[%s2 + $0x10] sm:$0xff]
        %v396 = vld [vmem:[%s2 + $0x18] sm:$0xff]
        %v397 = vld [vmem:[%s2 + $0x20] sm:$0xff]
        %v398 = vld [vmem:[%s2 + $0x28] sm:$0xff]
        %v399 = vld [vmem:[%s2 + $0x30] sm:$0xff]
        %v400 = vld [vmem:[%s2 + $0x38] sm:$0xff]
        %v401 = vld [vmem:[%s2 + $0x40] sm:$0xff]
        %v402 = vld [vmem:[%s2 + $0x48] sm:$0xff]
        %v403 = vld [vmem:[%s2 + $0x50] sm:$0xff]
        %v404 = vld [vmem:[%s2 + $0x58] sm:$0xff]
        %v405 = vld [vmem:[%s2 + $0x60] sm:$0xff]
        %v406 = vld [vmem:[%s2 + $0x68] sm:$0xff]
        %v407 = vld [vmem:[%s2 + $0x70] sm:$0xff]
        %v408 = vld [vmem:[%s2 + $0x78] sm:$0xff]
        %v409 = vld [vmem:[%s2 + $0x80] sm:$0xff]
        %v410 = vld [vmem:[%s2 + $0x88] sm:$0xff]
        %v411 = vld [vmem:[%s2 + $0x90] sm:$0xff]
        %v412 = vld [vmem:[%s2 + $0x98] sm:$0xff]
        %v413 = vld [vmem:[%s2 + $0xa0] sm:$0xff]
        %v414 = vld [vmem:[%s2 + $0xa8] sm:$0xff]
        %v415 = vld [vmem:[%s2 + $0xb0] sm:$0xff]
        %v416 = vld [vmem:[%s2 + $0xb8] sm:$0xff]
        %v417 = vld [vmem:[%s2 + $0xc0] sm:$0xff]
        %v418 = vld [vmem:[%s2 + $0xc8] sm:$0xff]
        %v419 = vld [vmem:[%s2 + $0xd0] sm:$0xff]
        %v420 = vld [vmem:[%s2 + $0xd8] sm:$0xff]
        %v421 = vld [vmem:[%s2 + $0xe0] sm:$0xff]
        %v422 = vld [vmem:[%s2 + $0xe8] sm:$0xff]
        %v423 = vld [vmem:[%s2 + $0xf0] sm:$0xff]
        %v424 = vld [vmem:[%s2 + $0xf8] sm:$0xff]
        %v425 = vld [vmem:[%s2 + $0x100] sm:$0xff]
        %v426 = vld [vmem:[%s2 + $0x108] sm:$0xff]
        %v427 = vld [vmem:[%s2 + $0x110] sm:$0xff]
        %v428 = vld [vmem:[%s2 + $0x118] sm:$0xff]
        %v429 = vld [vmem:[%s2 + $0x120] sm:$0xff]
        %v430 = vld [vmem:[%s2 + $0x128] sm:$0xff]
        %v431 = vld [vmem:[%s2 + $0x130] sm:$0xff]
        %v432 = vld [vmem:[%s2 + $0x138] sm:$0xff]
        %v433 = vld [vmem:[%s2 + $0x140] sm:$0xff]
        %v434 = vld [vmem:[%s2 + $0x148] sm:$0xff]
        %v435 = vld [vmem:[%s2 + $0x150] sm:$0xff]
        %v436 = vld [vmem:[%s2 + $0x158] sm:$0xff]
        %v437 = vld [vmem:[%s2 + $0x160] sm:$0xff]
        %v438 = vld [vmem:[%s2 + $0x168] sm:$0xff]
        %v439 = vld [vmem:[%s2 + $0x170] sm:$0xff]
        %v440 = vld [vmem:[%s2 + $0x178] sm:$0xff]
        %v441 = vld [vmem:[%s2 + $0x180] sm:$0xff]
        %v442 = vld [vmem:[%s2 + $0x188] sm:$0xff]
        %v443 = vld [vmem:[%s2 + $0x190] sm:$0xff]
        %v444 = vld [vmem:[%s2 + $0x198] sm:$0xff]
        %v445 = vld [vmem:[%s2 + $0x1a0] sm:$0xff]
        %v446 = vld [vmem:[%s2 + $0x1a8] sm:$0xff]
        %v447 = vld [vmem:[%s2 + $0x1b0] sm:$0xff]
        %v448 = vld [vmem:[%s2 + $0x1b8] sm:$0xff]
        %v449 = vld [vmem:[%s2 + $0x1c0] sm:$0xff]
        %v450 = vld [vmem:[%s2 + $0x1c8] sm:$0xff]
        %v451 = vld [vmem:[%s2 + $0x1d0] sm:$0xff]
        %v452 = vld [vmem:[%s2 + $0x1d8] sm:$0xff]
        %v453 = vld [vmem:[%s2 + $0x1e0] sm:$0xff]
        %v454 = vld [vmem:[%s2 + $0x1e8] sm:$0xff]
        %v455 = vld [vmem:[%s2 + $0x1f0] sm:$0xff]
        %v456 = vld [vmem:[%s2 + $0x1f8] sm:$0xff]
        %v457 = vld [vmem:[%s3] sm:$0xff]
        %v458 = vld [vmem:[%s381] sm:$0xff]
        %v459 = vld [vmem:[%s381 + $0x8] sm:$0xff]
        %v460 = vld [vmem:[%s381 + $0x10] sm:$0xff]
        %v461 = vld [vmem:[%s381 + $0x18] sm:$0xff]
        %462 = vrot.lane.b32.xlu0 %v458, 17
        %v463 = vpop.permute.xlu0 %462
        %464 = vrot.lane.b32.xlu0 %v459, 17
        %v465 = vpop.permute.xlu0 %464
        %466 = vrot.lane.b32.xlu0 %v460, 17
        %v467 = vpop.permute.xlu0 %466
        %468 = vrot.lane.b32.xlu0 %v461, 17
        %v469 = vpop.permute.xlu0 %468
        %v470 = vlaneseq
        %v471 = vand.u32 %v470, 127
        %vm472 = vcmp.lt.s32.totalorder %v471, 17
        %v473 = vsel %vm472, %v467, %v469
        %v474 = vsel %vm472, %v465, %v467
        %v475 = vsel %vm472, %v463, %v465
        %v476 = vsel %vm472, %v469, %v463
        %v477 = vperm.slane %v385, 0
        %v478 = vperm.slane %v386, 0
        %v479 = vperm.slane %v387, 0
        %v480 = vperm.slane %v388, 0
        %v481 = vmul.f32 %v476, %v477
        %v482 = vmul.f32 %v475, %v478
        %v483 = vmul.f32 %v474, %v479
        %v484 = vmul.f32 %v473, %v480
        %485 = vrot.lane.b32.xlu0 %v458, 16
        %v486 = vpop.permute.xlu0 %485
        %487 = vrot.lane.b32.xlu0 %v459, 16
        %v488 = vpop.permute.xlu0 %487
        %489 = vrot.lane.b32.xlu0 %v460, 16
        %v490 = vpop.permute.xlu0 %489
        %491 = vrot.lane.b32.xlu0 %v461, 16
        %v492 = vpop.permute.xlu0 %491
        %vm493 = vcmp.lt.s32.totalorder %v471, 16
        %v494 = vsel %vm493, %v490, %v492
        %v495 = vsel %vm493, %v488, %v490
        %v496 = vsel %vm493, %v486, %v488
        %v497 = vsel %vm493, %v492, %v486
        %v498 = vperm.slane %v385, 1
        %v499 = vperm.slane %v386, 1
        %v500 = vperm.slane %v387, 1
        %v501 = vperm.slane %v388, 1
        %v502 = vmul.f32 %v497, %v498
        %v503 = vmul.f32 %v496, %v499
        %v504 = vmul.f32 %v495, %v500
        %v505 = vmul.f32 %v494, %v501
        %506 = vrot.lane.b32.xlu0 %v458, 15
        %v507 = vpop.permute.xlu0 %506
        %508 = vrot.lane.b32.xlu0 %v459, 15
        %v509 = vpop.permute.xlu0 %508
        %510 = vrot.lane.b32.xlu0 %v460, 15
        %v511 = vpop.permute.xlu0 %510
        %512 = vrot.lane.b32.xlu0 %v461, 15
        %v513 = vpop.permute.xlu0 %512
        %vm514 = vcmp.lt.s32.totalorder %v471, 15
        %v515 = vsel %vm514, %v511, %v513
        %v516 = vsel %vm514, %v509, %v511
        %v517 = vsel %vm514, %v507, %v509
        %v518 = vsel %vm514, %v513, %v507
        %v519 = vperm.slane %v385, 2
        %v520 = vperm.slane %v386, 2
        %v521 = vperm.slane %v387, 2
        %v522 = vperm.slane %v388, 2
        %v523 = vmul.f32 %v518, %v519
        %v524 = vmul.f32 %v517, %v520
        %v525 = vmul.f32 %v516, %v521
        %v526 = vmul.f32 %v515, %v522
        %527 = vrot.lane.b32.xlu0 %v458, 1
        %v528 = vpop.permute.xlu0 %527
        %529 = vrot.lane.b32.xlu0 %v459, 1
        %v530 = vpop.permute.xlu0 %529
        %531 = vrot.lane.b32.xlu0 %v460, 1
        %v532 = vpop.permute.xlu0 %531
        %533 = vrot.lane.b32.xlu0 %v461, 1
        %v534 = vpop.permute.xlu0 %533
        %vm535 = vcmp.lt.s32.totalorder %v471, 1
        %v536 = vsel %vm535, %v532, %v534
        %v537 = vsel %vm535, %v530, %v532
        %v538 = vsel %vm535, %v528, %v530
        %v539 = vsel %vm535, %v534, %v528
        %v540 = vperm.slane %v385, 3
        %v541 = vperm.slane %v386, 3
        %v542 = vperm.slane %v387, 3
        %v543 = vperm.slane %v388, 3
        %v544 = vmul.f32 %v539, %v540
        %v545 = vmul.f32 %v538, %v541
        %v546 = vmul.f32 %v537, %v542
        %v547 = vmul.f32 %v536, %v543
        %548 = vrot.lane.b32.xlu0 %v458, 127
        %v549 = vpop.permute.xlu0 %548
        %550 = vrot.lane.b32.xlu0 %v459, 127
        %v551 = vpop.permute.xlu0 %550
        %552 = vrot.lane.b32.xlu0 %v460, 127
        %v553 = vpop.permute.xlu0 %552
        %554 = vrot.lane.b32.xlu0 %v461, 127
        %v555 = vpop.permute.xlu0 %554
        %vm556 = vcmp.lt.s32.totalorder %v471, 127
        %v557 = vsel %vm556, %v553, %v555
        %v558 = vsel %vm556, %v551, %v553
        %v559 = vsel %vm556, %v549, %v551
        %v560 = vsel %vm556, %v555, %v549
        %v561 = vperm.slane %v385, 5
        %v562 = vperm.slane %v386, 5
        %v563 = vperm.slane %v387, 5
        %v564 = vperm.slane %v388, 5
        %v565 = vmul.f32 %v559, %v561
        %v566 = vmul.f32 %v558, %v562
        %v567 = vmul.f32 %v557, %v563
        %v568 = vmul.f32 %v560, %v564
        %569 = vrot.lane.b32.xlu0 %v458, 113
        %v570 = vpop.permute.xlu0 %569
        %571 = vrot.lane.b32.xlu0 %v459, 113
        %v572 = vpop.permute.xlu0 %571
        %573 = vrot.lane.b32.xlu0 %v460, 113
        %v574 = vpop.permute.xlu0 %573
        %575 = vrot.lane.b32.xlu0 %v461, 113
        %v576 = vpop.permute.xlu0 %575
        %vm577 = vcmp.lt.s32.totalorder %v471, 113
        %v578 = vsel %vm577, %v574, %v576
        %v579 = vsel %vm577, %v572, %v574
        %v580 = vsel %vm577, %v570, %v572
        %v581 = vsel %vm577, %v576, %v570
        %v582 = vperm.slane %v385, 6
        %v583 = vperm.slane %v386, 6
        %v584 = vperm.slane %v387, 6
        %v585 = vperm.slane %v388, 6
        %v586 = vmul.f32 %v580, %v582
        %v587 = vmul.f32 %v579, %v583
        %v588 = vmul.f32 %v578, %v584
        %v589 = vmul.f32 %v581, %v585
        %590 = vrot.lane.b32.xlu0 %v458, 112
        %v591 = vpop.permute.xlu0 %590
        %592 = vrot.lane.b32.xlu0 %v459, 112
        %v593 = vpop.permute.xlu0 %592
        %594 = vrot.lane.b32.xlu0 %v460, 112
        %v595 = vpop.permute.xlu0 %594
        %596 = vrot.lane.b32.xlu0 %v461, 112
        %v597 = vpop.permute.xlu0 %596
        %vm598 = vcmp.lt.s32.totalorder %v471, 112
        %v599 = vsel %vm598, %v595, %v597
        %v600 = vsel %vm598, %v593, %v595
        %v601 = vsel %vm598, %v591, %v593
        %v602 = vsel %vm598, %v597, %v591
        %v603 = vperm.slane %v385, 7
        %v604 = vperm.slane %v386, 7
        %v605 = vperm.slane %v387, 7
        %v606 = vperm.slane %v388, 7
        %v607 = vmul.f32 %v601, %v603
        %v608 = vmul.f32 %v600, %v604
        %v609 = vmul.f32 %v599, %v605
        %v610 = vmul.f32 %v602, %v606
        %611 = vrot.lane.b32.xlu0 %v458, 111
        %v612 = vpop.permute.xlu0 %611
        %613 = vrot.lane.b32.xlu0 %v459, 111
        %v614 = vpop.permute.xlu0 %613
        %615 = vrot.lane.b32.xlu0 %v460, 111
        %v616 = vpop.permute.xlu0 %615
        %617 = vrot.lane.b32.xlu0 %v461, 111
        %v618 = vpop.permute.xlu0 %617
        %vm619 = vcmp.lt.s32.totalorder %v471, 111
        %v620 = vsel %vm619, %v616, %v618
        %v621 = vsel %vm619, %v614, %v616
        %v622 = vsel %vm619, %v612, %v614
        %v623 = vsel %vm619, %v618, %v612
        %v624 = vperm.slane %v389, 0
        %v625 = vperm.slane %v390, 0
        %v626 = vperm.slane %v391, 0
        %v627 = vperm.slane %v392, 0
        %v628 = vmul.f32 %v622, %v624
        %v629 = vmul.f32 %v621, %v625
        %v630 = vmul.f32 %v620, %v626
        %v631 = vmul.f32 %v623, %v627
        %v632 = vld [vmem:[%s4] sm:$0xf]
        %v633 = vld [vmem:[%s4 + $0x4] sm:$0xf]
        %v634 = vpack.c.bf16 %v502, %v481
        %v635 = vpack.c.bf16 %v503, %v482
        %v636 = vpack.c.bf16 %v504, %v483
        %v637 = vpack.c.bf16 %v505, %v484
        %v638 = vpack.c.bf16 %v544, %v523
        %v639 = vpack.c.bf16 %v545, %v524
        %v640 = vpack.c.bf16 %v546, %v525
        %v641 = vpack.c.bf16 %v547, %v526
        %v642 = vpack.c.bf16 %v565, %v458
        %v643 = vpack.c.bf16 %v566, %v459
        %v644 = vpack.c.bf16 %v567, %v460
        %v645 = vpack.c.bf16 %v568, %v461
        %v646 = vpack.c.bf16 %v607, %v586
        %v647 = vpack.c.bf16 %v608, %v587
        %v648 = vpack.c.bf16 %v609, %v588
        %v649 = vpack.c.bf16 %v610, %v589
        %v650 = vpack.c.bf16 %v628, %v628
        %v651 = vpack.c.bf16 %v629, %v629
        %v652 = vpack.c.bf16 %v630, %v630
        %v653 = vpack.c.bf16 %v631, %v631
        %v656 = vunpack.c.l.b16 %v632
        %v657 = vunpack.c.l.b16 %v633
        %v658 = vpack.c.b16 %v657, %v656
        %vm659 = vcmask 588800
        %v661 = vsel %vm659, %v658, 0
        %vm663 = vcmask 1043456
        %v665 = vsel %vm663, %v650, 0
        %v668 = vsel %vm663, %v651, 0
        %v671 = vsel %vm663, %v652, 0
        %v674 = vsel %vm663, %v653, 0
        %676 = vmatpush.bf16.msra.mxu0 0
        %677 = vmatpush.bf16.msra.mxu0 0
        %678 = vmatpush.bf16.msra.mxu0 0
        %679 = vmatpush.bf16.msra.mxu0 %v665
        %680 = vmatpush.bf16.msra.mxu0 %v646
        %681 = vmatpush.bf16.msra.mxu0 %v642
        %682 = vmatpush.bf16.msra.mxu0 %v638
        %683 = vmatpush.bf16.msra.mxu0 %v634
        %684 = vmatmul.bf16.gmra.mxu0 %v661
        %v685 = vpop.f32.mrf.mxu0
        %v686 = vadd.f32 0.0, %v685
        %v687 = vpop.f32.mrf.mxu0
        %v688 = vadd.f32 0.0, %v687
        %689 = vdwg.mxu0
        %690 = vmatpush.bf16.msra.mxu0 0
        %691 = vmatpush.bf16.msra.mxu0 0
        %692 = vmatpush.bf16.msra.mxu0 0
        %693 = vmatpush.bf16.msra.mxu0 %v668
        %694 = vmatpush.bf16.msra.mxu0 %v647
        %695 = vmatpush.bf16.msra.mxu0 %v643
        %696 = vmatpush.bf16.msra.mxu0 %v639
        %697 = vmatpush.bf16.msra.mxu0 %v635
        %698 = vmatmul.bf16.gmra.mxu0 %v661
        %v699 = vpop.f32.mrf.mxu0
        %v700 = vadd.f32 0.0, %v699
        %v701 = vpop.f32.mrf.mxu0
        %v702 = vadd.f32 0.0, %v701
        %703 = vdwg.mxu0
        %704 = vmatpush.bf16.msra.mxu0 0
        %705 = vmatpush.bf16.msra.mxu0 0
        %706 = vmatpush.bf16.msra.mxu0 0
        %707 = vmatpush.bf16.msra.mxu0 %v671
        %708 = vmatpush.bf16.msra.mxu0 %v648
        %709 = vmatpush.bf16.msra.mxu0 %v644
        %710 = vmatpush.bf16.msra.mxu0 %v640
        %711 = vmatpush.bf16.msra.mxu0 %v636
        %712 = vmatmul.bf16.gmra.mxu0 %v661
        %v713 = vpop.f32.mrf.mxu0
        %v714 = vadd.f32 0.0, %v713
        %v715 = vpop.f32.mrf.mxu0
        %v716 = vadd.f32 0.0, %v715
        %717 = vdwg.mxu0
        %718 = vmatpush.bf16.msra.mxu0 0
        %719 = vmatpush.bf16.msra.mxu0 0
        %720 = vmatpush.bf16.msra.mxu0 0
        %721 = vmatpush.bf16.msra.mxu0 %v674
        %722 = vmatpush.bf16.msra.mxu0 %v649
        %723 = vmatpush.bf16.msra.mxu0 %v645
        %724 = vmatpush.bf16.msra.mxu0 %v641
        %725 = vmatpush.bf16.msra.mxu0 %v637
        %726 = vmatmul.bf16.gmra.mxu0 %v661
        %v727 = vpop.f32.mrf.mxu0
        %v728 = vadd.f32 0.0, %v727
        %v729 = vpop.f32.mrf.mxu0
        %v730 = vadd.f32 0.0, %v729
        %731 = vdwg.mxu0
        %732 = vmatpush.msra.mxu0 %v408
        %733 = vmatpush.msra.mxu0 %v407
        %734 = vmatpush.msra.mxu0 %v406
        %735 = vmatpush.msra.mxu0 %v405
        %736 = vmatpush.msra.mxu0 %v404
        %737 = vmatpush.msra.mxu0 %v403
        %738 = vmatpush.msra.mxu0 %v402
        %739 = vmatpush.msra.mxu0 %v401
        %740 = vmatpush.msra.mxu0 %v400
        %741 = vmatpush.msra.mxu0 %v399
        %742 = vmatpush.msra.mxu0 %v398
        %743 = vmatpush.msra.mxu0 %v397
        %744 = vmatpush.msra.mxu0 %v396
        %745 = vmatpush.msra.mxu0 %v395
        %746 = vmatpush.msra.mxu0 %v394
        %747 = vmatpush.msra.mxu0 %v393
        %748 = vmatmul.f32.gmra.mxu0 %v686
        %v749 = vpop.f32.mrf.mxu0
        %v750 = vadd.f32 0.0, %v749
        %751 = vmatmul.f32.gmra.mxu0 %v688
        %v752 = vpop.f32.mrf.mxu0
        %v753 = vadd.f32 0.0, %v752
        %754 = vdwg.mxu0
        %755 = vmatpush.msra.mxu0 %v424
        %756 = vmatpush.msra.mxu0 %v423
        %757 = vmatpush.msra.mxu0 %v422
        %758 = vmatpush.msra.mxu0 %v421
        %759 = vmatpush.msra.mxu0 %v420
        %760 = vmatpush.msra.mxu0 %v419
        %761 = vmatpush.msra.mxu0 %v418
        %762 = vmatpush.msra.mxu0 %v417
        %763 = vmatpush.msra.mxu0 %v416
        %764 = vmatpush.msra.mxu0 %v415
        %765 = vmatpush.msra.mxu0 %v414
        %766 = vmatpush.msra.mxu0 %v413
        %767 = vmatpush.msra.mxu0 %v412
        %768 = vmatpush.msra.mxu0 %v411
        %769 = vmatpush.msra.mxu0 %v410
        %770 = vmatpush.msra.mxu0 %v409
        %771 = vmatmul.f32.gmra.mxu0 %v700
        %v772 = vpop.f32.mrf.mxu0
        %v773 = vadd.f32 %v750, %v772
        %774 = vmatmul.f32.gmra.mxu0 %v702
        %v775 = vpop.f32.mrf.mxu0
        %v776 = vadd.f32 %v753, %v775
        %777 = vdwg.mxu0
        %778 = vmatpush.msra.mxu0 %v440
        %779 = vmatpush.msra.mxu0 %v439
        %780 = vmatpush.msra.mxu0 %v438
        %781 = vmatpush.msra.mxu0 %v437
        %782 = vmatpush.msra.mxu0 %v436
        %783 = vmatpush.msra.mxu0 %v435
        %784 = vmatpush.msra.mxu0 %v434
        %785 = vmatpush.msra.mxu0 %v433
        %786 = vmatpush.msra.mxu0 %v432
        %787 = vmatpush.msra.mxu0 %v431
        %788 = vmatpush.msra.mxu0 %v430
        %789 = vmatpush.msra.mxu0 %v429
        %790 = vmatpush.msra.mxu0 %v428
        %791 = vmatpush.msra.mxu0 %v427
        %792 = vmatpush.msra.mxu0 %v426
        %793 = vmatpush.msra.mxu0 %v425
        %794 = vmatmul.f32.gmra.mxu0 %v714
        %v795 = vpop.f32.mrf.mxu0
        %v796 = vadd.f32 %v773, %v795
        %797 = vmatmul.f32.gmra.mxu0 %v716
        %v798 = vpop.f32.mrf.mxu0
        %v799 = vadd.f32 %v776, %v798
        %800 = vdwg.mxu0
        %801 = vmatpush.msra.mxu0 %v456
        %802 = vmatpush.msra.mxu0 %v455
        %803 = vmatpush.msra.mxu0 %v454
        %804 = vmatpush.msra.mxu0 %v453
        %805 = vmatpush.msra.mxu0 %v452
        %806 = vmatpush.msra.mxu0 %v451
        %807 = vmatpush.msra.mxu0 %v450
        %808 = vmatpush.msra.mxu0 %v449
        %809 = vmatpush.msra.mxu0 %v448
        %810 = vmatpush.msra.mxu0 %v447
        %811 = vmatpush.msra.mxu0 %v446
        %812 = vmatpush.msra.mxu0 %v445
        %813 = vmatpush.msra.mxu0 %v444
        %814 = vmatpush.msra.mxu0 %v443
        %815 = vmatpush.msra.mxu0 %v442
        %816 = vmatpush.msra.mxu0 %v441
        %817 = vmatmul.f32.gmra.mxu0 %v728
        %v818 = vpop.f32.mrf.mxu0
        %v819 = vadd.f32 %v796, %v818
        %820 = vmatmul.f32.gmra.mxu0 %v730
        %v821 = vpop.f32.mrf.mxu0
        %v822 = vadd.f32 %v799, %v821
        %823 = vdwg.mxu0
        %v824 = vmul.f32 %v686, %v686
        %v825 = vmul.f32 %v700, %v700
        %v826 = vmul.f32 %v714, %v714
        %v827 = vmul.f32 %v728, %v728
        %v828 = vmul.f32 %v688, %v688
        %v829 = vmul.f32 %v702, %v702
        %v830 = vmul.f32 %v716, %v716
        %v831 = vmul.f32 %v730, %v730
        %832 = vmatpush.msra.mxu0 %v408
        %833 = vmatpush.msra.mxu0 %v407
        %834 = vmatpush.msra.mxu0 %v406
        %835 = vmatpush.msra.mxu0 %v405
        %836 = vmatpush.msra.mxu0 %v404
        %837 = vmatpush.msra.mxu0 %v403
        %838 = vmatpush.msra.mxu0 %v402
        %839 = vmatpush.msra.mxu0 %v401
        %840 = vmatpush.msra.mxu0 %v400
        %841 = vmatpush.msra.mxu0 %v399
        %842 = vmatpush.msra.mxu0 %v398
        %843 = vmatpush.msra.mxu0 %v397
        %844 = vmatpush.msra.mxu0 %v396
        %845 = vmatpush.msra.mxu0 %v395
        %846 = vmatpush.msra.mxu0 %v394
        %847 = vmatpush.msra.mxu0 %v393
        %848 = vmatmul.f32.gmra.mxu0 %v824
        %v849 = vpop.f32.mrf.mxu0
        %v850 = vadd.f32 0.0, %v849
        %851 = vmatmul.f32.gmra.mxu0 %v828
        %v852 = vpop.f32.mrf.mxu0
        %v853 = vadd.f32 0.0, %v852
        %854 = vdwg.mxu0
        %855 = vmatpush.msra.mxu0 %v424
        %856 = vmatpush.msra.mxu0 %v423
        %857 = vmatpush.msra.mxu0 %v422
        %858 = vmatpush.msra.mxu0 %v421
        %859 = vmatpush.msra.mxu0 %v420
        %860 = vmatpush.msra.mxu0 %v419
        %861 = vmatpush.msra.mxu0 %v418
        %862 = vmatpush.msra.mxu0 %v417
        %863 = vmatpush.msra.mxu0 %v416
        %864 = vmatpush.msra.mxu0 %v415
        %865 = vmatpush.msra.mxu0 %v414
        %866 = vmatpush.msra.mxu0 %v413
        %867 = vmatpush.msra.mxu0 %v412
        %868 = vmatpush.msra.mxu0 %v411
        %869 = vmatpush.msra.mxu0 %v410
        %870 = vmatpush.msra.mxu0 %v409
        %871 = vmatmul.f32.gmra.mxu0 %v825
        %v872 = vpop.f32.mrf.mxu0
        %v873 = vadd.f32 %v850, %v872
        %874 = vmatmul.f32.gmra.mxu0 %v829
        %v875 = vpop.f32.mrf.mxu0
        %v876 = vadd.f32 %v853, %v875
        %877 = vdwg.mxu0
        %878 = vmatpush.msra.mxu0 %v440
        %879 = vmatpush.msra.mxu0 %v439
        %880 = vmatpush.msra.mxu0 %v438
        %881 = vmatpush.msra.mxu0 %v437
        %882 = vmatpush.msra.mxu0 %v436
        %883 = vmatpush.msra.mxu0 %v435
        %884 = vmatpush.msra.mxu0 %v434
        %885 = vmatpush.msra.mxu0 %v433
        %886 = vmatpush.msra.mxu0 %v432
        %887 = vmatpush.msra.mxu0 %v431
        %888 = vmatpush.msra.mxu0 %v430
        %889 = vmatpush.msra.mxu0 %v429
        %890 = vmatpush.msra.mxu0 %v428
        %891 = vmatpush.msra.mxu0 %v427
        %892 = vmatpush.msra.mxu0 %v426
        %893 = vmatpush.msra.mxu0 %v425
        %894 = vmatmul.f32.gmra.mxu0 %v826
        %v895 = vpop.f32.mrf.mxu0
        %v896 = vadd.f32 %v873, %v895
        %897 = vmatmul.f32.gmra.mxu0 %v830
        %v898 = vpop.f32.mrf.mxu0
        %v899 = vadd.f32 %v876, %v898
        %900 = vdwg.mxu0
        %901 = vmatpush.msra.mxu0 %v456
        %902 = vmatpush.msra.mxu0 %v455
        %903 = vmatpush.msra.mxu0 %v454
        %904 = vmatpush.msra.mxu0 %v453
        %905 = vmatpush.msra.mxu0 %v452
        %906 = vmatpush.msra.mxu0 %v451
        %907 = vmatpush.msra.mxu0 %v450
        %908 = vmatpush.msra.mxu0 %v449
        %909 = vmatpush.msra.mxu0 %v448
        %910 = vmatpush.msra.mxu0 %v447
        %911 = vmatpush.msra.mxu0 %v446
        %912 = vmatpush.msra.mxu0 %v445
        %913 = vmatpush.msra.mxu0 %v444
        %914 = vmatpush.msra.mxu0 %v443
        %915 = vmatpush.msra.mxu0 %v442
        %916 = vmatpush.msra.mxu0 %v441
        %917 = vmatmul.f32.gmra.mxu0 %v827
        %v918 = vpop.f32.mrf.mxu0
        %v919 = vadd.f32 %v896, %v918
        %920 = vmatmul.f32.gmra.mxu0 %v831
        %v921 = vpop.f32.mrf.mxu0
        %v922 = vadd.f32 %v899, %v921
        %923 = vdwg.mxu0
        %v924 = vmul.f32 %v819, 0.00390625
        %v925 = vmul.f32 %v822, 0.00390625
        %v926 = vmul.f32 %v919, 0.00390625
        %v927 = vmul.f32 %v922, 0.00390625
        %v928 = vmul.f32 %v924, %v924
        %v929 = vmul.f32 %v925, %v925
        %v930 = vsub.f32 %v926, %v928
        %v931 = vsub.f32 %v927, %v929
        %v932 = vmax.f32 %v930, 0.0
        %v933 = vmax.f32 %v931, 0.0
        %v934 = vadd.f32 %v932, 1e-05
        %v935 = vadd.f32 %v933, 1e-05
        %v936 = vrsqrt.pop %v934
        %v937 = vmul.f32 %v936, %v934
        %v938 = vmul.f32 %v937, %v936
        %v939 = vmul.f32 0.5, %v938
        %v940 = vsub.f32 1.5, %v939
        %v941 = vmul.f32 %v936, %v940
        %vm942 = vweird.f32 %v934
        %vm943 = vweird.f32 %v936
        %vm944 = vmor %vm942, %vm943
        %v945 = vsel %vm944, %v936, %v941
        %v946 = vrsqrt.pop %v935
        %v947 = vmul.f32 %v946, %v935
        %v948 = vmul.f32 %v947, %v946
        %v949 = vmul.f32 0.5, %v948
        %v950 = vsub.f32 1.5, %v949
        %v951 = vmul.f32 %v946, %v950
        %vm952 = vweird.f32 %v935
        %vm953 = vweird.f32 %v946
        %vm954 = vmor %vm952, %vm953
        %v955 = vsel %vm954, %v946, %v951
        %957 = vst [vmem:[#allocation1] ss:$4 sm:$0xff] %v457
        %v958 = vld.sshfl [vmem:[#allocation1] sm:$0xff pattern:$0x73625140]
        %v959 = vld.sshfl [vmem:[#allocation1 + $0x8] sm:$0xff pattern:$0x73625140]
        %v960 = vld.sshfl [vmem:[#allocation1 + $0x10] sm:$0xff pattern:$0x73625140]
        %v961 = vld.sshfl [vmem:[#allocation1 + $0x18] sm:$0xff pattern:$0x73625140]
        %vm962 = vcmask 15360
        %v964 = vsel %vm962, %v945, 0
        %v967 = vsel %vm962, %v955, 0
        %vm969 = vcmask 1041408
        %v970 = vsel %vm969, %v958, 0
        %v972 = vsel %vm969, %v959, 0
        %v974 = vsel %vm969, %v960, 0
        %v976 = vsel %vm969, %v961, 0
        %978 = vmatpush.msra.mxu0 0.0
        %979 = vmatpush.msra.mxu0 0.0
        %980 = vmatpush.msra.mxu0 0.0
        %981 = vmatpush.msra.mxu0 0.0
        %982 = vmatpush.msra.mxu0 0.0
        %983 = vmatpush.msra.mxu0 0.0
        %984 = vmatpush.msra.mxu0 0.0
        %985 = vmatpush.msra.mxu0 0.0
        %986 = vmatpush.msra.mxu0 0.0
        %987 = vmatpush.msra.mxu0 0.0
        %988 = vmatpush.msra.mxu0 0.0
        %989 = vmatpush.msra.mxu0 0.0
        %990 = vmatpush.msra.mxu0 0.0
        %991 = vmatpush.msra.mxu0 0.0
        %992 = vmatpush.msra.mxu0 0.0
        %993 = vmatpush.msra.mxu0 %v970
        %994 = vmatmul.f32.gmra.mxu0 %v964
        %v995 = vpop.f32.mrf.mxu0
        %v996 = vadd.f32 0.0, %v995
        %997 = vmatmul.f32.gmra.mxu0 %v967
        %v998 = vpop.f32.mrf.mxu0
        %v999 = vadd.f32 0.0, %v998
        %1000 = vdwg.mxu0
        %1001 = vmatpush.msra.mxu0 0.0
        %1002 = vmatpush.msra.mxu0 0.0
        %1003 = vmatpush.msra.mxu0 0.0
        %1004 = vmatpush.msra.mxu0 0.0
        %1005 = vmatpush.msra.mxu0 0.0
        %1006 = vmatpush.msra.mxu0 0.0
        %1007 = vmatpush.msra.mxu0 0.0
        %1008 = vmatpush.msra.mxu0 0.0
        %1009 = vmatpush.msra.mxu0 0.0
        %1010 = vmatpush.msra.mxu0 0.0
        %1011 = vmatpush.msra.mxu0 0.0
        %1012 = vmatpush.msra.mxu0 0.0
        %1013 = vmatpush.msra.mxu0 0.0
        %1014 = vmatpush.msra.mxu0 0.0
        %1015 = vmatpush.msra.mxu0 0.0
        %1016 = vmatpush.msra.mxu0 %v972
        %1017 = vmatmul.f32.gmra.mxu0 %v964
        %v1018 = vpop.f32.mrf.mxu0
        %v1019 = vadd.f32 0.0, %v1018
        %1020 = vmatmul.f32.gmra.mxu0 %v967
        %v1021 = vpop.f32.mrf.mxu0
        %v1022 = vadd.f32 0.0, %v1021
        %1023 = vdwg.mxu0
        %1024 = vmatpush.msra.mxu0 0.0
        %1025 = vmatpush.msra.mxu0 0.0
        %1026 = vmatpush.msra.mxu0 0.0
        %1027 = vmatpush.msra.mxu0 0.0
        %1028 = vmatpush.msra.mxu0 0.0
        %1029 = vmatpush.msra.mxu0 0.0
        %1030 = vmatpush.msra.mxu0 0.0
        %1031 = vmatpush.msra.mxu0 0.0
        %1032 = vmatpush.msra.mxu0 0.0
        %1033 = vmatpush.msra.mxu0 0.0
        %1034 = vmatpush.msra.mxu0 0.0
        %1035 = vmatpush.msra.mxu0 0.0
        %1036 = vmatpush.msra.mxu0 0.0
        %1037 = vmatpush.msra.mxu0 0.0
        %1038 = vmatpush.msra.mxu0 0.0
        %1039 = vmatpush.msra.mxu0 %v974
        %1040 = vmatmul.f32.gmra.mxu0 %v964
        %v1041 = vpop.f32.mrf.mxu0
        %v1042 = vadd.f32 0.0, %v1041
        %1043 = vmatmul.f32.gmra.mxu0 %v967
        %v1044 = vpop.f32.mrf.mxu0
        %v1045 = vadd.f32 0.0, %v1044
        %1046 = vdwg.mxu0
        %1047 = vmatpush.msra.mxu0 0.0
        %1048 = vmatpush.msra.mxu0 0.0
        %1049 = vmatpush.msra.mxu0 0.0
        %1050 = vmatpush.msra.mxu0 0.0
        %1051 = vmatpush.msra.mxu0 0.0
        %1052 = vmatpush.msra.mxu0 0.0
        %1053 = vmatpush.msra.mxu0 0.0
        %1054 = vmatpush.msra.mxu0 0.0
        %1055 = vmatpush.msra.mxu0 0.0
        %1056 = vmatpush.msra.mxu0 0.0
        %1057 = vmatpush.msra.mxu0 0.0
        %1058 = vmatpush.msra.mxu0 0.0
        %1059 = vmatpush.msra.mxu0 0.0
        %1060 = vmatpush.msra.mxu0 0.0
        %1061 = vmatpush.msra.mxu0 0.0
        %1062 = vmatpush.msra.mxu0 %v976
        %1063 = vmatmul.f32.gmra.mxu0 %v964
        %v1064 = vpop.f32.mrf.mxu0
        %v1065 = vadd.f32 0.0, %v1064
        %1066 = vmatmul.f32.gmra.mxu0 %v967
        %v1067 = vpop.f32.mrf.mxu0
        %v1068 = vadd.f32 0.0, %v1067
        %1069 = vdwg.mxu0
        %v1070 = vsub.f32 0.0, %v924
        %v1071 = vsub.f32 0.0, %v925
        %v1072 = vmul.f32 %v1070, %v945
        %v1073 = vmul.f32 %v1071, %v955
        %1074 = vst [vmem:[#allocation1] ss:$4 sm:$0xff] %v457
        %v1075 = vld.sshfl [vmem:[#allocation1] sm:$0xff pattern:$0x73625140]
        %v1076 = vld.sshfl [vmem:[#allocation1 + $0x8] sm:$0xff pattern:$0x73625140]
        %v1077 = vld.sshfl [vmem:[#allocation1 + $0x10] sm:$0xff pattern:$0x73625140]
        %v1078 = vld.sshfl [vmem:[#allocation1 + $0x18] sm:$0xff pattern:$0x73625140]
        %v1080 = vsel %vm962, %v1072, 0
        %v1083 = vsel %vm962, %v1073, 0
        %v1085 = vsel %vm969, %v1075, 0
        %v1087 = vsel %vm969, %v1076, 0
        %v1089 = vsel %vm969, %v1077, 0
        %v1091 = vsel %vm969, %v1078, 0
        %1093 = vmatpush.msra.mxu0 0.0
        %1094 = vmatpush.msra.mxu0 0.0
        %1095 = vmatpush.msra.mxu0 0.0
        %1096 = vmatpush.msra.mxu0 0.0
        %1097 = vmatpush.msra.mxu0 0.0
        %1098 = vmatpush.msra.mxu0 0.0
        %1099 = vmatpush.msra.mxu0 0.0
        %1100 = vmatpush.msra.mxu0 0.0
        %1101 = vmatpush.msra.mxu0 0.0
        %1102 = vmatpush.msra.mxu0 0.0
        %1103 = vmatpush.msra.mxu0 0.0
        %1104 = vmatpush.msra.mxu0 0.0
        %1105 = vmatpush.msra.mxu0 0.0
        %1106 = vmatpush.msra.mxu0 0.0
        %1107 = vmatpush.msra.mxu0 0.0
        %1108 = vmatpush.msra.mxu0 %v1085
        %1109 = vmatmul.f32.gmra.mxu0 %v1080
        %v1110 = vpop.f32.mrf.mxu0
        %v1111 = vadd.f32 0.0, %v1110
        %1112 = vmatmul.f32.gmra.mxu0 %v1083
        %v1113 = vpop.f32.mrf.mxu0
        %v1114 = vadd.f32 0.0, %v1113
        %1115 = vdwg.mxu0
        %1116 = vmatpush.msra.mxu0 0.0
        %1117 = vmatpush.msra.mxu0 0.0
        %1118 = vmatpush.msra.mxu0 0.0
        %1119 = vmatpush.msra.mxu0 0.0
        %1120 = vmatpush.msra.mxu0 0.0
        %1121 = vmatpush.msra.mxu0 0.0
        %1122 = vmatpush.msra.mxu0 0.0
        %1123 = vmatpush.msra.mxu0 0.0
        %1124 = vmatpush.msra.mxu0 0.0
        %1125 = vmatpush.msra.mxu0 0.0
        %1126 = vmatpush.msra.mxu0 0.0
        %1127 = vmatpush.msra.mxu0 0.0
        %1128 = vmatpush.msra.mxu0 0.0
        %1129 = vmatpush.msra.mxu0 0.0
        %1130 = vmatpush.msra.mxu0 0.0
        %1131 = vmatpush.msra.mxu0 %v1087
        %1132 = vmatmul.f32.gmra.mxu0 %v1080
        %v1133 = vpop.f32.mrf.mxu0
        %v1134 = vadd.f32 0.0, %v1133
        %1135 = vmatmul.f32.gmra.mxu0 %v1083
        %v1136 = vpop.f32.mrf.mxu0
        %v1137 = vadd.f32 0.0, %v1136
        %1138 = vdwg.mxu0
        %1139 = vmatpush.msra.mxu0 0.0
        %1140 = vmatpush.msra.mxu0 0.0
        %1141 = vmatpush.msra.mxu0 0.0
        %1142 = vmatpush.msra.mxu0 0.0
        %1143 = vmatpush.msra.mxu0 0.0
        %1144 = vmatpush.msra.mxu0 0.0
        %1145 = vmatpush.msra.mxu0 0.0
        %1146 = vmatpush.msra.mxu0 0.0
        %1147 = vmatpush.msra.mxu0 0.0
        %1148 = vmatpush.msra.mxu0 0.0
        %1149 = vmatpush.msra.mxu0 0.0
        %1150 = vmatpush.msra.mxu0 0.0
        %1151 = vmatpush.msra.mxu0 0.0
        %1152 = vmatpush.msra.mxu0 0.0
        %1153 = vmatpush.msra.mxu0 0.0
        %1154 = vmatpush.msra.mxu0 %v1089
        %1155 = vmatmul.f32.gmra.mxu0 %v1080
        %v1156 = vpop.f32.mrf.mxu0
        %v1157 = vadd.f32 0.0, %v1156
        %1158 = vmatmul.f32.gmra.mxu0 %v1083
        %v1159 = vpop.f32.mrf.mxu0
        %v1160 = vadd.f32 0.0, %v1159
        %1161 = vdwg.mxu0
        %1162 = vmatpush.msra.mxu0 0.0
        %1163 = vmatpush.msra.mxu0 0.0
        %1164 = vmatpush.msra.mxu0 0.0
        %1165 = vmatpush.msra.mxu0 0.0
        %1166 = vmatpush.msra.mxu0 0.0
        %1167 = vmatpush.msra.mxu0 0.0
        %1168 = vmatpush.msra.mxu0 0.0
        %1169 = vmatpush.msra.mxu0 0.0
        %1170 = vmatpush.msra.mxu0 0.0
        %1171 = vmatpush.msra.mxu0 0.0
        %1172 = vmatpush.msra.mxu0 0.0
        %1173 = vmatpush.msra.mxu0 0.0
        %1174 = vmatpush.msra.mxu0 0.0
        %1175 = vmatpush.msra.mxu0 0.0
        %1176 = vmatpush.msra.mxu0 0.0
        %1177 = vmatpush.msra.mxu0 %v1091
        %1178 = vmatmul.f32.gmra.mxu0 %v1080
        %v1179 = vpop.f32.mrf.mxu0
        %v1180 = vadd.f32 0.0, %v1179
        %1181 = vmatmul.f32.gmra.mxu0 %v1083
        %v1182 = vpop.f32.mrf.mxu0
        %v1183 = vadd.f32 0.0, %v1182
        %1184 = vdwg.mxu0
        %v1185 = vmul.f32 %v686, %v996
        %v1186 = vmul.f32 %v700, %v1019
        %v1187 = vmul.f32 %v714, %v1042
        %v1188 = vmul.f32 %v728, %v1065
        %v1189 = vmul.f32 %v688, %v999
        %v1190 = vmul.f32 %v702, %v1022
        %v1191 = vmul.f32 %v716, %v1045
        %v1192 = vmul.f32 %v730, %v1068
        %v1193 = vadd.f32 %v1185, %v1111
        %v1194 = vadd.f32 %v1186, %v1134
        %v1195 = vadd.f32 %v1187, %v1157
        %v1196 = vadd.f32 %v1188, %v1180
        %v1197 = vadd.f32 %v1189, %v1114
        %v1198 = vadd.f32 %v1190, %v1137
        %v1199 = vadd.f32 %v1191, %v1160
        %v1200 = vadd.f32 %v1192, %v1183
        %v1201 = vmax.f32 %v1193, 0.0
        %v1202 = vmax.f32 %v1194, 0.0
        %v1203 = vmax.f32 %v1195, 0.0
        %v1204 = vmax.f32 %v1196, 0.0
        %v1205 = vmax.f32 %v1197, 0.0
        %v1206 = vmax.f32 %v1198, 0.0
        %v1207 = vmax.f32 %v1199, 0.0
        %v1208 = vmax.f32 %v1200, 0.0
        %1209 = vrot.lane.b32.xlu0 %v1201, 17
        %v1210 = vpop.permute.xlu0 %1209
        %1211 = vrot.lane.b32.xlu0 %v1205, 17
        %v1212 = vpop.permute.xlu0 %1211
        %1213 = vrot.lane.b32.xlu0 %v1202, 17
        %v1214 = vpop.permute.xlu0 %1213
        %1215 = vrot.lane.b32.xlu0 %v1206, 17
        %v1216 = vpop.permute.xlu0 %1215
        %1217 = vrot.lane.b32.xlu0 %v1203, 17
        %v1218 = vpop.permute.xlu0 %1217
        %1219 = vrot.lane.b32.xlu0 %v1207, 17
        %v1220 = vpop.permute.xlu0 %1219
        %1221 = vrot.lane.b32.xlu0 %v1204, 17
        %v1222 = vpop.permute.xlu0 %1221
        %1223 = vrot.lane.b32.xlu0 %v1208, 17
        %v1224 = vpop.permute.xlu0 %1223
        %v1225 = vsel %vm472, %v1218, %v1222
        %v1226 = vsel %vm472, %v1220, %v1224
        %v1227 = vsel %vm472, %v1214, %v1218
        %v1228 = vsel %vm472, %v1216, %v1220
        %v1229 = vsel %vm472, %v1210, %v1214
        %v1230 = vsel %vm472, %v1212, %v1216
        %v1231 = vsel %vm472, %v1222, %v1210
        %v1232 = vsel %vm472, %v1224, %v1212
        %v1233 = vmul.f32 %v1231, %v477
        %v1234 = vmul.f32 %v1229, %v478
        %v1235 = vmul.f32 %v1227, %v479
        %v1236 = vmul.f32 %v1225, %v480
        %v1237 = vmul.f32 %v1232, %v477
        %v1238 = vmul.f32 %v1230, %v478
        %v1239 = vmul.f32 %v1228, %v479
        %v1240 = vmul.f32 %v1226, %v480
        %1241 = vrot.lane.b32.xlu0 %v1201, 16
        %v1242 = vpop.permute.xlu0 %1241
        %1243 = vrot.lane.b32.xlu0 %v1205, 16
        %v1244 = vpop.permute.xlu0 %1243
        %1245 = vrot.lane.b32.xlu0 %v1202, 16
        %v1246 = vpop.permute.xlu0 %1245
        %1247 = vrot.lane.b32.xlu0 %v1206, 16
        %v1248 = vpop.permute.xlu0 %1247
        %1249 = vrot.lane.b32.xlu0 %v1203, 16
        %v1250 = vpop.permute.xlu0 %1249
        %1251 = vrot.lane.b32.xlu0 %v1207, 16
        %v1252 = vpop.permute.xlu0 %1251
        %1253 = vrot.lane.b32.xlu0 %v1204, 16
        %v1254 = vpop.permute.xlu0 %1253
        %1255 = vrot.lane.b32.xlu0 %v1208, 16
        %v1256 = vpop.permute.xlu0 %1255
        %v1257 = vsel %vm493, %v1250, %v1254
        %v1258 = vsel %vm493, %v1252, %v1256
        %v1259 = vsel %vm493, %v1246, %v1250
        %v1260 = vsel %vm493, %v1248, %v1252
        %v1261 = vsel %vm493, %v1242, %v1246
        %v1262 = vsel %vm493, %v1244, %v1248
        %v1263 = vsel %vm493, %v1254, %v1242
        %v1264 = vsel %vm493, %v1256, %v1244
        %v1265 = vmul.f32 %v1263, %v498
        %v1266 = vmul.f32 %v1261, %v499
        %v1267 = vmul.f32 %v1259, %v500
        %v1268 = vmul.f32 %v1257, %v501
        %v1269 = vmul.f32 %v1264, %v498
        %v1270 = vmul.f32 %v1262, %v499
        %v1271 = vmul.f32 %v1260, %v500
        %v1272 = vmul.f32 %v1258, %v501
        %1273 = vrot.lane.b32.xlu0 %v1201, 15
        %v1274 = vpop.permute.xlu0 %1273
        %1275 = vrot.lane.b32.xlu0 %v1205, 15
        %v1276 = vpop.permute.xlu0 %1275
        %1277 = vrot.lane.b32.xlu0 %v1202, 15
        %v1278 = vpop.permute.xlu0 %1277
        %1279 = vrot.lane.b32.xlu0 %v1206, 15
        %v1280 = vpop.permute.xlu0 %1279
        %1281 = vrot.lane.b32.xlu0 %v1203, 15
        %v1282 = vpop.permute.xlu0 %1281
        %1283 = vrot.lane.b32.xlu0 %v1207, 15
        %v1284 = vpop.permute.xlu0 %1283
        %1285 = vrot.lane.b32.xlu0 %v1204, 15
        %v1286 = vpop.permute.xlu0 %1285
        %1287 = vrot.lane.b32.xlu0 %v1208, 15
        %v1288 = vpop.permute.xlu0 %1287
        %v1289 = vsel %vm514, %v1282, %v1286
        %v1290 = vsel %vm514, %v1284, %v1288
        %v1291 = vsel %vm514, %v1278, %v1282
        %v1292 = vsel %vm514, %v1280, %v1284
        %v1293 = vsel %vm514, %v1274, %v1278
        %v1294 = vsel %vm514, %v1276, %v1280
        %v1295 = vsel %vm514, %v1286, %v1274
        %v1296 = vsel %vm514, %v1288, %v1276
        %v1297 = vmul.f32 %v1295, %v519
        %v1298 = vmul.f32 %v1293, %v520
        %v1299 = vmul.f32 %v1291, %v521
        %v1300 = vmul.f32 %v1289, %v522
        %v1301 = vmul.f32 %v1296, %v519
        %v1302 = vmul.f32 %v1294, %v520
        %v1303 = vmul.f32 %v1292, %v521
        %v1304 = vmul.f32 %v1290, %v522
        %1305 = vrot.lane.b32.xlu0 %v1201, 1
        %v1306 = vpop.permute.xlu0 %1305
        %1307 = vrot.lane.b32.xlu0 %v1205, 1
        %v1308 = vpop.permute.xlu0 %1307
        %1309 = vrot.lane.b32.xlu0 %v1202, 1
        %v1310 = vpop.permute.xlu0 %1309
        %1311 = vrot.lane.b32.xlu0 %v1206, 1
        %v1312 = vpop.permute.xlu0 %1311
        %1313 = vrot.lane.b32.xlu0 %v1203, 1
        %v1314 = vpop.permute.xlu0 %1313
        %1315 = vrot.lane.b32.xlu0 %v1207, 1
        %v1316 = vpop.permute.xlu0 %1315
        %1317 = vrot.lane.b32.xlu0 %v1204, 1
        %v1318 = vpop.permute.xlu0 %1317
        %1319 = vrot.lane.b32.xlu0 %v1208, 1
        %v1320 = vpop.permute.xlu0 %1319
        %v1321 = vsel %vm535, %v1314, %v1318
        %v1322 = vsel %vm535, %v1316, %v1320
        %v1323 = vsel %vm535, %v1310, %v1314
        %v1324 = vsel %vm535, %v1312, %v1316
        %v1325 = vsel %vm535, %v1306, %v1310
        %v1326 = vsel %vm535, %v1308, %v1312
        %v1327 = vsel %vm535, %v1318, %v1306
        %v1328 = vsel %vm535, %v1320, %v1308
        %v1329 = vmul.f32 %v1327, %v540
        %v1330 = vmul.f32 %v1325, %v541
        %v1331 = vmul.f32 %v1323, %v542
        %v1332 = vmul.f32 %v1321, %v543
        %v1333 = vmul.f32 %v1328, %v540
        %v1334 = vmul.f32 %v1326, %v541
        %v1335 = vmul.f32 %v1324, %v542
        %v1336 = vmul.f32 %v1322, %v543
        %1337 = vrot.lane.b32.xlu0 %v1201, 127
        %v1338 = vpop.permute.xlu0 %1337
        %1339 = vrot.lane.b32.xlu0 %v1205, 127
        %v1340 = vpop.permute.xlu0 %1339
        %1341 = vrot.lane.b32.xlu0 %v1202, 127
        %v1342 = vpop.permute.xlu0 %1341
        %1343 = vrot.lane.b32.xlu0 %v1206, 127
        %v1344 = vpop.permute.xlu0 %1343
        %1345 = vrot.lane.b32.xlu0 %v1203, 127
        %v1346 = vpop.permute.xlu0 %1345
        %1347 = vrot.lane.b32.xlu0 %v1207, 127
        %v1348 = vpop.permute.xlu0 %1347
        %1349 = vrot.lane.b32.xlu0 %v1204, 127
        %v1350 = vpop.permute.xlu0 %1349
        %1351 = vrot.lane.b32.xlu0 %v1208, 127
        %v1352 = vpop.permute.xlu0 %1351
        %v1353 = vsel %vm556, %v1346, %v1350
        %v1354 = vsel %vm556, %v1348, %v1352
        %v1355 = vsel %vm556, %v1342, %v1346
        %v1356 = vsel %vm556, %v1344, %v1348
        %v1357 = vsel %vm556, %v1338, %v1342
        %v1358 = vsel %vm556, %v1340, %v1344
        %v1359 = vsel %vm556, %v1350, %v1338
        %v1360 = vsel %vm556, %v1352, %v1340
        %v1361 = vmul.f32 %v1357, %v561
        %v1362 = vmul.f32 %v1355, %v562
        %v1363 = vmul.f32 %v1353, %v563
        %v1364 = vmul.f32 %v1359, %v564
        %v1365 = vmul.f32 %v1358, %v561
        %v1366 = vmul.f32 %v1356, %v562
        %v1367 = vmul.f32 %v1354, %v563
        %v1368 = vmul.f32 %v1360, %v564
        %1369 = vrot.lane.b32.xlu0 %v1201, 113
        %v1370 = vpop.permute.xlu0 %1369
        %1371 = vrot.lane.b32.xlu0 %v1205, 113
        %v1372 = vpop.permute.xlu0 %1371
        %1373 = vrot.lane.b32.xlu0 %v1202, 113
        %v1374 = vpop.permute.xlu0 %1373
        %1375 = vrot.lane.b32.xlu0 %v1206, 113
        %v1376 = vpop.permute.xlu0 %1375
        %1377 = vrot.lane.b32.xlu0 %v1203, 113
        %v1378 = vpop.permute.xlu0 %1377
        %1379 = vrot.lane.b32.xlu0 %v1207, 113
        %v1380 = vpop.permute.xlu0 %1379
        %1381 = vrot.lane.b32.xlu0 %v1204, 113
        %v1382 = vpop.permute.xlu0 %1381
        %1383 = vrot.lane.b32.xlu0 %v1208, 113
        %v1384 = vpop.permute.xlu0 %1383
        %v1385 = vsel %vm577, %v1378, %v1382
        %v1386 = vsel %vm577, %v1380, %v1384
        %v1387 = vsel %vm577, %v1374, %v1378
        %v1388 = vsel %vm577, %v1376, %v1380
        %v1389 = vsel %vm577, %v1370, %v1374
        %v1390 = vsel %vm577, %v1372, %v1376
        %v1391 = vsel %vm577, %v1382, %v1370
        %v1392 = vsel %vm577, %v1384, %v1372
        %v1393 = vmul.f32 %v1389, %v582
        %v1394 = vmul.f32 %v1387, %v583
        %v1395 = vmul.f32 %v1385, %v584
        %v1396 = vmul.f32 %v1391, %v585
        %v1397 = vmul.f32 %v1390, %v582
        %v1398 = vmul.f32 %v1388, %v583
        %v1399 = vmul.f32 %v1386, %v584
        %v1400 = vmul.f32 %v1392, %v585
        %1401 = vrot.lane.b32.xlu0 %v1201, 112
        %v1402 = vpop.permute.xlu0 %1401
        %1403 = vrot.lane.b32.xlu0 %v1205, 112
        %v1404 = vpop.permute.xlu0 %1403
        %1405 = vrot.lane.b32.xlu0 %v1202, 112
        %v1406 = vpop.permute.xlu0 %1405
        %1407 = vrot.lane.b32.xlu0 %v1206, 112
        %v1408 = vpop.permute.xlu0 %1407
        %1409 = vrot.lane.b32.xlu0 %v1203, 112
        %v1410 = vpop.permute.xlu0 %1409
        %1411 = vrot.lane.b32.xlu0 %v1207, 112
        %v1412 = vpop.permute.xlu0 %1411
        %1413 = vrot.lane.b32.xlu0 %v1204, 112
        %v1414 = vpop.permute.xlu0 %1413
        %1415 = vrot.lane.b32.xlu0 %v1208, 112
        %v1416 = vpop.permute.xlu0 %1415
        %v1417 = vsel %vm598, %v1410, %v1414
        %v1418 = vsel %vm598, %v1412, %v1416
        %v1419 = vsel %vm598, %v1406, %v1410
        %v1420 = vsel %vm598, %v1408, %v1412
        %v1421 = vsel %vm598, %v1402, %v1406
        %v1422 = vsel %vm598, %v1404, %v1408
        %v1423 = vsel %vm598, %v1414, %v1402
        %v1424 = vsel %vm598, %v1416, %v1404
        %v1425 = vmul.f32 %v1421, %v603
        %v1426 = vmul.f32 %v1419, %v604
        %v1427 = vmul.f32 %v1417, %v605
        %v1428 = vmul.f32 %v1423, %v606
        %v1429 = vmul.f32 %v1422, %v603
        %v1430 = vmul.f32 %v1420, %v604
        %v1431 = vmul.f32 %v1418, %v605
        %v1432 = vmul.f32 %v1424, %v606
        %1433 = vrot.lane.b32.xlu0 %v1201, 111
        %v1434 = vpop.permute.xlu0 %1433
        %1435 = vrot.lane.b32.xlu0 %v1205, 111
        %v1436 = vpop.permute.xlu0 %1435
        %1437 = vrot.lane.b32.xlu0 %v1202, 111
        %v1438 = vpop.permute.xlu0 %1437
        %1439 = vrot.lane.b32.xlu0 %v1206, 111
        %v1440 = vpop.permute.xlu0 %1439
        %1441 = vrot.lane.b32.xlu0 %v1203, 111
        %v1442 = vpop.permute.xlu0 %1441
        %1443 = vrot.lane.b32.xlu0 %v1207, 111
        %v1444 = vpop.permute.xlu0 %1443
        %1445 = vrot.lane.b32.xlu0 %v1204, 111
        %v1446 = vpop.permute.xlu0 %1445
        %1447 = vrot.lane.b32.xlu0 %v1208, 111
        %v1448 = vpop.permute.xlu0 %1447
        %v1449 = vsel %vm619, %v1442, %v1446
        %v1450 = vsel %vm619, %v1444, %v1448
        %v1451 = vsel %vm619, %v1438, %v1442
        %v1452 = vsel %vm619, %v1440, %v1444
        %v1453 = vsel %vm619, %v1434, %v1438
        %v1454 = vsel %vm619, %v1436, %v1440
        %v1455 = vsel %vm619, %v1446, %v1434
        %v1456 = vsel %vm619, %v1448, %v1436
        %v1457 = vmul.f32 %v1453, %v624
        %v1458 = vmul.f32 %v1451, %v625
        %v1459 = vmul.f32 %v1449, %v626
        %v1460 = vmul.f32 %v1455, %v627
        %v1461 = vmul.f32 %v1454, %v624
        %v1462 = vmul.f32 %v1452, %v625
        %v1463 = vmul.f32 %v1450, %v626
        %v1464 = vmul.f32 %v1456, %v627
        %v1465 = vld [vmem:[%s5] sm:$0xff]
        %v1466 = vld [vmem:[%s5 + $0x8] sm:$0xff]
        %v1467 = vpack.c.bf16 %v1237, %v1233
        %v1468 = vpack.c.bf16 %v1238, %v1234
        %v1469 = vpack.c.bf16 %v1239, %v1235
        %v1470 = vpack.c.bf16 %v1240, %v1236
        %v1471 = vpack.c.bf16 %v1269, %v1265
        %v1472 = vpack.c.bf16 %v1270, %v1266
        %v1473 = vpack.c.bf16 %v1271, %v1267
        %v1474 = vpack.c.bf16 %v1272, %v1268
        %v1475 = vpack.c.bf16 %v1301, %v1297
        %v1476 = vpack.c.bf16 %v1302, %v1298
        %v1477 = vpack.c.bf16 %v1303, %v1299
        %v1478 = vpack.c.bf16 %v1304, %v1300
        %v1479 = vpack.c.bf16 %v1333, %v1329
        %v1480 = vpack.c.bf16 %v1334, %v1330
        %v1481 = vpack.c.bf16 %v1335, %v1331
        %v1482 = vpack.c.bf16 %v1336, %v1332
        %v1483 = vpack.c.bf16 %v1205, %v1201
        %v1484 = vpack.c.bf16 %v1206, %v1202
        %v1485 = vpack.c.bf16 %v1207, %v1203
        %v1486 = vpack.c.bf16 %v1208, %v1204
        %v1487 = vpack.c.bf16 %v1365, %v1361
        %v1488 = vpack.c.bf16 %v1366, %v1362
        %v1489 = vpack.c.bf16 %v1367, %v1363
        %v1490 = vpack.c.bf16 %v1368, %v1364
        %v1491 = vpack.c.bf16 %v1397, %v1393
        %v1492 = vpack.c.bf16 %v1398, %v1394
        %v1493 = vpack.c.bf16 %v1399, %v1395
        %v1494 = vpack.c.bf16 %v1400, %v1396
        %v1495 = vpack.c.bf16 %v1429, %v1425
        %v1496 = vpack.c.bf16 %v1430, %v1426
        %v1497 = vpack.c.bf16 %v1431, %v1427
        %v1498 = vpack.c.bf16 %v1432, %v1428
        %v1499 = vpack.c.bf16 %v1461, %v1457
        %v1500 = vpack.c.bf16 %v1462, %v1458
        %v1501 = vpack.c.bf16 %v1463, %v1459
        %v1502 = vpack.c.bf16 %v1464, %v1460
        %v1505 = vunpack.c.l.b16 %v1465
        %v1506 = vunpack.c.h.b16 %v1465
        %v1507 = vunpack.c.l.b16 %v1466
        %v1508 = vunpack.c.h.b16 %v1466
        %v1509 = vpack.c.b16 %v1507, %v1505
        %v1510 = vpack.c.b16 %v1508, %v1506
        %vm1512 = vcmask 130048
        %v1514 = vsel %vm1512, %v1510, 0
        %1516 = vmatpush.bf16.msra.mxu0 %v1495
        %1517 = vmatpush.bf16.msra.mxu0 %v1491
        %1518 = vmatpush.bf16.msra.mxu0 %v1487
        %1519 = vmatpush.bf16.msra.mxu0 %v1483
        %1520 = vmatpush.bf16.msra.mxu0 %v1479
        %1521 = vmatpush.bf16.msra.mxu0 %v1475
        %1522 = vmatpush.bf16.msra.mxu0 %v1471
        %1523 = vmatpush.bf16.msra.mxu0 %v1467
        %1524 = vmatmul.bf16.gmra.mxu0 %v1509
        %v1525 = vpop.f32.mrf.mxu0
        %v1526 = vadd.f32 0.0, %v1525
        %v1527 = vpop.f32.mrf.mxu0
        %v1528 = vadd.f32 0.0, %v1527
        %1529 = vdwg.mxu0
        %1530 = vmatpush.bf16.msra.mxu0 0
        %1531 = vmatpush.bf16.msra.mxu0 0
        %1532 = vmatpush.bf16.msra.mxu0 0
        %1533 = vmatpush.bf16.msra.mxu0 0
        %1534 = vmatpush.bf16.msra.mxu0 0
        %1535 = vmatpush.bf16.msra.mxu0 0
        %1536 = vmatpush.bf16.msra.mxu0 0
        %1537 = vmatpush.bf16.msra.mxu0 %v1499
        %1538 = vmatmul.bf16.gmra.mxu0 %v1514
        %v1539 = vpop.f32.mrf.mxu0
        %v1540 = vadd.f32 %v1526, %v1539
        %v1541 = vpop.f32.mrf.mxu0
        %v1542 = vadd.f32 %v1528, %v1541
        %1543 = vdwg.mxu0
        %1544 = vmatpush.bf16.msra.mxu0 %v1496
        %1545 = vmatpush.bf16.msra.mxu0 %v1492
        %1546 = vmatpush.bf16.msra.mxu0 %v1488
        %1547 = vmatpush.bf16.msra.mxu0 %v1484
        %1548 = vmatpush.bf16.msra.mxu0 %v1480
        %1549 = vmatpush.bf16.msra.mxu0 %v1476
        %1550 = vmatpush.bf16.msra.mxu0 %v1472
        %1551 = vmatpush.bf16.msra.mxu0 %v1468
        %1552 = vmatmul.bf16.gmra.mxu0 %v1509
        %v1553 = vpop.f32.mrf.mxu0
        %v1554 = vadd.f32 0.0, %v1553
        %v1555 = vpop.f32.mrf.mxu0
        %v1556 = vadd.f32 0.0, %v1555
        %1557 = vdwg.mxu0
        %1558 = vmatpush.bf16.msra.mxu0 0
        %1559 = vmatpush.bf16.msra.mxu0 0
        %1560 = vmatpush.bf16.msra.mxu0 0
        %1561 = vmatpush.bf16.msra.mxu0 0
        %1562 = vmatpush.bf16.msra.mxu0 0
        %1563 = vmatpush.bf16.msra.mxu0 0
        %1564 = vmatpush.bf16.msra.mxu0 0
        %1565 = vmatpush.bf16.msra.mxu0 %v1500
        %1566 = vmatmul.bf16.gmra.mxu0 %v1514
        %v1567 = vpop.f32.mrf.mxu0
        %v1568 = vadd.f32 %v1554, %v1567
        %v1569 = vpop.f32.mrf.mxu0
        %v1570 = vadd.f32 %v1556, %v1569
        %1571 = vdwg.mxu0
        %1572 = vmatpush.bf16.msra.mxu0 %v1497
        %1573 = vmatpush.bf16.msra.mxu0 %v1493
        %1574 = vmatpush.bf16.msra.mxu0 %v1489
        %1575 = vmatpush.bf16.msra.mxu0 %v1485
        %1576 = vmatpush.bf16.msra.mxu0 %v1481
        %1577 = vmatpush.bf16.msra.mxu0 %v1477
        %1578 = vmatpush.bf16.msra.mxu0 %v1473
        %1579 = vmatpush.bf16.msra.mxu0 %v1469
        %1580 = vmatmul.bf16.gmra.mxu0 %v1509
        %v1581 = vpop.f32.mrf.mxu0
        %v1582 = vadd.f32 0.0, %v1581
        %v1583 = vpop.f32.mrf.mxu0
        %v1584 = vadd.f32 0.0, %v1583
        %1585 = vdwg.mxu0
        %1586 = vmatpush.bf16.msra.mxu0 0
        %1587 = vmatpush.bf16.msra.mxu0 0
        %1588 = vmatpush.bf16.msra.mxu0 0
        %1589 = vmatpush.bf16.msra.mxu0 0
        %1590 = vmatpush.bf16.msra.mxu0 0
        %1591 = vmatpush.bf16.msra.mxu0 0
        %1592 = vmatpush.bf16.msra.mxu0 0
        %1593 = vmatpush.bf16.msra.mxu0 %v1501
        %1594 = vmatmul.bf16.gmra.mxu0 %v1514
        %v1595 = vpop.f32.mrf.mxu0
        %v1596 = vadd.f32 %v1582, %v1595
        %v1597 = vpop.f32.mrf.mxu0
        %v1598 = vadd.f32 %v1584, %v1597
        %1599 = vdwg.mxu0
        %1600 = vmatpush.bf16.msra.mxu0 %v1498
        %1601 = vmatpush.bf16.msra.mxu0 %v1494
        %1602 = vmatpush.bf16.msra.mxu0 %v1490
        %1603 = vmatpush.bf16.msra.mxu0 %v1486
        %1604 = vmatpush.bf16.msra.mxu0 %v1482
        %1605 = vmatpush.bf16.msra.mxu0 %v1478
        %1606 = vmatpush.bf16.msra.mxu0 %v1474
        %1607 = vmatpush.bf16.msra.mxu0 %v1470
        %1608 = vmatmul.bf16.gmra.mxu0 %v1509
        %v1609 = vpop.f32.mrf.mxu0
        %v1610 = vadd.f32 0.0, %v1609
        %v1611 = vpop.f32.mrf.mxu0
        %v1612 = vadd.f32 0.0, %v1611
        %1613 = vdwg.mxu0
        %1614 = vmatpush.bf16.msra.mxu0 0
        %1615 = vmatpush.bf16.msra.mxu0 0
        %1616 = vmatpush.bf16.msra.mxu0 0
        %1617 = vmatpush.bf16.msra.mxu0 0
        %1618 = vmatpush.bf16.msra.mxu0 0
        %1619 = vmatpush.bf16.msra.mxu0 0
        %1620 = vmatpush.bf16.msra.mxu0 0
        %1621 = vmatpush.bf16.msra.mxu0 %v1502
        %1622 = vmatmul.bf16.gmra.mxu0 %v1514
        %v1623 = vpop.f32.mrf.mxu0
        %v1624 = vadd.f32 %v1610, %v1623
        %v1625 = vpop.f32.mrf.mxu0
        %v1626 = vadd.f32 %v1612, %v1625
        %1627 = vdwg.mxu0
        %1628 = vmatpush.msra.mxu0 %v408
        %1629 = vmatpush.msra.mxu0 %v407
        %1630 = vmatpush.msra.mxu0 %v406
        %1631 = vmatpush.msra.mxu0 %v405
        %1632 = vmatpush.msra.mxu0 %v404
        %1633 = vmatpush.msra.mxu0 %v403
        %1634 = vmatpush.msra.mxu0 %v402
        %1635 = vmatpush.msra.mxu0 %v401
        %1636 = vmatpush.msra.mxu0 %v400
        %1637 = vmatpush.msra.mxu0 %v399
        %1638 = vmatpush.msra.mxu0 %v398
        %1639 = vmatpush.msra.mxu0 %v397
        %1640 = vmatpush.msra.mxu0 %v396
        %1641 = vmatpush.msra.mxu0 %v395
        %1642 = vmatpush.msra.mxu0 %v394
        %1643 = vmatpush.msra.mxu0 %v393
        %1644 = vmatmul.f32.gmra.mxu0 %v1540
        %v1645 = vpop.f32.mrf.mxu0
        %v1646 = vadd.f32 0.0, %v1645
        %1647 = vmatmul.f32.gmra.mxu0 %v1542
        %v1648 = vpop.f32.mrf.mxu0
        %v1649 = vadd.f32 0.0, %v1648
        %1650 = vdwg.mxu0
        %1651 = vmatpush.msra.mxu0 %v424
        %1652 = vmatpush.msra.mxu0 %v423
        %1653 = vmatpush.msra.mxu0 %v422
        %1654 = vmatpush.msra.mxu0 %v421
        %1655 = vmatpush.msra.mxu0 %v420
        %1656 = vmatpush.msra.mxu0 %v419
        %1657 = vmatpush.msra.mxu0 %v418
        %1658 = vmatpush.msra.mxu0 %v417
        %1659 = vmatpush.msra.mxu0 %v416
        %1660 = vmatpush.msra.mxu0 %v415
        %1661 = vmatpush.msra.mxu0 %v414
        %1662 = vmatpush.msra.mxu0 %v413
        %1663 = vmatpush.msra.mxu0 %v412
        %1664 = vmatpush.msra.mxu0 %v411
        %1665 = vmatpush.msra.mxu0 %v410
        %1666 = vmatpush.msra.mxu0 %v409
        %1667 = vmatmul.f32.gmra.mxu0 %v1568
        %v1668 = vpop.f32.mrf.mxu0
        %v1669 = vadd.f32 %v1646, %v1668
        %1670 = vmatmul.f32.gmra.mxu0 %v1570
        %v1671 = vpop.f32.mrf.mxu0
        %v1672 = vadd.f32 %v1649, %v1671
        %1673 = vdwg.mxu0
        %1674 = vmatpush.msra.mxu0 %v440
        %1675 = vmatpush.msra.mxu0 %v439
        %1676 = vmatpush.msra.mxu0 %v438
        %1677 = vmatpush.msra.mxu0 %v437
        %1678 = vmatpush.msra.mxu0 %v436
        %1679 = vmatpush.msra.mxu0 %v435
        %1680 = vmatpush.msra.mxu0 %v434
        %1681 = vmatpush.msra.mxu0 %v433
        %1682 = vmatpush.msra.mxu0 %v432
        %1683 = vmatpush.msra.mxu0 %v431
        %1684 = vmatpush.msra.mxu0 %v430
        %1685 = vmatpush.msra.mxu0 %v429
        %1686 = vmatpush.msra.mxu0 %v428
        %1687 = vmatpush.msra.mxu0 %v427
        %1688 = vmatpush.msra.mxu0 %v426
        %1689 = vmatpush.msra.mxu0 %v425
        %1690 = vmatmul.f32.gmra.mxu0 %v1596
        %v1691 = vpop.f32.mrf.mxu0
        %v1692 = vadd.f32 %v1669, %v1691
        %1693 = vmatmul.f32.gmra.mxu0 %v1598
        %v1694 = vpop.f32.mrf.mxu0
        %v1695 = vadd.f32 %v1672, %v1694
        %1696 = vdwg.mxu0
        %1697 = vmatpush.msra.mxu0 %v456
        %1698 = vmatpush.msra.mxu0 %v455
        %1699 = vmatpush.msra.mxu0 %v454
        %1700 = vmatpush.msra.mxu0 %v453
        %1701 = vmatpush.msra.mxu0 %v452
        %1702 = vmatpush.msra.mxu0 %v451
        %1703 = vmatpush.msra.mxu0 %v450
        %1704 = vmatpush.msra.mxu0 %v449
        %1705 = vmatpush.msra.mxu0 %v448
        %1706 = vmatpush.msra.mxu0 %v447
        %1707 = vmatpush.msra.mxu0 %v446
        %1708 = vmatpush.msra.mxu0 %v445
        %1709 = vmatpush.msra.mxu0 %v444
        %1710 = vmatpush.msra.mxu0 %v443
        %1711 = vmatpush.msra.mxu0 %v442
        %1712 = vmatpush.msra.mxu0 %v441
        %1713 = vmatmul.f32.gmra.mxu0 %v1624
        %v1714 = vpop.f32.mrf.mxu0
        %v1715 = vadd.f32 %v1692, %v1714
        %1716 = vmatmul.f32.gmra.mxu0 %v1626
        %v1717 = vpop.f32.mrf.mxu0
        %v1718 = vadd.f32 %v1695, %v1717
        %1719 = vdwg.mxu0
        %v1720 = vmul.f32 %v1540, %v1540
        %v1721 = vmul.f32 %v1568, %v1568
        %v1722 = vmul.f32 %v1596, %v1596
        %v1723 = vmul.f32 %v1624, %v1624
        %v1724 = vmul.f32 %v1542, %v1542
        %v1725 = vmul.f32 %v1570, %v1570
        %v1726 = vmul.f32 %v1598, %v1598
        %v1727 = vmul.f32 %v1626, %v1626
        %1728 = vmatpush.msra.mxu0 %v408
        %1729 = vmatpush.msra.mxu0 %v407
        %1730 = vmatpush.msra.mxu0 %v406
        %1731 = vmatpush.msra.mxu0 %v405
        %1732 = vmatpush.msra.mxu0 %v404
        %1733 = vmatpush.msra.mxu0 %v403
        %1734 = vmatpush.msra.mxu0 %v402
        %1735 = vmatpush.msra.mxu0 %v401
        %1736 = vmatpush.msra.mxu0 %v400
        %1737 = vmatpush.msra.mxu0 %v399
        %1738 = vmatpush.msra.mxu0 %v398
        %1739 = vmatpush.msra.mxu0 %v397
        %1740 = vmatpush.msra.mxu0 %v396
        %1741 = vmatpush.msra.mxu0 %v395
        %1742 = vmatpush.msra.mxu0 %v394
        %1743 = vmatpush.msra.mxu0 %v393
        %1744 = vmatmul.f32.gmra.mxu0 %v1720
        %v1745 = vpop.f32.mrf.mxu0
        %v1746 = vadd.f32 0.0, %v1745
        %1747 = vmatmul.f32.gmra.mxu0 %v1724
        %v1748 = vpop.f32.mrf.mxu0
        %v1749 = vadd.f32 0.0, %v1748
        %1750 = vdwg.mxu0
        %1751 = vmatpush.msra.mxu0 %v424
        %1752 = vmatpush.msra.mxu0 %v423
        %1753 = vmatpush.msra.mxu0 %v422
        %1754 = vmatpush.msra.mxu0 %v421
        %1755 = vmatpush.msra.mxu0 %v420
        %1756 = vmatpush.msra.mxu0 %v419
        %1757 = vmatpush.msra.mxu0 %v418
        %1758 = vmatpush.msra.mxu0 %v417
        %1759 = vmatpush.msra.mxu0 %v416
        %1760 = vmatpush.msra.mxu0 %v415
        %1761 = vmatpush.msra.mxu0 %v414
        %1762 = vmatpush.msra.mxu0 %v413
        %1763 = vmatpush.msra.mxu0 %v412
        %1764 = vmatpush.msra.mxu0 %v411
        %1765 = vmatpush.msra.mxu0 %v410
        %1766 = vmatpush.msra.mxu0 %v409
        %1767 = vmatmul.f32.gmra.mxu0 %v1721
        %v1768 = vpop.f32.mrf.mxu0
        %v1769 = vadd.f32 %v1746, %v1768
        %1770 = vmatmul.f32.gmra.mxu0 %v1725
        %v1771 = vpop.f32.mrf.mxu0
        %v1772 = vadd.f32 %v1749, %v1771
        %1773 = vdwg.mxu0
        %1774 = vmatpush.msra.mxu0 %v440
        %1775 = vmatpush.msra.mxu0 %v439
        %1776 = vmatpush.msra.mxu0 %v438
        %1777 = vmatpush.msra.mxu0 %v437
        %1778 = vmatpush.msra.mxu0 %v436
        %1779 = vmatpush.msra.mxu0 %v435
        %1780 = vmatpush.msra.mxu0 %v434
        %1781 = vmatpush.msra.mxu0 %v433
        %1782 = vmatpush.msra.mxu0 %v432
        %1783 = vmatpush.msra.mxu0 %v431
        %1784 = vmatpush.msra.mxu0 %v430
        %1785 = vmatpush.msra.mxu0 %v429
        %1786 = vmatpush.msra.mxu0 %v428
        %1787 = vmatpush.msra.mxu0 %v427
        %1788 = vmatpush.msra.mxu0 %v426
        %1789 = vmatpush.msra.mxu0 %v425
        %1790 = vmatmul.f32.gmra.mxu0 %v1722
        %v1791 = vpop.f32.mrf.mxu0
        %v1792 = vadd.f32 %v1769, %v1791
        %1793 = vmatmul.f32.gmra.mxu0 %v1726
        %v1794 = vpop.f32.mrf.mxu0
        %v1795 = vadd.f32 %v1772, %v1794
        %1796 = vdwg.mxu0
        %1797 = vmatpush.msra.mxu0 %v456
        %1798 = vmatpush.msra.mxu0 %v455
        %1799 = vmatpush.msra.mxu0 %v454
        %1800 = vmatpush.msra.mxu0 %v453
        %1801 = vmatpush.msra.mxu0 %v452
        %1802 = vmatpush.msra.mxu0 %v451
        %1803 = vmatpush.msra.mxu0 %v450
        %1804 = vmatpush.msra.mxu0 %v449
        %1805 = vmatpush.msra.mxu0 %v448
        %1806 = vmatpush.msra.mxu0 %v447
        %1807 = vmatpush.msra.mxu0 %v446
        %1808 = vmatpush.msra.mxu0 %v445
        %1809 = vmatpush.msra.mxu0 %v444
        %1810 = vmatpush.msra.mxu0 %v443
        %1811 = vmatpush.msra.mxu0 %v442
        %1812 = vmatpush.msra.mxu0 %v441
        %1813 = vmatmul.f32.gmra.mxu0 %v1723
        %v1814 = vpop.f32.mrf.mxu0
        %v1815 = vadd.f32 %v1792, %v1814
        %1816 = vmatmul.f32.gmra.mxu0 %v1727
        %v1817 = vpop.f32.mrf.mxu0
        %v1818 = vadd.f32 %v1795, %v1817
        %1819 = vdwg.mxu0
        %v1820 = vmul.f32 %v1715, 0.00390625
        %v1821 = vmul.f32 %v1718, 0.00390625
        %v1822 = vmul.f32 %v1815, 0.00390625
        %v1823 = vmul.f32 %v1818, 0.00390625
        %v1824 = vmul.f32 %v1820, %v1820
        %v1825 = vmul.f32 %v1821, %v1821
        %v1826 = vsub.f32 %v1822, %v1824
        %v1827 = vsub.f32 %v1823, %v1825
        %v1828 = vmax.f32 %v1826, 0.0
        %v1829 = vmax.f32 %v1827, 0.0
        %v1830 = vadd.f32 %v1828, 1e-05
        %v1831 = vadd.f32 %v1829, 1e-05
        %v1832 = vrsqrt.pop %v1830
        %v1833 = vmul.f32 %v1832, %v1830
        %v1834 = vmul.f32 %v1833, %v1832
        %v1835 = vmul.f32 0.5, %v1834
        %v1836 = vsub.f32 1.5, %v1835
        %v1837 = vmul.f32 %v1832, %v1836
        %vm1838 = vweird.f32 %v1830
        %vm1839 = vweird.f32 %v1832
        %vm1840 = vmor %vm1838, %vm1839
        %v1841 = vsel %vm1840, %v1832, %v1837
        %v1842 = vrsqrt.pop %v1831
        %v1843 = vmul.f32 %v1842, %v1831
        %v1844 = vmul.f32 %v1843, %v1842
        %v1845 = vmul.f32 0.5, %v1844
        %v1846 = vsub.f32 1.5, %v1845
        %v1847 = vmul.f32 %v1842, %v1846
        %vm1848 = vweird.f32 %v1831
        %vm1849 = vweird.f32 %v1842
        %vm1850 = vmor %vm1848, %vm1849
        %v1851 = vsel %vm1850, %v1842, %v1847
        %1852 = vst [vmem:[#allocation1] ss:$4 sm:$0xff] %v457
        %v1853 = vld.sshfl [vmem:[#allocation1] sm:$0xff pattern:$0x73625140]
        %v1854 = vld.sshfl [vmem:[#allocation1 + $0x8] sm:$0xff pattern:$0x73625140]
        %v1855 = vld.sshfl [vmem:[#allocation1 + $0x10] sm:$0xff pattern:$0x73625140]
        %v1856 = vld.sshfl [vmem:[#allocation1 + $0x18] sm:$0xff pattern:$0x73625140]
        %v1858 = vsel %vm962, %v1841, 0
        %v1861 = vsel %vm962, %v1851, 0
        %v1863 = vsel %vm969, %v1853, 0
        %v1865 = vsel %vm969, %v1854, 0
        %v1867 = vsel %vm969, %v1855, 0
        %v1869 = vsel %vm969, %v1856, 0
        %1871 = vmatpush.msra.mxu0 0.0
        %1872 = vmatpush.msra.mxu0 0.0
        %1873 = vmatpush.msra.mxu0 0.0
        %1874 = vmatpush.msra.mxu0 0.0
        %1875 = vmatpush.msra.mxu0 0.0
        %1876 = vmatpush.msra.mxu0 0.0
        %1877 = vmatpush.msra.mxu0 0.0
        %1878 = vmatpush.msra.mxu0 0.0
        %1879 = vmatpush.msra.mxu0 0.0
        %1880 = vmatpush.msra.mxu0 0.0
        %1881 = vmatpush.msra.mxu0 0.0
        %1882 = vmatpush.msra.mxu0 0.0
        %1883 = vmatpush.msra.mxu0 0.0
        %1884 = vmatpush.msra.mxu0 0.0
        %1885 = vmatpush.msra.mxu0 0.0
        %1886 = vmatpush.msra.mxu0 %v1863
        %1887 = vmatmul.f32.gmra.mxu0 %v1858
        %v1888 = vpop.f32.mrf.mxu0
        %v1889 = vadd.f32 0.0, %v1888
        %1890 = vmatmul.f32.gmra.mxu0 %v1861
        %v1891 = vpop.f32.mrf.mxu0
        %v1892 = vadd.f32 0.0, %v1891
        %1893 = vdwg.mxu0
        %1894 = vmatpush.msra.mxu0 0.0
        %1895 = vmatpush.msra.mxu0 0.0
        %1896 = vmatpush.msra.mxu0 0.0
        %1897 = vmatpush.msra.mxu0 0.0
        %1898 = vmatpush.msra.mxu0 0.0
        %1899 = vmatpush.msra.mxu0 0.0
        %1900 = vmatpush.msra.mxu0 0.0
        %1901 = vmatpush.msra.mxu0 0.0
        %1902 = vmatpush.msra.mxu0 0.0
        %1903 = vmatpush.msra.mxu0 0.0
        %1904 = vmatpush.msra.mxu0 0.0
        %1905 = vmatpush.msra.mxu0 0.0
        %1906 = vmatpush.msra.mxu0 0.0
        %1907 = vmatpush.msra.mxu0 0.0
        %1908 = vmatpush.msra.mxu0 0.0
        %1909 = vmatpush.msra.mxu0 %v1865
        %1910 = vmatmul.f32.gmra.mxu0 %v1858
        %v1911 = vpop.f32.mrf.mxu0
        %v1912 = vadd.f32 0.0, %v1911
        %1913 = vmatmul.f32.gmra.mxu0 %v1861
        %v1914 = vpop.f32.mrf.mxu0
        %v1915 = vadd.f32 0.0, %v1914
        %1916 = vdwg.mxu0
        %1917 = vmatpush.msra.mxu0 0.0
        %1918 = vmatpush.msra.mxu0 0.0
        %1919 = vmatpush.msra.mxu0 0.0
        %1920 = vmatpush.msra.mxu0 0.0
        %1921 = vmatpush.msra.mxu0 0.0
        %1922 = vmatpush.msra.mxu0 0.0
        %1923 = vmatpush.msra.mxu0 0.0
        %1924 = vmatpush.msra.mxu0 0.0
        %1925 = vmatpush.msra.mxu0 0.0
        %1926 = vmatpush.msra.mxu0 0.0
        %1927 = vmatpush.msra.mxu0 0.0
        %1928 = vmatpush.msra.mxu0 0.0
        %1929 = vmatpush.msra.mxu0 0.0
        %1930 = vmatpush.msra.mxu0 0.0
        %1931 = vmatpush.msra.mxu0 0.0
        %1932 = vmatpush.msra.mxu0 %v1867
        %1933 = vmatmul.f32.gmra.mxu0 %v1858
        %v1934 = vpop.f32.mrf.mxu0
        %v1935 = vadd.f32 0.0, %v1934
        %1936 = vmatmul.f32.gmra.mxu0 %v1861
        %v1937 = vpop.f32.mrf.mxu0
        %v1938 = vadd.f32 0.0, %v1937
        %1939 = vdwg.mxu0
        %1940 = vmatpush.msra.mxu0 0.0
        %1941 = vmatpush.msra.mxu0 0.0
        %1942 = vmatpush.msra.mxu0 0.0
        %1943 = vmatpush.msra.mxu0 0.0
        %1944 = vmatpush.msra.mxu0 0.0
        %1945 = vmatpush.msra.mxu0 0.0
        %1946 = vmatpush.msra.mxu0 0.0
        %1947 = vmatpush.msra.mxu0 0.0
        %1948 = vmatpush.msra.mxu0 0.0
        %1949 = vmatpush.msra.mxu0 0.0
        %1950 = vmatpush.msra.mxu0 0.0
        %1951 = vmatpush.msra.mxu0 0.0
        %1952 = vmatpush.msra.mxu0 0.0
        %1953 = vmatpush.msra.mxu0 0.0
        %1954 = vmatpush.msra.mxu0 0.0
        %1955 = vmatpush.msra.mxu0 %v1869
        %1956 = vmatmul.f32.gmra.mxu0 %v1858
        %v1957 = vpop.f32.mrf.mxu0
        %v1958 = vadd.f32 0.0, %v1957
        %1959 = vmatmul.f32.gmra.mxu0 %v1861
        %v1960 = vpop.f32.mrf.mxu0
        %v1961 = vadd.f32 0.0, %v1960
        %1962 = vdwg.mxu0
        %v1963 = vsub.f32 0.0, %v1820
        %v1964 = vsub.f32 0.0, %v1821
        %v1965 = vmul.f32 %v1963, %v1841
        %v1966 = vmul.f32 %v1964, %v1851
        %1967 = vst [vmem:[#allocation1] ss:$4 sm:$0xff] %v457
        %v1968 = vld.sshfl [vmem:[#allocation1] sm:$0xff pattern:$0x73625140]
        %v1969 = vld.sshfl [vmem:[#allocation1 + $0x8] sm:$0xff pattern:$0x73625140]
        %v1970 = vld.sshfl [vmem:[#allocation1 + $0x10] sm:$0xff pattern:$0x73625140]
        %v1971 = vld.sshfl [vmem:[#allocation1 + $0x18] sm:$0xff pattern:$0x73625140]
        %v1973 = vsel %vm962, %v1965, 0
        %v1976 = vsel %vm962, %v1966, 0
        %v1978 = vsel %vm969, %v1968, 0
        %v1980 = vsel %vm969, %v1969, 0
        %v1982 = vsel %vm969, %v1970, 0
        %v1984 = vsel %vm969, %v1971, 0
        %1986 = vmatpush.msra.mxu0 0.0
        %1987 = vmatpush.msra.mxu0 0.0
        %1988 = vmatpush.msra.mxu0 0.0
        %1989 = vmatpush.msra.mxu0 0.0
        %1990 = vmatpush.msra.mxu0 0.0
        %1991 = vmatpush.msra.mxu0 0.0
        %1992 = vmatpush.msra.mxu0 0.0
        %1993 = vmatpush.msra.mxu0 0.0
        %1994 = vmatpush.msra.mxu0 0.0
        %1995 = vmatpush.msra.mxu0 0.0
        %1996 = vmatpush.msra.mxu0 0.0
        %1997 = vmatpush.msra.mxu0 0.0
        %1998 = vmatpush.msra.mxu0 0.0
        %1999 = vmatpush.msra.mxu0 0.0
        %2000 = vmatpush.msra.mxu0 0.0
        %2001 = vmatpush.msra.mxu0 %v1978
        %2002 = vmatmul.f32.gmra.mxu0 %v1973
        %v2003 = vpop.f32.mrf.mxu0
        %v2004 = vadd.f32 0.0, %v2003
        %2005 = vmatmul.f32.gmra.mxu0 %v1976
        %v2006 = vpop.f32.mrf.mxu0
        %v2007 = vadd.f32 0.0, %v2006
        %2008 = vdwg.mxu0
        %2009 = vmatpush.msra.mxu0 0.0
        %2010 = vmatpush.msra.mxu0 0.0
        %2011 = vmatpush.msra.mxu0 0.0
        %2012 = vmatpush.msra.mxu0 0.0
        %2013 = vmatpush.msra.mxu0 0.0
        %2014 = vmatpush.msra.mxu0 0.0
        %2015 = vmatpush.msra.mxu0 0.0
        %2016 = vmatpush.msra.mxu0 0.0
        %2017 = vmatpush.msra.mxu0 0.0
        %2018 = vmatpush.msra.mxu0 0.0
        %2019 = vmatpush.msra.mxu0 0.0
        %2020 = vmatpush.msra.mxu0 0.0
        %2021 = vmatpush.msra.mxu0 0.0
        %2022 = vmatpush.msra.mxu0 0.0
        %2023 = vmatpush.msra.mxu0 0.0
        %2024 = vmatpush.msra.mxu0 %v1980
        %2025 = vmatmul.f32.gmra.mxu0 %v1973
        %v2026 = vpop.f32.mrf.mxu0
        %v2027 = vadd.f32 0.0, %v2026
        %2028 = vmatmul.f32.gmra.mxu0 %v1976
        %v2029 = vpop.f32.mrf.mxu0
        %v2030 = vadd.f32 0.0, %v2029
        %2031 = vdwg.mxu0
        %2032 = vmatpush.msra.mxu0 0.0
        %2033 = vmatpush.msra.mxu0 0.0
        %2034 = vmatpush.msra.mxu0 0.0
        %2035 = vmatpush.msra.mxu0 0.0
        %2036 = vmatpush.msra.mxu0 0.0
        %2037 = vmatpush.msra.mxu0 0.0
        %2038 = vmatpush.msra.mxu0 0.0
        %2039 = vmatpush.msra.mxu0 0.0
        %2040 = vmatpush.msra.mxu0 0.0
        %2041 = vmatpush.msra.mxu0 0.0
        %2042 = vmatpush.msra.mxu0 0.0
        %2043 = vmatpush.msra.mxu0 0.0
        %2044 = vmatpush.msra.mxu0 0.0
        %2045 = vmatpush.msra.mxu0 0.0
        %2046 = vmatpush.msra.mxu0 0.0
        %2047 = vmatpush.msra.mxu0 %v1982
        %2048 = vmatmul.f32.gmra.mxu0 %v1973
        %v2049 = vpop.f32.mrf.mxu0
        %v2050 = vadd.f32 0.0, %v2049
        %2051 = vmatmul.f32.gmra.mxu0 %v1976
        %v2052 = vpop.f32.mrf.mxu0
        %v2053 = vadd.f32 0.0, %v2052
        %2054 = vdwg.mxu0
        %2055 = vmatpush.msra.mxu0 0.0
        %2056 = vmatpush.msra.mxu0 0.0
        %2057 = vmatpush.msra.mxu0 0.0
        %2058 = vmatpush.msra.mxu0 0.0
        %2059 = vmatpush.msra.mxu0 0.0
        %2060 = vmatpush.msra.mxu0 0.0
        %2061 = vmatpush.msra.mxu0 0.0
        %2062 = vmatpush.msra.mxu0 0.0
        %2063 = vmatpush.msra.mxu0 0.0
        %2064 = vmatpush.msra.mxu0 0.0
        %2065 = vmatpush.msra.mxu0 0.0
        %2066 = vmatpush.msra.mxu0 0.0
        %2067 = vmatpush.msra.mxu0 0.0
        %2068 = vmatpush.msra.mxu0 0.0
        %2069 = vmatpush.msra.mxu0 0.0
        %2070 = vmatpush.msra.mxu0 %v1984
        %2071 = vmatmul.f32.gmra.mxu0 %v1973
        %v2072 = vpop.f32.mrf.mxu0
        %v2073 = vadd.f32 0.0, %v2072
        %2074 = vmatmul.f32.gmra.mxu0 %v1976
        %v2075 = vpop.f32.mrf.mxu0
        %v2076 = vadd.f32 0.0, %v2075
        %2077 = vdwg.mxu0
        %v2078 = vmul.f32 %v1540, %v1889
        %v2079 = vmul.f32 %v1568, %v1912
        %v2080 = vmul.f32 %v1596, %v1935
        %v2081 = vmul.f32 %v1624, %v1958
        %v2082 = vmul.f32 %v1542, %v1892
        %v2083 = vmul.f32 %v1570, %v1915
        %v2084 = vmul.f32 %v1598, %v1938
        %v2085 = vmul.f32 %v1626, %v1961
        %v2086 = vadd.f32 %v2078, %v2004
        %v2087 = vadd.f32 %v2079, %v2027
        %v2088 = vadd.f32 %v2080, %v2050
        %v2089 = vadd.f32 %v2081, %v2073
        %v2090 = vadd.f32 %v2082, %v2007
        %v2091 = vadd.f32 %v2083, %v2030
        %v2092 = vadd.f32 %v2084, %v2053
        %v2093 = vadd.f32 %v2085, %v2076
        %v2094 = vmax.f32 %v2086, 0.0
        %v2095 = vmax.f32 %v2087, 0.0
        %v2096 = vmax.f32 %v2088, 0.0
        %v2097 = vmax.f32 %v2089, 0.0
        %v2098 = vmax.f32 %v2090, 0.0
        %v2099 = vmax.f32 %v2091, 0.0
        %v2100 = vmax.f32 %v2092, 0.0
        %v2101 = vmax.f32 %v2093, 0.0
        %2102 = vrot.lane.b32.xlu0 %v2094, 17
        %v2103 = vpop.permute.xlu0 %2102
        %2104 = vrot.lane.b32.xlu0 %v2098, 17
        %v2105 = vpop.permute.xlu0 %2104
        %2106 = vrot.lane.b32.xlu0 %v2095, 17
        %v2107 = vpop.permute.xlu0 %2106
        %2108 = vrot.lane.b32.xlu0 %v2099, 17
        %v2109 = vpop.permute.xlu0 %2108
        %2110 = vrot.lane.b32.xlu0 %v2096, 17
        %v2111 = vpop.permute.xlu0 %2110
        %2112 = vrot.lane.b32.xlu0 %v2100, 17
        %v2113 = vpop.permute.xlu0 %2112
        %2114 = vrot.lane.b32.xlu0 %v2097, 17
        %v2115 = vpop.permute.xlu0 %2114
        %2116 = vrot.lane.b32.xlu0 %v2101, 17
        %v2117 = vpop.permute.xlu0 %2116
        %v2118 = vsel %vm472, %v2111, %v2115
        %v2119 = vsel %vm472, %v2113, %v2117
        %v2120 = vsel %vm472, %v2107, %v2111
        %v2121 = vsel %vm472, %v2109, %v2113
        %v2122 = vsel %vm472, %v2103, %v2107
        %v2123 = vsel %vm472, %v2105, %v2109
        %v2124 = vsel %vm472, %v2115, %v2103
        %v2125 = vsel %vm472, %v2117, %v2105
        %v2126 = vmul.f32 %v2124, %v477
        %v2127 = vmul.f32 %v2122, %v478
        %v2128 = vmul.f32 %v2120, %v479
        %v2129 = vmul.f32 %v2118, %v480
        %v2130 = vmul.f32 %v2125, %v477
        %v2131 = vmul.f32 %v2123, %v478
        %v2132 = vmul.f32 %v2121, %v479
        %v2133 = vmul.f32 %v2119, %v480
        %2134 = vrot.lane.b32.xlu0 %v2094, 16
        %v2135 = vpop.permute.xlu0 %2134
        %2136 = vrot.lane.b32.xlu0 %v2098, 16
        %v2137 = vpop.permute.xlu0 %2136
        %2138 = vrot.lane.b32.xlu0 %v2095, 16
        %v2139 = vpop.permute.xlu0 %2138
        %2140 = vrot.lane.b32.xlu0 %v2099, 16
        %v2141 = vpop.permute.xlu0 %2140
        %2142 = vrot.lane.b32.xlu0 %v2096, 16
        %v2143 = vpop.permute.xlu0 %2142
        %2144 = vrot.lane.b32.xlu0 %v2100, 16
        %v2145 = vpop.permute.xlu0 %2144
        %2146 = vrot.lane.b32.xlu0 %v2097, 16
        %v2147 = vpop.permute.xlu0 %2146
        %2148 = vrot.lane.b32.xlu0 %v2101, 16
        %v2149 = vpop.permute.xlu0 %2148
        %v2150 = vsel %vm493, %v2143, %v2147
        %v2151 = vsel %vm493, %v2145, %v2149
        %v2152 = vsel %vm493, %v2139, %v2143
        %v2153 = vsel %vm493, %v2141, %v2145
        %v2154 = vsel %vm493, %v2135, %v2139
        %v2155 = vsel %vm493, %v2137, %v2141
        %v2156 = vsel %vm493, %v2147, %v2135
        %v2157 = vsel %vm493, %v2149, %v2137
        %v2158 = vmul.f32 %v2156, %v498
        %v2159 = vmul.f32 %v2154, %v499
        %v2160 = vmul.f32 %v2152, %v500
        %v2161 = vmul.f32 %v2150, %v501
        %v2162 = vmul.f32 %v2157, %v498
        %v2163 = vmul.f32 %v2155, %v499
        %v2164 = vmul.f32 %v2153, %v500
        %v2165 = vmul.f32 %v2151, %v501
        %2166 = vrot.lane.b32.xlu0 %v2094, 15
        %v2167 = vpop.permute.xlu0 %2166
        %2168 = vrot.lane.b32.xlu0 %v2098, 15
        %v2169 = vpop.permute.xlu0 %2168
        %2170 = vrot.lane.b32.xlu0 %v2095, 15
        %v2171 = vpop.permute.xlu0 %2170
        %2172 = vrot.lane.b32.xlu0 %v2099, 15
        %v2173 = vpop.permute.xlu0 %2172
        %2174 = vrot.lane.b32.xlu0 %v2096, 15
        %v2175 = vpop.permute.xlu0 %2174
        %2176 = vrot.lane.b32.xlu0 %v2100, 15
        %v2177 = vpop.permute.xlu0 %2176
        %2178 = vrot.lane.b32.xlu0 %v2097, 15
        %v2179 = vpop.permute.xlu0 %2178
        %2180 = vrot.lane.b32.xlu0 %v2101, 15
        %v2181 = vpop.permute.xlu0 %2180
        %v2182 = vsel %vm514, %v2175, %v2179
        %v2183 = vsel %vm514, %v2177, %v2181
        %v2184 = vsel %vm514, %v2171, %v2175
        %v2185 = vsel %vm514, %v2173, %v2177
        %v2186 = vsel %vm514, %v2167, %v2171
        %v2187 = vsel %vm514, %v2169, %v2173
        %v2188 = vsel %vm514, %v2179, %v2167
        %v2189 = vsel %vm514, %v2181, %v2169
        %v2190 = vmul.f32 %v2188, %v519
        %v2191 = vmul.f32 %v2186, %v520
        %v2192 = vmul.f32 %v2184, %v521
        %v2193 = vmul.f32 %v2182, %v522
        %v2194 = vmul.f32 %v2189, %v519
        %v2195 = vmul.f32 %v2187, %v520
        %v2196 = vmul.f32 %v2185, %v521
        %v2197 = vmul.f32 %v2183, %v522
        %2198 = vrot.lane.b32.xlu0 %v2094, 1
        %v2199 = vpop.permute.xlu0 %2198
        %2200 = vrot.lane.b32.xlu0 %v2098, 1
        %v2201 = vpop.permute.xlu0 %2200
        %2202 = vrot.lane.b32.xlu0 %v2095, 1
        %v2203 = vpop.permute.xlu0 %2202
        %2204 = vrot.lane.b32.xlu0 %v2099, 1
        %v2205 = vpop.permute.xlu0 %2204
        %2206 = vrot.lane.b32.xlu0 %v2096, 1
        %v2207 = vpop.permute.xlu0 %2206
        %2208 = vrot.lane.b32.xlu0 %v2100, 1
        %v2209 = vpop.permute.xlu0 %2208
        %2210 = vrot.lane.b32.xlu0 %v2097, 1
        %v2211 = vpop.permute.xlu0 %2210
        %2212 = vrot.lane.b32.xlu0 %v2101, 1
        %v2213 = vpop.permute.xlu0 %2212
        %v2214 = vsel %vm535, %v2207, %v2211
        %v2215 = vsel %vm535, %v2209, %v2213
        %v2216 = vsel %vm535, %v2203, %v2207
        %v2217 = vsel %vm535, %v2205, %v2209
        %v2218 = vsel %vm535, %v2199, %v2203
        %v2219 = vsel %vm535, %v2201, %v2205
        %v2220 = vsel %vm535, %v2211, %v2199
        %v2221 = vsel %vm535, %v2213, %v2201
        %v2222 = vmul.f32 %v2220, %v540
        %v2223 = vmul.f32 %v2218, %v541
        %v2224 = vmul.f32 %v2216, %v542
        %v2225 = vmul.f32 %v2214, %v543
        %v2226 = vmul.f32 %v2221, %v540
        %v2227 = vmul.f32 %v2219, %v541
        %v2228 = vmul.f32 %v2217, %v542
        %v2229 = vmul.f32 %v2215, %v543
        %2230 = vrot.lane.b32.xlu0 %v2094, 127
        %v2231 = vpop.permute.xlu0 %2230
        %2232 = vrot.lane.b32.xlu0 %v2098, 127
        %v2233 = vpop.permute.xlu0 %2232
        %2234 = vrot.lane.b32.xlu0 %v2095, 127
        %v2235 = vpop.permute.xlu0 %2234
        %2236 = vrot.lane.b32.xlu0 %v2099, 127
        %v2237 = vpop.permute.xlu0 %2236
        %2238 = vrot.lane.b32.xlu0 %v2096, 127
        %v2239 = vpop.permute.xlu0 %2238
        %2240 = vrot.lane.b32.xlu0 %v2100, 127
        %v2241 = vpop.permute.xlu0 %2240
        %2242 = vrot.lane.b32.xlu0 %v2097, 127
        %v2243 = vpop.permute.xlu0 %2242
        %2244 = vrot.lane.b32.xlu0 %v2101, 127
        %v2245 = vpop.permute.xlu0 %2244
        %v2246 = vsel %vm556, %v2239, %v2243
        %v2247 = vsel %vm556, %v2241, %v2245
        %v2248 = vsel %vm556, %v2235, %v2239
        %v2249 = vsel %vm556, %v2237, %v2241
        %v2250 = vsel %vm556, %v2231, %v2235
        %v2251 = vsel %vm556, %v2233, %v2237
        %v2252 = vsel %vm556, %v2243, %v2231
        %v2253 = vsel %vm556, %v2245, %v2233
        %v2254 = vmul.f32 %v2250, %v561
        %v2255 = vmul.f32 %v2248, %v562
        %v2256 = vmul.f32 %v2246, %v563
        %v2257 = vmul.f32 %v2252, %v564
        %v2258 = vmul.f32 %v2251, %v561
        %v2259 = vmul.f32 %v2249, %v562
        %v2260 = vmul.f32 %v2247, %v563
        %v2261 = vmul.f32 %v2253, %v564
        %2262 = vrot.lane.b32.xlu0 %v2094, 113
        %v2263 = vpop.permute.xlu0 %2262
        %2264 = vrot.lane.b32.xlu0 %v2098, 113
        %v2265 = vpop.permute.xlu0 %2264
        %2266 = vrot.lane.b32.xlu0 %v2095, 113
        %v2267 = vpop.permute.xlu0 %2266
        %2268 = vrot.lane.b32.xlu0 %v2099, 113
        %v2269 = vpop.permute.xlu0 %2268
        %2270 = vrot.lane.b32.xlu0 %v2096, 113
        %v2271 = vpop.permute.xlu0 %2270
        %2272 = vrot.lane.b32.xlu0 %v2100, 113
        %v2273 = vpop.permute.xlu0 %2272
        %2274 = vrot.lane.b32.xlu0 %v2097, 113
        %v2275 = vpop.permute.xlu0 %2274
        %2276 = vrot.lane.b32.xlu0 %v2101, 113
        %v2277 = vpop.permute.xlu0 %2276
        %v2278 = vsel %vm577, %v2271, %v2275
        %v2279 = vsel %vm577, %v2273, %v2277
        %v2280 = vsel %vm577, %v2267, %v2271
        %v2281 = vsel %vm577, %v2269, %v2273
        %v2282 = vsel %vm577, %v2263, %v2267
        %v2283 = vsel %vm577, %v2265, %v2269
        %v2284 = vsel %vm577, %v2275, %v2263
        %v2285 = vsel %vm577, %v2277, %v2265
        %v2286 = vmul.f32 %v2282, %v582
        %v2287 = vmul.f32 %v2280, %v583
        %v2288 = vmul.f32 %v2278, %v584
        %v2289 = vmul.f32 %v2284, %v585
        %v2290 = vmul.f32 %v2283, %v582
        %v2291 = vmul.f32 %v2281, %v583
        %v2292 = vmul.f32 %v2279, %v584
        %v2293 = vmul.f32 %v2285, %v585
        %2294 = vrot.lane.b32.xlu0 %v2094, 112
        %v2295 = vpop.permute.xlu0 %2294
        %2296 = vrot.lane.b32.xlu0 %v2098, 112
        %v2297 = vpop.permute.xlu0 %2296
        %2298 = vrot.lane.b32.xlu0 %v2095, 112
        %v2299 = vpop.permute.xlu0 %2298
        %2300 = vrot.lane.b32.xlu0 %v2099, 112
        %v2301 = vpop.permute.xlu0 %2300
        %2302 = vrot.lane.b32.xlu0 %v2096, 112
        %v2303 = vpop.permute.xlu0 %2302
        %2304 = vrot.lane.b32.xlu0 %v2100, 112
        %v2305 = vpop.permute.xlu0 %2304
        %2306 = vrot.lane.b32.xlu0 %v2097, 112
        %v2307 = vpop.permute.xlu0 %2306
        %2308 = vrot.lane.b32.xlu0 %v2101, 112
        %v2309 = vpop.permute.xlu0 %2308
        %v2310 = vsel %vm598, %v2303, %v2307
        %v2311 = vsel %vm598, %v2305, %v2309
        %v2312 = vsel %vm598, %v2299, %v2303
        %v2313 = vsel %vm598, %v2301, %v2305
        %v2314 = vsel %vm598, %v2295, %v2299
        %v2315 = vsel %vm598, %v2297, %v2301
        %v2316 = vsel %vm598, %v2307, %v2295
        %v2317 = vsel %vm598, %v2309, %v2297
        %v2318 = vmul.f32 %v2314, %v603
        %v2319 = vmul.f32 %v2312, %v604
        %v2320 = vmul.f32 %v2310, %v605
        %v2321 = vmul.f32 %v2316, %v606
        %v2322 = vmul.f32 %v2315, %v603
        %v2323 = vmul.f32 %v2313, %v604
        %v2324 = vmul.f32 %v2311, %v605
        %v2325 = vmul.f32 %v2317, %v606
        %2326 = vrot.lane.b32.xlu0 %v2094, 111
        %v2327 = vpop.permute.xlu0 %2326
        %2328 = vrot.lane.b32.xlu0 %v2098, 111
        %v2329 = vpop.permute.xlu0 %2328
        %2330 = vrot.lane.b32.xlu0 %v2095, 111
        %v2331 = vpop.permute.xlu0 %2330
        %2332 = vrot.lane.b32.xlu0 %v2099, 111
        %v2333 = vpop.permute.xlu0 %2332
        %2334 = vrot.lane.b32.xlu0 %v2096, 111
        %v2335 = vpop.permute.xlu0 %2334
        %2336 = vrot.lane.b32.xlu0 %v2100, 111
        %v2337 = vpop.permute.xlu0 %2336
        %2338 = vrot.lane.b32.xlu0 %v2097, 111
        %v2339 = vpop.permute.xlu0 %2338
        %2340 = vrot.lane.b32.xlu0 %v2101, 111
        %v2341 = vpop.permute.xlu0 %2340
        %v2342 = vsel %vm619, %v2335, %v2339
        %v2343 = vsel %vm619, %v2337, %v2341
        %v2344 = vsel %vm619, %v2331, %v2335
        %v2345 = vsel %vm619, %v2333, %v2337
        %v2346 = vsel %vm619, %v2327, %v2331
        %v2347 = vsel %vm619, %v2329, %v2333
        %v2348 = vsel %vm619, %v2339, %v2327
        %v2349 = vsel %vm619, %v2341, %v2329
        %v2350 = vmul.f32 %v2346, %v624
        %v2351 = vmul.f32 %v2344, %v625
        %v2352 = vmul.f32 %v2342, %v626
        %v2353 = vmul.f32 %v2348, %v627
        %v2354 = vmul.f32 %v2347, %v624
        %v2355 = vmul.f32 %v2345, %v625
        %v2356 = vmul.f32 %v2343, %v626
        %v2357 = vmul.f32 %v2349, %v627
        %v2358 = vld [vmem:[%s6] sm:$0xff]
        %v2359 = vld [vmem:[%s6 + $0x8] sm:$0xff]
        %v2360 = vpack.c.bf16 %v2130, %v2126
        %v2361 = vpack.c.bf16 %v2131, %v2127
        %v2362 = vpack.c.bf16 %v2132, %v2128
        %v2363 = vpack.c.bf16 %v2133, %v2129
        %v2364 = vpack.c.bf16 %v2162, %v2158
        %v2365 = vpack.c.bf16 %v2163, %v2159
        %v2366 = vpack.c.bf16 %v2164, %v2160
        %v2367 = vpack.c.bf16 %v2165, %v2161
        %v2368 = vpack.c.bf16 %v2194, %v2190
        %v2369 = vpack.c.bf16 %v2195, %v2191
        %v2370 = vpack.c.bf16 %v2196, %v2192
        %v2371 = vpack.c.bf16 %v2197, %v2193
        %v2372 = vpack.c.bf16 %v2226, %v2222
        %v2373 = vpack.c.bf16 %v2227, %v2223
        %v2374 = vpack.c.bf16 %v2228, %v2224
        %v2375 = vpack.c.bf16 %v2229, %v2225
        %v2376 = vpack.c.bf16 %v2098, %v2094
        %v2377 = vpack.c.bf16 %v2099, %v2095
        %v2378 = vpack.c.bf16 %v2100, %v2096
        %v2379 = vpack.c.bf16 %v2101, %v2097
        %v2380 = vpack.c.bf16 %v2258, %v2254
        %v2381 = vpack.c.bf16 %v2259, %v2255
        %v2382 = vpack.c.bf16 %v2260, %v2256
        %v2383 = vpack.c.bf16 %v2261, %v2257
        %v2384 = vpack.c.bf16 %v2290, %v2286
        %v2385 = vpack.c.bf16 %v2291, %v2287
        %v2386 = vpack.c.bf16 %v2292, %v2288
        %v2387 = vpack.c.bf16 %v2293, %v2289
        %v2388 = vpack.c.bf16 %v2322, %v2318
        %v2389 = vpack.c.bf16 %v2323, %v2319
        %v2390 = vpack.c.bf16 %v2324, %v2320
        %v2391 = vpack.c.bf16 %v2325, %v2321
        %v2392 = vpack.c.bf16 %v2354, %v2350
        %v2393 = vpack.c.bf16 %v2355, %v2351
        %v2394 = vpack.c.bf16 %v2356, %v2352
        %v2395 = vpack.c.bf16 %v2357, %v2353
        %v2398 = vunpack.c.l.b16 %v2358
        %v2399 = vunpack.c.h.b16 %v2358
        %v2400 = vunpack.c.l.b16 %v2359
        %v2401 = vunpack.c.h.b16 %v2359
        %v2402 = vpack.c.b16 %v2400, %v2398
        %v2403 = vpack.c.b16 %v2401, %v2399
        %v2406 = vsel %vm1512, %v2403, 0
        %2408 = vmatpush.bf16.msra.mxu0 %v2388
        %2409 = vmatpush.bf16.msra.mxu0 %v2384
        %2410 = vmatpush.bf16.msra.mxu0 %v2380
        %2411 = vmatpush.bf16.msra.mxu0 %v2376
        %2412 = vmatpush.bf16.msra.mxu0 %v2372
        %2413 = vmatpush.bf16.msra.mxu0 %v2368
        %2414 = vmatpush.bf16.msra.mxu0 %v2364
        %2415 = vmatpush.bf16.msra.mxu0 %v2360
        %2416 = vmatmul.bf16.gmra.mxu0 %v2402
        %v2417 = vpop.f32.mrf.mxu0
        %v2418 = vadd.f32 0.0, %v2417
        %v2419 = vpop.f32.mrf.mxu0
        %v2420 = vadd.f32 0.0, %v2419
        %2421 = vdwg.mxu0
        %2422 = vmatpush.bf16.msra.mxu0 0
        %2423 = vmatpush.bf16.msra.mxu0 0
        %2424 = vmatpush.bf16.msra.mxu0 0
        %2425 = vmatpush.bf16.msra.mxu0 0
        %2426 = vmatpush.bf16.msra.mxu0 0
        %2427 = vmatpush.bf16.msra.mxu0 0
        %2428 = vmatpush.bf16.msra.mxu0 0
        %2429 = vmatpush.bf16.msra.mxu0 %v2392
        %2430 = vmatmul.bf16.gmra.mxu0 %v2406
        %v2431 = vpop.f32.mrf.mxu0
        %v2432 = vadd.f32 %v2418, %v2431
        %v2433 = vpop.f32.mrf.mxu0
        %v2434 = vadd.f32 %v2420, %v2433
        %2435 = vdwg.mxu0
        %2436 = vmatpush.bf16.msra.mxu0 %v2389
        %2437 = vmatpush.bf16.msra.mxu0 %v2385
        %2438 = vmatpush.bf16.msra.mxu0 %v2381
        %2439 = vmatpush.bf16.msra.mxu0 %v2377
        %2440 = vmatpush.bf16.msra.mxu0 %v2373
        %2441 = vmatpush.bf16.msra.mxu0 %v2369
        %2442 = vmatpush.bf16.msra.mxu0 %v2365
        %2443 = vmatpush.bf16.msra.mxu0 %v2361
        %2444 = vmatmul.bf16.gmra.mxu0 %v2402
        %v2445 = vpop.f32.mrf.mxu0
        %v2446 = vadd.f32 0.0, %v2445
        %v2447 = vpop.f32.mrf.mxu0
        %v2448 = vadd.f32 0.0, %v2447
        %2449 = vdwg.mxu0
        %2450 = vmatpush.bf16.msra.mxu0 0
        %2451 = vmatpush.bf16.msra.mxu0 0
        %2452 = vmatpush.bf16.msra.mxu0 0
        %2453 = vmatpush.bf16.msra.mxu0 0
        %2454 = vmatpush.bf16.msra.mxu0 0
        %2455 = vmatpush.bf16.msra.mxu0 0
        %2456 = vmatpush.bf16.msra.mxu0 0
        %2457 = vmatpush.bf16.msra.mxu0 %v2393
        %2458 = vmatmul.bf16.gmra.mxu0 %v2406
        %v2459 = vpop.f32.mrf.mxu0
        %v2460 = vadd.f32 %v2446, %v2459
        %v2461 = vpop.f32.mrf.mxu0
        %v2462 = vadd.f32 %v2448, %v2461
        %2463 = vdwg.mxu0
        %2464 = vmatpush.bf16.msra.mxu0 %v2390
        %2465 = vmatpush.bf16.msra.mxu0 %v2386
        %2466 = vmatpush.bf16.msra.mxu0 %v2382
        %2467 = vmatpush.bf16.msra.mxu0 %v2378
        %2468 = vmatpush.bf16.msra.mxu0 %v2374
        %2469 = vmatpush.bf16.msra.mxu0 %v2370
        %2470 = vmatpush.bf16.msra.mxu0 %v2366
        %2471 = vmatpush.bf16.msra.mxu0 %v2362
        %2472 = vmatmul.bf16.gmra.mxu0 %v2402
        %v2473 = vpop.f32.mrf.mxu0
        %v2474 = vadd.f32 0.0, %v2473
        %v2475 = vpop.f32.mrf.mxu0
        %v2476 = vadd.f32 0.0, %v2475
        %2477 = vdwg.mxu0
        %2478 = vmatpush.bf16.msra.mxu0 0
        %2479 = vmatpush.bf16.msra.mxu0 0
        %2480 = vmatpush.bf16.msra.mxu0 0
        %2481 = vmatpush.bf16.msra.mxu0 0
        %2482 = vmatpush.bf16.msra.mxu0 0
        %2483 = vmatpush.bf16.msra.mxu0 0
        %2484 = vmatpush.bf16.msra.mxu0 0
        %2485 = vmatpush.bf16.msra.mxu0 %v2394
        %2486 = vmatmul.bf16.gmra.mxu0 %v2406
        %v2487 = vpop.f32.mrf.mxu0
        %v2488 = vadd.f32 %v2474, %v2487
        %v2489 = vpop.f32.mrf.mxu0
        %v2490 = vadd.f32 %v2476, %v2489
        %2491 = vdwg.mxu0
        %2492 = vmatpush.bf16.msra.mxu0 %v2391
        %2493 = vmatpush.bf16.msra.mxu0 %v2387
        %2494 = vmatpush.bf16.msra.mxu0 %v2383
        %2495 = vmatpush.bf16.msra.mxu0 %v2379
        %2496 = vmatpush.bf16.msra.mxu0 %v2375
        %2497 = vmatpush.bf16.msra.mxu0 %v2371
        %2498 = vmatpush.bf16.msra.mxu0 %v2367
        %2499 = vmatpush.bf16.msra.mxu0 %v2363
        %2500 = vmatmul.bf16.gmra.mxu0 %v2402
        %v2501 = vpop.f32.mrf.mxu0
        %v2502 = vadd.f32 0.0, %v2501
        %v2503 = vpop.f32.mrf.mxu0
        %v2504 = vadd.f32 0.0, %v2503
        %2505 = vdwg.mxu0
        %2506 = vmatpush.bf16.msra.mxu0 0
        %2507 = vmatpush.bf16.msra.mxu0 0
        %2508 = vmatpush.bf16.msra.mxu0 0
        %2509 = vmatpush.bf16.msra.mxu0 0
        %2510 = vmatpush.bf16.msra.mxu0 0
        %2511 = vmatpush.bf16.msra.mxu0 0
        %2512 = vmatpush.bf16.msra.mxu0 0
        %2513 = vmatpush.bf16.msra.mxu0 %v2395
        %2514 = vmatmul.bf16.gmra.mxu0 %v2406
        %v2515 = vpop.f32.mrf.mxu0
        %v2516 = vadd.f32 %v2502, %v2515
        %v2517 = vpop.f32.mrf.mxu0
        %v2518 = vadd.f32 %v2504, %v2517
        %2519 = vdwg.mxu0
        %2520 = vmatpush.msra.mxu0 %v408
        %2521 = vmatpush.msra.mxu0 %v407
        %2522 = vmatpush.msra.mxu0 %v406
        %2523 = vmatpush.msra.mxu0 %v405
        %2524 = vmatpush.msra.mxu0 %v404
        %2525 = vmatpush.msra.mxu0 %v403
        %2526 = vmatpush.msra.mxu0 %v402
        %2527 = vmatpush.msra.mxu0 %v401
        %2528 = vmatpush.msra.mxu0 %v400
        %2529 = vmatpush.msra.mxu0 %v399
        %2530 = vmatpush.msra.mxu0 %v398
        %2531 = vmatpush.msra.mxu0 %v397
        %2532 = vmatpush.msra.mxu0 %v396
        %2533 = vmatpush.msra.mxu0 %v395
        %2534 = vmatpush.msra.mxu0 %v394
        %2535 = vmatpush.msra.mxu0 %v393
        %2536 = vmatmul.f32.gmra.mxu0 %v2432
        %v2537 = vpop.f32.mrf.mxu0
        %v2538 = vadd.f32 0.0, %v2537
        %2539 = vmatmul.f32.gmra.mxu0 %v2434
        %v2540 = vpop.f32.mrf.mxu0
        %v2541 = vadd.f32 0.0, %v2540
        %2542 = vdwg.mxu0
        %2543 = vmatpush.msra.mxu0 %v424
        %2544 = vmatpush.msra.mxu0 %v423
        %2545 = vmatpush.msra.mxu0 %v422
        %2546 = vmatpush.msra.mxu0 %v421
        %2547 = vmatpush.msra.mxu0 %v420
        %2548 = vmatpush.msra.mxu0 %v419
        %2549 = vmatpush.msra.mxu0 %v418
        %2550 = vmatpush.msra.mxu0 %v417
        %2551 = vmatpush.msra.mxu0 %v416
        %2552 = vmatpush.msra.mxu0 %v415
        %2553 = vmatpush.msra.mxu0 %v414
        %2554 = vmatpush.msra.mxu0 %v413
        %2555 = vmatpush.msra.mxu0 %v412
        %2556 = vmatpush.msra.mxu0 %v411
        %2557 = vmatpush.msra.mxu0 %v410
        %2558 = vmatpush.msra.mxu0 %v409
        %2559 = vmatmul.f32.gmra.mxu0 %v2460
        %v2560 = vpop.f32.mrf.mxu0
        %v2561 = vadd.f32 %v2538, %v2560
        %2562 = vmatmul.f32.gmra.mxu0 %v2462
        %v2563 = vpop.f32.mrf.mxu0
        %v2564 = vadd.f32 %v2541, %v2563
        %2565 = vdwg.mxu0
        %2566 = vmatpush.msra.mxu0 %v440
        %2567 = vmatpush.msra.mxu0 %v439
        %2568 = vmatpush.msra.mxu0 %v438
        %2569 = vmatpush.msra.mxu0 %v437
        %2570 = vmatpush.msra.mxu0 %v436
        %2571 = vmatpush.msra.mxu0 %v435
        %2572 = vmatpush.msra.mxu0 %v434
        %2573 = vmatpush.msra.mxu0 %v433
        %2574 = vmatpush.msra.mxu0 %v432
        %2575 = vmatpush.msra.mxu0 %v431
        %2576 = vmatpush.msra.mxu0 %v430
        %2577 = vmatpush.msra.mxu0 %v429
        %2578 = vmatpush.msra.mxu0 %v428
        %2579 = vmatpush.msra.mxu0 %v427
        %2580 = vmatpush.msra.mxu0 %v426
        %2581 = vmatpush.msra.mxu0 %v425
        %2582 = vmatmul.f32.gmra.mxu0 %v2488
        %v2583 = vpop.f32.mrf.mxu0
        %v2584 = vadd.f32 %v2561, %v2583
        %2585 = vmatmul.f32.gmra.mxu0 %v2490
        %v2586 = vpop.f32.mrf.mxu0
        %v2587 = vadd.f32 %v2564, %v2586
        %2588 = vdwg.mxu0
        %2589 = vmatpush.msra.mxu0 %v456
        %2590 = vmatpush.msra.mxu0 %v455
        %2591 = vmatpush.msra.mxu0 %v454
        %2592 = vmatpush.msra.mxu0 %v453
        %2593 = vmatpush.msra.mxu0 %v452
        %2594 = vmatpush.msra.mxu0 %v451
        %2595 = vmatpush.msra.mxu0 %v450
        %2596 = vmatpush.msra.mxu0 %v449
        %2597 = vmatpush.msra.mxu0 %v448
        %2598 = vmatpush.msra.mxu0 %v447
        %2599 = vmatpush.msra.mxu0 %v446
        %2600 = vmatpush.msra.mxu0 %v445
        %2601 = vmatpush.msra.mxu0 %v444
        %2602 = vmatpush.msra.mxu0 %v443
        %2603 = vmatpush.msra.mxu0 %v442
        %2604 = vmatpush.msra.mxu0 %v441
        %2605 = vmatmul.f32.gmra.mxu0 %v2516
        %v2606 = vpop.f32.mrf.mxu0
        %v2607 = vadd.f32 %v2584, %v2606
        %2608 = vmatmul.f32.gmra.mxu0 %v2518
        %v2609 = vpop.f32.mrf.mxu0
        %v2610 = vadd.f32 %v2587, %v2609
        %2611 = vdwg.mxu0
        %v2612 = vmul.f32 %v2432, %v2432
        %v2613 = vmul.f32 %v2460, %v2460
        %v2614 = vmul.f32 %v2488, %v2488
        %v2615 = vmul.f32 %v2516, %v2516
        %v2616 = vmul.f32 %v2434, %v2434
        %v2617 = vmul.f32 %v2462, %v2462
        %v2618 = vmul.f32 %v2490, %v2490
        %v2619 = vmul.f32 %v2518, %v2518
        %2620 = vmatpush.msra.mxu0 %v408
        %2621 = vmatpush.msra.mxu0 %v407
        %2622 = vmatpush.msra.mxu0 %v406
        %2623 = vmatpush.msra.mxu0 %v405
        %2624 = vmatpush.msra.mxu0 %v404
        %2625 = vmatpush.msra.mxu0 %v403
        %2626 = vmatpush.msra.mxu0 %v402
        %2627 = vmatpush.msra.mxu0 %v401
        %2628 = vmatpush.msra.mxu0 %v400
        %2629 = vmatpush.msra.mxu0 %v399
        %2630 = vmatpush.msra.mxu0 %v398
        %2631 = vmatpush.msra.mxu0 %v397
        %2632 = vmatpush.msra.mxu0 %v396
        %2633 = vmatpush.msra.mxu0 %v395
        %2634 = vmatpush.msra.mxu0 %v394
        %2635 = vmatpush.msra.mxu0 %v393
        %2636 = vmatmul.f32.gmra.mxu0 %v2612
        %v2637 = vpop.f32.mrf.mxu0
        %v2638 = vadd.f32 0.0, %v2637
        %2639 = vmatmul.f32.gmra.mxu0 %v2616
        %v2640 = vpop.f32.mrf.mxu0
        %v2641 = vadd.f32 0.0, %v2640
        %2642 = vdwg.mxu0
        %2643 = vmatpush.msra.mxu0 %v424
        %2644 = vmatpush.msra.mxu0 %v423
        %2645 = vmatpush.msra.mxu0 %v422
        %2646 = vmatpush.msra.mxu0 %v421
        %2647 = vmatpush.msra.mxu0 %v420
        %2648 = vmatpush.msra.mxu0 %v419
        %2649 = vmatpush.msra.mxu0 %v418
        %2650 = vmatpush.msra.mxu0 %v417
        %2651 = vmatpush.msra.mxu0 %v416
        %2652 = vmatpush.msra.mxu0 %v415
        %2653 = vmatpush.msra.mxu0 %v414
        %2654 = vmatpush.msra.mxu0 %v413
        %2655 = vmatpush.msra.mxu0 %v412
        %2656 = vmatpush.msra.mxu0 %v411
        %2657 = vmatpush.msra.mxu0 %v410
        %2658 = vmatpush.msra.mxu0 %v409
        %2659 = vmatmul.f32.gmra.mxu0 %v2613
        %v2660 = vpop.f32.mrf.mxu0
        %v2661 = vadd.f32 %v2638, %v2660
        %2662 = vmatmul.f32.gmra.mxu0 %v2617
        %v2663 = vpop.f32.mrf.mxu0
        %v2664 = vadd.f32 %v2641, %v2663
        %2665 = vdwg.mxu0
        %2666 = vmatpush.msra.mxu0 %v440
        %2667 = vmatpush.msra.mxu0 %v439
        %2668 = vmatpush.msra.mxu0 %v438
        %2669 = vmatpush.msra.mxu0 %v437
        %2670 = vmatpush.msra.mxu0 %v436
        %2671 = vmatpush.msra.mxu0 %v435
        %2672 = vmatpush.msra.mxu0 %v434
        %2673 = vmatpush.msra.mxu0 %v433
        %2674 = vmatpush.msra.mxu0 %v432
        %2675 = vmatpush.msra.mxu0 %v431
        %2676 = vmatpush.msra.mxu0 %v430
        %2677 = vmatpush.msra.mxu0 %v429
        %2678 = vmatpush.msra.mxu0 %v428
        %2679 = vmatpush.msra.mxu0 %v427
        %2680 = vmatpush.msra.mxu0 %v426
        %2681 = vmatpush.msra.mxu0 %v425
        %2682 = vmatmul.f32.gmra.mxu0 %v2614
        %v2683 = vpop.f32.mrf.mxu0
        %v2684 = vadd.f32 %v2661, %v2683
        %2685 = vmatmul.f32.gmra.mxu0 %v2618
        %v2686 = vpop.f32.mrf.mxu0
        %v2687 = vadd.f32 %v2664, %v2686
        %2688 = vdwg.mxu0
        %2689 = vmatpush.msra.mxu0 %v456
        %2690 = vmatpush.msra.mxu0 %v455
        %2691 = vmatpush.msra.mxu0 %v454
        %2692 = vmatpush.msra.mxu0 %v453
        %2693 = vmatpush.msra.mxu0 %v452
        %2694 = vmatpush.msra.mxu0 %v451
        %2695 = vmatpush.msra.mxu0 %v450
        %2696 = vmatpush.msra.mxu0 %v449
        %2697 = vmatpush.msra.mxu0 %v448
        %2698 = vmatpush.msra.mxu0 %v447
        %2699 = vmatpush.msra.mxu0 %v446
        %2700 = vmatpush.msra.mxu0 %v445
        %2701 = vmatpush.msra.mxu0 %v444
        %2702 = vmatpush.msra.mxu0 %v443
        %2703 = vmatpush.msra.mxu0 %v442
        %2704 = vmatpush.msra.mxu0 %v441
        %2705 = vmatmul.f32.gmra.mxu0 %v2615
        %v2706 = vpop.f32.mrf.mxu0
        %v2707 = vadd.f32 %v2684, %v2706
        %2708 = vmatmul.f32.gmra.mxu0 %v2619
        %v2709 = vpop.f32.mrf.mxu0
        %v2710 = vadd.f32 %v2687, %v2709
        %2711 = vdwg.mxu0
        %v2712 = vmul.f32 %v2607, 0.00390625
        %v2713 = vmul.f32 %v2610, 0.00390625
        %v2714 = vmul.f32 %v2707, 0.00390625
        %v2715 = vmul.f32 %v2710, 0.00390625
        %v2716 = vmul.f32 %v2712, %v2712
        %v2717 = vmul.f32 %v2713, %v2713
        %v2718 = vsub.f32 %v2714, %v2716
        %v2719 = vsub.f32 %v2715, %v2717
        %v2720 = vmax.f32 %v2718, 0.0
        %v2721 = vmax.f32 %v2719, 0.0
        %v2722 = vadd.f32 %v2720, 1e-05
        %v2723 = vadd.f32 %v2721, 1e-05
        %v2724 = vrsqrt.pop %v2722
        %v2725 = vmul.f32 %v2724, %v2722
        %v2726 = vmul.f32 %v2725, %v2724
        %v2727 = vmul.f32 0.5, %v2726
        %v2728 = vsub.f32 1.5, %v2727
        %v2729 = vmul.f32 %v2724, %v2728
        %vm2730 = vweird.f32 %v2722
        %vm2731 = vweird.f32 %v2724
        %vm2732 = vmor %vm2730, %vm2731
        %v2733 = vsel %vm2732, %v2724, %v2729
        %v2734 = vrsqrt.pop %v2723
        %v2735 = vmul.f32 %v2734, %v2723
        %v2736 = vmul.f32 %v2735, %v2734
        %v2737 = vmul.f32 0.5, %v2736
        %v2738 = vsub.f32 1.5, %v2737
        %v2739 = vmul.f32 %v2734, %v2738
        %vm2740 = vweird.f32 %v2723
        %vm2741 = vweird.f32 %v2734
        %vm2742 = vmor %vm2740, %vm2741
        %v2743 = vsel %vm2742, %v2734, %v2739
        %2744 = vst [vmem:[#allocation1] ss:$4 sm:$0xff] %v457
        %v2745 = vld.sshfl [vmem:[#allocation1] sm:$0xff pattern:$0x73625140]
        %v2746 = vld.sshfl [vmem:[#allocation1 + $0x8] sm:$0xff pattern:$0x73625140]
        %v2747 = vld.sshfl [vmem:[#allocation1 + $0x10] sm:$0xff pattern:$0x73625140]
        %v2748 = vld.sshfl [vmem:[#allocation1 + $0x18] sm:$0xff pattern:$0x73625140]
        %v2750 = vsel %vm962, %v2733, 0
        %v2753 = vsel %vm962, %v2743, 0
        %v2755 = vsel %vm969, %v2745, 0
        %v2757 = vsel %vm969, %v2746, 0
        %v2759 = vsel %vm969, %v2747, 0
        %v2761 = vsel %vm969, %v2748, 0
        %2763 = vmatpush.msra.mxu0 0.0
        %2764 = vmatpush.msra.mxu0 0.0
        %2765 = vmatpush.msra.mxu0 0.0
        %2766 = vmatpush.msra.mxu0 0.0
        %2767 = vmatpush.msra.mxu0 0.0
        %2768 = vmatpush.msra.mxu0 0.0
        %2769 = vmatpush.msra.mxu0 0.0
        %2770 = vmatpush.msra.mxu0 0.0
        %2771 = vmatpush.msra.mxu0 0.0
        %2772 = vmatpush.msra.mxu0 0.0
        %2773 = vmatpush.msra.mxu0 0.0
        %2774 = vmatpush.msra.mxu0 0.0
        %2775 = vmatpush.msra.mxu0 0.0
        %2776 = vmatpush.msra.mxu0 0.0
        %2777 = vmatpush.msra.mxu0 0.0
        %2778 = vmatpush.msra.mxu0 %v2755
        %2779 = vmatmul.f32.gmra.mxu0 %v2750
        %v2780 = vpop.f32.mrf.mxu0
        %v2781 = vadd.f32 0.0, %v2780
        %2782 = vmatmul.f32.gmra.mxu0 %v2753
        %v2783 = vpop.f32.mrf.mxu0
        %v2784 = vadd.f32 0.0, %v2783
        %2785 = vdwg.mxu0
        %2786 = vmatpush.msra.mxu0 0.0
        %2787 = vmatpush.msra.mxu0 0.0
        %2788 = vmatpush.msra.mxu0 0.0
        %2789 = vmatpush.msra.mxu0 0.0
        %2790 = vmatpush.msra.mxu0 0.0
        %2791 = vmatpush.msra.mxu0 0.0
        %2792 = vmatpush.msra.mxu0 0.0
        %2793 = vmatpush.msra.mxu0 0.0
        %2794 = vmatpush.msra.mxu0 0.0
        %2795 = vmatpush.msra.mxu0 0.0
        %2796 = vmatpush.msra.mxu0 0.0
        %2797 = vmatpush.msra.mxu0 0.0
        %2798 = vmatpush.msra.mxu0 0.0
        %2799 = vmatpush.msra.mxu0 0.0
        %2800 = vmatpush.msra.mxu0 0.0
        %2801 = vmatpush.msra.mxu0 %v2757
        %2802 = vmatmul.f32.gmra.mxu0 %v2750
        %v2803 = vpop.f32.mrf.mxu0
        %v2804 = vadd.f32 0.0, %v2803
        %2805 = vmatmul.f32.gmra.mxu0 %v2753
        %v2806 = vpop.f32.mrf.mxu0
        %v2807 = vadd.f32 0.0, %v2806
        %2808 = vdwg.mxu0
        %2809 = vmatpush.msra.mxu0 0.0
        %2810 = vmatpush.msra.mxu0 0.0
        %2811 = vmatpush.msra.mxu0 0.0
        %2812 = vmatpush.msra.mxu0 0.0
        %2813 = vmatpush.msra.mxu0 0.0
        %2814 = vmatpush.msra.mxu0 0.0
        %2815 = vmatpush.msra.mxu0 0.0
        %2816 = vmatpush.msra.mxu0 0.0
        %2817 = vmatpush.msra.mxu0 0.0
        %2818 = vmatpush.msra.mxu0 0.0
        %2819 = vmatpush.msra.mxu0 0.0
        %2820 = vmatpush.msra.mxu0 0.0
        %2821 = vmatpush.msra.mxu0 0.0
        %2822 = vmatpush.msra.mxu0 0.0
        %2823 = vmatpush.msra.mxu0 0.0
        %2824 = vmatpush.msra.mxu0 %v2759
        %2825 = vmatmul.f32.gmra.mxu0 %v2750
        %v2826 = vpop.f32.mrf.mxu0
        %v2827 = vadd.f32 0.0, %v2826
        %2828 = vmatmul.f32.gmra.mxu0 %v2753
        %v2829 = vpop.f32.mrf.mxu0
        %v2830 = vadd.f32 0.0, %v2829
        %2831 = vdwg.mxu0
        %2832 = vmatpush.msra.mxu0 0.0
        %2833 = vmatpush.msra.mxu0 0.0
        %2834 = vmatpush.msra.mxu0 0.0
        %2835 = vmatpush.msra.mxu0 0.0
        %2836 = vmatpush.msra.mxu0 0.0
        %2837 = vmatpush.msra.mxu0 0.0
        %2838 = vmatpush.msra.mxu0 0.0
        %2839 = vmatpush.msra.mxu0 0.0
        %2840 = vmatpush.msra.mxu0 0.0
        %2841 = vmatpush.msra.mxu0 0.0
        %2842 = vmatpush.msra.mxu0 0.0
        %2843 = vmatpush.msra.mxu0 0.0
        %2844 = vmatpush.msra.mxu0 0.0
        %2845 = vmatpush.msra.mxu0 0.0
        %2846 = vmatpush.msra.mxu0 0.0
        %2847 = vmatpush.msra.mxu0 %v2761
        %2848 = vmatmul.f32.gmra.mxu0 %v2750
        %v2849 = vpop.f32.mrf.mxu0
        %v2850 = vadd.f32 0.0, %v2849
        %2851 = vmatmul.f32.gmra.mxu0 %v2753
        %v2852 = vpop.f32.mrf.mxu0
        %v2853 = vadd.f32 0.0, %v2852
        %2854 = vdwg.mxu0
        %v2855 = vsub.f32 0.0, %v2712
        %v2856 = vsub.f32 0.0, %v2713
        %v2857 = vmul.f32 %v2855, %v2733
        %v2858 = vmul.f32 %v2856, %v2743
        %2859 = vst [vmem:[#allocation1] ss:$4 sm:$0xff] %v457
        %v2860 = vld.sshfl [vmem:[#allocation1] sm:$0xff pattern:$0x73625140]
        %v2861 = vld.sshfl [vmem:[#allocation1 + $0x8] sm:$0xff pattern:$0x73625140]
        %v2862 = vld.sshfl [vmem:[#allocation1 + $0x10] sm:$0xff pattern:$0x73625140]
        %v2863 = vld.sshfl [vmem:[#allocation1 + $0x18] sm:$0xff pattern:$0x73625140]
        %v2865 = vsel %vm962, %v2857, 0
        %v2868 = vsel %vm962, %v2858, 0
        %v2870 = vsel %vm969, %v2860, 0
        %v2872 = vsel %vm969, %v2861, 0
        %v2874 = vsel %vm969, %v2862, 0
        %v2876 = vsel %vm969, %v2863, 0
        %2878 = vmatpush.msra.mxu0 0.0
        %2879 = vmatpush.msra.mxu0 0.0
        %2880 = vmatpush.msra.mxu0 0.0
        %2881 = vmatpush.msra.mxu0 0.0
        %2882 = vmatpush.msra.mxu0 0.0
        %2883 = vmatpush.msra.mxu0 0.0
        %2884 = vmatpush.msra.mxu0 0.0
        %2885 = vmatpush.msra.mxu0 0.0
        %2886 = vmatpush.msra.mxu0 0.0
        %2887 = vmatpush.msra.mxu0 0.0
        %2888 = vmatpush.msra.mxu0 0.0
        %2889 = vmatpush.msra.mxu0 0.0
        %2890 = vmatpush.msra.mxu0 0.0
        %2891 = vmatpush.msra.mxu0 0.0
        %2892 = vmatpush.msra.mxu0 0.0
        %2893 = vmatpush.msra.mxu0 %v2870
        %2894 = vmatmul.f32.gmra.mxu0 %v2865
        %v2895 = vpop.f32.mrf.mxu0
        %v2896 = vadd.f32 0.0, %v2895
        %2897 = vmatmul.f32.gmra.mxu0 %v2868
        %v2898 = vpop.f32.mrf.mxu0
        %v2899 = vadd.f32 0.0, %v2898
        %2900 = vdwg.mxu0
        %2901 = vmatpush.msra.mxu0 0.0
        %2902 = vmatpush.msra.mxu0 0.0
        %2903 = vmatpush.msra.mxu0 0.0
        %2904 = vmatpush.msra.mxu0 0.0
        %2905 = vmatpush.msra.mxu0 0.0
        %2906 = vmatpush.msra.mxu0 0.0
        %2907 = vmatpush.msra.mxu0 0.0
        %2908 = vmatpush.msra.mxu0 0.0
        %2909 = vmatpush.msra.mxu0 0.0
        %2910 = vmatpush.msra.mxu0 0.0
        %2911 = vmatpush.msra.mxu0 0.0
        %2912 = vmatpush.msra.mxu0 0.0
        %2913 = vmatpush.msra.mxu0 0.0
        %2914 = vmatpush.msra.mxu0 0.0
        %2915 = vmatpush.msra.mxu0 0.0
        %2916 = vmatpush.msra.mxu0 %v2872
        %2917 = vmatmul.f32.gmra.mxu0 %v2865
        %v2918 = vpop.f32.mrf.mxu0
        %v2919 = vadd.f32 0.0, %v2918
        %2920 = vmatmul.f32.gmra.mxu0 %v2868
        %v2921 = vpop.f32.mrf.mxu0
        %v2922 = vadd.f32 0.0, %v2921
        %2923 = vdwg.mxu0
        %2924 = vmatpush.msra.mxu0 0.0
        %2925 = vmatpush.msra.mxu0 0.0
        %2926 = vmatpush.msra.mxu0 0.0
        %2927 = vmatpush.msra.mxu0 0.0
        %2928 = vmatpush.msra.mxu0 0.0
        %2929 = vmatpush.msra.mxu0 0.0
        %2930 = vmatpush.msra.mxu0 0.0
        %2931 = vmatpush.msra.mxu0 0.0
        %2932 = vmatpush.msra.mxu0 0.0
        %2933 = vmatpush.msra.mxu0 0.0
        %2934 = vmatpush.msra.mxu0 0.0
        %2935 = vmatpush.msra.mxu0 0.0
        %2936 = vmatpush.msra.mxu0 0.0
        %2937 = vmatpush.msra.mxu0 0.0
        %2938 = vmatpush.msra.mxu0 0.0
        %2939 = vmatpush.msra.mxu0 %v2874
        %2940 = vmatmul.f32.gmra.mxu0 %v2865
        %v2941 = vpop.f32.mrf.mxu0
        %v2942 = vadd.f32 0.0, %v2941
        %2943 = vmatmul.f32.gmra.mxu0 %v2868
        %v2944 = vpop.f32.mrf.mxu0
        %v2945 = vadd.f32 0.0, %v2944
        %2946 = vdwg.mxu0
        %2947 = vmatpush.msra.mxu0 0.0
        %2948 = vmatpush.msra.mxu0 0.0
        %2949 = vmatpush.msra.mxu0 0.0
        %2950 = vmatpush.msra.mxu0 0.0
        %2951 = vmatpush.msra.mxu0 0.0
        %2952 = vmatpush.msra.mxu0 0.0
        %2953 = vmatpush.msra.mxu0 0.0
        %2954 = vmatpush.msra.mxu0 0.0
        %2955 = vmatpush.msra.mxu0 0.0
        %2956 = vmatpush.msra.mxu0 0.0
        %2957 = vmatpush.msra.mxu0 0.0
        %2958 = vmatpush.msra.mxu0 0.0
        %2959 = vmatpush.msra.mxu0 0.0
        %2960 = vmatpush.msra.mxu0 0.0
        %2961 = vmatpush.msra.mxu0 0.0
        %2962 = vmatpush.msra.mxu0 %v2876
        %2963 = vmatmul.f32.gmra.mxu0 %v2865
        %v2964 = vpop.f32.mrf.mxu0
        %v2965 = vadd.f32 0.0, %v2964
        %2966 = vmatmul.f32.gmra.mxu0 %v2868
        %v2967 = vpop.f32.mrf.mxu0
        %v2968 = vadd.f32 0.0, %v2967
        %2969 = vdwg.mxu0
        %v2970 = vmul.f32 %v2432, %v2781
        %v2971 = vmul.f32 %v2460, %v2804
        %v2972 = vmul.f32 %v2488, %v2827
        %v2973 = vmul.f32 %v2516, %v2850
        %v2974 = vmul.f32 %v2434, %v2784
        %v2975 = vmul.f32 %v2462, %v2807
        %v2976 = vmul.f32 %v2490, %v2830
        %v2977 = vmul.f32 %v2518, %v2853
        %v2978 = vadd.f32 %v2970, %v2896
        %v2979 = vadd.f32 %v2971, %v2919
        %v2980 = vadd.f32 %v2972, %v2942
        %v2981 = vadd.f32 %v2973, %v2965
        %v2982 = vadd.f32 %v2974, %v2899
        %v2983 = vadd.f32 %v2975, %v2922
        %v2984 = vadd.f32 %v2976, %v2945
        %v2985 = vadd.f32 %v2977, %v2968
        %v2986 = vmax.f32 %v2978, 0.0
        %v2987 = vmax.f32 %v2979, 0.0
        %v2988 = vmax.f32 %v2980, 0.0
        %v2989 = vmax.f32 %v2981, 0.0
        %v2990 = vmax.f32 %v2982, 0.0
        %v2991 = vmax.f32 %v2983, 0.0
        %v2992 = vmax.f32 %v2984, 0.0
        %v2993 = vmax.f32 %v2985, 0.0
        %v2994 = vadd.f32 %v1201, %v2986
        %v2995 = vadd.f32 %v1202, %v2987
        %v2996 = vadd.f32 %v1203, %v2988
        %v2997 = vadd.f32 %v1204, %v2989
        %v2998 = vadd.f32 %v1205, %v2990
        %v2999 = vadd.f32 %v1206, %v2991
        %v3000 = vadd.f32 %v1207, %v2992
        %v3001 = vadd.f32 %v1208, %v2993
        %v3002 = vmax.f32 %v2994, 0.0
        %v3003 = vmax.f32 %v2995, 0.0
        %v3004 = vmax.f32 %v2996, 0.0
        %v3005 = vmax.f32 %v2997, 0.0
        %v3006 = vmax.f32 %v2998, 0.0
        %v3007 = vmax.f32 %v2999, 0.0
        %v3008 = vmax.f32 %v3000, 0.0
        %v3009 = vmax.f32 %v3001, 0.0
        %3010 = vrot.lane.b32.xlu0 %v3002, 17
        %v3011 = vpop.permute.xlu0 %3010
        %3012 = vrot.lane.b32.xlu0 %v3006, 17
        %v3013 = vpop.permute.xlu0 %3012
        %3014 = vrot.lane.b32.xlu0 %v3003, 17
        %v3015 = vpop.permute.xlu0 %3014
        %3016 = vrot.lane.b32.xlu0 %v3007, 17
        %v3017 = vpop.permute.xlu0 %3016
        %3018 = vrot.lane.b32.xlu0 %v3004, 17
        %v3019 = vpop.permute.xlu0 %3018
        %3020 = vrot.lane.b32.xlu0 %v3008, 17
        %v3021 = vpop.permute.xlu0 %3020
        %3022 = vrot.lane.b32.xlu0 %v3005, 17
        %v3023 = vpop.permute.xlu0 %3022
        %3024 = vrot.lane.b32.xlu0 %v3009, 17
        %v3025 = vpop.permute.xlu0 %3024
        %v3026 = vsel %vm472, %v3019, %v3023
        %v3027 = vsel %vm472, %v3021, %v3025
        %v3028 = vsel %vm472, %v3015, %v3019
        %v3029 = vsel %vm472, %v3017, %v3021
        %v3030 = vsel %vm472, %v3011, %v3015
        %v3031 = vsel %vm472, %v3013, %v3017
        %v3032 = vsel %vm472, %v3023, %v3011
        %v3033 = vsel %vm472, %v3025, %v3013
        %v3034 = vmul.f32 %v3032, %v477
        %v3035 = vmul.f32 %v3030, %v478
        %v3036 = vmul.f32 %v3028, %v479
        %v3037 = vmul.f32 %v3026, %v480
        %v3038 = vmul.f32 %v3033, %v477
        %v3039 = vmul.f32 %v3031, %v478
        %v3040 = vmul.f32 %v3029, %v479
        %v3041 = vmul.f32 %v3027, %v480
        %3042 = vrot.lane.b32.xlu0 %v3002, 16
        %v3043 = vpop.permute.xlu0 %3042
        %3044 = vrot.lane.b32.xlu0 %v3006, 16
        %v3045 = vpop.permute.xlu0 %3044
        %3046 = vrot.lane.b32.xlu0 %v3003, 16
        %v3047 = vpop.permute.xlu0 %3046
        %3048 = vrot.lane.b32.xlu0 %v3007, 16
        %v3049 = vpop.permute.xlu0 %3048
        %3050 = vrot.lane.b32.xlu0 %v3004, 16
        %v3051 = vpop.permute.xlu0 %3050
        %3052 = vrot.lane.b32.xlu0 %v3008, 16
        %v3053 = vpop.permute.xlu0 %3052
        %3054 = vrot.lane.b32.xlu0 %v3005, 16
        %v3055 = vpop.permute.xlu0 %3054
        %3056 = vrot.lane.b32.xlu0 %v3009, 16
        %v3057 = vpop.permute.xlu0 %3056
        %v3058 = vsel %vm493, %v3051, %v3055
        %v3059 = vsel %vm493, %v3053, %v3057
        %v3060 = vsel %vm493, %v3047, %v3051
        %v3061 = vsel %vm493, %v3049, %v3053
        %v3062 = vsel %vm493, %v3043, %v3047
        %v3063 = vsel %vm493, %v3045, %v3049
        %v3064 = vsel %vm493, %v3055, %v3043
        %v3065 = vsel %vm493, %v3057, %v3045
        %v3066 = vmul.f32 %v3064, %v498
        %v3067 = vmul.f32 %v3062, %v499
        %v3068 = vmul.f32 %v3060, %v500
        %v3069 = vmul.f32 %v3058, %v501
        %v3070 = vmul.f32 %v3065, %v498
        %v3071 = vmul.f32 %v3063, %v499
        %v3072 = vmul.f32 %v3061, %v500
        %v3073 = vmul.f32 %v3059, %v501
        %3074 = vrot.lane.b32.xlu0 %v3002, 15
        %v3075 = vpop.permute.xlu0 %3074
        %3076 = vrot.lane.b32.xlu0 %v3006, 15
        %v3077 = vpop.permute.xlu0 %3076
        %3078 = vrot.lane.b32.xlu0 %v3003, 15
        %v3079 = vpop.permute.xlu0 %3078
        %3080 = vrot.lane.b32.xlu0 %v3007, 15
        %v3081 = vpop.permute.xlu0 %3080
        %3082 = vrot.lane.b32.xlu0 %v3004, 15
        %v3083 = vpop.permute.xlu0 %3082
        %3084 = vrot.lane.b32.xlu0 %v3008, 15
        %v3085 = vpop.permute.xlu0 %3084
        %3086 = vrot.lane.b32.xlu0 %v3005, 15
        %v3087 = vpop.permute.xlu0 %3086
        %3088 = vrot.lane.b32.xlu0 %v3009, 15
        %v3089 = vpop.permute.xlu0 %3088
        %v3090 = vsel %vm514, %v3083, %v3087
        %v3091 = vsel %vm514, %v3085, %v3089
        %v3092 = vsel %vm514, %v3079, %v3083
        %v3093 = vsel %vm514, %v3081, %v3085
        %v3094 = vsel %vm514, %v3075, %v3079
        %v3095 = vsel %vm514, %v3077, %v3081
        %v3096 = vsel %vm514, %v3087, %v3075
        %v3097 = vsel %vm514, %v3089, %v3077
        %v3098 = vmul.f32 %v3096, %v519
        %v3099 = vmul.f32 %v3094, %v520
        %v3100 = vmul.f32 %v3092, %v521
        %v3101 = vmul.f32 %v3090, %v522
        %v3102 = vmul.f32 %v3097, %v519
        %v3103 = vmul.f32 %v3095, %v520
        %v3104 = vmul.f32 %v3093, %v521
        %v3105 = vmul.f32 %v3091, %v522
        %3106 = vrot.lane.b32.xlu0 %v3002, 1
        %v3107 = vpop.permute.xlu0 %3106
        %3108 = vrot.lane.b32.xlu0 %v3006, 1
        %v3109 = vpop.permute.xlu0 %3108
        %3110 = vrot.lane.b32.xlu0 %v3003, 1
        %v3111 = vpop.permute.xlu0 %3110
        %3112 = vrot.lane.b32.xlu0 %v3007, 1
        %v3113 = vpop.permute.xlu0 %3112
        %3114 = vrot.lane.b32.xlu0 %v3004, 1
        %v3115 = vpop.permute.xlu0 %3114
        %3116 = vrot.lane.b32.xlu0 %v3008, 1
        %v3117 = vpop.permute.xlu0 %3116
        %3118 = vrot.lane.b32.xlu0 %v3005, 1
        %v3119 = vpop.permute.xlu0 %3118
        %3120 = vrot.lane.b32.xlu0 %v3009, 1
        %v3121 = vpop.permute.xlu0 %3120
        %v3122 = vsel %vm535, %v3115, %v3119
        %v3123 = vsel %vm535, %v3117, %v3121
        %v3124 = vsel %vm535, %v3111, %v3115
        %v3125 = vsel %vm535, %v3113, %v3117
        %v3126 = vsel %vm535, %v3107, %v3111
        %v3127 = vsel %vm535, %v3109, %v3113
        %v3128 = vsel %vm535, %v3119, %v3107
        %v3129 = vsel %vm535, %v3121, %v3109
        %v3130 = vmul.f32 %v3128, %v540
        %v3131 = vmul.f32 %v3126, %v541
        %v3132 = vmul.f32 %v3124, %v542
        %v3133 = vmul.f32 %v3122, %v543
        %v3134 = vmul.f32 %v3129, %v540
        %v3135 = vmul.f32 %v3127, %v541
        %v3136 = vmul.f32 %v3125, %v542
        %v3137 = vmul.f32 %v3123, %v543
        %3138 = vrot.lane.b32.xlu0 %v3002, 127
        %v3139 = vpop.permute.xlu0 %3138
        %3140 = vrot.lane.b32.xlu0 %v3006, 127
        %v3141 = vpop.permute.xlu0 %3140
        %3142 = vrot.lane.b32.xlu0 %v3003, 127
        %v3143 = vpop.permute.xlu0 %3142
        %3144 = vrot.lane.b32.xlu0 %v3007, 127
        %v3145 = vpop.permute.xlu0 %3144
        %3146 = vrot.lane.b32.xlu0 %v3004, 127
        %v3147 = vpop.permute.xlu0 %3146
        %3148 = vrot.lane.b32.xlu0 %v3008, 127
        %v3149 = vpop.permute.xlu0 %3148
        %3150 = vrot.lane.b32.xlu0 %v3005, 127
        %v3151 = vpop.permute.xlu0 %3150
        %3152 = vrot.lane.b32.xlu0 %v3009, 127
        %v3153 = vpop.permute.xlu0 %3152
        %v3154 = vsel %vm556, %v3147, %v3151
        %v3155 = vsel %vm556, %v3149, %v3153
        %v3156 = vsel %vm556, %v3143, %v3147
        %v3157 = vsel %vm556, %v3145, %v3149
        %v3158 = vsel %vm556, %v3139, %v3143
        %v3159 = vsel %vm556, %v3141, %v3145
        %v3160 = vsel %vm556, %v3151, %v3139
        %v3161 = vsel %vm556, %v3153, %v3141
        %v3162 = vmul.f32 %v3158, %v561
        %v3163 = vmul.f32 %v3156, %v562
        %v3164 = vmul.f32 %v3154, %v563
        %v3165 = vmul.f32 %v3160, %v564
        %v3166 = vmul.f32 %v3159, %v561
        %v3167 = vmul.f32 %v3157, %v562
        %v3168 = vmul.f32 %v3155, %v563
        %v3169 = vmul.f32 %v3161, %v564
        %3170 = vrot.lane.b32.xlu0 %v3002, 113
        %v3171 = vpop.permute.xlu0 %3170
        %3172 = vrot.lane.b32.xlu0 %v3006, 113
        %v3173 = vpop.permute.xlu0 %3172
        %3174 = vrot.lane.b32.xlu0 %v3003, 113
        %v3175 = vpop.permute.xlu0 %3174
        %3176 = vrot.lane.b32.xlu0 %v3007, 113
        %v3177 = vpop.permute.xlu0 %3176
        %3178 = vrot.lane.b32.xlu0 %v3004, 113
        %v3179 = vpop.permute.xlu0 %3178
        %3180 = vrot.lane.b32.xlu0 %v3008, 113
        %v3181 = vpop.permute.xlu0 %3180
        %3182 = vrot.lane.b32.xlu0 %v3005, 113
        %v3183 = vpop.permute.xlu0 %3182
        %3184 = vrot.lane.b32.xlu0 %v3009, 113
        %v3185 = vpop.permute.xlu0 %3184
        %v3186 = vsel %vm577, %v3179, %v3183
        %v3187 = vsel %vm577, %v3181, %v3185
        %v3188 = vsel %vm577, %v3175, %v3179
        %v3189 = vsel %vm577, %v3177, %v3181
        %v3190 = vsel %vm577, %v3171, %v3175
        %v3191 = vsel %vm577, %v3173, %v3177
        %v3192 = vsel %vm577, %v3183, %v3171
        %v3193 = vsel %vm577, %v3185, %v3173
        %v3194 = vmul.f32 %v3190, %v582
        %v3195 = vmul.f32 %v3188, %v583
        %v3196 = vmul.f32 %v3186, %v584
        %v3197 = vmul.f32 %v3192, %v585
        %v3198 = vmul.f32 %v3191, %v582
        %v3199 = vmul.f32 %v3189, %v583
        %v3200 = vmul.f32 %v3187, %v584
        %v3201 = vmul.f32 %v3193, %v585
        %3202 = vrot.lane.b32.xlu0 %v3002, 112
        %v3203 = vpop.permute.xlu0 %3202
        %3204 = vrot.lane.b32.xlu0 %v3006, 112
        %v3205 = vpop.permute.xlu0 %3204
        %3206 = vrot.lane.b32.xlu0 %v3003, 112
        %v3207 = vpop.permute.xlu0 %3206
        %3208 = vrot.lane.b32.xlu0 %v3007, 112
        %v3209 = vpop.permute.xlu0 %3208
        %3210 = vrot.lane.b32.xlu0 %v3004, 112
        %v3211 = vpop.permute.xlu0 %3210
        %3212 = vrot.lane.b32.xlu0 %v3008, 112
        %v3213 = vpop.permute.xlu0 %3212
        %3214 = vrot.lane.b32.xlu0 %v3005, 112
        %v3215 = vpop.permute.xlu0 %3214
        %3216 = vrot.lane.b32.xlu0 %v3009, 112
        %v3217 = vpop.permute.xlu0 %3216
        %v3218 = vsel %vm598, %v3211, %v3215
        %v3219 = vsel %vm598, %v3213, %v3217
        %v3220 = vsel %vm598, %v3207, %v3211
        %v3221 = vsel %vm598, %v3209, %v3213
        %v3222 = vsel %vm598, %v3203, %v3207
        %v3223 = vsel %vm598, %v3205, %v3209
        %v3224 = vsel %vm598, %v3215, %v3203
        %v3225 = vsel %vm598, %v3217, %v3205
        %v3226 = vmul.f32 %v3222, %v603
        %v3227 = vmul.f32 %v3220, %v604
        %v3228 = vmul.f32 %v3218, %v605
        %v3229 = vmul.f32 %v3224, %v606
        %v3230 = vmul.f32 %v3223, %v603
        %v3231 = vmul.f32 %v3221, %v604
        %v3232 = vmul.f32 %v3219, %v605
        %v3233 = vmul.f32 %v3225, %v606
        %3234 = vrot.lane.b32.xlu0 %v3002, 111
        %v3235 = vpop.permute.xlu0 %3234
        %3236 = vrot.lane.b32.xlu0 %v3006, 111
        %v3237 = vpop.permute.xlu0 %3236
        %3238 = vrot.lane.b32.xlu0 %v3003, 111
        %v3239 = vpop.permute.xlu0 %3238
        %3240 = vrot.lane.b32.xlu0 %v3007, 111
        %v3241 = vpop.permute.xlu0 %3240
        %3242 = vrot.lane.b32.xlu0 %v3004, 111
        %v3243 = vpop.permute.xlu0 %3242
        %3244 = vrot.lane.b32.xlu0 %v3008, 111
        %v3245 = vpop.permute.xlu0 %3244
        %3246 = vrot.lane.b32.xlu0 %v3005, 111
        %v3247 = vpop.permute.xlu0 %3246
        %3248 = vrot.lane.b32.xlu0 %v3009, 111
        %v3249 = vpop.permute.xlu0 %3248
        %v3250 = vsel %vm619, %v3243, %v3247
        %v3251 = vsel %vm619, %v3245, %v3249
        %v3252 = vsel %vm619, %v3239, %v3243
        %v3253 = vsel %vm619, %v3241, %v3245
        %v3254 = vsel %vm619, %v3235, %v3239
        %v3255 = vsel %vm619, %v3237, %v3241
        %v3256 = vsel %vm619, %v3247, %v3235
        %v3257 = vsel %vm619, %v3249, %v3237
        %v3258 = vmul.f32 %v3254, %v624
        %v3259 = vmul.f32 %v3252, %v625
        %v3260 = vmul.f32 %v3250, %v626
        %v3261 = vmul.f32 %v3256, %v627
        %v3262 = vmul.f32 %v3255, %v624
        %v3263 = vmul.f32 %v3253, %v625
        %v3264 = vmul.f32 %v3251, %v626
        %v3265 = vmul.f32 %v3257, %v627
        %v3266 = vld [vmem:[%s7] sm:$0xff]
        %v3267 = vld [vmem:[%s7 + $0x8] sm:$0xff]
        %v3268 = vld [vmem:[%s7 + $0x10] sm:$0xff]
        %v3269 = vld [vmem:[%s7 + $0x18] sm:$0xff]
        %v3270 = vpack.c.bf16 %v3038, %v3034
        %v3271 = vpack.c.bf16 %v3039, %v3035
        %v3272 = vpack.c.bf16 %v3040, %v3036
        %v3273 = vpack.c.bf16 %v3041, %v3037
        %v3274 = vpack.c.bf16 %v3070, %v3066
        %v3275 = vpack.c.bf16 %v3071, %v3067
        %v3276 = vpack.c.bf16 %v3072, %v3068
        %v3277 = vpack.c.bf16 %v3073, %v3069
        %v3278 = vpack.c.bf16 %v3102, %v3098
        %v3279 = vpack.c.bf16 %v3103, %v3099
        %v3280 = vpack.c.bf16 %v3104, %v3100
        %v3281 = vpack.c.bf16 %v3105, %v3101
        %v3282 = vpack.c.bf16 %v3134, %v3130
        %v3283 = vpack.c.bf16 %v3135, %v3131
        %v3284 = vpack.c.bf16 %v3136, %v3132
        %v3285 = vpack.c.bf16 %v3137, %v3133
        %v3286 = vpack.c.bf16 %v3006, %v3002
        %v3287 = vpack.c.bf16 %v3007, %v3003
        %v3288 = vpack.c.bf16 %v3008, %v3004
        %v3289 = vpack.c.bf16 %v3009, %v3005
        %v3290 = vpack.c.bf16 %v3166, %v3162
        %v3291 = vpack.c.bf16 %v3167, %v3163
        %v3292 = vpack.c.bf16 %v3168, %v3164
        %v3293 = vpack.c.bf16 %v3169, %v3165
        %v3294 = vpack.c.bf16 %v3198, %v3194
        %v3295 = vpack.c.bf16 %v3199, %v3195
        %v3296 = vpack.c.bf16 %v3200, %v3196
        %v3297 = vpack.c.bf16 %v3201, %v3197
        %v3298 = vpack.c.bf16 %v3230, %v3226
        %v3299 = vpack.c.bf16 %v3231, %v3227
        %v3300 = vpack.c.bf16 %v3232, %v3228
        %v3301 = vpack.c.bf16 %v3233, %v3229
        %v3302 = vpack.c.bf16 %v3262, %v3258
        %v3303 = vpack.c.bf16 %v3263, %v3259
        %v3304 = vpack.c.bf16 %v3264, %v3260
        %v3305 = vpack.c.bf16 %v3265, %v3261
        %v3310 = vunpack.c.l.b16 %v3266
        %v3311 = vunpack.c.h.b16 %v3266
        %v3312 = vunpack.c.l.b16 %v3267
        %v3313 = vunpack.c.h.b16 %v3267
        %v3314 = vunpack.c.l.b16 %v3268
        %v3315 = vunpack.c.h.b16 %v3268
        %v3316 = vunpack.c.l.b16 %v3269
        %v3317 = vunpack.c.h.b16 %v3269
        %v3318 = vpack.c.b16 %v3312, %v3310
        %v3319 = vpack.c.b16 %v3313, %v3311
        %v3320 = vpack.c.b16 %v3316, %v3314
        %v3321 = vpack.c.b16 %v3317, %v3315
        %v3325 = vsel %vm1512, %v3319, 0
        %v3328 = vsel %vm1512, %v3321, 0
        %3330 = vmatpush.bf16.msra.mxu0 %v3298
        %3331 = vmatpush.bf16.msra.mxu0 %v3294
        %3332 = vmatpush.bf16.msra.mxu0 %v3290
        %3333 = vmatpush.bf16.msra.mxu0 %v3286
        %3334 = vmatpush.bf16.msra.mxu0 %v3282
        %3335 = vmatpush.bf16.msra.mxu0 %v3278
        %3336 = vmatpush.bf16.msra.mxu0 %v3274
        %3337 = vmatpush.bf16.msra.mxu0 %v3270
        %3338 = vmatmul.bf16.gmra.mxu0 %v3318
        %v3339 = vpop.f32.mrf.mxu0
        %v3340 = vadd.f32 0.0, %v3339
        %v3341 = vpop.f32.mrf.mxu0
        %v3342 = vadd.f32 0.0, %v3341
        %3343 = vmatmul.bf16.gmra.mxu0 %v3320
        %v3344 = vpop.f32.mrf.mxu0
        %v3345 = vadd.f32 0.0, %v3344
        %v3346 = vpop.f32.mrf.mxu0
        %v3347 = vadd.f32 0.0, %v3346
        %3348 = vdwg.mxu0
        %3349 = vmatpush.bf16.msra.mxu0 0
        %3350 = vmatpush.bf16.msra.mxu0 0
        %3351 = vmatpush.bf16.msra.mxu0 0
        %3352 = vmatpush.bf16.msra.mxu0 0
        %3353 = vmatpush.bf16.msra.mxu0 0
        %3354 = vmatpush.bf16.msra.mxu0 0
        %3355 = vmatpush.bf16.msra.mxu0 0
        %3356 = vmatpush.bf16.msra.mxu0 %v3302
        %3357 = vmatmul.bf16.gmra.mxu0 %v3325
        %v3358 = vpop.f32.mrf.mxu0
        %v3359 = vadd.f32 %v3340, %v3358
        %v3360 = vpop.f32.mrf.mxu0
        %v3361 = vadd.f32 %v3342, %v3360
        %3362 = vmatmul.bf16.gmra.mxu0 %v3328
        %v3363 = vpop.f32.mrf.mxu0
        %v3364 = vadd.f32 %v3345, %v3363
        %v3365 = vpop.f32.mrf.mxu0
        %v3366 = vadd.f32 %v3347, %v3365
        %3367 = vdwg.mxu0
        %3368 = vmatpush.bf16.msra.mxu0 %v3299
        %3369 = vmatpush.bf16.msra.mxu0 %v3295
        %3370 = vmatpush.bf16.msra.mxu0 %v3291
        %3371 = vmatpush.bf16.msra.mxu0 %v3287
        %3372 = vmatpush.bf16.msra.mxu0 %v3283
        %3373 = vmatpush.bf16.msra.mxu0 %v3279
        %3374 = vmatpush.bf16.msra.mxu0 %v3275
        %3375 = vmatpush.bf16.msra.mxu0 %v3271
        %3376 = vmatmul.bf16.gmra.mxu0 %v3318
        %v3377 = vpop.f32.mrf.mxu0
        %v3378 = vadd.f32 0.0, %v3377
        %v3379 = vpop.f32.mrf.mxu0
        %v3380 = vadd.f32 0.0, %v3379
        %3381 = vmatmul.bf16.gmra.mxu0 %v3320
        %v3382 = vpop.f32.mrf.mxu0
        %v3383 = vadd.f32 0.0, %v3382
        %v3384 = vpop.f32.mrf.mxu0
        %v3385 = vadd.f32 0.0, %v3384
        %3386 = vdwg.mxu0
        %3387 = vmatpush.bf16.msra.mxu0 0
        %3388 = vmatpush.bf16.msra.mxu0 0
        %3389 = vmatpush.bf16.msra.mxu0 0
        %3390 = vmatpush.bf16.msra.mxu0 0
        %3391 = vmatpush.bf16.msra.mxu0 0
        %3392 = vmatpush.bf16.msra.mxu0 0
        %3393 = vmatpush.bf16.msra.mxu0 0
        %3394 = vmatpush.bf16.msra.mxu0 %v3303
        %3395 = vmatmul.bf16.gmra.mxu0 %v3325
        %v3396 = vpop.f32.mrf.mxu0
        %v3397 = vadd.f32 %v3378, %v3396
        %v3398 = vpop.f32.mrf.mxu0
        %v3399 = vadd.f32 %v3380, %v3398
        %3400 = vmatmul.bf16.gmra.mxu0 %v3328
        %v3401 = vpop.f32.mrf.mxu0
        %v3402 = vadd.f32 %v3383, %v3401
        %v3403 = vpop.f32.mrf.mxu0
        %v3404 = vadd.f32 %v3385, %v3403
        %3405 = vdwg.mxu0
        %3406 = vmatpush.bf16.msra.mxu0 %v3300
        %3407 = vmatpush.bf16.msra.mxu0 %v3296
        %3408 = vmatpush.bf16.msra.mxu0 %v3292
        %3409 = vmatpush.bf16.msra.mxu0 %v3288
        %3410 = vmatpush.bf16.msra.mxu0 %v3284
        %3411 = vmatpush.bf16.msra.mxu0 %v3280
        %3412 = vmatpush.bf16.msra.mxu0 %v3276
        %3413 = vmatpush.bf16.msra.mxu0 %v3272
        %3414 = vmatmul.bf16.gmra.mxu0 %v3318
        %v3415 = vpop.f32.mrf.mxu0
        %v3416 = vadd.f32 0.0, %v3415
        %v3417 = vpop.f32.mrf.mxu0
        %v3418 = vadd.f32 0.0, %v3417
        %3419 = vmatmul.bf16.gmra.mxu0 %v3320
        %v3420 = vpop.f32.mrf.mxu0
        %v3421 = vadd.f32 0.0, %v3420
        %v3422 = vpop.f32.mrf.mxu0
        %v3423 = vadd.f32 0.0, %v3422
        %3424 = vdwg.mxu0
        %3425 = vmatpush.bf16.msra.mxu0 0
        %3426 = vmatpush.bf16.msra.mxu0 0
        %3427 = vmatpush.bf16.msra.mxu0 0
        %3428 = vmatpush.bf16.msra.mxu0 0
        %3429 = vmatpush.bf16.msra.mxu0 0
        %3430 = vmatpush.bf16.msra.mxu0 0
        %3431 = vmatpush.bf16.msra.mxu0 0
        %3432 = vmatpush.bf16.msra.mxu0 %v3304
        %3433 = vmatmul.bf16.gmra.mxu0 %v3325
        %v3434 = vpop.f32.mrf.mxu0
        %v3435 = vadd.f32 %v3416, %v3434
        %v3436 = vpop.f32.mrf.mxu0
        %v3437 = vadd.f32 %v3418, %v3436
        %3438 = vmatmul.bf16.gmra.mxu0 %v3328
        %v3439 = vpop.f32.mrf.mxu0
        %v3440 = vadd.f32 %v3421, %v3439
        %v3441 = vpop.f32.mrf.mxu0
        %v3442 = vadd.f32 %v3423, %v3441
        %3443 = vdwg.mxu0
        %3444 = vmatpush.bf16.msra.mxu0 %v3301
        %3445 = vmatpush.bf16.msra.mxu0 %v3297
        %3446 = vmatpush.bf16.msra.mxu0 %v3293
        %3447 = vmatpush.bf16.msra.mxu0 %v3289
        %3448 = vmatpush.bf16.msra.mxu0 %v3285
        %3449 = vmatpush.bf16.msra.mxu0 %v3281
        %3450 = vmatpush.bf16.msra.mxu0 %v3277
        %3451 = vmatpush.bf16.msra.mxu0 %v3273
        %3452 = vmatmul.bf16.gmra.mxu0 %v3318
        %v3453 = vpop.f32.mrf.mxu0
        %v3454 = vadd.f32 0.0, %v3453
        %v3455 = vpop.f32.mrf.mxu0
        %v3456 = vadd.f32 0.0, %v3455
        %3457 = vmatmul.bf16.gmra.mxu0 %v3320
        %v3458 = vpop.f32.mrf.mxu0
        %v3459 = vadd.f32 0.0, %v3458
        %v3460 = vpop.f32.mrf.mxu0
        %v3461 = vadd.f32 0.0, %v3460
        %3462 = vdwg.mxu0
        %3463 = vmatpush.bf16.msra.mxu0 0
        %3464 = vmatpush.bf16.msra.mxu0 0
        %3465 = vmatpush.bf16.msra.mxu0 0
        %3466 = vmatpush.bf16.msra.mxu0 0
        %3467 = vmatpush.bf16.msra.mxu0 0
        %3468 = vmatpush.bf16.msra.mxu0 0
        %3469 = vmatpush.bf16.msra.mxu0 0
        %3470 = vmatpush.bf16.msra.mxu0 %v3305
        %3471 = vmatmul.bf16.gmra.mxu0 %v3325
        %v3472 = vpop.f32.mrf.mxu0
        %v3473 = vadd.f32 %v3454, %v3472
        %v3474 = vpop.f32.mrf.mxu0
        %v3475 = vadd.f32 %v3456, %v3474
        %3476 = vmatmul.bf16.gmra.mxu0 %v3328
        %v3477 = vpop.f32.mrf.mxu0
        %v3478 = vadd.f32 %v3459, %v3477
        %v3479 = vpop.f32.mrf.mxu0
        %v3480 = vadd.f32 %v3461, %v3479
        %3481 = vdwg.mxu0
        %3482 = vmatpush.msra.mxu0 %v408
        %3483 = vmatpush.msra.mxu0 %v407
        %3484 = vmatpush.msra.mxu0 %v406
        %3485 = vmatpush.msra.mxu0 %v405
        %3486 = vmatpush.msra.mxu0 %v404
        %3487 = vmatpush.msra.mxu0 %v403
        %3488 = vmatpush.msra.mxu0 %v402
        %3489 = vmatpush.msra.mxu0 %v401
        %3490 = vmatpush.msra.mxu0 %v400
        %3491 = vmatpush.msra.mxu0 %v399
        %3492 = vmatpush.msra.mxu0 %v398
        %3493 = vmatpush.msra.mxu0 %v397
        %3494 = vmatpush.msra.mxu0 %v396
        %3495 = vmatpush.msra.mxu0 %v395
        %3496 = vmatpush.msra.mxu0 %v394
        %3497 = vmatpush.msra.mxu0 %v393
        %3498 = vmatmul.f32.gmra.mxu0 %v3359
        %v3499 = vpop.f32.mrf.mxu0
        %v3500 = vadd.f32 0.0, %v3499
        %3501 = vmatmul.f32.gmra.mxu0 %v3361
        %v3502 = vpop.f32.mrf.mxu0
        %v3503 = vadd.f32 0.0, %v3502
        %3504 = vmatmul.f32.gmra.mxu0 %v3364
        %v3505 = vpop.f32.mrf.mxu0
        %v3506 = vadd.f32 0.0, %v3505
        %3507 = vmatmul.f32.gmra.mxu0 %v3366
        %v3508 = vpop.f32.mrf.mxu0
        %v3509 = vadd.f32 0.0, %v3508
        %3510 = vdwg.mxu0
        %3511 = vmatpush.msra.mxu0 %v424
        %3512 = vmatpush.msra.mxu0 %v423
        %3513 = vmatpush.msra.mxu0 %v422
        %3514 = vmatpush.msra.mxu0 %v421
        %3515 = vmatpush.msra.mxu0 %v420
        %3516 = vmatpush.msra.mxu0 %v419
        %3517 = vmatpush.msra.mxu0 %v418
        %3518 = vmatpush.msra.mxu0 %v417
        %3519 = vmatpush.msra.mxu0 %v416
        %3520 = vmatpush.msra.mxu0 %v415
        %3521 = vmatpush.msra.mxu0 %v414
        %3522 = vmatpush.msra.mxu0 %v413
        %3523 = vmatpush.msra.mxu0 %v412
        %3524 = vmatpush.msra.mxu0 %v411
        %3525 = vmatpush.msra.mxu0 %v410
        %3526 = vmatpush.msra.mxu0 %v409
        %3527 = vmatmul.f32.gmra.mxu0 %v3397
        %v3528 = vpop.f32.mrf.mxu0
        %v3529 = vadd.f32 %v3500, %v3528
        %3530 = vmatmul.f32.gmra.mxu0 %v3399
        %v3531 = vpop.f32.mrf.mxu0
        %v3532 = vadd.f32 %v3503, %v3531
        %3533 = vmatmul.f32.gmra.mxu0 %v3402
        %v3534 = vpop.f32.mrf.mxu0
        %v3535 = vadd.f32 %v3506, %v3534
        %3536 = vmatmul.f32.gmra.mxu0 %v3404
        %v3537 = vpop.f32.mrf.mxu0
        %v3538 = vadd.f32 %v3509, %v3537
        %3539 = vdwg.mxu0
        %3540 = vmatpush.msra.mxu0 %v440
        %3541 = vmatpush.msra.mxu0 %v439
        %3542 = vmatpush.msra.mxu0 %v438
        %3543 = vmatpush.msra.mxu0 %v437
        %3544 = vmatpush.msra.mxu0 %v436
        %3545 = vmatpush.msra.mxu0 %v435
        %3546 = vmatpush.msra.mxu0 %v434
        %3547 = vmatpush.msra.mxu0 %v433
        %3548 = vmatpush.msra.mxu0 %v432
        %3549 = vmatpush.msra.mxu0 %v431
        %3550 = vmatpush.msra.mxu0 %v430
        %3551 = vmatpush.msra.mxu0 %v429
        %3552 = vmatpush.msra.mxu0 %v428
        %3553 = vmatpush.msra.mxu0 %v427
        %3554 = vmatpush.msra.mxu0 %v426
        %3555 = vmatpush.msra.mxu0 %v425
        %3556 = vmatmul.f32.gmra.mxu0 %v3435
        %v3557 = vpop.f32.mrf.mxu0
        %v3558 = vadd.f32 %v3529, %v3557
        %3559 = vmatmul.f32.gmra.mxu0 %v3437
        %v3560 = vpop.f32.mrf.mxu0
        %v3561 = vadd.f32 %v3532, %v3560
        %3562 = vmatmul.f32.gmra.mxu0 %v3440
        %v3563 = vpop.f32.mrf.mxu0
        %v3564 = vadd.f32 %v3535, %v3563
        %3565 = vmatmul.f32.gmra.mxu0 %v3442
        %v3566 = vpop.f32.mrf.mxu0
        %v3567 = vadd.f32 %v3538, %v3566
        %3568 = vdwg.mxu0
        %3569 = vmatpush.msra.mxu0 %v456
        %3570 = vmatpush.msra.mxu0 %v455
        %3571 = vmatpush.msra.mxu0 %v454
        %3572 = vmatpush.msra.mxu0 %v453
        %3573 = vmatpush.msra.mxu0 %v452
        %3574 = vmatpush.msra.mxu0 %v451
        %3575 = vmatpush.msra.mxu0 %v450
        %3576 = vmatpush.msra.mxu0 %v449
        %3577 = vmatpush.msra.mxu0 %v448
        %3578 = vmatpush.msra.mxu0 %v447
        %3579 = vmatpush.msra.mxu0 %v446
        %3580 = vmatpush.msra.mxu0 %v445
        %3581 = vmatpush.msra.mxu0 %v444
        %3582 = vmatpush.msra.mxu0 %v443
        %3583 = vmatpush.msra.mxu0 %v442
        %3584 = vmatpush.msra.mxu0 %v441
        %3585 = vmatmul.f32.gmra.mxu0 %v3473
        %v3586 = vpop.f32.mrf.mxu0
        %v3587 = vadd.f32 %v3558, %v3586
        %3588 = vmatmul.f32.gmra.mxu0 %v3475
        %v3589 = vpop.f32.mrf.mxu0
        %v3590 = vadd.f32 %v3561, %v3589
        %3591 = vmatmul.f32.gmra.mxu0 %v3478
        %v3592 = vpop.f32.mrf.mxu0
        %v3593 = vadd.f32 %v3564, %v3592
        %3594 = vmatmul.f32.gmra.mxu0 %v3480
        %v3595 = vpop.f32.mrf.mxu0
        %v3596 = vadd.f32 %v3567, %v3595
        %3597 = vdwg.mxu0
        %v3598 = vmul.f32 %v3359, %v3359
        %v3599 = vmul.f32 %v3397, %v3397
        %v3600 = vmul.f32 %v3435, %v3435
        %v3601 = vmul.f32 %v3473, %v3473
        %v3602 = vmul.f32 %v3361, %v3361
        %v3603 = vmul.f32 %v3399, %v3399
        %v3604 = vmul.f32 %v3437, %v3437
        %v3605 = vmul.f32 %v3475, %v3475
        %v3606 = vmul.f32 %v3364, %v3364
        %v3607 = vmul.f32 %v3402, %v3402
        %v3608 = vmul.f32 %v3440, %v3440
        %v3609 = vmul.f32 %v3478, %v3478
        %v3610 = vmul.f32 %v3366, %v3366
        %v3611 = vmul.f32 %v3404, %v3404
        %v3612 = vmul.f32 %v3442, %v3442
        %v3613 = vmul.f32 %v3480, %v3480
        %3614 = vmatpush.msra.mxu0 %v408
        %3615 = vmatpush.msra.mxu0 %v407
        %3616 = vmatpush.msra.mxu0 %v406
        %3617 = vmatpush.msra.mxu0 %v405
        %3618 = vmatpush.msra.mxu0 %v404
        %3619 = vmatpush.msra.mxu0 %v403
        %3620 = vmatpush.msra.mxu0 %v402
        %3621 = vmatpush.msra.mxu0 %v401
        %3622 = vmatpush.msra.mxu0 %v400
        %3623 = vmatpush.msra.mxu0 %v399
        %3624 = vmatpush.msra.mxu0 %v398
        %3625 = vmatpush.msra.mxu0 %v397
        %3626 = vmatpush.msra.mxu0 %v396
        %3627 = vmatpush.msra.mxu0 %v395
        %3628 = vmatpush.msra.mxu0 %v394
        %3629 = vmatpush.msra.mxu0 %v393
        %3630 = vmatmul.f32.gmra.mxu0 %v3598
        %v3631 = vpop.f32.mrf.mxu0
        %v3632 = vadd.f32 0.0, %v3631
        %3633 = vmatmul.f32.gmra.mxu0 %v3602
        %v3634 = vpop.f32.mrf.mxu0
        %v3635 = vadd.f32 0.0, %v3634
        %3636 = vmatmul.f32.gmra.mxu0 %v3606
        %v3637 = vpop.f32.mrf.mxu0
        %v3638 = vadd.f32 0.0, %v3637
        %3639 = vmatmul.f32.gmra.mxu0 %v3610
        %v3640 = vpop.f32.mrf.mxu0
        %v3641 = vadd.f32 0.0, %v3640
        %3642 = vdwg.mxu0
        %3643 = vmatpush.msra.mxu0 %v424
        %3644 = vmatpush.msra.mxu0 %v423
        %3645 = vmatpush.msra.mxu0 %v422
        %3646 = vmatpush.msra.mxu0 %v421
        %3647 = vmatpush.msra.mxu0 %v420
        %3648 = vmatpush.msra.mxu0 %v419
        %3649 = vmatpush.msra.mxu0 %v418
        %3650 = vmatpush.msra.mxu0 %v417
        %3651 = vmatpush.msra.mxu0 %v416
        %3652 = vmatpush.msra.mxu0 %v415
        %3653 = vmatpush.msra.mxu0 %v414
        %3654 = vmatpush.msra.mxu0 %v413
        %3655 = vmatpush.msra.mxu0 %v412
        %3656 = vmatpush.msra.mxu0 %v411
        %3657 = vmatpush.msra.mxu0 %v410
        %3658 = vmatpush.msra.mxu0 %v409
        %3659 = vmatmul.f32.gmra.mxu0 %v3599
        %v3660 = vpop.f32.mrf.mxu0
        %v3661 = vadd.f32 %v3632, %v3660
        %3662 = vmatmul.f32.gmra.mxu0 %v3603
        %v3663 = vpop.f32.mrf.mxu0
        %v3664 = vadd.f32 %v3635, %v3663
        %3665 = vmatmul.f32.gmra.mxu0 %v3607
        %v3666 = vpop.f32.mrf.mxu0
        %v3667 = vadd.f32 %v3638, %v3666
        %3668 = vmatmul.f32.gmra.mxu0 %v3611
        %v3669 = vpop.f32.mrf.mxu0
        %v3670 = vadd.f32 %v3641, %v3669
        %3671 = vdwg.mxu0
        %3672 = vmatpush.msra.mxu0 %v440
        %3673 = vmatpush.msra.mxu0 %v439
        %3674 = vmatpush.msra.mxu0 %v438
        %3675 = vmatpush.msra.mxu0 %v437
        %3676 = vmatpush.msra.mxu0 %v436
        %3677 = vmatpush.msra.mxu0 %v435
        %3678 = vmatpush.msra.mxu0 %v434
        %3679 = vmatpush.msra.mxu0 %v433
        %3680 = vmatpush.msra.mxu0 %v432
        %3681 = vmatpush.msra.mxu0 %v431
        %3682 = vmatpush.msra.mxu0 %v430
        %3683 = vmatpush.msra.mxu0 %v429
        %3684 = vmatpush.msra.mxu0 %v428
        %3685 = vmatpush.msra.mxu0 %v427
        %3686 = vmatpush.msra.mxu0 %v426
        %3687 = vmatpush.msra.mxu0 %v425
        %3688 = vmatmul.f32.gmra.mxu0 %v3600
        %v3689 = vpop.f32.mrf.mxu0
        %v3690 = vadd.f32 %v3661, %v3689
        %3691 = vmatmul.f32.gmra.mxu0 %v3604
        %v3692 = vpop.f32.mrf.mxu0
        %v3693 = vadd.f32 %v3664, %v3692
        %3694 = vmatmul.f32.gmra.mxu0 %v3608
        %v3695 = vpop.f32.mrf.mxu0
        %v3696 = vadd.f32 %v3667, %v3695
        %3697 = vmatmul.f32.gmra.mxu0 %v3612
        %v3698 = vpop.f32.mrf.mxu0
        %v3699 = vadd.f32 %v3670, %v3698
        %3700 = vdwg.mxu0
        %3701 = vmatpush.msra.mxu0 %v456
        %3702 = vmatpush.msra.mxu0 %v455
        %3703 = vmatpush.msra.mxu0 %v454
        %3704 = vmatpush.msra.mxu0 %v453
        %3705 = vmatpush.msra.mxu0 %v452
        %3706 = vmatpush.msra.mxu0 %v451
        %3707 = vmatpush.msra.mxu0 %v450
        %3708 = vmatpush.msra.mxu0 %v449
        %3709 = vmatpush.msra.mxu0 %v448
        %3710 = vmatpush.msra.mxu0 %v447
        %3711 = vmatpush.msra.mxu0 %v446
        %3712 = vmatpush.msra.mxu0 %v445
        %3713 = vmatpush.msra.mxu0 %v444
        %3714 = vmatpush.msra.mxu0 %v443
        %3715 = vmatpush.msra.mxu0 %v442
        %3716 = vmatpush.msra.mxu0 %v441
        %3717 = vmatmul.f32.gmra.mxu0 %v3601
        %v3718 = vpop.f32.mrf.mxu0
        %v3719 = vadd.f32 %v3690, %v3718
        %3720 = vmatmul.f32.gmra.mxu0 %v3605
        %v3721 = vpop.f32.mrf.mxu0
        %v3722 = vadd.f32 %v3693, %v3721
        %3723 = vmatmul.f32.gmra.mxu0 %v3609
        %v3724 = vpop.f32.mrf.mxu0
        %v3725 = vadd.f32 %v3696, %v3724
        %3726 = vmatmul.f32.gmra.mxu0 %v3613
        %v3727 = vpop.f32.mrf.mxu0
        %v3728 = vadd.f32 %v3699, %v3727
        %3729 = vdwg.mxu0
        %v3730 = vmul.f32 %v3587, 0.00390625
        %v3731 = vmul.f32 %v3590, 0.00390625
        %v3732 = vmul.f32 %v3593, 0.00390625
        %v3733 = vmul.f32 %v3596, 0.00390625
        %v3734 = vmul.f32 %v3719, 0.00390625
        %v3735 = vmul.f32 %v3722, 0.00390625
        %v3736 = vmul.f32 %v3725, 0.00390625
        %v3737 = vmul.f32 %v3728, 0.00390625
        %v3738 = vmul.f32 %v3730, %v3730
        %v3739 = vmul.f32 %v3731, %v3731
        %v3740 = vmul.f32 %v3732, %v3732
        %v3741 = vmul.f32 %v3733, %v3733
        %v3742 = vsub.f32 %v3734, %v3738
        %v3743 = vsub.f32 %v3735, %v3739
        %v3744 = vsub.f32 %v3736, %v3740
        %v3745 = vsub.f32 %v3737, %v3741
        %v3746 = vmax.f32 %v3742, 0.0
        %v3747 = vmax.f32 %v3743, 0.0
        %v3748 = vmax.f32 %v3744, 0.0
        %v3749 = vmax.f32 %v3745, 0.0
        %v3750 = vadd.f32 %v3746, 1e-05
        %v3751 = vadd.f32 %v3747, 1e-05
        %v3752 = vadd.f32 %v3748, 1e-05
        %v3753 = vadd.f32 %v3749, 1e-05
        %v3754 = vrsqrt.pop %v3750
        %v3755 = vmul.f32 %v3754, %v3750
        %v3756 = vmul.f32 %v3755, %v3754
        %v3757 = vmul.f32 0.5, %v3756
        %v3758 = vsub.f32 1.5, %v3757
        %v3759 = vmul.f32 %v3754, %v3758
        %vm3760 = vweird.f32 %v3750
        %vm3761 = vweird.f32 %v3754
        %vm3762 = vmor %vm3760, %vm3761
        %v3763 = vsel %vm3762, %v3754, %v3759
        %v3764 = vrsqrt.pop %v3751
        %v3765 = vmul.f32 %v3764, %v3751
        %v3766 = vmul.f32 %v3765, %v3764
        %v3767 = vmul.f32 0.5, %v3766
        %v3768 = vsub.f32 1.5, %v3767
        %v3769 = vmul.f32 %v3764, %v3768
        %vm3770 = vweird.f32 %v3751
        %vm3771 = vweird.f32 %v3764
        %vm3772 = vmor %vm3770, %vm3771
        %v3773 = vsel %vm3772, %v3764, %v3769
        %v3774 = vrsqrt.pop %v3752
        %v3775 = vmul.f32 %v3774, %v3752
        %v3776 = vmul.f32 %v3775, %v3774
        %v3777 = vmul.f32 0.5, %v3776
        %v3778 = vsub.f32 1.5, %v3777
        %v3779 = vmul.f32 %v3774, %v3778
        %vm3780 = vweird.f32 %v3752
        %vm3781 = vweird.f32 %v3774
        %vm3782 = vmor %vm3780, %vm3781
        %v3783 = vsel %vm3782, %v3774, %v3779
        %v3784 = vrsqrt.pop %v3753
        %v3785 = vmul.f32 %v3784, %v3753
        %v3786 = vmul.f32 %v3785, %v3784
        %v3787 = vmul.f32 0.5, %v3786
        %v3788 = vsub.f32 1.5, %v3787
        %v3789 = vmul.f32 %v3784, %v3788
        %vm3790 = vweird.f32 %v3753
        %vm3791 = vweird.f32 %v3784
        %vm3792 = vmor %vm3790, %vm3791
        %v3793 = vsel %vm3792, %v3784, %v3789
        %3794 = vst [vmem:[#allocation1] ss:$4 sm:$0xff] %v457
        %v3795 = vld.sshfl [vmem:[#allocation1] sm:$0xff pattern:$0x73625140]
        %v3796 = vld.sshfl [vmem:[#allocation1 + $0x8] sm:$0xff pattern:$0x73625140]
        %v3797 = vld.sshfl [vmem:[#allocation1 + $0x10] sm:$0xff pattern:$0x73625140]
        %v3798 = vld.sshfl [vmem:[#allocation1 + $0x18] sm:$0xff pattern:$0x73625140]
        %v3800 = vsel %vm962, %v3763, 0
        %v3803 = vsel %vm962, %v3773, 0
        %v3806 = vsel %vm962, %v3783, 0
        %v3809 = vsel %vm962, %v3793, 0
        %v3811 = vsel %vm969, %v3795, 0
        %v3813 = vsel %vm969, %v3796, 0
        %v3815 = vsel %vm969, %v3797, 0
        %v3817 = vsel %vm969, %v3798, 0
        %3819 = vmatpush.msra.mxu0 0.0
        %3820 = vmatpush.msra.mxu0 0.0
        %3821 = vmatpush.msra.mxu0 0.0
        %3822 = vmatpush.msra.mxu0 0.0
        %3823 = vmatpush.msra.mxu0 0.0
        %3824 = vmatpush.msra.mxu0 0.0
        %3825 = vmatpush.msra.mxu0 0.0
        %3826 = vmatpush.msra.mxu0 0.0
        %3827 = vmatpush.msra.mxu0 0.0
        %3828 = vmatpush.msra.mxu0 0.0
        %3829 = vmatpush.msra.mxu0 0.0
        %3830 = vmatpush.msra.mxu0 0.0
        %3831 = vmatpush.msra.mxu0 0.0
        %3832 = vmatpush.msra.mxu0 0.0
        %3833 = vmatpush.msra.mxu0 0.0
        %3834 = vmatpush.msra.mxu0 %v3811
        %3835 = vmatmul.f32.gmra.mxu0 %v3800
        %v3836 = vpop.f32.mrf.mxu0
        %v3837 = vadd.f32 0.0, %v3836
        %3838 = vmatmul.f32.gmra.mxu0 %v3803
        %v3839 = vpop.f32.mrf.mxu0
        %v3840 = vadd.f32 0.0, %v3839
        %3841 = vmatmul.f32.gmra.mxu0 %v3806
        %v3842 = vpop.f32.mrf.mxu0
        %v3843 = vadd.f32 0.0, %v3842
        %3844 = vmatmul.f32.gmra.mxu0 %v3809
        %v3845 = vpop.f32.mrf.mxu0
        %v3846 = vadd.f32 0.0, %v3845
        %3847 = vdwg.mxu0
        %3848 = vmatpush.msra.mxu0 0.0
        %3849 = vmatpush.msra.mxu0 0.0
        %3850 = vmatpush.msra.mxu0 0.0
        %3851 = vmatpush.msra.mxu0 0.0
        %3852 = vmatpush.msra.mxu0 0.0
        %3853 = vmatpush.msra.mxu0 0.0
        %3854 = vmatpush.msra.mxu0 0.0
        %3855 = vmatpush.msra.mxu0 0.0
        %3856 = vmatpush.msra.mxu0 0.0
        %3857 = vmatpush.msra.mxu0 0.0
        %3858 = vmatpush.msra.mxu0 0.0
        %3859 = vmatpush.msra.mxu0 0.0
        %3860 = vmatpush.msra.mxu0 0.0
        %3861 = vmatpush.msra.mxu0 0.0
        %3862 = vmatpush.msra.mxu0 0.0
        %3863 = vmatpush.msra.mxu0 %v3813
        %3864 = vmatmul.f32.gmra.mxu0 %v3800
        %v3865 = vpop.f32.mrf.mxu0
        %v3866 = vadd.f32 0.0, %v3865
        %3867 = vmatmul.f32.gmra.mxu0 %v3803
        %v3868 = vpop.f32.mrf.mxu0
        %v3869 = vadd.f32 0.0, %v3868
        %3870 = vmatmul.f32.gmra.mxu0 %v3806
        %v3871 = vpop.f32.mrf.mxu0
        %v3872 = vadd.f32 0.0, %v3871
        %3873 = vmatmul.f32.gmra.mxu0 %v3809
        %v3874 = vpop.f32.mrf.mxu0
        %v3875 = vadd.f32 0.0, %v3874
        %3876 = vdwg.mxu0
        %3877 = vmatpush.msra.mxu0 0.0
        %3878 = vmatpush.msra.mxu0 0.0
        %3879 = vmatpush.msra.mxu0 0.0
        %3880 = vmatpush.msra.mxu0 0.0
        %3881 = vmatpush.msra.mxu0 0.0
        %3882 = vmatpush.msra.mxu0 0.0
        %3883 = vmatpush.msra.mxu0 0.0
        %3884 = vmatpush.msra.mxu0 0.0
        %3885 = vmatpush.msra.mxu0 0.0
        %3886 = vmatpush.msra.mxu0 0.0
        %3887 = vmatpush.msra.mxu0 0.0
        %3888 = vmatpush.msra.mxu0 0.0
        %3889 = vmatpush.msra.mxu0 0.0
        %3890 = vmatpush.msra.mxu0 0.0
        %3891 = vmatpush.msra.mxu0 0.0
        %3892 = vmatpush.msra.mxu0 %v3815
        %3893 = vmatmul.f32.gmra.mxu0 %v3800
        %v3894 = vpop.f32.mrf.mxu0
        %v3895 = vadd.f32 0.0, %v3894
        %3896 = vmatmul.f32.gmra.mxu0 %v3803
        %v3897 = vpop.f32.mrf.mxu0
        %v3898 = vadd.f32 0.0, %v3897
        %3899 = vmatmul.f32.gmra.mxu0 %v3806
        %v3900 = vpop.f32.mrf.mxu0
        %v3901 = vadd.f32 0.0, %v3900
        %3902 = vmatmul.f32.gmra.mxu0 %v3809
        %v3903 = vpop.f32.mrf.mxu0
        %v3904 = vadd.f32 0.0, %v3903
        %3905 = vdwg.mxu0
        %3906 = vmatpush.msra.mxu0 0.0
        %3907 = vmatpush.msra.mxu0 0.0
        %3908 = vmatpush.msra.mxu0 0.0
        %3909 = vmatpush.msra.mxu0 0.0
        %3910 = vmatpush.msra.mxu0 0.0
        %3911 = vmatpush.msra.mxu0 0.0
        %3912 = vmatpush.msra.mxu0 0.0
        %3913 = vmatpush.msra.mxu0 0.0
        %3914 = vmatpush.msra.mxu0 0.0
        %3915 = vmatpush.msra.mxu0 0.0
        %3916 = vmatpush.msra.mxu0 0.0
        %3917 = vmatpush.msra.mxu0 0.0
        %3918 = vmatpush.msra.mxu0 0.0
        %3919 = vmatpush.msra.mxu0 0.0
        %3920 = vmatpush.msra.mxu0 0.0
        %3921 = vmatpush.msra.mxu0 %v3817
        %3922 = vmatmul.f32.gmra.mxu0 %v3800
        %v3923 = vpop.f32.mrf.mxu0
        %v3924 = vadd.f32 0.0, %v3923
        %3925 = vmatmul.f32.gmra.mxu0 %v3803
        %v3926 = vpop.f32.mrf.mxu0
        %v3927 = vadd.f32 0.0, %v3926
        %3928 = vmatmul.f32.gmra.mxu0 %v3806
        %v3929 = vpop.f32.mrf.mxu0
        %v3930 = vadd.f32 0.0, %v3929
        %3931 = vmatmul.f32.gmra.mxu0 %v3809
        %v3932 = vpop.f32.mrf.mxu0
        %v3933 = vadd.f32 0.0, %v3932
        %3934 = vdwg.mxu0
        %v3935 = vsub.f32 0.0, %v3730
        %v3936 = vsub.f32 0.0, %v3731
        %v3937 = vsub.f32 0.0, %v3732
        %v3938 = vsub.f32 0.0, %v3733
        %v3939 = vmul.f32 %v3935, %v3763
        %v3940 = vmul.f32 %v3936, %v3773
        %v3941 = vmul.f32 %v3937, %v3783
        %v3942 = vmul.f32 %v3938, %v3793
        %3943 = vst [vmem:[#allocation1] ss:$4 sm:$0xff] %v457
        %v3944 = vld.sshfl [vmem:[#allocation1] sm:$0xff pattern:$0x73625140]
        %v3945 = vld.sshfl [vmem:[#allocation1 + $0x8] sm:$0xff pattern:$0x73625140]
        %v3946 = vld.sshfl [vmem:[#allocation1 + $0x10] sm:$0xff pattern:$0x73625140]
        %v3947 = vld.sshfl [vmem:[#allocation1 + $0x18] sm:$0xff pattern:$0x73625140]
        %v3949 = vsel %vm962, %v3939, 0
        %v3952 = vsel %vm962, %v3940, 0
        %v3955 = vsel %vm962, %v3941, 0
        %v3958 = vsel %vm962, %v3942, 0
        %v3960 = vsel %vm969, %v3944, 0
        %v3962 = vsel %vm969, %v3945, 0
        %v3964 = vsel %vm969, %v3946, 0
        %v3966 = vsel %vm969, %v3947, 0
        %3968 = vmatpush.msra.mxu0 0.0
        %3969 = vmatpush.msra.mxu0 0.0
        %3970 = vmatpush.msra.mxu0 0.0
        %3971 = vmatpush.msra.mxu0 0.0
        %3972 = vmatpush.msra.mxu0 0.0
        %3973 = vmatpush.msra.mxu0 0.0
        %3974 = vmatpush.msra.mxu0 0.0
        %3975 = vmatpush.msra.mxu0 0.0
        %3976 = vmatpush.msra.mxu0 0.0
        %3977 = vmatpush.msra.mxu0 0.0
        %3978 = vmatpush.msra.mxu0 0.0
        %3979 = vmatpush.msra.mxu0 0.0
        %3980 = vmatpush.msra.mxu0 0.0
        %3981 = vmatpush.msra.mxu0 0.0
        %3982 = vmatpush.msra.mxu0 0.0
        %3983 = vmatpush.msra.mxu0 %v3960
        %3984 = vmatmul.f32.gmra.mxu0 %v3949
        %v3985 = vpop.f32.mrf.mxu0
        %v3986 = vadd.f32 0.0, %v3985
        %3987 = vmatmul.f32.gmra.mxu0 %v3952
        %v3988 = vpop.f32.mrf.mxu0
        %v3989 = vadd.f32 0.0, %v3988
        %3990 = vmatmul.f32.gmra.mxu0 %v3955
        %v3991 = vpop.f32.mrf.mxu0
        %v3992 = vadd.f32 0.0, %v3991
        %3993 = vmatmul.f32.gmra.mxu0 %v3958
        %v3994 = vpop.f32.mrf.mxu0
        %v3995 = vadd.f32 0.0, %v3994
        %3996 = vdwg.mxu0
        %3997 = vmatpush.msra.mxu0 0.0
        %3998 = vmatpush.msra.mxu0 0.0
        %3999 = vmatpush.msra.mxu0 0.0
        %4000 = vmatpush.msra.mxu0 0.0
        %4001 = vmatpush.msra.mxu0 0.0
        %4002 = vmatpush.msra.mxu0 0.0
        %4003 = vmatpush.msra.mxu0 0.0
        %4004 = vmatpush.msra.mxu0 0.0
        %4005 = vmatpush.msra.mxu0 0.0
        %4006 = vmatpush.msra.mxu0 0.0
        %4007 = vmatpush.msra.mxu0 0.0
        %4008 = vmatpush.msra.mxu0 0.0
        %4009 = vmatpush.msra.mxu0 0.0
        %4010 = vmatpush.msra.mxu0 0.0
        %4011 = vmatpush.msra.mxu0 0.0
        %4012 = vmatpush.msra.mxu0 %v3962
        %4013 = vmatmul.f32.gmra.mxu0 %v3949
        %v4014 = vpop.f32.mrf.mxu0
        %v4015 = vadd.f32 0.0, %v4014
        %4016 = vmatmul.f32.gmra.mxu0 %v3952
        %v4017 = vpop.f32.mrf.mxu0
        %v4018 = vadd.f32 0.0, %v4017
        %4019 = vmatmul.f32.gmra.mxu0 %v3955
        %v4020 = vpop.f32.mrf.mxu0
        %v4021 = vadd.f32 0.0, %v4020
        %4022 = vmatmul.f32.gmra.mxu0 %v3958
        %v4023 = vpop.f32.mrf.mxu0
        %v4024 = vadd.f32 0.0, %v4023
        %4025 = vdwg.mxu0
        %4026 = vmatpush.msra.mxu0 0.0
        %4027 = vmatpush.msra.mxu0 0.0
        %4028 = vmatpush.msra.mxu0 0.0
        %4029 = vmatpush.msra.mxu0 0.0
        %4030 = vmatpush.msra.mxu0 0.0
        %4031 = vmatpush.msra.mxu0 0.0
        %4032 = vmatpush.msra.mxu0 0.0
        %4033 = vmatpush.msra.mxu0 0.0
        %4034 = vmatpush.msra.mxu0 0.0
        %4035 = vmatpush.msra.mxu0 0.0
        %4036 = vmatpush.msra.mxu0 0.0
        %4037 = vmatpush.msra.mxu0 0.0
        %4038 = vmatpush.msra.mxu0 0.0
        %4039 = vmatpush.msra.mxu0 0.0
        %4040 = vmatpush.msra.mxu0 0.0
        %4041 = vmatpush.msra.mxu0 %v3964
        %4042 = vmatmul.f32.gmra.mxu0 %v3949
        %v4043 = vpop.f32.mrf.mxu0
        %v4044 = vadd.f32 0.0, %v4043
        %4045 = vmatmul.f32.gmra.mxu0 %v3952
        %v4046 = vpop.f32.mrf.mxu0
        %v4047 = vadd.f32 0.0, %v4046
        %4048 = vmatmul.f32.gmra.mxu0 %v3955
        %v4049 = vpop.f32.mrf.mxu0
        %v4050 = vadd.f32 0.0, %v4049
        %4051 = vmatmul.f32.gmra.mxu0 %v3958
        %v4052 = vpop.f32.mrf.mxu0
        %v4053 = vadd.f32 0.0, %v4052
        %4054 = vdwg.mxu0
        %4055 = vmatpush.msra.mxu0 0.0
        %4056 = vmatpush.msra.mxu0 0.0
        %4057 = vmatpush.msra.mxu0 0.0
        %4058 = vmatpush.msra.mxu0 0.0
        %4059 = vmatpush.msra.mxu0 0.0
        %4060 = vmatpush.msra.mxu0 0.0
        %4061 = vmatpush.msra.mxu0 0.0
        %4062 = vmatpush.msra.mxu0 0.0
        %4063 = vmatpush.msra.mxu0 0.0
        %4064 = vmatpush.msra.mxu0 0.0
        %4065 = vmatpush.msra.mxu0 0.0
        %4066 = vmatpush.msra.mxu0 0.0
        %4067 = vmatpush.msra.mxu0 0.0
        %4068 = vmatpush.msra.mxu0 0.0
        %4069 = vmatpush.msra.mxu0 0.0
        %4070 = vmatpush.msra.mxu0 %v3966
        %4071 = vmatmul.f32.gmra.mxu0 %v3949
        %v4072 = vpop.f32.mrf.mxu0
        %v4073 = vadd.f32 0.0, %v4072
        %4074 = vmatmul.f32.gmra.mxu0 %v3952
        %v4075 = vpop.f32.mrf.mxu0
        %v4076 = vadd.f32 0.0, %v4075
        %4077 = vmatmul.f32.gmra.mxu0 %v3955
        %v4078 = vpop.f32.mrf.mxu0
        %v4079 = vadd.f32 0.0, %v4078
        %4080 = vmatmul.f32.gmra.mxu0 %v3958
        %v4081 = vpop.f32.mrf.mxu0
        %v4082 = vadd.f32 0.0, %v4081
        %4083 = vdwg.mxu0
        %v4084 = vmul.f32 %v3359, %v3837
        %v4085 = vmul.f32 %v3397, %v3866
        %v4086 = vmul.f32 %v3435, %v3895
        %v4087 = vmul.f32 %v3473, %v3924
        %v4088 = vmul.f32 %v3361, %v3840
        %v4089 = vmul.f32 %v3399, %v3869
        %v4090 = vmul.f32 %v3437, %v3898
        %v4091 = vmul.f32 %v3475, %v3927
        %v4092 = vmul.f32 %v3364, %v3843
        %v4093 = vmul.f32 %v3402, %v3872
        %v4094 = vmul.f32 %v3440, %v3901
        %v4095 = vmul.f32 %v3478, %v3930
        %v4096 = vmul.f32 %v3366, %v3846
        %v4097 = vmul.f32 %v3404, %v3875
        %v4098 = vmul.f32 %v3442, %v3904
        %v4099 = vmul.f32 %v3480, %v3933
        %v4100 = vadd.f32 %v4084, %v3986
        %v4101 = vadd.f32 %v4085, %v4015
        %v4102 = vadd.f32 %v4086, %v4044
        %v4103 = vadd.f32 %v4087, %v4073
        %v4104 = vadd.f32 %v4088, %v3989
        %v4105 = vadd.f32 %v4089, %v4018
        %v4106 = vadd.f32 %v4090, %v4047
        %v4107 = vadd.f32 %v4091, %v4076
        %v4108 = vadd.f32 %v4092, %v3992
        %v4109 = vadd.f32 %v4093, %v4021
        %v4110 = vadd.f32 %v4094, %v4050
        %v4111 = vadd.f32 %v4095, %v4079
        %v4112 = vadd.f32 %v4096, %v3995
        %v4113 = vadd.f32 %v4097, %v4024
        %v4114 = vadd.f32 %v4098, %v4053
        %v4115 = vadd.f32 %v4099, %v4082
        %v4116 = vmax.f32 %v4100, 0.0
        %v4117 = vmax.f32 %v4101, 0.0
        %v4118 = vmax.f32 %v4102, 0.0
        %v4119 = vmax.f32 %v4103, 0.0
        %v4120 = vmax.f32 %v4104, 0.0
        %v4121 = vmax.f32 %v4105, 0.0
        %v4122 = vmax.f32 %v4106, 0.0
        %v4123 = vmax.f32 %v4107, 0.0
        %v4124 = vmax.f32 %v4108, 0.0
        %v4125 = vmax.f32 %v4109, 0.0
        %v4126 = vmax.f32 %v4110, 0.0
        %v4127 = vmax.f32 %v4111, 0.0
        %v4128 = vmax.f32 %v4112, 0.0
        %v4129 = vmax.f32 %v4113, 0.0
        %v4130 = vmax.f32 %v4114, 0.0
        %v4131 = vmax.f32 %v4115, 0.0
        %4132 = vrot.lane.b32.xlu0 %v4116, 17
        %v4133 = vpop.permute.xlu0 %4132
        %4134 = vrot.lane.b32.xlu0 %v4120, 17
        %v4135 = vpop.permute.xlu0 %4134
        %4136 = vrot.lane.b32.xlu0 %v4124, 17
        %v4137 = vpop.permute.xlu0 %4136
        %4138 = vrot.lane.b32.xlu0 %v4128, 17
        %v4139 = vpop.permute.xlu0 %4138
        %4140 = vrot.lane.b32.xlu0 %v4117, 17
        %v4141 = vpop.permute.xlu0 %4140
        %4142 = vrot.lane.b32.xlu0 %v4121, 17
        %v4143 = vpop.permute.xlu0 %4142
        %4144 = vrot.lane.b32.xlu0 %v4125, 17
        %v4145 = vpop.permute.xlu0 %4144
        %4146 = vrot.lane.b32.xlu0 %v4129, 17
        %v4147 = vpop.permute.xlu0 %4146
        %4148 = vrot.lane.b32.xlu0 %v4118, 17
        %v4149 = vpop.permute.xlu0 %4148
        %4150 = vrot.lane.b32.xlu0 %v4122, 17
        %v4151 = vpop.permute.xlu0 %4150
        %4152 = vrot.lane.b32.xlu0 %v4126, 17
        %v4153 = vpop.permute.xlu0 %4152
        %4154 = vrot.lane.b32.xlu0 %v4130, 17
        %v4155 = vpop.permute.xlu0 %4154
        %4156 = vrot.lane.b32.xlu0 %v4119, 17
        %v4157 = vpop.permute.xlu0 %4156
        %4158 = vrot.lane.b32.xlu0 %v4123, 17
        %v4159 = vpop.permute.xlu0 %4158
        %4160 = vrot.lane.b32.xlu0 %v4127, 17
        %v4161 = vpop.permute.xlu0 %4160
        %4162 = vrot.lane.b32.xlu0 %v4131, 17
        %v4163 = vpop.permute.xlu0 %4162
        %v4164 = vsel %vm472, %v4149, %v4157
        %v4165 = vsel %vm472, %v4151, %v4159
        %v4166 = vsel %vm472, %v4153, %v4161
        %v4167 = vsel %vm472, %v4155, %v4163
        %v4168 = vsel %vm472, %v4141, %v4149
        %v4169 = vsel %vm472, %v4143, %v4151
        %v4170 = vsel %vm472, %v4145, %v4153
        %v4171 = vsel %vm472, %v4147, %v4155
        %v4172 = vsel %vm472, %v4133, %v4141
        %v4173 = vsel %vm472, %v4135, %v4143
        %v4174 = vsel %vm472, %v4137, %v4145
        %v4175 = vsel %vm472, %v4139, %v4147
        %v4176 = vsel %vm472, %v4157, %v4133
        %v4177 = vsel %vm472, %v4159, %v4135
        %v4178 = vsel %vm472, %v4161, %v4137
        %v4179 = vsel %vm472, %v4163, %v4139
        %v4180 = vmul.f32 %v4176, %v477
        %v4181 = vmul.f32 %v4172, %v478
        %v4182 = vmul.f32 %v4168, %v479
        %v4183 = vmul.f32 %v4164, %v480
        %v4184 = vmul.f32 %v4177, %v477
        %v4185 = vmul.f32 %v4173, %v478
        %v4186 = vmul.f32 %v4169, %v479
        %v4187 = vmul.f32 %v4165, %v480
        %v4188 = vmul.f32 %v4178, %v477
        %v4189 = vmul.f32 %v4174, %v478
        %v4190 = vmul.f32 %v4170, %v479
        %v4191 = vmul.f32 %v4166, %v480
        %v4192 = vmul.f32 %v4179, %v477
        %v4193 = vmul.f32 %v4175, %v478
        %v4194 = vmul.f32 %v4171, %v479
        %v4195 = vmul.f32 %v4167, %v480
        %4196 = vrot.lane.b32.xlu0 %v4116, 16
        %v4197 = vpop.permute.xlu0 %4196
        %4198 = vrot.lane.b32.xlu0 %v4120, 16
        %v4199 = vpop.permute.xlu0 %4198
        %4200 = vrot.lane.b32.xlu0 %v4124, 16
        %v4201 = vpop.permute.xlu0 %4200
        %4202 = vrot.lane.b32.xlu0 %v4128, 16
        %v4203 = vpop.permute.xlu0 %4202
        %4204 = vrot.lane.b32.xlu0 %v4117, 16
        %v4205 = vpop.permute.xlu0 %4204
        %4206 = vrot.lane.b32.xlu0 %v4121, 16
        %v4207 = vpop.permute.xlu0 %4206
        %4208 = vrot.lane.b32.xlu0 %v4125, 16
        %v4209 = vpop.permute.xlu0 %4208
        %4210 = vrot.lane.b32.xlu0 %v4129, 16
        %v4211 = vpop.permute.xlu0 %4210
        %4212 = vrot.lane.b32.xlu0 %v4118, 16
        %v4213 = vpop.permute.xlu0 %4212
        %4214 = vrot.lane.b32.xlu0 %v4122, 16
        %v4215 = vpop.permute.xlu0 %4214
        %4216 = vrot.lane.b32.xlu0 %v4126, 16
        %v4217 = vpop.permute.xlu0 %4216
        %4218 = vrot.lane.b32.xlu0 %v4130, 16
        %v4219 = vpop.permute.xlu0 %4218
        %4220 = vrot.lane.b32.xlu0 %v4119, 16
        %v4221 = vpop.permute.xlu0 %4220
        %4222 = vrot.lane.b32.xlu0 %v4123, 16
        %v4223 = vpop.permute.xlu0 %4222
        %4224 = vrot.lane.b32.xlu0 %v4127, 16
        %v4225 = vpop.permute.xlu0 %4224
        %4226 = vrot.lane.b32.xlu0 %v4131, 16
        %v4227 = vpop.permute.xlu0 %4226
        %v4228 = vsel %vm493, %v4213, %v4221
        %v4229 = vsel %vm493, %v4215, %v4223
        %v4230 = vsel %vm493, %v4217, %v4225
        %v4231 = vsel %vm493, %v4219, %v4227
        %v4232 = vsel %vm493, %v4205, %v4213
        %v4233 = vsel %vm493, %v4207, %v4215
        %v4234 = vsel %vm493, %v4209, %v4217
        %v4235 = vsel %vm493, %v4211, %v4219
        %v4236 = vsel %vm493, %v4197, %v4205
        %v4237 = vsel %vm493, %v4199, %v4207
        %v4238 = vsel %vm493, %v4201, %v4209
        %v4239 = vsel %vm493, %v4203, %v4211
        %v4240 = vsel %vm493, %v4221, %v4197
        %v4241 = vsel %vm493, %v4223, %v4199
        %v4242 = vsel %vm493, %v4225, %v4201
        %v4243 = vsel %vm493, %v4227, %v4203
        %v4244 = vmul.f32 %v4240, %v498
        %v4245 = vmul.f32 %v4236, %v499
        %v4246 = vmul.f32 %v4232, %v500
        %v4247 = vmul.f32 %v4228, %v501
        %v4248 = vmul.f32 %v4241, %v498
        %v4249 = vmul.f32 %v4237, %v499
        %v4250 = vmul.f32 %v4233, %v500
        %v4251 = vmul.f32 %v4229, %v501
        %v4252 = vmul.f32 %v4242, %v498
        %v4253 = vmul.f32 %v4238, %v499
        %v4254 = vmul.f32 %v4234, %v500
        %v4255 = vmul.f32 %v4230, %v501
        %v4256 = vmul.f32 %v4243, %v498
        %v4257 = vmul.f32 %v4239, %v499
        %v4258 = vmul.f32 %v4235, %v500
        %v4259 = vmul.f32 %v4231, %v501
        %4260 = vrot.lane.b32.xlu0 %v4116, 15
        %v4261 = vpop.permute.xlu0 %4260
        %4262 = vrot.lane.b32.xlu0 %v4120, 15
        %v4263 = vpop.permute.xlu0 %4262
        %4264 = vrot.lane.b32.xlu0 %v4124, 15
        %v4265 = vpop.permute.xlu0 %4264
        %4266 = vrot.lane.b32.xlu0 %v4128, 15
        %v4267 = vpop.permute.xlu0 %4266
        %4268 = vrot.lane.b32.xlu0 %v4117, 15
        %v4269 = vpop.permute.xlu0 %4268
        %4270 = vrot.lane.b32.xlu0 %v4121, 15
        %v4271 = vpop.permute.xlu0 %4270
        %4272 = vrot.lane.b32.xlu0 %v4125, 15
        %v4273 = vpop.permute.xlu0 %4272
        %4274 = vrot.lane.b32.xlu0 %v4129, 15
        %v4275 = vpop.permute.xlu0 %4274
        %4276 = vrot.lane.b32.xlu0 %v4118, 15
        %v4277 = vpop.permute.xlu0 %4276
        %4278 = vrot.lane.b32.xlu0 %v4122, 15
        %v4279 = vpop.permute.xlu0 %4278
        %4280 = vrot.lane.b32.xlu0 %v4126, 15
        %v4281 = vpop.permute.xlu0 %4280
        %4282 = vrot.lane.b32.xlu0 %v4130, 15
        %v4283 = vpop.permute.xlu0 %4282
        %4284 = vrot.lane.b32.xlu0 %v4119, 15
        %v4285 = vpop.permute.xlu0 %4284
        %4286 = vrot.lane.b32.xlu0 %v4123, 15
        %v4287 = vpop.permute.xlu0 %4286
        %4288 = vrot.lane.b32.xlu0 %v4127, 15
        %v4289 = vpop.permute.xlu0 %4288
        %4290 = vrot.lane.b32.xlu0 %v4131, 15
        %v4291 = vpop.permute.xlu0 %4290
        %v4292 = vsel %vm514, %v4277, %v4285
        %v4293 = vsel %vm514, %v4279, %v4287
        %v4294 = vsel %vm514, %v4281, %v4289
        %v4295 = vsel %vm514, %v4283, %v4291
        %v4296 = vsel %vm514, %v4269, %v4277
        %v4297 = vsel %vm514, %v4271, %v4279
        %v4298 = vsel %vm514, %v4273, %v4281
        %v4299 = vsel %vm514, %v4275, %v4283
        %v4300 = vsel %vm514, %v4261, %v4269
        %v4301 = vsel %vm514, %v4263, %v4271
        %v4302 = vsel %vm514, %v4265, %v4273
        %v4303 = vsel %vm514, %v4267, %v4275
        %v4304 = vsel %vm514, %v4285, %v4261
        %v4305 = vsel %vm514, %v4287, %v4263
        %v4306 = vsel %vm514, %v4289, %v4265
        %v4307 = vsel %vm514, %v4291, %v4267
        %v4308 = vmul.f32 %v4304, %v519
        %v4309 = vmul.f32 %v4300, %v520
        %v4310 = vmul.f32 %v4296, %v521
        %v4311 = vmul.f32 %v4292, %v522
        %v4312 = vmul.f32 %v4305, %v519
        %v4313 = vmul.f32 %v4301, %v520
        %v4314 = vmul.f32 %v4297, %v521
        %v4315 = vmul.f32 %v4293, %v522
        %v4316 = vmul.f32 %v4306, %v519
        %v4317 = vmul.f32 %v4302, %v520
        %v4318 = vmul.f32 %v4298, %v521
        %v4319 = vmul.f32 %v4294, %v522
        %v4320 = vmul.f32 %v4307, %v519
        %v4321 = vmul.f32 %v4303, %v520
        %v4322 = vmul.f32 %v4299, %v521
        %v4323 = vmul.f32 %v4295, %v522
        %4324 = vrot.lane.b32.xlu0 %v4116, 1
        %v4325 = vpop.permute.xlu0 %4324
        %4326 = vrot.lane.b32.xlu0 %v4120, 1
        %v4327 = vpop.permute.xlu0 %4326
        %4328 = vrot.lane.b32.xlu0 %v4124, 1
        %v4329 = vpop.permute.xlu0 %4328
        %4330 = vrot.lane.b32.xlu0 %v4128, 1
        %v4331 = vpop.permute.xlu0 %4330
        %4332 = vrot.lane.b32.xlu0 %v4117, 1
        %v4333 = vpop.permute.xlu0 %4332
        %4334 = vrot.lane.b32.xlu0 %v4121, 1
        %v4335 = vpop.permute.xlu0 %4334
        %4336 = vrot.lane.b32.xlu0 %v4125, 1
        %v4337 = vpop.permute.xlu0 %4336
        %4338 = vrot.lane.b32.xlu0 %v4129, 1
        %v4339 = vpop.permute.xlu0 %4338
        %4340 = vrot.lane.b32.xlu0 %v4118, 1
        %v4341 = vpop.permute.xlu0 %4340
        %4342 = vrot.lane.b32.xlu0 %v4122, 1
        %v4343 = vpop.permute.xlu0 %4342
        %4344 = vrot.lane.b32.xlu0 %v4126, 1
        %v4345 = vpop.permute.xlu0 %4344
        %4346 = vrot.lane.b32.xlu0 %v4130, 1
        %v4347 = vpop.permute.xlu0 %4346
        %4348 = vrot.lane.b32.xlu0 %v4119, 1
        %v4349 = vpop.permute.xlu0 %4348
        %4350 = vrot.lane.b32.xlu0 %v4123, 1
        %v4351 = vpop.permute.xlu0 %4350
        %4352 = vrot.lane.b32.xlu0 %v4127, 1
        %v4353 = vpop.permute.xlu0 %4352
        %4354 = vrot.lane.b32.xlu0 %v4131, 1
        %v4355 = vpop.permute.xlu0 %4354
        %v4356 = vsel %vm535, %v4341, %v4349
        %v4357 = vsel %vm535, %v4343, %v4351
        %v4358 = vsel %vm535, %v4345, %v4353
        %v4359 = vsel %vm535, %v4347, %v4355
        %v4360 = vsel %vm535, %v4333, %v4341
        %v4361 = vsel %vm535, %v4335, %v4343
        %v4362 = vsel %vm535, %v4337, %v4345
        %v4363 = vsel %vm535, %v4339, %v4347
        %v4364 = vsel %vm535, %v4325, %v4333
        %v4365 = vsel %vm535, %v4327, %v4335
        %v4366 = vsel %vm535, %v4329, %v4337
        %v4367 = vsel %vm535, %v4331, %v4339
        %v4368 = vsel %vm535, %v4349, %v4325
        %v4369 = vsel %vm535, %v4351, %v4327
        %v4370 = vsel %vm535, %v4353, %v4329
        %v4371 = vsel %vm535, %v4355, %v4331
        %v4372 = vmul.f32 %v4368, %v540
        %v4373 = vmul.f32 %v4364, %v541
        %v4374 = vmul.f32 %v4360, %v542
        %v4375 = vmul.f32 %v4356, %v543
        %v4376 = vmul.f32 %v4369, %v540
        %v4377 = vmul.f32 %v4365, %v541
        %v4378 = vmul.f32 %v4361, %v542
        %v4379 = vmul.f32 %v4357, %v543
        %v4380 = vmul.f32 %v4370, %v540
        %v4381 = vmul.f32 %v4366, %v541
        %v4382 = vmul.f32 %v4362, %v542
        %v4383 = vmul.f32 %v4358, %v543
        %v4384 = vmul.f32 %v4371, %v540
        %v4385 = vmul.f32 %v4367, %v541
        %v4386 = vmul.f32 %v4363, %v542
        %v4387 = vmul.f32 %v4359, %v543
        %4388 = vrot.lane.b32.xlu0 %v4116, 127
        %v4389 = vpop.permute.xlu0 %4388
        %4390 = vrot.lane.b32.xlu0 %v4120, 127
        %v4391 = vpop.permute.xlu0 %4390
        %4392 = vrot.lane.b32.xlu0 %v4124, 127
        %v4393 = vpop.permute.xlu0 %4392
        %4394 = vrot.lane.b32.xlu0 %v4128, 127
        %v4395 = vpop.permute.xlu0 %4394
        %4396 = vrot.lane.b32.xlu0 %v4117, 127
        %v4397 = vpop.permute.xlu0 %4396
        %4398 = vrot.lane.b32.xlu0 %v4121, 127
        %v4399 = vpop.permute.xlu0 %4398
        %4400 = vrot.lane.b32.xlu0 %v4125, 127
        %v4401 = vpop.permute.xlu0 %4400
        %4402 = vrot.lane.b32.xlu0 %v4129, 127
        %v4403 = vpop.permute.xlu0 %4402
        %4404 = vrot.lane.b32.xlu0 %v4118, 127
        %v4405 = vpop.permute.xlu0 %4404
        %4406 = vrot.lane.b32.xlu0 %v4122, 127
        %v4407 = vpop.permute.xlu0 %4406
        %4408 = vrot.lane.b32.xlu0 %v4126, 127
        %v4409 = vpop.permute.xlu0 %4408
        %4410 = vrot.lane.b32.xlu0 %v4130, 127
        %v4411 = vpop.permute.xlu0 %4410
        %4412 = vrot.lane.b32.xlu0 %v4119, 127
        %v4413 = vpop.permute.xlu0 %4412
        %4414 = vrot.lane.b32.xlu0 %v4123, 127
        %v4415 = vpop.permute.xlu0 %4414
        %4416 = vrot.lane.b32.xlu0 %v4127, 127
        %v4417 = vpop.permute.xlu0 %4416
        %4418 = vrot.lane.b32.xlu0 %v4131, 127
        %v4419 = vpop.permute.xlu0 %4418
        %v4420 = vsel %vm556, %v4405, %v4413
        %v4421 = vsel %vm556, %v4407, %v4415
        %v4422 = vsel %vm556, %v4409, %v4417
        %v4423 = vsel %vm556, %v4411, %v4419
        %v4424 = vsel %vm556, %v4397, %v4405
        %v4425 = vsel %vm556, %v4399, %v4407
        %v4426 = vsel %vm556, %v4401, %v4409
        %v4427 = vsel %vm556, %v4403, %v4411
        %v4428 = vsel %vm556, %v4389, %v4397
        %v4429 = vsel %vm556, %v4391, %v4399
        %v4430 = vsel %vm556, %v4393, %v4401
        %v4431 = vsel %vm556, %v4395, %v4403
        %v4432 = vsel %vm556, %v4413, %v4389
        %v4433 = vsel %vm556, %v4415, %v4391
        %v4434 = vsel %vm556, %v4417, %v4393
        %v4435 = vsel %vm556, %v4419, %v4395
        %v4436 = vmul.f32 %v4428, %v561
        %v4437 = vmul.f32 %v4424, %v562
        %v4438 = vmul.f32 %v4420, %v563
        %v4439 = vmul.f32 %v4432, %v564
        %v4440 = vmul.f32 %v4429, %v561
        %v4441 = vmul.f32 %v4425, %v562
        %v4442 = vmul.f32 %v4421, %v563
        %v4443 = vmul.f32 %v4433, %v564
        %v4444 = vmul.f32 %v4430, %v561
        %v4445 = vmul.f32 %v4426, %v562
        %v4446 = vmul.f32 %v4422, %v563
        %v4447 = vmul.f32 %v4434, %v564
        %v4448 = vmul.f32 %v4431, %v561
        %v4449 = vmul.f32 %v4427, %v562
        %v4450 = vmul.f32 %v4423, %v563
        %v4451 = vmul.f32 %v4435, %v564
        %4452 = vrot.lane.b32.xlu0 %v4116, 113
        %v4453 = vpop.permute.xlu0 %4452
        %4454 = vrot.lane.b32.xlu0 %v4120, 113
        %v4455 = vpop.permute.xlu0 %4454
        %4456 = vrot.lane.b32.xlu0 %v4124, 113
        %v4457 = vpop.permute.xlu0 %4456
        %4458 = vrot.lane.b32.xlu0 %v4128, 113
        %v4459 = vpop.permute.xlu0 %4458
        %4460 = vrot.lane.b32.xlu0 %v4117, 113
        %v4461 = vpop.permute.xlu0 %4460
        %4462 = vrot.lane.b32.xlu0 %v4121, 113
        %v4463 = vpop.permute.xlu0 %4462
        %4464 = vrot.lane.b32.xlu0 %v4125, 113
        %v4465 = vpop.permute.xlu0 %4464
        %4466 = vrot.lane.b32.xlu0 %v4129, 113
        %v4467 = vpop.permute.xlu0 %4466
        %4468 = vrot.lane.b32.xlu0 %v4118, 113
        %v4469 = vpop.permute.xlu0 %4468
        %4470 = vrot.lane.b32.xlu0 %v4122, 113
        %v4471 = vpop.permute.xlu0 %4470
        %4472 = vrot.lane.b32.xlu0 %v4126, 113
        %v4473 = vpop.permute.xlu0 %4472
        %4474 = vrot.lane.b32.xlu0 %v4130, 113
        %v4475 = vpop.permute.xlu0 %4474
        %4476 = vrot.lane.b32.xlu0 %v4119, 113
        %v4477 = vpop.permute.xlu0 %4476
        %4478 = vrot.lane.b32.xlu0 %v4123, 113
        %v4479 = vpop.permute.xlu0 %4478
        %4480 = vrot.lane.b32.xlu0 %v4127, 113
        %v4481 = vpop.permute.xlu0 %4480
        %4482 = vrot.lane.b32.xlu0 %v4131, 113
        %v4483 = vpop.permute.xlu0 %4482
        %v4484 = vsel %vm577, %v4469, %v4477
        %v4485 = vsel %vm577, %v4471, %v4479
        %v4486 = vsel %vm577, %v4473, %v4481
        %v4487 = vsel %vm577, %v4475, %v4483
        %v4488 = vsel %vm577, %v4461, %v4469
        %v4489 = vsel %vm577, %v4463, %v4471
        %v4490 = vsel %vm577, %v4465, %v4473
        %v4491 = vsel %vm577, %v4467, %v4475
        %v4492 = vsel %vm577, %v4453, %v4461
        %v4493 = vsel %vm577, %v4455, %v4463
        %v4494 = vsel %vm577, %v4457, %v4465
        %v4495 = vsel %vm577, %v4459, %v4467
        %v4496 = vsel %vm577, %v4477, %v4453
        %v4497 = vsel %vm577, %v4479, %v4455
        %v4498 = vsel %vm577, %v4481, %v4457
        %v4499 = vsel %vm577, %v4483, %v4459
        %v4500 = vmul.f32 %v4492, %v582
        %v4501 = vmul.f32 %v4488, %v583
        %v4502 = vmul.f32 %v4484, %v584
        %v4503 = vmul.f32 %v4496, %v585
        %v4504 = vmul.f32 %v4493, %v582
        %v4505 = vmul.f32 %v4489, %v583
        %v4506 = vmul.f32 %v4485, %v584
        %v4507 = vmul.f32 %v4497, %v585
        %v4508 = vmul.f32 %v4494, %v582
        %v4509 = vmul.f32 %v4490, %v583
        %v4510 = vmul.f32 %v4486, %v584
        %v4511 = vmul.f32 %v4498, %v585
        %v4512 = vmul.f32 %v4495, %v582
        %v4513 = vmul.f32 %v4491, %v583
        %v4514 = vmul.f32 %v4487, %v584
        %v4515 = vmul.f32 %v4499, %v585
        %4516 = vrot.lane.b32.xlu0 %v4116, 112
        %v4517 = vpop.permute.xlu0 %4516
        %4518 = vrot.lane.b32.xlu0 %v4120, 112
        %v4519 = vpop.permute.xlu0 %4518
        %4520 = vrot.lane.b32.xlu0 %v4124, 112
        %v4521 = vpop.permute.xlu0 %4520
        %4522 = vrot.lane.b32.xlu0 %v4128, 112
        %v4523 = vpop.permute.xlu0 %4522
        %4524 = vrot.lane.b32.xlu0 %v4117, 112
        %v4525 = vpop.permute.xlu0 %4524
        %4526 = vrot.lane.b32.xlu0 %v4121, 112
        %v4527 = vpop.permute.xlu0 %4526
        %4528 = vrot.lane.b32.xlu0 %v4125, 112
        %v4529 = vpop.permute.xlu0 %4528
        %4530 = vrot.lane.b32.xlu0 %v4129, 112
        %v4531 = vpop.permute.xlu0 %4530
        %4532 = vrot.lane.b32.xlu0 %v4118, 112
        %v4533 = vpop.permute.xlu0 %4532
        %4534 = vrot.lane.b32.xlu0 %v4122, 112
        %v4535 = vpop.permute.xlu0 %4534
        %4536 = vrot.lane.b32.xlu0 %v4126, 112
        %v4537 = vpop.permute.xlu0 %4536
        %4538 = vrot.lane.b32.xlu0 %v4130, 112
        %v4539 = vpop.permute.xlu0 %4538
        %4540 = vrot.lane.b32.xlu0 %v4119, 112
        %v4541 = vpop.permute.xlu0 %4540
        %4542 = vrot.lane.b32.xlu0 %v4123, 112
        %v4543 = vpop.permute.xlu0 %4542
        %4544 = vrot.lane.b32.xlu0 %v4127, 112
        %v4545 = vpop.permute.xlu0 %4544
        %4546 = vrot.lane.b32.xlu0 %v4131, 112
        %v4547 = vpop.permute.xlu0 %4546
        %v4548 = vsel %vm598, %v4533, %v4541
        %v4549 = vsel %vm598, %v4535, %v4543
        %v4550 = vsel %vm598, %v4537, %v4545
        %v4551 = vsel %vm598, %v4539, %v4547
        %v4552 = vsel %vm598, %v4525, %v4533
        %v4553 = vsel %vm598, %v4527, %v4535
        %v4554 = vsel %vm598, %v4529, %v4537
        %v4555 = vsel %vm598, %v4531, %v4539
        %v4556 = vsel %vm598, %v4517, %v4525
        %v4557 = vsel %vm598, %v4519, %v4527
        %v4558 = vsel %vm598, %v4521, %v4529
        %v4559 = vsel %vm598, %v4523, %v4531
        %v4560 = vsel %vm598, %v4541, %v4517
        %v4561 = vsel %vm598, %v4543, %v4519
        %v4562 = vsel %vm598, %v4545, %v4521
        %v4563 = vsel %vm598, %v4547, %v4523
        %v4564 = vmul.f32 %v4556, %v603
        %v4565 = vmul.f32 %v4552, %v604
        %v4566 = vmul.f32 %v4548, %v605
        %v4567 = vmul.f32 %v4560, %v606
        %v4568 = vmul.f32 %v4557, %v603
        %v4569 = vmul.f32 %v4553, %v604
        %v4570 = vmul.f32 %v4549, %v605
        %v4571 = vmul.f32 %v4561, %v606
        %v4572 = vmul.f32 %v4558, %v603
        %v4573 = vmul.f32 %v4554, %v604
        %v4574 = vmul.f32 %v4550, %v605
        %v4575 = vmul.f32 %v4562, %v606
        %v4576 = vmul.f32 %v4559, %v603
        %v4577 = vmul.f32 %v4555, %v604
        %v4578 = vmul.f32 %v4551, %v605
        %v4579 = vmul.f32 %v4563, %v606
        %4580 = vrot.lane.b32.xlu0 %v4116, 111
        %v4581 = vpop.permute.xlu0 %4580
        %4582 = vrot.lane.b32.xlu0 %v4120, 111
        %v4583 = vpop.permute.xlu0 %4582
        %4584 = vrot.lane.b32.xlu0 %v4124, 111
        %v4585 = vpop.permute.xlu0 %4584
        %4586 = vrot.lane.b32.xlu0 %v4128, 111
        %v4587 = vpop.permute.xlu0 %4586
        %4588 = vrot.lane.b32.xlu0 %v4117, 111
        %v4589 = vpop.permute.xlu0 %4588
        %4590 = vrot.lane.b32.xlu0 %v4121, 111
        %v4591 = vpop.permute.xlu0 %4590
        %4592 = vrot.lane.b32.xlu0 %v4125, 111
        %v4593 = vpop.permute.xlu0 %4592
        %4594 = vrot.lane.b32.xlu0 %v4129, 111
        %v4595 = vpop.permute.xlu0 %4594
        %4596 = vrot.lane.b32.xlu0 %v4118, 111
        %v4597 = vpop.permute.xlu0 %4596
        %4598 = vrot.lane.b32.xlu0 %v4122, 111
        %v4599 = vpop.permute.xlu0 %4598
        %4600 = vrot.lane.b32.xlu0 %v4126, 111
        %v4601 = vpop.permute.xlu0 %4600
        %4602 = vrot.lane.b32.xlu0 %v4130, 111
        %v4603 = vpop.permute.xlu0 %4602
        %4604 = vrot.lane.b32.xlu0 %v4119, 111
        %v4605 = vpop.permute.xlu0 %4604
        %4606 = vrot.lane.b32.xlu0 %v4123, 111
        %v4607 = vpop.permute.xlu0 %4606
        %4608 = vrot.lane.b32.xlu0 %v4127, 111
        %v4609 = vpop.permute.xlu0 %4608
        %4610 = vrot.lane.b32.xlu0 %v4131, 111
        %v4611 = vpop.permute.xlu0 %4610
        %v4612 = vsel %vm619, %v4597, %v4605
        %v4613 = vsel %vm619, %v4599, %v4607
        %v4614 = vsel %vm619, %v4601, %v4609
        %v4615 = vsel %vm619, %v4603, %v4611
        %v4616 = vsel %vm619, %v4589, %v4597
        %v4617 = vsel %vm619, %v4591, %v4599
        %v4618 = vsel %vm619, %v4593, %v4601
        %v4619 = vsel %vm619, %v4595, %v4603
        %v4620 = vsel %vm619, %v4581, %v4589
        %v4621 = vsel %vm619, %v4583, %v4591
        %v4622 = vsel %vm619, %v4585, %v4593
        %v4623 = vsel %vm619, %v4587, %v4595
        %v4624 = vsel %vm619, %v4605, %v4581
        %v4625 = vsel %vm619, %v4607, %v4583
        %v4626 = vsel %vm619, %v4609, %v4585
        %v4627 = vsel %vm619, %v4611, %v4587
        %v4628 = vmul.f32 %v4620, %v624
        %v4629 = vmul.f32 %v4616, %v625
        %v4630 = vmul.f32 %v4612, %v626
        %v4631 = vmul.f32 %v4624, %v627
        %v4632 = vmul.f32 %v4621, %v624
        %v4633 = vmul.f32 %v4617, %v625
        %v4634 = vmul.f32 %v4613, %v626
        %v4635 = vmul.f32 %v4625, %v627
        %v4636 = vmul.f32 %v4622, %v624
        %v4637 = vmul.f32 %v4618, %v625
        %v4638 = vmul.f32 %v4614, %v626
        %v4639 = vmul.f32 %v4626, %v627
        %v4640 = vmul.f32 %v4623, %v624
        %v4641 = vmul.f32 %v4619, %v625
        %v4642 = vmul.f32 %v4615, %v626
        %v4643 = vmul.f32 %v4627, %v627
        %v4644 = vld [vmem:[%s8] sm:$0xff]
        %v4645 = vld [vmem:[%s8 + $0x8] sm:$0xf]
        %v4646 = vld [vmem:[%s8 + $0xc] sm:$0xff]
        %v4647 = vld [vmem:[%s8 + $0x14] sm:$0xf]
        %v4648 = vld [vmem:[%s8 + $0x18] sm:$0xff]
        %v4649 = vld [vmem:[%s8 + $0x20] sm:$0xf]
        %v4650 = vld [vmem:[%s8 + $0x24] sm:$0xff]
        %v4651 = vld [vmem:[%s8 + $0x2c] sm:$0xf]
        %v4652 = vpack.c.bf16 %v4184, %v4180
        %v4653 = vpack.c.bf16 %v4185, %v4181
        %v4654 = vpack.c.bf16 %v4186, %v4182
        %v4655 = vpack.c.bf16 %v4187, %v4183
        %v4656 = vpack.c.bf16 %v4192, %v4188
        %v4657 = vpack.c.bf16 %v4193, %v4189
        %v4658 = vpack.c.bf16 %v4194, %v4190
        %v4659 = vpack.c.bf16 %v4195, %v4191
        %v4660 = vpack.c.bf16 %v4248, %v4244
        %v4661 = vpack.c.bf16 %v4249, %v4245
        %v4662 = vpack.c.bf16 %v4250, %v4246
        %v4663 = vpack.c.bf16 %v4251, %v4247
        %v4664 = vpack.c.bf16 %v4256, %v4252
        %v4665 = vpack.c.bf16 %v4257, %v4253
        %v4666 = vpack.c.bf16 %v4258, %v4254
        %v4667 = vpack.c.bf16 %v4259, %v4255
        %v4668 = vpack.c.bf16 %v4312, %v4308
        %v4669 = vpack.c.bf16 %v4313, %v4309
        %v4670 = vpack.c.bf16 %v4314, %v4310
        %v4671 = vpack.c.bf16 %v4315, %v4311
        %v4672 = vpack.c.bf16 %v4320, %v4316
        %v4673 = vpack.c.bf16 %v4321, %v4317
        %v4674 = vpack.c.bf16 %v4322, %v4318
        %v4675 = vpack.c.bf16 %v4323, %v4319
        %v4676 = vpack.c.bf16 %v4376, %v4372
        %v4677 = vpack.c.bf16 %v4377, %v4373
        %v4678 = vpack.c.bf16 %v4378, %v4374
        %v4679 = vpack.c.bf16 %v4379, %v4375
        %v4680 = vpack.c.bf16 %v4384, %v4380
        %v4681 = vpack.c.bf16 %v4385, %v4381
        %v4682 = vpack.c.bf16 %v4386, %v4382
        %v4683 = vpack.c.bf16 %v4387, %v4383
        %v4684 = vpack.c.bf16 %v4120, %v4116
        %v4685 = vpack.c.bf16 %v4121, %v4117
        %v4686 = vpack.c.bf16 %v4122, %v4118
        %v4687 = vpack.c.bf16 %v4123, %v4119
        %v4688 = vpack.c.bf16 %v4128, %v4124
        %v4689 = vpack.c.bf16 %v4129, %v4125
        %v4690 = vpack.c.bf16 %v4130, %v4126
        %v4691 = vpack.c.bf16 %v4131, %v4127
        %v4692 = vpack.c.bf16 %v4440, %v4436
        %v4693 = vpack.c.bf16 %v4441, %v4437
        %v4694 = vpack.c.bf16 %v4442, %v4438
        %v4695 = vpack.c.bf16 %v4443, %v4439
        %v4696 = vpack.c.bf16 %v4448, %v4444
        %v4697 = vpack.c.bf16 %v4449, %v4445
        %v4698 = vpack.c.bf16 %v4450, %v4446
        %v4699 = vpack.c.bf16 %v4451, %v4447
        %v4700 = vpack.c.bf16 %v4504, %v4500
        %v4701 = vpack.c.bf16 %v4505, %v4501
        %v4702 = vpack.c.bf16 %v4506, %v4502
        %v4703 = vpack.c.bf16 %v4507, %v4503
        %v4704 = vpack.c.bf16 %v4512, %v4508
        %v4705 = vpack.c.bf16 %v4513, %v4509
        %v4706 = vpack.c.bf16 %v4514, %v4510
        %v4707 = vpack.c.bf16 %v4515, %v4511
        %v4708 = vpack.c.bf16 %v4568, %v4564
        %v4709 = vpack.c.bf16 %v4569, %v4565
        %v4710 = vpack.c.bf16 %v4570, %v4566
        %v4711 = vpack.c.bf16 %v4571, %v4567
        %v4712 = vpack.c.bf16 %v4576, %v4572
        %v4713 = vpack.c.bf16 %v4577, %v4573
        %v4714 = vpack.c.bf16 %v4578, %v4574
        %v4715 = vpack.c.bf16 %v4579, %v4575
        %v4716 = vpack.c.bf16 %v4632, %v4628
        %v4717 = vpack.c.bf16 %v4633, %v4629
        %v4718 = vpack.c.bf16 %v4634, %v4630
        %v4719 = vpack.c.bf16 %v4635, %v4631
        %v4720 = vpack.c.bf16 %v4640, %v4636
        %v4721 = vpack.c.bf16 %v4641, %v4637
        %v4722 = vpack.c.bf16 %v4642, %v4638
        %v4723 = vpack.c.bf16 %v4643, %v4639
        %v4732 = vunpack.c.l.b16 %v4644
        %v4733 = vunpack.c.h.b16 %v4644
        %v4734 = vunpack.c.l.b16 %v4645
        %v4735 = vunpack.c.l.b16 %v4646
        %v4736 = vunpack.c.h.b16 %v4646
        %v4737 = vunpack.c.l.b16 %v4647
        %v4738 = vunpack.c.l.b16 %v4648
        %v4739 = vunpack.c.h.b16 %v4648
        %v4740 = vunpack.c.l.b16 %v4649
        %v4741 = vunpack.c.l.b16 %v4650
        %v4742 = vunpack.c.h.b16 %v4650
        %v4743 = vunpack.c.l.b16 %v4651
        %v4744 = vpack.c.b16 %v4735, %v4732
        %v4745 = vpack.c.b16 %v4736, %v4733
        %v4746 = vpack.c.b16 %v4737, %v4734
        %v4747 = vpack.c.b16 %v4741, %v4738
        %v4748 = vpack.c.b16 %v4742, %v4739
        %v4749 = vpack.c.b16 %v4743, %v4740
        %vm4754 = vcmask 261120
        %v4756 = vsel %vm4754, %v4746, 0
        %v4759 = vsel %vm4754, %v4749, 0
        %4761 = vmatpush.bf16.msra.mxu0 %v4680
        %4762 = vmatpush.bf16.msra.mxu0 %v4676
        %4763 = vmatpush.bf16.msra.mxu0 %v4672
        %4764 = vmatpush.bf16.msra.mxu0 %v4668
        %4765 = vmatpush.bf16.msra.mxu0 %v4664
        %4766 = vmatpush.bf16.msra.mxu0 %v4660
        %4767 = vmatpush.bf16.msra.mxu0 %v4656
        %4768 = vmatpush.bf16.msra.mxu0 %v4652
        %4769 = vmatmul.bf16.gmra.mxu0 %v4744
        %v4770 = vpop.f32.mrf.mxu0
        %v4771 = vadd.f32 0.0, %v4770
        %v4772 = vpop.f32.mrf.mxu0
        %v4773 = vadd.f32 0.0, %v4772
        %4774 = vmatmul.bf16.gmra.mxu0 %v4747
        %v4775 = vpop.f32.mrf.mxu0
        %v4776 = vadd.f32 0.0, %v4775
        %v4777 = vpop.f32.mrf.mxu0
        %v4778 = vadd.f32 0.0, %v4777
        %4779 = vdwg.mxu0
        %4780 = vmatpush.bf16.msra.mxu0 %v4712
        %4781 = vmatpush.bf16.msra.mxu0 %v4708
        %4782 = vmatpush.bf16.msra.mxu0 %v4704
        %4783 = vmatpush.bf16.msra.mxu0 %v4700
        %4784 = vmatpush.bf16.msra.mxu0 %v4696
        %4785 = vmatpush.bf16.msra.mxu0 %v4692
        %4786 = vmatpush.bf16.msra.mxu0 %v4688
        %4787 = vmatpush.bf16.msra.mxu0 %v4684
        %4788 = vmatmul.bf16.gmra.mxu0 %v4745
        %v4789 = vpop.f32.mrf.mxu0
        %v4790 = vadd.f32 %v4771, %v4789
        %v4791 = vpop.f32.mrf.mxu0
        %v4792 = vadd.f32 %v4773, %v4791
        %4793 = vmatmul.bf16.gmra.mxu0 %v4748
        %v4794 = vpop.f32.mrf.mxu0
        %v4795 = vadd.f32 %v4776, %v4794
        %v4796 = vpop.f32.mrf.mxu0
        %v4797 = vadd.f32 %v4778, %v4796
        %4798 = vdwg.mxu0
        %4799 = vmatpush.bf16.msra.mxu0 0
        %4800 = vmatpush.bf16.msra.mxu0 0
        %4801 = vmatpush.bf16.msra.mxu0 0
        %4802 = vmatpush.bf16.msra.mxu0 0
        %4803 = vmatpush.bf16.msra.mxu0 0
        %4804 = vmatpush.bf16.msra.mxu0 0
        %4805 = vmatpush.bf16.msra.mxu0 %v4720
        %4806 = vmatpush.bf16.msra.mxu0 %v4716
        %4807 = vmatmul.bf16.gmra.mxu0 %v4756
        %v4808 = vpop.f32.mrf.mxu0
        %v4809 = vadd.f32 %v4790, %v4808
        %v4810 = vpop.f32.mrf.mxu0
        %v4811 = vadd.f32 %v4792, %v4810
        %4812 = vmatmul.bf16.gmra.mxu0 %v4759
        %v4813 = vpop.f32.mrf.mxu0
        %v4814 = vadd.f32 %v4795, %v4813
        %v4815 = vpop.f32.mrf.mxu0
        %v4816 = vadd.f32 %v4797, %v4815
        %4817 = vdwg.mxu0
        %4818 = vmatpush.bf16.msra.mxu0 %v4681
        %4819 = vmatpush.bf16.msra.mxu0 %v4677
        %4820 = vmatpush.bf16.msra.mxu0 %v4673
        %4821 = vmatpush.bf16.msra.mxu0 %v4669
        %4822 = vmatpush.bf16.msra.mxu0 %v4665
        %4823 = vmatpush.bf16.msra.mxu0 %v4661
        %4824 = vmatpush.bf16.msra.mxu0 %v4657
        %4825 = vmatpush.bf16.msra.mxu0 %v4653
        %4826 = vmatmul.bf16.gmra.mxu0 %v4744
        %v4827 = vpop.f32.mrf.mxu0
        %v4828 = vadd.f32 0.0, %v4827
        %v4829 = vpop.f32.mrf.mxu0
        %v4830 = vadd.f32 0.0, %v4829
        %4831 = vmatmul.bf16.gmra.mxu0 %v4747
        %v4832 = vpop.f32.mrf.mxu0
        %v4833 = vadd.f32 0.0, %v4832
        %v4834 = vpop.f32.mrf.mxu0
        %v4835 = vadd.f32 0.0, %v4834
        %4836 = vdwg.mxu0
        %4837 = vmatpush.bf16.msra.mxu0 %v4713
        %4838 = vmatpush.bf16.msra.mxu0 %v4709
        %4839 = vmatpush.bf16.msra.mxu0 %v4705
        %4840 = vmatpush.bf16.msra.mxu0 %v4701
        %4841 = vmatpush.bf16.msra.mxu0 %v4697
        %4842 = vmatpush.bf16.msra.mxu0 %v4693
        %4843 = vmatpush.bf16.msra.mxu0 %v4689
        %4844 = vmatpush.bf16.msra.mxu0 %v4685
        %4845 = vmatmul.bf16.gmra.mxu0 %v4745
        %v4846 = vpop.f32.mrf.mxu0
        %v4847 = vadd.f32 %v4828, %v4846
        %v4848 = vpop.f32.mrf.mxu0
        %v4849 = vadd.f32 %v4830, %v4848
        %4850 = vmatmul.bf16.gmra.mxu0 %v4748
        %v4851 = vpop.f32.mrf.mxu0
        %v4852 = vadd.f32 %v4833, %v4851
        %v4853 = vpop.f32.mrf.mxu0
        %v4854 = vadd.f32 %v4835, %v4853
        %4855 = vdwg.mxu0
        %4856 = vmatpush.bf16.msra.mxu0 0
        %4857 = vmatpush.bf16.msra.mxu0 0
        %4858 = vmatpush.bf16.msra.mxu0 0
        %4859 = vmatpush.bf16.msra.mxu0 0
        %4860 = vmatpush.bf16.msra.mxu0 0
        %4861 = vmatpush.bf16.msra.mxu0 0
        %4862 = vmatpush.bf16.msra.mxu0 %v4721
        %4863 = vmatpush.bf16.msra.mxu0 %v4717
        %4864 = vmatmul.bf16.gmra.mxu0 %v4756
        %v4865 = vpop.f32.mrf.mxu0
        %v4866 = vadd.f32 %v4847, %v4865
        %v4867 = vpop.f32.mrf.mxu0
        %v4868 = vadd.f32 %v4849, %v4867
        %4869 = vmatmul.bf16.gmra.mxu0 %v4759
        %v4870 = vpop.f32.mrf.mxu0
        %v4871 = vadd.f32 %v4852, %v4870
        %v4872 = vpop.f32.mrf.mxu0
        %v4873 = vadd.f32 %v4854, %v4872
        %4874 = vdwg.mxu0
        %4875 = vmatpush.bf16.msra.mxu0 %v4682
        %4876 = vmatpush.bf16.msra.mxu0 %v4678
        %4877 = vmatpush.bf16.msra.mxu0 %v4674
        %4878 = vmatpush.bf16.msra.mxu0 %v4670
        %4879 = vmatpush.bf16.msra.mxu0 %v4666
        %4880 = vmatpush.bf16.msra.mxu0 %v4662
        %4881 = vmatpush.bf16.msra.mxu0 %v4658
        %4882 = vmatpush.bf16.msra.mxu0 %v4654
        %4883 = vmatmul.bf16.gmra.mxu0 %v4744
        %v4884 = vpop.f32.mrf.mxu0
        %v4885 = vadd.f32 0.0, %v4884
        %v4886 = vpop.f32.mrf.mxu0
        %v4887 = vadd.f32 0.0, %v4886
        %4888 = vmatmul.bf16.gmra.mxu0 %v4747
        %v4889 = vpop.f32.mrf.mxu0
        %v4890 = vadd.f32 0.0, %v4889
        %v4891 = vpop.f32.mrf.mxu0
        %v4892 = vadd.f32 0.0, %v4891
        %4893 = vdwg.mxu0
        %4894 = vmatpush.bf16.msra.mxu0 %v4714
        %4895 = vmatpush.bf16.msra.mxu0 %v4710
        %4896 = vmatpush.bf16.msra.mxu0 %v4706
        %4897 = vmatpush.bf16.msra.mxu0 %v4702
        %4898 = vmatpush.bf16.msra.mxu0 %v4698
        %4899 = vmatpush.bf16.msra.mxu0 %v4694
        %4900 = vmatpush.bf16.msra.mxu0 %v4690
        %4901 = vmatpush.bf16.msra.mxu0 %v4686
        %4902 = vmatmul.bf16.gmra.mxu0 %v4745
        %v4903 = vpop.f32.mrf.mxu0
        %v4904 = vadd.f32 %v4885, %v4903
        %v4905 = vpop.f32.mrf.mxu0
        %v4906 = vadd.f32 %v4887, %v4905
        %4907 = vmatmul.bf16.gmra.mxu0 %v4748
        %v4908 = vpop.f32.mrf.mxu0
        %v4909 = vadd.f32 %v4890, %v4908
        %v4910 = vpop.f32.mrf.mxu0
        %v4911 = vadd.f32 %v4892, %v4910
        %4912 = vdwg.mxu0
        %4913 = vmatpush.bf16.msra.mxu0 0
        %4914 = vmatpush.bf16.msra.mxu0 0
        %4915 = vmatpush.bf16.msra.mxu0 0
        %4916 = vmatpush.bf16.msra.mxu0 0
        %4917 = vmatpush.bf16.msra.mxu0 0
        %4918 = vmatpush.bf16.msra.mxu0 0
        %4919 = vmatpush.bf16.msra.mxu0 %v4722
        %4920 = vmatpush.bf16.msra.mxu0 %v4718
        %4921 = vmatmul.bf16.gmra.mxu0 %v4756
        %v4922 = vpop.f32.mrf.mxu0
        %v4923 = vadd.f32 %v4904, %v4922
        %v4924 = vpop.f32.mrf.mxu0
        %v4925 = vadd.f32 %v4906, %v4924
        %4926 = vmatmul.bf16.gmra.mxu0 %v4759
        %v4927 = vpop.f32.mrf.mxu0
        %v4928 = vadd.f32 %v4909, %v4927
        %v4929 = vpop.f32.mrf.mxu0
        %v4930 = vadd.f32 %v4911, %v4929
        %4931 = vdwg.mxu0
        %4932 = vmatpush.bf16.msra.mxu0 %v4683
        %4933 = vmatpush.bf16.msra.mxu0 %v4679
        %4934 = vmatpush.bf16.msra.mxu0 %v4675
        %4935 = vmatpush.bf16.msra.mxu0 %v4671
        %4936 = vmatpush.bf16.msra.mxu0 %v4667
        %4937 = vmatpush.bf16.msra.mxu0 %v4663
        %4938 = vmatpush.bf16.msra.mxu0 %v4659
        %4939 = vmatpush.bf16.msra.mxu0 %v4655
        %4940 = vmatmul.bf16.gmra.mxu0 %v4744
        %v4941 = vpop.f32.mrf.mxu0
        %v4942 = vadd.f32 0.0, %v4941
        %v4943 = vpop.f32.mrf.mxu0
        %v4944 = vadd.f32 0.0, %v4943
        %4945 = vmatmul.bf16.gmra.mxu0 %v4747
        %v4946 = vpop.f32.mrf.mxu0
        %v4947 = vadd.f32 0.0, %v4946
        %v4948 = vpop.f32.mrf.mxu0
        %v4949 = vadd.f32 0.0, %v4948
        %4950 = vdwg.mxu0
        %4951 = vmatpush.bf16.msra.mxu0 %v4715
        %4952 = vmatpush.bf16.msra.mxu0 %v4711
        %4953 = vmatpush.bf16.msra.mxu0 %v4707
        %4954 = vmatpush.bf16.msra.mxu0 %v4703
        %4955 = vmatpush.bf16.msra.mxu0 %v4699
        %4956 = vmatpush.bf16.msra.mxu0 %v4695
        %4957 = vmatpush.bf16.msra.mxu0 %v4691
        %4958 = vmatpush.bf16.msra.mxu0 %v4687
        %4959 = vmatmul.bf16.gmra.mxu0 %v4745
        %v4960 = vpop.f32.mrf.mxu0
        %v4961 = vadd.f32 %v4942, %v4960
        %v4962 = vpop.f32.mrf.mxu0
        %v4963 = vadd.f32 %v4944, %v4962
        %4964 = vmatmul.bf16.gmra.mxu0 %v4748
        %v4965 = vpop.f32.mrf.mxu0
        %v4966 = vadd.f32 %v4947, %v4965
        %v4967 = vpop.f32.mrf.mxu0
        %v4968 = vadd.f32 %v4949, %v4967
        %4969 = vdwg.mxu0
        %4970 = vmatpush.bf16.msra.mxu0 0
        %4971 = vmatpush.bf16.msra.mxu0 0
        %4972 = vmatpush.bf16.msra.mxu0 0
        %4973 = vmatpush.bf16.msra.mxu0 0
        %4974 = vmatpush.bf16.msra.mxu0 0
        %4975 = vmatpush.bf16.msra.mxu0 0
        %4976 = vmatpush.bf16.msra.mxu0 %v4723
        %4977 = vmatpush.bf16.msra.mxu0 %v4719
        %4978 = vmatmul.bf16.gmra.mxu0 %v4756
        %v4979 = vpop.f32.mrf.mxu0
        %v4980 = vadd.f32 %v4961, %v4979
        %v4981 = vpop.f32.mrf.mxu0
        %v4982 = vadd.f32 %v4963, %v4981
        %4983 = vmatmul.bf16.gmra.mxu0 %v4759
        %v4984 = vpop.f32.mrf.mxu0
        %v4985 = vadd.f32 %v4966, %v4984
        %v4986 = vpop.f32.mrf.mxu0
        %v4987 = vadd.f32 %v4968, %v4986
        %4988 = vdwg.mxu0
        %4989 = vmatpush.msra.mxu0 %v408
        %4990 = vmatpush.msra.mxu0 %v407
        %4991 = vmatpush.msra.mxu0 %v406
        %4992 = vmatpush.msra.mxu0 %v405
        %4993 = vmatpush.msra.mxu0 %v404
        %4994 = vmatpush.msra.mxu0 %v403
        %4995 = vmatpush.msra.mxu0 %v402
        %4996 = vmatpush.msra.mxu0 %v401
        %4997 = vmatpush.msra.mxu0 %v400
        %4998 = vmatpush.msra.mxu0 %v399
        %4999 = vmatpush.msra.mxu0 %v398
        %5000 = vmatpush.msra.mxu0 %v397
        %5001 = vmatpush.msra.mxu0 %v396
        %5002 = vmatpush.msra.mxu0 %v395
        %5003 = vmatpush.msra.mxu0 %v394
        %5004 = vmatpush.msra.mxu0 %v393
        %5005 = vmatmul.f32.gmra.mxu0 %v4809
        %v5006 = vpop.f32.mrf.mxu0
        %v5007 = vadd.f32 0.0, %v5006
        %5008 = vmatmul.f32.gmra.mxu0 %v4811
        %v5009 = vpop.f32.mrf.mxu0
        %v5010 = vadd.f32 0.0, %v5009
        %5011 = vmatmul.f32.gmra.mxu0 %v4814
        %v5012 = vpop.f32.mrf.mxu0
        %v5013 = vadd.f32 0.0, %v5012
        %5014 = vmatmul.f32.gmra.mxu0 %v4816
        %v5015 = vpop.f32.mrf.mxu0
        %v5016 = vadd.f32 0.0, %v5015
        %5017 = vdwg.mxu0
        %5018 = vmatpush.msra.mxu0 %v424
        %5019 = vmatpush.msra.mxu0 %v423
        %5020 = vmatpush.msra.mxu0 %v422
        %5021 = vmatpush.msra.mxu0 %v421
        %5022 = vmatpush.msra.mxu0 %v420
        %5023 = vmatpush.msra.mxu0 %v419
        %5024 = vmatpush.msra.mxu0 %v418
        %5025 = vmatpush.msra.mxu0 %v417
        %5026 = vmatpush.msra.mxu0 %v416
        %5027 = vmatpush.msra.mxu0 %v415
        %5028 = vmatpush.msra.mxu0 %v414
        %5029 = vmatpush.msra.mxu0 %v413
        %5030 = vmatpush.msra.mxu0 %v412
        %5031 = vmatpush.msra.mxu0 %v411
        %5032 = vmatpush.msra.mxu0 %v410
        %5033 = vmatpush.msra.mxu0 %v409
        %5034 = vmatmul.f32.gmra.mxu0 %v4866
        %v5035 = vpop.f32.mrf.mxu0
        %v5036 = vadd.f32 %v5007, %v5035
        %5037 = vmatmul.f32.gmra.mxu0 %v4868
        %v5038 = vpop.f32.mrf.mxu0
        %v5039 = vadd.f32 %v5010, %v5038
        %5040 = vmatmul.f32.gmra.mxu0 %v4871
        %v5041 = vpop.f32.mrf.mxu0
        %v5042 = vadd.f32 %v5013, %v5041
        %5043 = vmatmul.f32.gmra.mxu0 %v4873
        %v5044 = vpop.f32.mrf.mxu0
        %v5045 = vadd.f32 %v5016, %v5044
        %5046 = vdwg.mxu0
        %5047 = vmatpush.msra.mxu0 %v440
        %5048 = vmatpush.msra.mxu0 %v439
        %5049 = vmatpush.msra.mxu0 %v438
        %5050 = vmatpush.msra.mxu0 %v437
        %5051 = vmatpush.msra.mxu0 %v436
        %5052 = vmatpush.msra.mxu0 %v435
        %5053 = vmatpush.msra.mxu0 %v434
        %5054 = vmatpush.msra.mxu0 %v433
        %5055 = vmatpush.msra.mxu0 %v432
        %5056 = vmatpush.msra.mxu0 %v431
        %5057 = vmatpush.msra.mxu0 %v430
        %5058 = vmatpush.msra.mxu0 %v429
        %5059 = vmatpush.msra.mxu0 %v428
        %5060 = vmatpush.msra.mxu0 %v427
        %5061 = vmatpush.msra.mxu0 %v426
        %5062 = vmatpush.msra.mxu0 %v425
        %5063 = vmatmul.f32.gmra.mxu0 %v4923
        %v5064 = vpop.f32.mrf.mxu0
        %v5065 = vadd.f32 %v5036, %v5064
        %5066 = vmatmul.f32.gmra.mxu0 %v4925
        %v5067 = vpop.f32.mrf.mxu0
        %v5068 = vadd.f32 %v5039, %v5067
        %5069 = vmatmul.f32.gmra.mxu0 %v4928
        %v5070 = vpop.f32.mrf.mxu0
        %v5071 = vadd.f32 %v5042, %v5070
        %5072 = vmatmul.f32.gmra.mxu0 %v4930
        %v5073 = vpop.f32.mrf.mxu0
        %v5074 = vadd.f32 %v5045, %v5073
        %5075 = vdwg.mxu0
        %5076 = vmatpush.msra.mxu0 %v456
        %5077 = vmatpush.msra.mxu0 %v455
        %5078 = vmatpush.msra.mxu0 %v454
        %5079 = vmatpush.msra.mxu0 %v453
        %5080 = vmatpush.msra.mxu0 %v452
        %5081 = vmatpush.msra.mxu0 %v451
        %5082 = vmatpush.msra.mxu0 %v450
        %5083 = vmatpush.msra.mxu0 %v449
        %5084 = vmatpush.msra.mxu0 %v448
        %5085 = vmatpush.msra.mxu0 %v447
        %5086 = vmatpush.msra.mxu0 %v446
        %5087 = vmatpush.msra.mxu0 %v445
        %5088 = vmatpush.msra.mxu0 %v444
        %5089 = vmatpush.msra.mxu0 %v443
        %5090 = vmatpush.msra.mxu0 %v442
        %5091 = vmatpush.msra.mxu0 %v441
        %5092 = vmatmul.f32.gmra.mxu0 %v4980
        %v5093 = vpop.f32.mrf.mxu0
        %v5094 = vadd.f32 %v5065, %v5093
        %5095 = vmatmul.f32.gmra.mxu0 %v4982
        %v5096 = vpop.f32.mrf.mxu0
        %v5097 = vadd.f32 %v5068, %v5096
        %5098 = vmatmul.f32.gmra.mxu0 %v4985
        %v5099 = vpop.f32.mrf.mxu0
        %v5100 = vadd.f32 %v5071, %v5099
        %5101 = vmatmul.f32.gmra.mxu0 %v4987
        %v5102 = vpop.f32.mrf.mxu0
        %v5103 = vadd.f32 %v5074, %v5102
        %5104 = vdwg.mxu0
        %v5105 = vmul.f32 %v4809, %v4809
        %v5106 = vmul.f32 %v4866, %v4866
        %v5107 = vmul.f32 %v4923, %v4923
        %v5108 = vmul.f32 %v4980, %v4980
        %v5109 = vmul.f32 %v4811, %v4811
        %v5110 = vmul.f32 %v4868, %v4868
        %v5111 = vmul.f32 %v4925, %v4925
        %v5112 = vmul.f32 %v4982, %v4982
        %v5113 = vmul.f32 %v4814, %v4814
        %v5114 = vmul.f32 %v4871, %v4871
        %v5115 = vmul.f32 %v4928, %v4928
        %v5116 = vmul.f32 %v4985, %v4985
        %v5117 = vmul.f32 %v4816, %v4816
        %v5118 = vmul.f32 %v4873, %v4873
        %v5119 = vmul.f32 %v4930, %v4930
        %v5120 = vmul.f32 %v4987, %v4987
        %5121 = vmatpush.msra.mxu0 %v408
        %5122 = vmatpush.msra.mxu0 %v407
        %5123 = vmatpush.msra.mxu0 %v406
        %5124 = vmatpush.msra.mxu0 %v405
        %5125 = vmatpush.msra.mxu0 %v404
        %5126 = vmatpush.msra.mxu0 %v403
        %5127 = vmatpush.msra.mxu0 %v402
        %5128 = vmatpush.msra.mxu0 %v401
        %5129 = vmatpush.msra.mxu0 %v400
        %5130 = vmatpush.msra.mxu0 %v399
        %5131 = vmatpush.msra.mxu0 %v398
        %5132 = vmatpush.msra.mxu0 %v397
        %5133 = vmatpush.msra.mxu0 %v396
        %5134 = vmatpush.msra.mxu0 %v395
        %5135 = vmatpush.msra.mxu0 %v394
        %5136 = vmatpush.msra.mxu0 %v393
        %5137 = vmatmul.f32.gmra.mxu0 %v5105
        %v5138 = vpop.f32.mrf.mxu0
        %v5139 = vadd.f32 0.0, %v5138
        %5140 = vmatmul.f32.gmra.mxu0 %v5109
        %v5141 = vpop.f32.mrf.mxu0
        %v5142 = vadd.f32 0.0, %v5141
        %5143 = vmatmul.f32.gmra.mxu0 %v5113
        %v5144 = vpop.f32.mrf.mxu0
        %v5145 = vadd.f32 0.0, %v5144
        %5146 = vmatmul.f32.gmra.mxu0 %v5117
        %v5147 = vpop.f32.mrf.mxu0
        %v5148 = vadd.f32 0.0, %v5147
        %5149 = vdwg.mxu0
        %5150 = vmatpush.msra.mxu0 %v424
        %5151 = vmatpush.msra.mxu0 %v423
        %5152 = vmatpush.msra.mxu0 %v422
        %5153 = vmatpush.msra.mxu0 %v421
        %5154 = vmatpush.msra.mxu0 %v420
        %5155 = vmatpush.msra.mxu0 %v419
        %5156 = vmatpush.msra.mxu0 %v418
        %5157 = vmatpush.msra.mxu0 %v417
        %5158 = vmatpush.msra.mxu0 %v416
        %5159 = vmatpush.msra.mxu0 %v415
        %5160 = vmatpush.msra.mxu0 %v414
        %5161 = vmatpush.msra.mxu0 %v413
        %5162 = vmatpush.msra.mxu0 %v412
        %5163 = vmatpush.msra.mxu0 %v411
        %5164 = vmatpush.msra.mxu0 %v410
        %5165 = vmatpush.msra.mxu0 %v409
        %5166 = vmatmul.f32.gmra.mxu0 %v5106
        %v5167 = vpop.f32.mrf.mxu0
        %v5168 = vadd.f32 %v5139, %v5167
        %5169 = vmatmul.f32.gmra.mxu0 %v5110
        %v5170 = vpop.f32.mrf.mxu0
        %v5171 = vadd.f32 %v5142, %v5170
        %5172 = vmatmul.f32.gmra.mxu0 %v5114
        %v5173 = vpop.f32.mrf.mxu0
        %v5174 = vadd.f32 %v5145, %v5173
        %5175 = vmatmul.f32.gmra.mxu0 %v5118
        %v5176 = vpop.f32.mrf.mxu0
        %v5177 = vadd.f32 %v5148, %v5176
        %5178 = vdwg.mxu0
        %5179 = vmatpush.msra.mxu0 %v440
        %5180 = vmatpush.msra.mxu0 %v439
        %5181 = vmatpush.msra.mxu0 %v438
        %5182 = vmatpush.msra.mxu0 %v437
        %5183 = vmatpush.msra.mxu0 %v436
        %5184 = vmatpush.msra.mxu0 %v435
        %5185 = vmatpush.msra.mxu0 %v434
        %5186 = vmatpush.msra.mxu0 %v433
        %5187 = vmatpush.msra.mxu0 %v432
        %5188 = vmatpush.msra.mxu0 %v431
        %5189 = vmatpush.msra.mxu0 %v430
        %5190 = vmatpush.msra.mxu0 %v429
        %5191 = vmatpush.msra.mxu0 %v428
        %5192 = vmatpush.msra.mxu0 %v427
        %5193 = vmatpush.msra.mxu0 %v426
        %5194 = vmatpush.msra.mxu0 %v425
        %5195 = vmatmul.f32.gmra.mxu0 %v5107
        %v5196 = vpop.f32.mrf.mxu0
        %v5197 = vadd.f32 %v5168, %v5196
        %5198 = vmatmul.f32.gmra.mxu0 %v5111
        %v5199 = vpop.f32.mrf.mxu0
        %v5200 = vadd.f32 %v5171, %v5199
        %5201 = vmatmul.f32.gmra.mxu0 %v5115
        %v5202 = vpop.f32.mrf.mxu0
        %v5203 = vadd.f32 %v5174, %v5202
        %5204 = vmatmul.f32.gmra.mxu0 %v5119
        %v5205 = vpop.f32.mrf.mxu0
        %v5206 = vadd.f32 %v5177, %v5205
        %5207 = vdwg.mxu0
        %5208 = vmatpush.msra.mxu0 %v456
        %5209 = vmatpush.msra.mxu0 %v455
        %5210 = vmatpush.msra.mxu0 %v454
        %5211 = vmatpush.msra.mxu0 %v453
        %5212 = vmatpush.msra.mxu0 %v452
        %5213 = vmatpush.msra.mxu0 %v451
        %5214 = vmatpush.msra.mxu0 %v450
        %5215 = vmatpush.msra.mxu0 %v449
        %5216 = vmatpush.msra.mxu0 %v448
        %5217 = vmatpush.msra.mxu0 %v447
        %5218 = vmatpush.msra.mxu0 %v446
        %5219 = vmatpush.msra.mxu0 %v445
        %5220 = vmatpush.msra.mxu0 %v444
        %5221 = vmatpush.msra.mxu0 %v443
        %5222 = vmatpush.msra.mxu0 %v442
        %5223 = vmatpush.msra.mxu0 %v441
        %5224 = vmatmul.f32.gmra.mxu0 %v5108
        %v5225 = vpop.f32.mrf.mxu0
        %v5226 = vadd.f32 %v5197, %v5225
        %5227 = vmatmul.f32.gmra.mxu0 %v5112
        %v5228 = vpop.f32.mrf.mxu0
        %v5229 = vadd.f32 %v5200, %v5228
        %5230 = vmatmul.f32.gmra.mxu0 %v5116
        %v5231 = vpop.f32.mrf.mxu0
        %v5232 = vadd.f32 %v5203, %v5231
        %5233 = vmatmul.f32.gmra.mxu0 %v5120
        %v5234 = vpop.f32.mrf.mxu0
        %v5235 = vadd.f32 %v5206, %v5234
        %5236 = vdwg.mxu0
        %v5237 = vmul.f32 %v5094, 0.00390625
        %v5238 = vmul.f32 %v5097, 0.00390625
        %v5239 = vmul.f32 %v5100, 0.00390625
        %v5240 = vmul.f32 %v5103, 0.00390625
        %v5241 = vmul.f32 %v5226, 0.00390625
        %v5242 = vmul.f32 %v5229, 0.00390625
        %v5243 = vmul.f32 %v5232, 0.00390625
        %v5244 = vmul.f32 %v5235, 0.00390625
        %v5245 = vmul.f32 %v5237, %v5237
        %v5246 = vmul.f32 %v5238, %v5238
        %v5247 = vmul.f32 %v5239, %v5239
        %v5248 = vmul.f32 %v5240, %v5240
        %v5249 = vsub.f32 %v5241, %v5245
        %v5250 = vsub.f32 %v5242, %v5246
        %v5251 = vsub.f32 %v5243, %v5247
        %v5252 = vsub.f32 %v5244, %v5248
        %v5253 = vmax.f32 %v5249, 0.0
        %v5254 = vmax.f32 %v5250, 0.0
        %v5255 = vmax.f32 %v5251, 0.0
        %v5256 = vmax.f32 %v5252, 0.0
        %v5257 = vadd.f32 %v5253, 1e-05
        %v5258 = vadd.f32 %v5254, 1e-05
        %v5259 = vadd.f32 %v5255, 1e-05
        %v5260 = vadd.f32 %v5256, 1e-05
        %v5261 = vrsqrt.pop %v5257
        %v5262 = vmul.f32 %v5261, %v5257
        %v5263 = vmul.f32 %v5262, %v5261
        %v5264 = vmul.f32 0.5, %v5263
        %v5265 = vsub.f32 1.5, %v5264
        %v5266 = vmul.f32 %v5261, %v5265
        %vm5267 = vweird.f32 %v5257
        %vm5268 = vweird.f32 %v5261
        %vm5269 = vmor %vm5267, %vm5268
        %v5270 = vsel %vm5269, %v5261, %v5266
        %v5271 = vrsqrt.pop %v5258
        %v5272 = vmul.f32 %v5271, %v5258
        %v5273 = vmul.f32 %v5272, %v5271
        %v5274 = vmul.f32 0.5, %v5273
        %v5275 = vsub.f32 1.5, %v5274
        %v5276 = vmul.f32 %v5271, %v5275
        %vm5277 = vweird.f32 %v5258
        %vm5278 = vweird.f32 %v5271
        %vm5279 = vmor %vm5277, %vm5278
        %v5280 = vsel %vm5279, %v5271, %v5276
        %v5281 = vrsqrt.pop %v5259
        %v5282 = vmul.f32 %v5281, %v5259
        %v5283 = vmul.f32 %v5282, %v5281
        %v5284 = vmul.f32 0.5, %v5283
        %v5285 = vsub.f32 1.5, %v5284
        %v5286 = vmul.f32 %v5281, %v5285
        %vm5287 = vweird.f32 %v5259
        %vm5288 = vweird.f32 %v5281
        %vm5289 = vmor %vm5287, %vm5288
        %v5290 = vsel %vm5289, %v5281, %v5286
        %v5291 = vrsqrt.pop %v5260
        %v5292 = vmul.f32 %v5291, %v5260
        %v5293 = vmul.f32 %v5292, %v5291
        %v5294 = vmul.f32 0.5, %v5293
        %v5295 = vsub.f32 1.5, %v5294
        %v5296 = vmul.f32 %v5291, %v5295
        %vm5297 = vweird.f32 %v5260
        %vm5298 = vweird.f32 %v5291
        %vm5299 = vmor %vm5297, %vm5298
        %v5300 = vsel %vm5299, %v5291, %v5296
        %5301 = vst [vmem:[#allocation1] ss:$4 sm:$0xff] %v457
        %v5302 = vld.sshfl [vmem:[#allocation1] sm:$0xff pattern:$0x73625140]
        %v5303 = vld.sshfl [vmem:[#allocation1 + $0x8] sm:$0xff pattern:$0x73625140]
        %v5304 = vld.sshfl [vmem:[#allocation1 + $0x10] sm:$0xff pattern:$0x73625140]
        %v5305 = vld.sshfl [vmem:[#allocation1 + $0x18] sm:$0xff pattern:$0x73625140]
        %v5307 = vsel %vm962, %v5270, 0
        %v5310 = vsel %vm962, %v5280, 0
        %v5313 = vsel %vm962, %v5290, 0
        %v5316 = vsel %vm962, %v5300, 0
        %v5318 = vsel %vm969, %v5302, 0
        %v5320 = vsel %vm969, %v5303, 0
        %v5322 = vsel %vm969, %v5304, 0
        %v5324 = vsel %vm969, %v5305, 0
        %5326 = vmatpush.msra.mxu0 0.0
        %5327 = vmatpush.msra.mxu0 0.0
        %5328 = vmatpush.msra.mxu0 0.0
        %5329 = vmatpush.msra.mxu0 0.0
        %5330 = vmatpush.msra.mxu0 0.0
        %5331 = vmatpush.msra.mxu0 0.0
        %5332 = vmatpush.msra.mxu0 0.0
        %5333 = vmatpush.msra.mxu0 0.0
        %5334 = vmatpush.msra.mxu0 0.0
        %5335 = vmatpush.msra.mxu0 0.0
        %5336 = vmatpush.msra.mxu0 0.0
        %5337 = vmatpush.msra.mxu0 0.0
        %5338 = vmatpush.msra.mxu0 0.0
        %5339 = vmatpush.msra.mxu0 0.0
        %5340 = vmatpush.msra.mxu0 0.0
        %5341 = vmatpush.msra.mxu0 %v5318
        %5342 = vmatmul.f32.gmra.mxu0 %v5307
        %v5343 = vpop.f32.mrf.mxu0
        %v5344 = vadd.f32 0.0, %v5343
        %5345 = vmatmul.f32.gmra.mxu0 %v5310
        %v5346 = vpop.f32.mrf.mxu0
        %v5347 = vadd.f32 0.0, %v5346
        %5348 = vmatmul.f32.gmra.mxu0 %v5313
        %v5349 = vpop.f32.mrf.mxu0
        %v5350 = vadd.f32 0.0, %v5349
        %5351 = vmatmul.f32.gmra.mxu0 %v5316
        %v5352 = vpop.f32.mrf.mxu0
        %v5353 = vadd.f32 0.0, %v5352
        %5354 = vdwg.mxu0
        %5355 = vmatpush.msra.mxu0 0.0
        %5356 = vmatpush.msra.mxu0 0.0
        %5357 = vmatpush.msra.mxu0 0.0
        %5358 = vmatpush.msra.mxu0 0.0
        %5359 = vmatpush.msra.mxu0 0.0
        %5360 = vmatpush.msra.mxu0 0.0
        %5361 = vmatpush.msra.mxu0 0.0
        %5362 = vmatpush.msra.mxu0 0.0
        %5363 = vmatpush.msra.mxu0 0.0
        %5364 = vmatpush.msra.mxu0 0.0
        %5365 = vmatpush.msra.mxu0 0.0
        %5366 = vmatpush.msra.mxu0 0.0
        %5367 = vmatpush.msra.mxu0 0.0
        %5368 = vmatpush.msra.mxu0 0.0
        %5369 = vmatpush.msra.mxu0 0.0
        %5370 = vmatpush.msra.mxu0 %v5320
        %5371 = vmatmul.f32.gmra.mxu0 %v5307
        %v5372 = vpop.f32.mrf.mxu0
        %v5373 = vadd.f32 0.0, %v5372
        %5374 = vmatmul.f32.gmra.mxu0 %v5310
        %v5375 = vpop.f32.mrf.mxu0
        %v5376 = vadd.f32 0.0, %v5375
        %5377 = vmatmul.f32.gmra.mxu0 %v5313
        %v5378 = vpop.f32.mrf.mxu0
        %v5379 = vadd.f32 0.0, %v5378
        %5380 = vmatmul.f32.gmra.mxu0 %v5316
        %v5381 = vpop.f32.mrf.mxu0
        %v5382 = vadd.f32 0.0, %v5381
        %5383 = vdwg.mxu0
        %5384 = vmatpush.msra.mxu0 0.0
        %5385 = vmatpush.msra.mxu0 0.0
        %5386 = vmatpush.msra.mxu0 0.0
        %5387 = vmatpush.msra.mxu0 0.0
        %5388 = vmatpush.msra.mxu0 0.0
        %5389 = vmatpush.msra.mxu0 0.0
        %5390 = vmatpush.msra.mxu0 0.0
        %5391 = vmatpush.msra.mxu0 0.0
        %5392 = vmatpush.msra.mxu0 0.0
        %5393 = vmatpush.msra.mxu0 0.0
        %5394 = vmatpush.msra.mxu0 0.0
        %5395 = vmatpush.msra.mxu0 0.0
        %5396 = vmatpush.msra.mxu0 0.0
        %5397 = vmatpush.msra.mxu0 0.0
        %5398 = vmatpush.msra.mxu0 0.0
        %5399 = vmatpush.msra.mxu0 %v5322
        %5400 = vmatmul.f32.gmra.mxu0 %v5307
        %v5401 = vpop.f32.mrf.mxu0
        %v5402 = vadd.f32 0.0, %v5401
        %5403 = vmatmul.f32.gmra.mxu0 %v5310
        %v5404 = vpop.f32.mrf.mxu0
        %v5405 = vadd.f32 0.0, %v5404
        %5406 = vmatmul.f32.gmra.mxu0 %v5313
        %v5407 = vpop.f32.mrf.mxu0
        %v5408 = vadd.f32 0.0, %v5407
        %5409 = vmatmul.f32.gmra.mxu0 %v5316
        %v5410 = vpop.f32.mrf.mxu0
        %v5411 = vadd.f32 0.0, %v5410
        %5412 = vdwg.mxu0
        %5413 = vmatpush.msra.mxu0 0.0
        %5414 = vmatpush.msra.mxu0 0.0
        %5415 = vmatpush.msra.mxu0 0.0
        %5416 = vmatpush.msra.mxu0 0.0
        %5417 = vmatpush.msra.mxu0 0.0
        %5418 = vmatpush.msra.mxu0 0.0
        %5419 = vmatpush.msra.mxu0 0.0
        %5420 = vmatpush.msra.mxu0 0.0
        %5421 = vmatpush.msra.mxu0 0.0
        %5422 = vmatpush.msra.mxu0 0.0
        %5423 = vmatpush.msra.mxu0 0.0
        %5424 = vmatpush.msra.mxu0 0.0
        %5425 = vmatpush.msra.mxu0 0.0
        %5426 = vmatpush.msra.mxu0 0.0
        %5427 = vmatpush.msra.mxu0 0.0
        %5428 = vmatpush.msra.mxu0 %v5324
        %5429 = vmatmul.f32.gmra.mxu0 %v5307
        %v5430 = vpop.f32.mrf.mxu0
        %v5431 = vadd.f32 0.0, %v5430
        %5432 = vmatmul.f32.gmra.mxu0 %v5310
        %v5433 = vpop.f32.mrf.mxu0
        %v5434 = vadd.f32 0.0, %v5433
        %5435 = vmatmul.f32.gmra.mxu0 %v5313
        %v5436 = vpop.f32.mrf.mxu0
        %v5437 = vadd.f32 0.0, %v5436
        %5438 = vmatmul.f32.gmra.mxu0 %v5316
        %v5439 = vpop.f32.mrf.mxu0
        %v5440 = vadd.f32 0.0, %v5439
        %5441 = vdwg.mxu0
        %v5442 = vsub.f32 0.0, %v5237
        %v5443 = vsub.f32 0.0, %v5238
        %v5444 = vsub.f32 0.0, %v5239
        %v5445 = vsub.f32 0.0, %v5240
        %v5446 = vmul.f32 %v5442, %v5270
        %v5447 = vmul.f32 %v5443, %v5280
        %v5448 = vmul.f32 %v5444, %v5290
        %v5449 = vmul.f32 %v5445, %v5300
        %5450 = vst [vmem:[#allocation1] ss:$4 sm:$0xff] %v457
        %v5451 = vld.sshfl [vmem:[#allocation1] sm:$0xff pattern:$0x73625140]
        %v5452 = vld.sshfl [vmem:[#allocation1 + $0x8] sm:$0xff pattern:$0x73625140]
        %v5453 = vld.sshfl [vmem:[#allocation1 + $0x10] sm:$0xff pattern:$0x73625140]
        %v5454 = vld.sshfl [vmem:[#allocation1 + $0x18] sm:$0xff pattern:$0x73625140]
        %v5456 = vsel %vm962, %v5446, 0
        %v5459 = vsel %vm962, %v5447, 0
        %v5462 = vsel %vm962, %v5448, 0
        %v5465 = vsel %vm962, %v5449, 0
        %v5467 = vsel %vm969, %v5451, 0
        %v5469 = vsel %vm969, %v5452, 0
        %v5471 = vsel %vm969, %v5453, 0
        %v5473 = vsel %vm969, %v5454, 0
        %5475 = vmatpush.msra.mxu0 0.0
        %5476 = vmatpush.msra.mxu0 0.0
        %5477 = vmatpush.msra.mxu0 0.0
        %5478 = vmatpush.msra.mxu0 0.0
        %5479 = vmatpush.msra.mxu0 0.0
        %5480 = vmatpush.msra.mxu0 0.0
        %5481 = vmatpush.msra.mxu0 0.0
        %5482 = vmatpush.msra.mxu0 0.0
        %5483 = vmatpush.msra.mxu0 0.0
        %5484 = vmatpush.msra.mxu0 0.0
        %5485 = vmatpush.msra.mxu0 0.0
        %5486 = vmatpush.msra.mxu0 0.0
        %5487 = vmatpush.msra.mxu0 0.0
        %5488 = vmatpush.msra.mxu0 0.0
        %5489 = vmatpush.msra.mxu0 0.0
        %5490 = vmatpush.msra.mxu0 %v5467
        %5491 = vmatmul.f32.gmra.mxu0 %v5456
        %v5492 = vpop.f32.mrf.mxu0
        %v5493 = vadd.f32 0.0, %v5492
        %5494 = vmatmul.f32.gmra.mxu0 %v5459
        %v5495 = vpop.f32.mrf.mxu0
        %v5496 = vadd.f32 0.0, %v5495
        %5497 = vmatmul.f32.gmra.mxu0 %v5462
        %v5498 = vpop.f32.mrf.mxu0
        %v5499 = vadd.f32 0.0, %v5498
        %5500 = vmatmul.f32.gmra.mxu0 %v5465
        %v5501 = vpop.f32.mrf.mxu0
        %v5502 = vadd.f32 0.0, %v5501
        %5503 = vdwg.mxu0
        %5504 = vmatpush.msra.mxu0 0.0
        %5505 = vmatpush.msra.mxu0 0.0
        %5506 = vmatpush.msra.mxu0 0.0
        %5507 = vmatpush.msra.mxu0 0.0
        %5508 = vmatpush.msra.mxu0 0.0
        %5509 = vmatpush.msra.mxu0 0.0
        %5510 = vmatpush.msra.mxu0 0.0
        %5511 = vmatpush.msra.mxu0 0.0
        %5512 = vmatpush.msra.mxu0 0.0
        %5513 = vmatpush.msra.mxu0 0.0
        %5514 = vmatpush.msra.mxu0 0.0
        %5515 = vmatpush.msra.mxu0 0.0
        %5516 = vmatpush.msra.mxu0 0.0
        %5517 = vmatpush.msra.mxu0 0.0
        %5518 = vmatpush.msra.mxu0 0.0
        %5519 = vmatpush.msra.mxu0 %v5469
        %5520 = vmatmul.f32.gmra.mxu0 %v5456
        %v5521 = vpop.f32.mrf.mxu0
        %v5522 = vadd.f32 0.0, %v5521
        %5523 = vmatmul.f32.gmra.mxu0 %v5459
        %v5524 = vpop.f32.mrf.mxu0
        %v5525 = vadd.f32 0.0, %v5524
        %5526 = vmatmul.f32.gmra.mxu0 %v5462
        %v5527 = vpop.f32.mrf.mxu0
        %v5528 = vadd.f32 0.0, %v5527
        %5529 = vmatmul.f32.gmra.mxu0 %v5465
        %v5530 = vpop.f32.mrf.mxu0
        %v5531 = vadd.f32 0.0, %v5530
        %5532 = vdwg.mxu0
        %5533 = vmatpush.msra.mxu0 0.0
        %5534 = vmatpush.msra.mxu0 0.0
        %5535 = vmatpush.msra.mxu0 0.0
        %5536 = vmatpush.msra.mxu0 0.0
        %5537 = vmatpush.msra.mxu0 0.0
        %5538 = vmatpush.msra.mxu0 0.0
        %5539 = vmatpush.msra.mxu0 0.0
        %5540 = vmatpush.msra.mxu0 0.0
        %5541 = vmatpush.msra.mxu0 0.0
        %5542 = vmatpush.msra.mxu0 0.0
        %5543 = vmatpush.msra.mxu0 0.0
        %5544 = vmatpush.msra.mxu0 0.0
        %5545 = vmatpush.msra.mxu0 0.0
        %5546 = vmatpush.msra.mxu0 0.0
        %5547 = vmatpush.msra.mxu0 0.0
        %5548 = vmatpush.msra.mxu0 %v5471
        %5549 = vmatmul.f32.gmra.mxu0 %v5456
        %v5550 = vpop.f32.mrf.mxu0
        %v5551 = vadd.f32 0.0, %v5550
        %5552 = vmatmul.f32.gmra.mxu0 %v5459
        %v5553 = vpop.f32.mrf.mxu0
        %v5554 = vadd.f32 0.0, %v5553
        %5555 = vmatmul.f32.gmra.mxu0 %v5462
        %v5556 = vpop.f32.mrf.mxu0
        %v5557 = vadd.f32 0.0, %v5556
        %5558 = vmatmul.f32.gmra.mxu0 %v5465
        %v5559 = vpop.f32.mrf.mxu0
        %v5560 = vadd.f32 0.0, %v5559
        %5561 = vdwg.mxu0
        %5562 = vmatpush.msra.mxu0 0.0
        %5563 = vmatpush.msra.mxu0 0.0
        %5564 = vmatpush.msra.mxu0 0.0
        %5565 = vmatpush.msra.mxu0 0.0
        %5566 = vmatpush.msra.mxu0 0.0
        %5567 = vmatpush.msra.mxu0 0.0
        %5568 = vmatpush.msra.mxu0 0.0
        %5569 = vmatpush.msra.mxu0 0.0
        %5570 = vmatpush.msra.mxu0 0.0
        %5571 = vmatpush.msra.mxu0 0.0
        %5572 = vmatpush.msra.mxu0 0.0
        %5573 = vmatpush.msra.mxu0 0.0
        %5574 = vmatpush.msra.mxu0 0.0
        %5575 = vmatpush.msra.mxu0 0.0
        %5576 = vmatpush.msra.mxu0 0.0
        %5577 = vmatpush.msra.mxu0 %v5473
        %5578 = vmatmul.f32.gmra.mxu0 %v5456
        %v5579 = vpop.f32.mrf.mxu0
        %v5580 = vadd.f32 0.0, %v5579
        %5581 = vmatmul.f32.gmra.mxu0 %v5459
        %v5582 = vpop.f32.mrf.mxu0
        %v5583 = vadd.f32 0.0, %v5582
        %5584 = vmatmul.f32.gmra.mxu0 %v5462
        %v5585 = vpop.f32.mrf.mxu0
        %v5586 = vadd.f32 0.0, %v5585
        %5587 = vmatmul.f32.gmra.mxu0 %v5465
        %v5588 = vpop.f32.mrf.mxu0
        %v5589 = vadd.f32 0.0, %v5588
        %5590 = vdwg.mxu0
        %v5591 = vmul.f32 %v4809, %v5344
        %v5592 = vmul.f32 %v4866, %v5373
        %v5593 = vmul.f32 %v4923, %v5402
        %v5594 = vmul.f32 %v4980, %v5431
        %v5595 = vmul.f32 %v4811, %v5347
        %v5596 = vmul.f32 %v4868, %v5376
        %v5597 = vmul.f32 %v4925, %v5405
        %v5598 = vmul.f32 %v4982, %v5434
        %v5599 = vmul.f32 %v4814, %v5350
        %v5600 = vmul.f32 %v4871, %v5379
        %v5601 = vmul.f32 %v4928, %v5408
        %v5602 = vmul.f32 %v4985, %v5437
        %v5603 = vmul.f32 %v4816, %v5353
        %v5604 = vmul.f32 %v4873, %v5382
        %v5605 = vmul.f32 %v4930, %v5411
        %v5606 = vmul.f32 %v4987, %v5440
        %v5607 = vadd.f32 %v5591, %v5493
        %v5608 = vadd.f32 %v5592, %v5522
        %v5609 = vadd.f32 %v5593, %v5551
        %v5610 = vadd.f32 %v5594, %v5580
        %v5611 = vadd.f32 %v5595, %v5496
        %v5612 = vadd.f32 %v5596, %v5525
        %v5613 = vadd.f32 %v5597, %v5554
        %v5614 = vadd.f32 %v5598, %v5583
        %v5615 = vadd.f32 %v5599, %v5499
        %v5616 = vadd.f32 %v5600, %v5528
        %v5617 = vadd.f32 %v5601, %v5557
        %v5618 = vadd.f32 %v5602, %v5586
        %v5619 = vadd.f32 %v5603, %v5502
        %v5620 = vadd.f32 %v5604, %v5531
        %v5621 = vadd.f32 %v5605, %v5560
        %v5622 = vadd.f32 %v5606, %v5589
        %v5623 = vmax.f32 %v5607, 0.0
        %v5624 = vmax.f32 %v5608, 0.0
        %v5625 = vmax.f32 %v5609, 0.0
        %v5626 = vmax.f32 %v5610, 0.0
        %v5627 = vmax.f32 %v5611, 0.0
        %v5628 = vmax.f32 %v5612, 0.0
        %v5629 = vmax.f32 %v5613, 0.0
        %v5630 = vmax.f32 %v5614, 0.0
        %v5631 = vmax.f32 %v5615, 0.0
        %v5632 = vmax.f32 %v5616, 0.0
        %v5633 = vmax.f32 %v5617, 0.0
        %v5634 = vmax.f32 %v5618, 0.0
        %v5635 = vmax.f32 %v5619, 0.0
        %v5636 = vmax.f32 %v5620, 0.0
        %v5637 = vmax.f32 %v5621, 0.0
        %v5638 = vmax.f32 %v5622, 0.0
        %v5639 = vld [vmem:[%s9] sm:$0xf]
        %v5640 = vld [vmem:[%s9 + $0x4] sm:$0xf]
        %v5641 = vld [vmem:[%s9 + $0x8] sm:$0xf]
        %v5642 = vld [vmem:[%s9 + $0xc] sm:$0xf]
        %v5647 = vunpack.c.l.b16 %v5639
        %v5648 = vunpack.c.l.b16 %v5640
        %v5649 = vunpack.c.l.b16 %v5641
        %v5650 = vunpack.c.l.b16 %v5642
        %v5651 = vpack.c.b16 %v5648, %v5647
        %v5652 = vpack.c.b16 %v5650, %v5649
        %v5654 = vsel %vm1512, %v5651, 0
        %v5657 = vsel %vm1512, %v5652, 0
        %5659 = vmatpush.bf16.msra.mxu0 0
        %5660 = vmatpush.bf16.msra.mxu0 0
        %5661 = vmatpush.bf16.msra.mxu0 0
        %5662 = vmatpush.bf16.msra.mxu0 0
        %5663 = vmatpush.bf16.msra.mxu0 0
        %5664 = vmatpush.bf16.msra.mxu0 0
        %5665 = vmatpush.bf16.msra.mxu0 0
        %5666 = vmatpush.bf16.msra.mxu0 %v3286
        %5667 = vmatmul.bf16.gmra.mxu0 %v5654
        %v5668 = vpop.f32.mrf.mxu0
        %v5669 = vadd.f32 0.0, %v5668
        %v5670 = vpop.f32.mrf.mxu0
        %v5671 = vadd.f32 0.0, %v5670
        %5672 = vmatmul.bf16.gmra.mxu0 %v5657
        %v5673 = vpop.f32.mrf.mxu0
        %v5674 = vadd.f32 0.0, %v5673
        %v5675 = vpop.f32.mrf.mxu0
        %v5676 = vadd.f32 0.0, %v5675
        %5677 = vdwg.mxu0
        %5678 = vmatpush.bf16.msra.mxu0 0
        %5679 = vmatpush.bf16.msra.mxu0 0
        %5680 = vmatpush.bf16.msra.mxu0 0
        %5681 = vmatpush.bf16.msra.mxu0 0
        %5682 = vmatpush.bf16.msra.mxu0 0
        %5683 = vmatpush.bf16.msra.mxu0 0
        %5684 = vmatpush.bf16.msra.mxu0 0
        %5685 = vmatpush.bf16.msra.mxu0 %v3287
        %5686 = vmatmul.bf16.gmra.mxu0 %v5654
        %v5687 = vpop.f32.mrf.mxu0
        %v5688 = vadd.f32 0.0, %v5687
        %v5689 = vpop.f32.mrf.mxu0
        %v5690 = vadd.f32 0.0, %v5689
        %5691 = vmatmul.bf16.gmra.mxu0 %v5657
        %v5692 = vpop.f32.mrf.mxu0
        %v5693 = vadd.f32 0.0, %v5692
        %v5694 = vpop.f32.mrf.mxu0
        %v5695 = vadd.f32 0.0, %v5694
        %5696 = vdwg.mxu0
        %5697 = vmatpush.bf16.msra.mxu0 0
        %5698 = vmatpush.bf16.msra.mxu0 0
        %5699 = vmatpush.bf16.msra.mxu0 0
        %5700 = vmatpush.bf16.msra.mxu0 0
        %5701 = vmatpush.bf16.msra.mxu0 0
        %5702 = vmatpush.bf16.msra.mxu0 0
        %5703 = vmatpush.bf16.msra.mxu0 0
        %5704 = vmatpush.bf16.msra.mxu0 %v3288
        %5705 = vmatmul.bf16.gmra.mxu0 %v5654
        %v5706 = vpop.f32.mrf.mxu0
        %v5707 = vadd.f32 0.0, %v5706
        %v5708 = vpop.f32.mrf.mxu0
        %v5709 = vadd.f32 0.0, %v5708
        %5710 = vmatmul.bf16.gmra.mxu0 %v5657
        %v5711 = vpop.f32.mrf.mxu0
        %v5712 = vadd.f32 0.0, %v5711
        %v5713 = vpop.f32.mrf.mxu0
        %v5714 = vadd.f32 0.0, %v5713
        %5715 = vdwg.mxu0
        %5716 = vmatpush.bf16.msra.mxu0 0
        %5717 = vmatpush.bf16.msra.mxu0 0
        %5718 = vmatpush.bf16.msra.mxu0 0
        %5719 = vmatpush.bf16.msra.mxu0 0
        %5720 = vmatpush.bf16.msra.mxu0 0
        %5721 = vmatpush.bf16.msra.mxu0 0
        %5722 = vmatpush.bf16.msra.mxu0 0
        %5723 = vmatpush.bf16.msra.mxu0 %v3289
        %5724 = vmatmul.bf16.gmra.mxu0 %v5654
        %v5725 = vpop.f32.mrf.mxu0
        %v5726 = vadd.f32 0.0, %v5725
        %v5727 = vpop.f32.mrf.mxu0
        %v5728 = vadd.f32 0.0, %v5727
        %5729 = vmatmul.bf16.gmra.mxu0 %v5657
        %v5730 = vpop.f32.mrf.mxu0
        %v5731 = vadd.f32 0.0, %v5730
        %v5732 = vpop.f32.mrf.mxu0
        %v5733 = vadd.f32 0.0, %v5732
        %5734 = vdwg.mxu0
        %5735 = vmatpush.msra.mxu0 %v408
        %5736 = vmatpush.msra.mxu0 %v407
        %5737 = vmatpush.msra.mxu0 %v406
        %5738 = vmatpush.msra.mxu0 %v405
        %5739 = vmatpush.msra.mxu0 %v404
        %5740 = vmatpush.msra.mxu0 %v403
        %5741 = vmatpush.msra.mxu0 %v402
        %5742 = vmatpush.msra.mxu0 %v401
        %5743 = vmatpush.msra.mxu0 %v400
        %5744 = vmatpush.msra.mxu0 %v399
        %5745 = vmatpush.msra.mxu0 %v398
        %5746 = vmatpush.msra.mxu0 %v397
        %5747 = vmatpush.msra.mxu0 %v396
        %5748 = vmatpush.msra.mxu0 %v395
        %5749 = vmatpush.msra.mxu0 %v394
        %5750 = vmatpush.msra.mxu0 %v393
        %5751 = vmatmul.f32.gmra.mxu0 %v5669
        %v5752 = vpop.f32.mrf.mxu0
        %v5753 = vadd.f32 0.0, %v5752
        %5754 = vmatmul.f32.gmra.mxu0 %v5671
        %v5755 = vpop.f32.mrf.mxu0
        %v5756 = vadd.f32 0.0, %v5755
        %5757 = vmatmul.f32.gmra.mxu0 %v5674
        %v5758 = vpop.f32.mrf.mxu0
        %v5759 = vadd.f32 0.0, %v5758
        %5760 = vmatmul.f32.gmra.mxu0 %v5676
        %v5761 = vpop.f32.mrf.mxu0
        %v5762 = vadd.f32 0.0, %v5761
        %5763 = vdwg.mxu0
        %5764 = vmatpush.msra.mxu0 %v424
        %5765 = vmatpush.msra.mxu0 %v423
        %5766 = vmatpush.msra.mxu0 %v422
        %5767 = vmatpush.msra.mxu0 %v421
        %5768 = vmatpush.msra.mxu0 %v420
        %5769 = vmatpush.msra.mxu0 %v419
        %5770 = vmatpush.msra.mxu0 %v418
        %5771 = vmatpush.msra.mxu0 %v417
        %5772 = vmatpush.msra.mxu0 %v416
        %5773 = vmatpush.msra.mxu0 %v415
        %5774 = vmatpush.msra.mxu0 %v414
        %5775 = vmatpush.msra.mxu0 %v413
        %5776 = vmatpush.msra.mxu0 %v412
        %5777 = vmatpush.msra.mxu0 %v411
        %5778 = vmatpush.msra.mxu0 %v410
        %5779 = vmatpush.msra.mxu0 %v409
        %5780 = vmatmul.f32.gmra.mxu0 %v5688
        %v5781 = vpop.f32.mrf.mxu0
        %v5782 = vadd.f32 %v5753, %v5781
        %5783 = vmatmul.f32.gmra.mxu0 %v5690
        %v5784 = vpop.f32.mrf.mxu0
        %v5785 = vadd.f32 %v5756, %v5784
        %5786 = vmatmul.f32.gmra.mxu0 %v5693
        %v5787 = vpop.f32.mrf.mxu0
        %v5788 = vadd.f32 %v5759, %v5787
        %5789 = vmatmul.f32.gmra.mxu0 %v5695
        %v5790 = vpop.f32.mrf.mxu0
        %v5791 = vadd.f32 %v5762, %v5790
        %5792 = vdwg.mxu0
        %5793 = vmatpush.msra.mxu0 %v440
        %5794 = vmatpush.msra.mxu0 %v439
        %5795 = vmatpush.msra.mxu0 %v438
        %5796 = vmatpush.msra.mxu0 %v437
        %5797 = vmatpush.msra.mxu0 %v436
        %5798 = vmatpush.msra.mxu0 %v435
        %5799 = vmatpush.msra.mxu0 %v434
        %5800 = vmatpush.msra.mxu0 %v433
        %5801 = vmatpush.msra.mxu0 %v432
        %5802 = vmatpush.msra.mxu0 %v431
        %5803 = vmatpush.msra.mxu0 %v430
        %5804 = vmatpush.msra.mxu0 %v429
        %5805 = vmatpush.msra.mxu0 %v428
        %5806 = vmatpush.msra.mxu0 %v427
        %5807 = vmatpush.msra.mxu0 %v426
        %5808 = vmatpush.msra.mxu0 %v425
        %5809 = vmatmul.f32.gmra.mxu0 %v5707
        %v5810 = vpop.f32.mrf.mxu0
        %v5811 = vadd.f32 %v5782, %v5810
        %5812 = vmatmul.f32.gmra.mxu0 %v5709
        %v5813 = vpop.f32.mrf.mxu0
        %v5814 = vadd.f32 %v5785, %v5813
        %5815 = vmatmul.f32.gmra.mxu0 %v5712
        %v5816 = vpop.f32.mrf.mxu0
        %v5817 = vadd.f32 %v5788, %v5816
        %5818 = vmatmul.f32.gmra.mxu0 %v5714
        %v5819 = vpop.f32.mrf.mxu0
        %v5820 = vadd.f32 %v5791, %v5819
        %5821 = vdwg.mxu0
        %5822 = vmatpush.msra.mxu0 %v456
        %5823 = vmatpush.msra.mxu0 %v455
        %5824 = vmatpush.msra.mxu0 %v454
        %5825 = vmatpush.msra.mxu0 %v453
        %5826 = vmatpush.msra.mxu0 %v452
        %5827 = vmatpush.msra.mxu0 %v451
        %5828 = vmatpush.msra.mxu0 %v450
        %5829 = vmatpush.msra.mxu0 %v449
        %5830 = vmatpush.msra.mxu0 %v448
        %5831 = vmatpush.msra.mxu0 %v447
        %5832 = vmatpush.msra.mxu0 %v446
        %5833 = vmatpush.msra.mxu0 %v445
        %5834 = vmatpush.msra.mxu0 %v444
        %5835 = vmatpush.msra.mxu0 %v443
        %5836 = vmatpush.msra.mxu0 %v442
        %5837 = vmatpush.msra.mxu0 %v441
        %5838 = vmatmul.f32.gmra.mxu0 %v5726
        %v5839 = vpop.f32.mrf.mxu0
        %v5840 = vadd.f32 %v5811, %v5839
        %5841 = vmatmul.f32.gmra.mxu0 %v5728
        %v5842 = vpop.f32.mrf.mxu0
        %v5843 = vadd.f32 %v5814, %v5842
        %5844 = vmatmul.f32.gmra.mxu0 %v5731
        %v5845 = vpop.f32.mrf.mxu0
        %v5846 = vadd.f32 %v5817, %v5845
        %5847 = vmatmul.f32.gmra.mxu0 %v5733
        %v5848 = vpop.f32.mrf.mxu0
        %v5849 = vadd.f32 %v5820, %v5848
        %5850 = vdwg.mxu0
        %v5851 = vmul.f32 %v5669, %v5669
        %v5852 = vmul.f32 %v5688, %v5688
        %v5853 = vmul.f32 %v5707, %v5707
        %v5854 = vmul.f32 %v5726, %v5726
        %v5855 = vmul.f32 %v5671, %v5671
        %v5856 = vmul.f32 %v5690, %v5690
        %v5857 = vmul.f32 %v5709, %v5709
        %v5858 = vmul.f32 %v5728, %v5728
        %v5859 = vmul.f32 %v5674, %v5674
        %v5860 = vmul.f32 %v5693, %v5693
        %v5861 = vmul.f32 %v5712, %v5712
        %v5862 = vmul.f32 %v5731, %v5731
        %v5863 = vmul.f32 %v5676, %v5676
        %v5864 = vmul.f32 %v5695, %v5695
        %v5865 = vmul.f32 %v5714, %v5714
        %v5866 = vmul.f32 %v5733, %v5733
        %5867 = vmatpush.msra.mxu0 %v408
        %5868 = vmatpush.msra.mxu0 %v407
        %5869 = vmatpush.msra.mxu0 %v406
        %5870 = vmatpush.msra.mxu0 %v405
        %5871 = vmatpush.msra.mxu0 %v404
        %5872 = vmatpush.msra.mxu0 %v403
        %5873 = vmatpush.msra.mxu0 %v402
        %5874 = vmatpush.msra.mxu0 %v401
        %5875 = vmatpush.msra.mxu0 %v400
        %5876 = vmatpush.msra.mxu0 %v399
        %5877 = vmatpush.msra.mxu0 %v398
        %5878 = vmatpush.msra.mxu0 %v397
        %5879 = vmatpush.msra.mxu0 %v396
        %5880 = vmatpush.msra.mxu0 %v395
        %5881 = vmatpush.msra.mxu0 %v394
        %5882 = vmatpush.msra.mxu0 %v393
        %5883 = vmatmul.f32.gmra.mxu0 %v5851
        %v5884 = vpop.f32.mrf.mxu0
        %v5885 = vadd.f32 0.0, %v5884
        %5886 = vmatmul.f32.gmra.mxu0 %v5855
        %v5887 = vpop.f32.mrf.mxu0
        %v5888 = vadd.f32 0.0, %v5887
        %5889 = vmatmul.f32.gmra.mxu0 %v5859
        %v5890 = vpop.f32.mrf.mxu0
        %v5891 = vadd.f32 0.0, %v5890
        %5892 = vmatmul.f32.gmra.mxu0 %v5863
        %v5893 = vpop.f32.mrf.mxu0
        %v5894 = vadd.f32 0.0, %v5893
        %5895 = vdwg.mxu0
        %5896 = vmatpush.msra.mxu0 %v424
        %5897 = vmatpush.msra.mxu0 %v423
        %5898 = vmatpush.msra.mxu0 %v422
        %5899 = vmatpush.msra.mxu0 %v421
        %5900 = vmatpush.msra.mxu0 %v420
        %5901 = vmatpush.msra.mxu0 %v419
        %5902 = vmatpush.msra.mxu0 %v418
        %5903 = vmatpush.msra.mxu0 %v417
        %5904 = vmatpush.msra.mxu0 %v416
        %5905 = vmatpush.msra.mxu0 %v415
        %5906 = vmatpush.msra.mxu0 %v414
        %5907 = vmatpush.msra.mxu0 %v413
        %5908 = vmatpush.msra.mxu0 %v412
        %5909 = vmatpush.msra.mxu0 %v411
        %5910 = vmatpush.msra.mxu0 %v410
        %5911 = vmatpush.msra.mxu0 %v409
        %5912 = vmatmul.f32.gmra.mxu0 %v5852
        %v5913 = vpop.f32.mrf.mxu0
        %v5914 = vadd.f32 %v5885, %v5913
        %5915 = vmatmul.f32.gmra.mxu0 %v5856
        %v5916 = vpop.f32.mrf.mxu0
        %v5917 = vadd.f32 %v5888, %v5916
        %5918 = vmatmul.f32.gmra.mxu0 %v5860
        %v5919 = vpop.f32.mrf.mxu0
        %v5920 = vadd.f32 %v5891, %v5919
        %5921 = vmatmul.f32.gmra.mxu0 %v5864
        %v5922 = vpop.f32.mrf.mxu0
        %v5923 = vadd.f32 %v5894, %v5922
        %5924 = vdwg.mxu0
        %5925 = vmatpush.msra.mxu0 %v440
        %5926 = vmatpush.msra.mxu0 %v439
        %5927 = vmatpush.msra.mxu0 %v438
        %5928 = vmatpush.msra.mxu0 %v437
        %5929 = vmatpush.msra.mxu0 %v436
        %5930 = vmatpush.msra.mxu0 %v435
        %5931 = vmatpush.msra.mxu0 %v434
        %5932 = vmatpush.msra.mxu0 %v433
        %5933 = vmatpush.msra.mxu0 %v432
        %5934 = vmatpush.msra.mxu0 %v431
        %5935 = vmatpush.msra.mxu0 %v430
        %5936 = vmatpush.msra.mxu0 %v429
        %5937 = vmatpush.msra.mxu0 %v428
        %5938 = vmatpush.msra.mxu0 %v427
        %5939 = vmatpush.msra.mxu0 %v426
        %5940 = vmatpush.msra.mxu0 %v425
        %5941 = vmatmul.f32.gmra.mxu0 %v5853
        %v5942 = vpop.f32.mrf.mxu0
        %v5943 = vadd.f32 %v5914, %v5942
        %5944 = vmatmul.f32.gmra.mxu0 %v5857
        %v5945 = vpop.f32.mrf.mxu0
        %v5946 = vadd.f32 %v5917, %v5945
        %5947 = vmatmul.f32.gmra.mxu0 %v5861
        %v5948 = vpop.f32.mrf.mxu0
        %v5949 = vadd.f32 %v5920, %v5948
        %5950 = vmatmul.f32.gmra.mxu0 %v5865
        %v5951 = vpop.f32.mrf.mxu0
        %v5952 = vadd.f32 %v5923, %v5951
        %5953 = vdwg.mxu0
        %5954 = vmatpush.msra.mxu0 %v456
        %5955 = vmatpush.msra.mxu0 %v455
        %5956 = vmatpush.msra.mxu0 %v454
        %5957 = vmatpush.msra.mxu0 %v453
        %5958 = vmatpush.msra.mxu0 %v452
        %5959 = vmatpush.msra.mxu0 %v451
        %5960 = vmatpush.msra.mxu0 %v450
        %5961 = vmatpush.msra.mxu0 %v449
        %5962 = vmatpush.msra.mxu0 %v448
        %5963 = vmatpush.msra.mxu0 %v447
        %5964 = vmatpush.msra.mxu0 %v446
        %5965 = vmatpush.msra.mxu0 %v445
        %5966 = vmatpush.msra.mxu0 %v444
        %5967 = vmatpush.msra.mxu0 %v443
        %5968 = vmatpush.msra.mxu0 %v442
        %5969 = vmatpush.msra.mxu0 %v441
        %5970 = vmatmul.f32.gmra.mxu0 %v5854
        %v5971 = vpop.f32.mrf.mxu0
        %v5972 = vadd.f32 %v5943, %v5971
        %5973 = vmatmul.f32.gmra.mxu0 %v5858
        %v5974 = vpop.f32.mrf.mxu0
        %v5975 = vadd.f32 %v5946, %v5974
        %5976 = vmatmul.f32.gmra.mxu0 %v5862
        %v5977 = vpop.f32.mrf.mxu0
        %v5978 = vadd.f32 %v5949, %v5977
        %5979 = vmatmul.f32.gmra.mxu0 %v5866
        %v5980 = vpop.f32.mrf.mxu0
        %v5981 = vadd.f32 %v5952, %v5980
        %5982 = vdwg.mxu0
        %v5983 = vmul.f32 %v5840, 0.00390625
        %v5984 = vmul.f32 %v5843, 0.00390625
        %v5985 = vmul.f32 %v5846, 0.00390625
        %v5986 = vmul.f32 %v5849, 0.00390625
        %v5987 = vmul.f32 %v5972, 0.00390625
        %v5988 = vmul.f32 %v5975, 0.00390625
        %v5989 = vmul.f32 %v5978, 0.00390625
        %v5990 = vmul.f32 %v5981, 0.00390625
        %v5991 = vmul.f32 %v5983, %v5983
        %v5992 = vmul.f32 %v5984, %v5984
        %v5993 = vmul.f32 %v5985, %v5985
        %v5994 = vmul.f32 %v5986, %v5986
        %v5995 = vsub.f32 %v5987, %v5991
        %v5996 = vsub.f32 %v5988, %v5992
        %v5997 = vsub.f32 %v5989, %v5993
        %v5998 = vsub.f32 %v5990, %v5994
        %v5999 = vmax.f32 %v5995, 0.0
        %v6000 = vmax.f32 %v5996, 0.0
        %v6001 = vmax.f32 %v5997, 0.0
        %v6002 = vmax.f32 %v5998, 0.0
        %v6003 = vadd.f32 %v5999, 1e-05
        %v6004 = vadd.f32 %v6000, 1e-05
        %v6005 = vadd.f32 %v6001, 1e-05
        %v6006 = vadd.f32 %v6002, 1e-05
        %v6007 = vrsqrt.pop %v6003
        %v6008 = vmul.f32 %v6007, %v6003
        %v6009 = vmul.f32 %v6008, %v6007
        %v6010 = vmul.f32 0.5, %v6009
        %v6011 = vsub.f32 1.5, %v6010
        %v6012 = vmul.f32 %v6007, %v6011
        %vm6013 = vweird.f32 %v6003
        %vm6014 = vweird.f32 %v6007
        %vm6015 = vmor %vm6013, %vm6014
        %v6016 = vsel %vm6015, %v6007, %v6012
        %v6017 = vrsqrt.pop %v6004
        %v6018 = vmul.f32 %v6017, %v6004
        %v6019 = vmul.f32 %v6018, %v6017
        %v6020 = vmul.f32 0.5, %v6019
        %v6021 = vsub.f32 1.5, %v6020
        %v6022 = vmul.f32 %v6017, %v6021
        %vm6023 = vweird.f32 %v6004
        %vm6024 = vweird.f32 %v6017
        %vm6025 = vmor %vm6023, %vm6024
        %v6026 = vsel %vm6025, %v6017, %v6022
        %v6027 = vrsqrt.pop %v6005
        %v6028 = vmul.f32 %v6027, %v6005
        %v6029 = vmul.f32 %v6028, %v6027
        %v6030 = vmul.f32 0.5, %v6029
        %v6031 = vsub.f32 1.5, %v6030
        %v6032 = vmul.f32 %v6027, %v6031
        %vm6033 = vweird.f32 %v6005
        %vm6034 = vweird.f32 %v6027
        %vm6035 = vmor %vm6033, %vm6034
        %v6036 = vsel %vm6035, %v6027, %v6032
        %v6037 = vrsqrt.pop %v6006
        %v6038 = vmul.f32 %v6037, %v6006
        %v6039 = vmul.f32 %v6038, %v6037
        %v6040 = vmul.f32 0.5, %v6039
        %v6041 = vsub.f32 1.5, %v6040
        %v6042 = vmul.f32 %v6037, %v6041
        %vm6043 = vweird.f32 %v6006
        %vm6044 = vweird.f32 %v6037
        %vm6045 = vmor %vm6043, %vm6044
        %v6046 = vsel %vm6045, %v6037, %v6042
        %6047 = vst [vmem:[#allocation1] ss:$4 sm:$0xff] %v457
        %v6048 = vld.sshfl [vmem:[#allocation1] sm:$0xff pattern:$0x73625140]
        %v6049 = vld.sshfl [vmem:[#allocation1 + $0x8] sm:$0xff pattern:$0x73625140]
        %v6050 = vld.sshfl [vmem:[#allocation1 + $0x10] sm:$0xff pattern:$0x73625140]
        %v6051 = vld.sshfl [vmem:[#allocation1 + $0x18] sm:$0xff pattern:$0x73625140]
        %v6053 = vsel %vm962, %v6016, 0
        %v6056 = vsel %vm962, %v6026, 0
        %v6059 = vsel %vm962, %v6036, 0
        %v6062 = vsel %vm962, %v6046, 0
        %v6064 = vsel %vm969, %v6048, 0
        %v6066 = vsel %vm969, %v6049, 0
        %v6068 = vsel %vm969, %v6050, 0
        %v6070 = vsel %vm969, %v6051, 0
        %6072 = vmatpush.msra.mxu0 0.0
        %6073 = vmatpush.msra.mxu0 0.0
        %6074 = vmatpush.msra.mxu0 0.0
        %6075 = vmatpush.msra.mxu0 0.0
        %6076 = vmatpush.msra.mxu0 0.0
        %6077 = vmatpush.msra.mxu0 0.0
        %6078 = vmatpush.msra.mxu0 0.0
        %6079 = vmatpush.msra.mxu0 0.0
        %6080 = vmatpush.msra.mxu0 0.0
        %6081 = vmatpush.msra.mxu0 0.0
        %6082 = vmatpush.msra.mxu0 0.0
        %6083 = vmatpush.msra.mxu0 0.0
        %6084 = vmatpush.msra.mxu0 0.0
        %6085 = vmatpush.msra.mxu0 0.0
        %6086 = vmatpush.msra.mxu0 0.0
        %6087 = vmatpush.msra.mxu0 %v6064
        %6088 = vmatmul.f32.gmra.mxu0 %v6053
        %v6089 = vpop.f32.mrf.mxu0
        %v6090 = vadd.f32 0.0, %v6089
        %6091 = vmatmul.f32.gmra.mxu0 %v6056
        %v6092 = vpop.f32.mrf.mxu0
        %v6093 = vadd.f32 0.0, %v6092
        %6094 = vmatmul.f32.gmra.mxu0 %v6059
        %v6095 = vpop.f32.mrf.mxu0
        %v6096 = vadd.f32 0.0, %v6095
        %6097 = vmatmul.f32.gmra.mxu0 %v6062
        %v6098 = vpop.f32.mrf.mxu0
        %v6099 = vadd.f32 0.0, %v6098
        %6100 = vdwg.mxu0
        %6101 = vmatpush.msra.mxu0 0.0
        %6102 = vmatpush.msra.mxu0 0.0
        %6103 = vmatpush.msra.mxu0 0.0
        %6104 = vmatpush.msra.mxu0 0.0
        %6105 = vmatpush.msra.mxu0 0.0
        %6106 = vmatpush.msra.mxu0 0.0
        %6107 = vmatpush.msra.mxu0 0.0
        %6108 = vmatpush.msra.mxu0 0.0
        %6109 = vmatpush.msra.mxu0 0.0
        %6110 = vmatpush.msra.mxu0 0.0
        %6111 = vmatpush.msra.mxu0 0.0
        %6112 = vmatpush.msra.mxu0 0.0
        %6113 = vmatpush.msra.mxu0 0.0
        %6114 = vmatpush.msra.mxu0 0.0
        %6115 = vmatpush.msra.mxu0 0.0
        %6116 = vmatpush.msra.mxu0 %v6066
        %6117 = vmatmul.f32.gmra.mxu0 %v6053
        %v6118 = vpop.f32.mrf.mxu0
        %v6119 = vadd.f32 0.0, %v6118
        %6120 = vmatmul.f32.gmra.mxu0 %v6056
        %v6121 = vpop.f32.mrf.mxu0
        %v6122 = vadd.f32 0.0, %v6121
        %6123 = vmatmul.f32.gmra.mxu0 %v6059
        %v6124 = vpop.f32.mrf.mxu0
        %v6125 = vadd.f32 0.0, %v6124
        %6126 = vmatmul.f32.gmra.mxu0 %v6062
        %v6127 = vpop.f32.mrf.mxu0
        %v6128 = vadd.f32 0.0, %v6127
        %6129 = vdwg.mxu0
        %6130 = vmatpush.msra.mxu0 0.0
        %6131 = vmatpush.msra.mxu0 0.0
        %6132 = vmatpush.msra.mxu0 0.0
        %6133 = vmatpush.msra.mxu0 0.0
        %6134 = vmatpush.msra.mxu0 0.0
        %6135 = vmatpush.msra.mxu0 0.0
        %6136 = vmatpush.msra.mxu0 0.0
        %6137 = vmatpush.msra.mxu0 0.0
        %6138 = vmatpush.msra.mxu0 0.0
        %6139 = vmatpush.msra.mxu0 0.0
        %6140 = vmatpush.msra.mxu0 0.0
        %6141 = vmatpush.msra.mxu0 0.0
        %6142 = vmatpush.msra.mxu0 0.0
        %6143 = vmatpush.msra.mxu0 0.0
        %6144 = vmatpush.msra.mxu0 0.0
        %6145 = vmatpush.msra.mxu0 %v6068
        %6146 = vmatmul.f32.gmra.mxu0 %v6053
        %v6147 = vpop.f32.mrf.mxu0
        %v6148 = vadd.f32 0.0, %v6147
        %6149 = vmatmul.f32.gmra.mxu0 %v6056
        %v6150 = vpop.f32.mrf.mxu0
        %v6151 = vadd.f32 0.0, %v6150
        %6152 = vmatmul.f32.gmra.mxu0 %v6059
        %v6153 = vpop.f32.mrf.mxu0
        %v6154 = vadd.f32 0.0, %v6153
        %6155 = vmatmul.f32.gmra.mxu0 %v6062
        %v6156 = vpop.f32.mrf.mxu0
        %v6157 = vadd.f32 0.0, %v6156
        %6158 = vdwg.mxu0
        %6159 = vmatpush.msra.mxu0 0.0
        %6160 = vmatpush.msra.mxu0 0.0
        %6161 = vmatpush.msra.mxu0 0.0
        %6162 = vmatpush.msra.mxu0 0.0
        %6163 = vmatpush.msra.mxu0 0.0
        %6164 = vmatpush.msra.mxu0 0.0
        %6165 = vmatpush.msra.mxu0 0.0
        %6166 = vmatpush.msra.mxu0 0.0
        %6167 = vmatpush.msra.mxu0 0.0
        %6168 = vmatpush.msra.mxu0 0.0
        %6169 = vmatpush.msra.mxu0 0.0
        %6170 = vmatpush.msra.mxu0 0.0
        %6171 = vmatpush.msra.mxu0 0.0
        %6172 = vmatpush.msra.mxu0 0.0
        %6173 = vmatpush.msra.mxu0 0.0
        %6174 = vmatpush.msra.mxu0 %v6070
        %6175 = vmatmul.f32.gmra.mxu0 %v6053
        %v6176 = vpop.f32.mrf.mxu0
        %v6177 = vadd.f32 0.0, %v6176
        %6178 = vmatmul.f32.gmra.mxu0 %v6056
        %v6179 = vpop.f32.mrf.mxu0
        %v6180 = vadd.f32 0.0, %v6179
        %6181 = vmatmul.f32.gmra.mxu0 %v6059
        %v6182 = vpop.f32.mrf.mxu0
        %v6183 = vadd.f32 0.0, %v6182
        %6184 = vmatmul.f32.gmra.mxu0 %v6062
        %v6185 = vpop.f32.mrf.mxu0
        %v6186 = vadd.f32 0.0, %v6185
        %6187 = vdwg.mxu0
        %v6188 = vsub.f32 0.0, %v5983
        %v6189 = vsub.f32 0.0, %v5984
        %v6190 = vsub.f32 0.0, %v5985
        %v6191 = vsub.f32 0.0, %v5986
        %v6192 = vmul.f32 %v6188, %v6016
        %v6193 = vmul.f32 %v6189, %v6026
        %v6194 = vmul.f32 %v6190, %v6036
        %v6195 = vmul.f32 %v6191, %v6046
        %6196 = vst [vmem:[#allocation1] ss:$4 sm:$0xff] %v457
        %v6197 = vld.sshfl [vmem:[#allocation1] sm:$0xff pattern:$0x73625140]
        %v6198 = vld.sshfl [vmem:[#allocation1 + $0x8] sm:$0xff pattern:$0x73625140]
        %v6199 = vld.sshfl [vmem:[#allocation1 + $0x10] sm:$0xff pattern:$0x73625140]
        %v6200 = vld.sshfl [vmem:[#allocation1 + $0x18] sm:$0xff pattern:$0x73625140]
        %v6202 = vsel %vm962, %v6192, 0
        %v6205 = vsel %vm962, %v6193, 0
        %v6208 = vsel %vm962, %v6194, 0
        %v6211 = vsel %vm962, %v6195, 0
        %v6213 = vsel %vm969, %v6197, 0
        %v6215 = vsel %vm969, %v6198, 0
        %v6217 = vsel %vm969, %v6199, 0
        %v6219 = vsel %vm969, %v6200, 0
        %6221 = vmatpush.msra.mxu0 0.0
        %6222 = vmatpush.msra.mxu0 0.0
        %6223 = vmatpush.msra.mxu0 0.0
        %6224 = vmatpush.msra.mxu0 0.0
        %6225 = vmatpush.msra.mxu0 0.0
        %6226 = vmatpush.msra.mxu0 0.0
        %6227 = vmatpush.msra.mxu0 0.0
        %6228 = vmatpush.msra.mxu0 0.0
        %6229 = vmatpush.msra.mxu0 0.0
        %6230 = vmatpush.msra.mxu0 0.0
        %6231 = vmatpush.msra.mxu0 0.0
        %6232 = vmatpush.msra.mxu0 0.0
        %6233 = vmatpush.msra.mxu0 0.0
        %6234 = vmatpush.msra.mxu0 0.0
        %6235 = vmatpush.msra.mxu0 0.0
        %6236 = vmatpush.msra.mxu0 %v6213
        %6237 = vmatmul.f32.gmra.mxu0 %v6202
        %v6238 = vpop.f32.mrf.mxu0
        %v6239 = vadd.f32 0.0, %v6238
        %6240 = vmatmul.f32.gmra.mxu0 %v6205
        %v6241 = vpop.f32.mrf.mxu0
        %v6242 = vadd.f32 0.0, %v6241
        %6243 = vmatmul.f32.gmra.mxu0 %v6208
        %v6244 = vpop.f32.mrf.mxu0
        %v6245 = vadd.f32 0.0, %v6244
        %6246 = vmatmul.f32.gmra.mxu0 %v6211
        %v6247 = vpop.f32.mrf.mxu0
        %v6248 = vadd.f32 0.0, %v6247
        %6249 = vdwg.mxu0
        %6250 = vmatpush.msra.mxu0 0.0
        %6251 = vmatpush.msra.mxu0 0.0
        %6252 = vmatpush.msra.mxu0 0.0
        %6253 = vmatpush.msra.mxu0 0.0
        %6254 = vmatpush.msra.mxu0 0.0
        %6255 = vmatpush.msra.mxu0 0.0
        %6256 = vmatpush.msra.mxu0 0.0
        %6257 = vmatpush.msra.mxu0 0.0
        %6258 = vmatpush.msra.mxu0 0.0
        %6259 = vmatpush.msra.mxu0 0.0
        %6260 = vmatpush.msra.mxu0 0.0
        %6261 = vmatpush.msra.mxu0 0.0
        %6262 = vmatpush.msra.mxu0 0.0
        %6263 = vmatpush.msra.mxu0 0.0
        %6264 = vmatpush.msra.mxu0 0.0
        %6265 = vmatpush.msra.mxu0 %v6215
        %6266 = vmatmul.f32.gmra.mxu0 %v6202
        %v6267 = vpop.f32.mrf.mxu0
        %v6268 = vadd.f32 0.0, %v6267
        %6269 = vmatmul.f32.gmra.mxu0 %v6205
        %v6270 = vpop.f32.mrf.mxu0
        %v6271 = vadd.f32 0.0, %v6270
        %6272 = vmatmul.f32.gmra.mxu0 %v6208
        %v6273 = vpop.f32.mrf.mxu0
        %v6274 = vadd.f32 0.0, %v6273
        %6275 = vmatmul.f32.gmra.mxu0 %v6211
        %v6276 = vpop.f32.mrf.mxu0
        %v6277 = vadd.f32 0.0, %v6276
        %6278 = vdwg.mxu0
        %6279 = vmatpush.msra.mxu0 0.0
        %6280 = vmatpush.msra.mxu0 0.0
        %6281 = vmatpush.msra.mxu0 0.0
        %6282 = vmatpush.msra.mxu0 0.0
        %6283 = vmatpush.msra.mxu0 0.0
        %6284 = vmatpush.msra.mxu0 0.0
        %6285 = vmatpush.msra.mxu0 0.0
        %6286 = vmatpush.msra.mxu0 0.0
        %6287 = vmatpush.msra.mxu0 0.0
        %6288 = vmatpush.msra.mxu0 0.0
        %6289 = vmatpush.msra.mxu0 0.0
        %6290 = vmatpush.msra.mxu0 0.0
        %6291 = vmatpush.msra.mxu0 0.0
        %6292 = vmatpush.msra.mxu0 0.0
        %6293 = vmatpush.msra.mxu0 0.0
        %6294 = vmatpush.msra.mxu0 %v6217
        %6295 = vmatmul.f32.gmra.mxu0 %v6202
        %v6296 = vpop.f32.mrf.mxu0
        %v6297 = vadd.f32 0.0, %v6296
        %6298 = vmatmul.f32.gmra.mxu0 %v6205
        %v6299 = vpop.f32.mrf.mxu0
        %v6300 = vadd.f32 0.0, %v6299
        %6301 = vmatmul.f32.gmra.mxu0 %v6208
        %v6302 = vpop.f32.mrf.mxu0
        %v6303 = vadd.f32 0.0, %v6302
        %6304 = vmatmul.f32.gmra.mxu0 %v6211
        %v6305 = vpop.f32.mrf.mxu0
        %v6306 = vadd.f32 0.0, %v6305
        %6307 = vdwg.mxu0
        %6308 = vmatpush.msra.mxu0 0.0
        %6309 = vmatpush.msra.mxu0 0.0
        %6310 = vmatpush.msra.mxu0 0.0
        %6311 = vmatpush.msra.mxu0 0.0
        %6312 = vmatpush.msra.mxu0 0.0
        %6313 = vmatpush.msra.mxu0 0.0
        %6314 = vmatpush.msra.mxu0 0.0
        %6315 = vmatpush.msra.mxu0 0.0
        %6316 = vmatpush.msra.mxu0 0.0
        %6317 = vmatpush.msra.mxu0 0.0
        %6318 = vmatpush.msra.mxu0 0.0
        %6319 = vmatpush.msra.mxu0 0.0
        %6320 = vmatpush.msra.mxu0 0.0
        %6321 = vmatpush.msra.mxu0 0.0
        %6322 = vmatpush.msra.mxu0 0.0
        %6323 = vmatpush.msra.mxu0 %v6219
        %6324 = vmatmul.f32.gmra.mxu0 %v6202
        %v6325 = vpop.f32.mrf.mxu0
        %v6326 = vadd.f32 0.0, %v6325
        %6327 = vmatmul.f32.gmra.mxu0 %v6205
        %v6328 = vpop.f32.mrf.mxu0
        %v6329 = vadd.f32 0.0, %v6328
        %6330 = vmatmul.f32.gmra.mxu0 %v6208
        %v6331 = vpop.f32.mrf.mxu0
        %v6332 = vadd.f32 0.0, %v6331
        %6333 = vmatmul.f32.gmra.mxu0 %v6211
        %v6334 = vpop.f32.mrf.mxu0
        %v6335 = vadd.f32 0.0, %v6334
        %6336 = vdwg.mxu0
        %v6337 = vmul.f32 %v5669, %v6090
        %v6338 = vmul.f32 %v5688, %v6119
        %v6339 = vmul.f32 %v5707, %v6148
        %v6340 = vmul.f32 %v5726, %v6177
        %v6341 = vmul.f32 %v5671, %v6093
        %v6342 = vmul.f32 %v5690, %v6122
        %v6343 = vmul.f32 %v5709, %v6151
        %v6344 = vmul.f32 %v5728, %v6180
        %v6345 = vmul.f32 %v5674, %v6096
        %v6346 = vmul.f32 %v5693, %v6125
        %v6347 = vmul.f32 %v5712, %v6154
        %v6348 = vmul.f32 %v5731, %v6183
        %v6349 = vmul.f32 %v5676, %v6099
        %v6350 = vmul.f32 %v5695, %v6128
        %v6351 = vmul.f32 %v5714, %v6157
        %v6352 = vmul.f32 %v5733, %v6186
        %v6353 = vadd.f32 %v6337, %v6239
        %v6354 = vadd.f32 %v6338, %v6268
        %v6355 = vadd.f32 %v6339, %v6297
        %v6356 = vadd.f32 %v6340, %v6326
        %v6357 = vadd.f32 %v6341, %v6242
        %v6358 = vadd.f32 %v6342, %v6271
        %v6359 = vadd.f32 %v6343, %v6300
        %v6360 = vadd.f32 %v6344, %v6329
        %v6361 = vadd.f32 %v6345, %v6245
        %v6362 = vadd.f32 %v6346, %v6274
        %v6363 = vadd.f32 %v6347, %v6303
        %v6364 = vadd.f32 %v6348, %v6332
        %v6365 = vadd.f32 %v6349, %v6248
        %v6366 = vadd.f32 %v6350, %v6277
        %v6367 = vadd.f32 %v6351, %v6306
        %v6368 = vadd.f32 %v6352, %v6335
        %v6369 = vadd.f32 %v6353, %v5623
        %v6370 = vadd.f32 %v6354, %v5624
        %v6371 = vadd.f32 %v6355, %v5625
        %v6372 = vadd.f32 %v6356, %v5626
        %v6373 = vadd.f32 %v6357, %v5627
        %v6374 = vadd.f32 %v6358, %v5628
        %v6375 = vadd.f32 %v6359, %v5629
        %v6376 = vadd.f32 %v6360, %v5630
        %v6377 = vadd.f32 %v6361, %v5631
        %v6378 = vadd.f32 %v6362, %v5632
        %v6379 = vadd.f32 %v6363, %v5633
        %v6380 = vadd.f32 %v6364, %v5634
        %v6381 = vadd.f32 %v6365, %v5635
        %v6382 = vadd.f32 %v6366, %v5636
        %v6383 = vadd.f32 %v6367, %v5637
        %v6384 = vadd.f32 %v6368, %v5638
        %v6385 = vmax.f32 %v6369, 0.0
        %v6386 = vmax.f32 %v6370, 0.0
        %v6387 = vmax.f32 %v6371, 0.0
        %v6388 = vmax.f32 %v6372, 0.0
        %v6389 = vmax.f32 %v6373, 0.0
        %v6390 = vmax.f32 %v6374, 0.0
        %v6391 = vmax.f32 %v6375, 0.0
        %v6392 = vmax.f32 %v6376, 0.0
        %v6393 = vmax.f32 %v6377, 0.0
        %v6394 = vmax.f32 %v6378, 0.0
        %v6395 = vmax.f32 %v6379, 0.0
        %v6396 = vmax.f32 %v6380, 0.0
        %v6397 = vmax.f32 %v6381, 0.0
        %v6398 = vmax.f32 %v6382, 0.0
        %v6399 = vmax.f32 %v6383, 0.0
        %v6400 = vmax.f32 %v6384, 0.0
        %6401 = vrot.lane.b32.xlu0 %v6385, 17
        %v6402 = vpop.permute.xlu0 %6401
        %6403 = vrot.lane.b32.xlu0 %v6389, 17
        %v6404 = vpop.permute.xlu0 %6403
        %6405 = vrot.lane.b32.xlu0 %v6393, 17
        %v6406 = vpop.permute.xlu0 %6405
        %6407 = vrot.lane.b32.xlu0 %v6397, 17
        %v6408 = vpop.permute.xlu0 %6407
        %6409 = vrot.lane.b32.xlu0 %v6386, 17
        %v6410 = vpop.permute.xlu0 %6409
        %6411 = vrot.lane.b32.xlu0 %v6390, 17
        %v6412 = vpop.permute.xlu0 %6411
        %6413 = vrot.lane.b32.xlu0 %v6394, 17
        %v6414 = vpop.permute.xlu0 %6413
        %6415 = vrot.lane.b32.xlu0 %v6398, 17
        %v6416 = vpop.permute.xlu0 %6415
        %6417 = vrot.lane.b32.xlu0 %v6387, 17
        %v6418 = vpop.permute.xlu0 %6417
        %6419 = vrot.lane.b32.xlu0 %v6391, 17
        %v6420 = vpop.permute.xlu0 %6419
        %6421 = vrot.lane.b32.xlu0 %v6395, 17
        %v6422 = vpop.permute.xlu0 %6421
        %6423 = vrot.lane.b32.xlu0 %v6399, 17
        %v6424 = vpop.permute.xlu0 %6423
        %6425 = vrot.lane.b32.xlu0 %v6388, 17
        %v6426 = vpop.permute.xlu0 %6425
        %6427 = vrot.lane.b32.xlu0 %v6392, 17
        %v6428 = vpop.permute.xlu0 %6427
        %6429 = vrot.lane.b32.xlu0 %v6396, 17
        %v6430 = vpop.permute.xlu0 %6429
        %6431 = vrot.lane.b32.xlu0 %v6400, 17
        %v6432 = vpop.permute.xlu0 %6431
        %v6433 = vsel %vm472, %v6418, %v6426
        %v6434 = vsel %vm472, %v6420, %v6428
        %v6435 = vsel %vm472, %v6422, %v6430
        %v6436 = vsel %vm472, %v6424, %v6432
        %v6437 = vsel %vm472, %v6410, %v6418
        %v6438 = vsel %vm472, %v6412, %v6420
        %v6439 = vsel %vm472, %v6414, %v6422
        %v6440 = vsel %vm472, %v6416, %v6424
        %v6441 = vsel %vm472, %v6402, %v6410
        %v6442 = vsel %vm472, %v6404, %v6412
        %v6443 = vsel %vm472, %v6406, %v6414
        %v6444 = vsel %vm472, %v6408, %v6416
        %v6445 = vsel %vm472, %v6426, %v6402
        %v6446 = vsel %vm472, %v6428, %v6404
        %v6447 = vsel %vm472, %v6430, %v6406
        %v6448 = vsel %vm472, %v6432, %v6408
        %v6449 = vmul.f32 %v6445, %v477
        %v6450 = vmul.f32 %v6441, %v478
        %v6451 = vmul.f32 %v6437, %v479
        %v6452 = vmul.f32 %v6433, %v480
        %v6453 = vmul.f32 %v6446, %v477
        %v6454 = vmul.f32 %v6442, %v478
        %v6455 = vmul.f32 %v6438, %v479
        %v6456 = vmul.f32 %v6434, %v480
        %v6457 = vmul.f32 %v6447, %v477
        %v6458 = vmul.f32 %v6443, %v478
        %v6459 = vmul.f32 %v6439, %v479
        %v6460 = vmul.f32 %v6435, %v480
        %v6461 = vmul.f32 %v6448, %v477
        %v6462 = vmul.f32 %v6444, %v478
        %v6463 = vmul.f32 %v6440, %v479
        %v6464 = vmul.f32 %v6436, %v480
        %6465 = vrot.lane.b32.xlu0 %v6385, 16
        %v6466 = vpop.permute.xlu0 %6465
        %6467 = vrot.lane.b32.xlu0 %v6389, 16
        %v6468 = vpop.permute.xlu0 %6467
        %6469 = vrot.lane.b32.xlu0 %v6393, 16
        %v6470 = vpop.permute.xlu0 %6469
        %6471 = vrot.lane.b32.xlu0 %v6397, 16
        %v6472 = vpop.permute.xlu0 %6471
        %6473 = vrot.lane.b32.xlu0 %v6386, 16
        %v6474 = vpop.permute.xlu0 %6473
        %6475 = vrot.lane.b32.xlu0 %v6390, 16
        %v6476 = vpop.permute.xlu0 %6475
        %6477 = vrot.lane.b32.xlu0 %v6394, 16
        %v6478 = vpop.permute.xlu0 %6477
        %6479 = vrot.lane.b32.xlu0 %v6398, 16
        %v6480 = vpop.permute.xlu0 %6479
        %6481 = vrot.lane.b32.xlu0 %v6387, 16
        %v6482 = vpop.permute.xlu0 %6481
        %6483 = vrot.lane.b32.xlu0 %v6391, 16
        %v6484 = vpop.permute.xlu0 %6483
        %6485 = vrot.lane.b32.xlu0 %v6395, 16
        %v6486 = vpop.permute.xlu0 %6485
        %6487 = vrot.lane.b32.xlu0 %v6399, 16
        %v6488 = vpop.permute.xlu0 %6487
        %6489 = vrot.lane.b32.xlu0 %v6388, 16
        %v6490 = vpop.permute.xlu0 %6489
        %6491 = vrot.lane.b32.xlu0 %v6392, 16
        %v6492 = vpop.permute.xlu0 %6491
        %6493 = vrot.lane.b32.xlu0 %v6396, 16
        %v6494 = vpop.permute.xlu0 %6493
        %6495 = vrot.lane.b32.xlu0 %v6400, 16
        %v6496 = vpop.permute.xlu0 %6495
        %v6497 = vsel %vm493, %v6482, %v6490
        %v6498 = vsel %vm493, %v6484, %v6492
        %v6499 = vsel %vm493, %v6486, %v6494
        %v6500 = vsel %vm493, %v6488, %v6496
        %v6501 = vsel %vm493, %v6474, %v6482
        %v6502 = vsel %vm493, %v6476, %v6484
        %v6503 = vsel %vm493, %v6478, %v6486
        %v6504 = vsel %vm493, %v6480, %v6488
        %v6505 = vsel %vm493, %v6466, %v6474
        %v6506 = vsel %vm493, %v6468, %v6476
        %v6507 = vsel %vm493, %v6470, %v6478
        %v6508 = vsel %vm493, %v6472, %v6480
        %v6509 = vsel %vm493, %v6490, %v6466
        %v6510 = vsel %vm493, %v6492, %v6468
        %v6511 = vsel %vm493, %v6494, %v6470
        %v6512 = vsel %vm493, %v6496, %v6472
        %v6513 = vmul.f32 %v6509, %v498
        %v6514 = vmul.f32 %v6505, %v499
        %v6515 = vmul.f32 %v6501, %v500
        %v6516 = vmul.f32 %v6497, %v501
        %v6517 = vmul.f32 %v6510, %v498
        %v6518 = vmul.f32 %v6506, %v499
        %v6519 = vmul.f32 %v6502, %v500
        %v6520 = vmul.f32 %v6498, %v501
        %v6521 = vmul.f32 %v6511, %v498
        %v6522 = vmul.f32 %v6507, %v499
        %v6523 = vmul.f32 %v6503, %v500
        %v6524 = vmul.f32 %v6499, %v501
        %v6525 = vmul.f32 %v6512, %v498
        %v6526 = vmul.f32 %v6508, %v499
        %v6527 = vmul.f32 %v6504, %v500
        %v6528 = vmul.f32 %v6500, %v501
        %6529 = vrot.lane.b32.xlu0 %v6385, 15
        %v6530 = vpop.permute.xlu0 %6529
        %6531 = vrot.lane.b32.xlu0 %v6389, 15
        %v6532 = vpop.permute.xlu0 %6531
        %6533 = vrot.lane.b32.xlu0 %v6393, 15
        %v6534 = vpop.permute.xlu0 %6533
        %6535 = vrot.lane.b32.xlu0 %v6397, 15
        %v6536 = vpop.permute.xlu0 %6535
        %6537 = vrot.lane.b32.xlu0 %v6386, 15
        %v6538 = vpop.permute.xlu0 %6537
        %6539 = vrot.lane.b32.xlu0 %v6390, 15
        %v6540 = vpop.permute.xlu0 %6539
        %6541 = vrot.lane.b32.xlu0 %v6394, 15
        %v6542 = vpop.permute.xlu0 %6541
        %6543 = vrot.lane.b32.xlu0 %v6398, 15
        %v6544 = vpop.permute.xlu0 %6543
        %6545 = vrot.lane.b32.xlu0 %v6387, 15
        %v6546 = vpop.permute.xlu0 %6545
        %6547 = vrot.lane.b32.xlu0 %v6391, 15
        %v6548 = vpop.permute.xlu0 %6547
        %6549 = vrot.lane.b32.xlu0 %v6395, 15
        %v6550 = vpop.permute.xlu0 %6549
        %6551 = vrot.lane.b32.xlu0 %v6399, 15
        %v6552 = vpop.permute.xlu0 %6551
        %6553 = vrot.lane.b32.xlu0 %v6388, 15
        %v6554 = vpop.permute.xlu0 %6553
        %6555 = vrot.lane.b32.xlu0 %v6392, 15
        %v6556 = vpop.permute.xlu0 %6555
        %6557 = vrot.lane.b32.xlu0 %v6396, 15
        %v6558 = vpop.permute.xlu0 %6557
        %6559 = vrot.lane.b32.xlu0 %v6400, 15
        %v6560 = vpop.permute.xlu0 %6559
        %v6561 = vsel %vm514, %v6546, %v6554
        %v6562 = vsel %vm514, %v6548, %v6556
        %v6563 = vsel %vm514, %v6550, %v6558
        %v6564 = vsel %vm514, %v6552, %v6560
        %v6565 = vsel %vm514, %v6538, %v6546
        %v6566 = vsel %vm514, %v6540, %v6548
        %v6567 = vsel %vm514, %v6542, %v6550
        %v6568 = vsel %vm514, %v6544, %v6552
        %v6569 = vsel %vm514, %v6530, %v6538
        %v6570 = vsel %vm514, %v6532, %v6540
        %v6571 = vsel %vm514, %v6534, %v6542
        %v6572 = vsel %vm514, %v6536, %v6544
        %v6573 = vsel %vm514, %v6554, %v6530
        %v6574 = vsel %vm514, %v6556, %v6532
        %v6575 = vsel %vm514, %v6558, %v6534
        %v6576 = vsel %vm514, %v6560, %v6536
        %v6577 = vmul.f32 %v6573, %v519
        %v6578 = vmul.f32 %v6569, %v520
        %v6579 = vmul.f32 %v6565, %v521
        %v6580 = vmul.f32 %v6561, %v522
        %v6581 = vmul.f32 %v6574, %v519
        %v6582 = vmul.f32 %v6570, %v520
        %v6583 = vmul.f32 %v6566, %v521
        %v6584 = vmul.f32 %v6562, %v522
        %v6585 = vmul.f32 %v6575, %v519
        %v6586 = vmul.f32 %v6571, %v520
        %v6587 = vmul.f32 %v6567, %v521
        %v6588 = vmul.f32 %v6563, %v522
        %v6589 = vmul.f32 %v6576, %v519
        %v6590 = vmul.f32 %v6572, %v520
        %v6591 = vmul.f32 %v6568, %v521
        %v6592 = vmul.f32 %v6564, %v522
        %6593 = vrot.lane.b32.xlu0 %v6385, 1
        %v6594 = vpop.permute.xlu0 %6593
        %6595 = vrot.lane.b32.xlu0 %v6389, 1
        %v6596 = vpop.permute.xlu0 %6595
        %6597 = vrot.lane.b32.xlu0 %v6393, 1
        %v6598 = vpop.permute.xlu0 %6597
        %6599 = vrot.lane.b32.xlu0 %v6397, 1
        %v6600 = vpop.permute.xlu0 %6599
        %6601 = vrot.lane.b32.xlu0 %v6386, 1
        %v6602 = vpop.permute.xlu0 %6601
        %6603 = vrot.lane.b32.xlu0 %v6390, 1
        %v6604 = vpop.permute.xlu0 %6603
        %6605 = vrot.lane.b32.xlu0 %v6394, 1
        %v6606 = vpop.permute.xlu0 %6605
        %6607 = vrot.lane.b32.xlu0 %v6398, 1
        %v6608 = vpop.permute.xlu0 %6607
        %6609 = vrot.lane.b32.xlu0 %v6387, 1
        %v6610 = vpop.permute.xlu0 %6609
        %6611 = vrot.lane.b32.xlu0 %v6391, 1
        %v6612 = vpop.permute.xlu0 %6611
        %6613 = vrot.lane.b32.xlu0 %v6395, 1
        %v6614 = vpop.permute.xlu0 %6613
        %6615 = vrot.lane.b32.xlu0 %v6399, 1
        %v6616 = vpop.permute.xlu0 %6615
        %6617 = vrot.lane.b32.xlu0 %v6388, 1
        %v6618 = vpop.permute.xlu0 %6617
        %6619 = vrot.lane.b32.xlu0 %v6392, 1
        %v6620 = vpop.permute.xlu0 %6619
        %6621 = vrot.lane.b32.xlu0 %v6396, 1
        %v6622 = vpop.permute.xlu0 %6621
        %6623 = vrot.lane.b32.xlu0 %v6400, 1
        %v6624 = vpop.permute.xlu0 %6623
        %v6625 = vsel %vm535, %v6610, %v6618
        %v6626 = vsel %vm535, %v6612, %v6620
        %v6627 = vsel %vm535, %v6614, %v6622
        %v6628 = vsel %vm535, %v6616, %v6624
        %v6629 = vsel %vm535, %v6602, %v6610
        %v6630 = vsel %vm535, %v6604, %v6612
        %v6631 = vsel %vm535, %v6606, %v6614
        %v6632 = vsel %vm535, %v6608, %v6616
        %v6633 = vsel %vm535, %v6594, %v6602
        %v6634 = vsel %vm535, %v6596, %v6604
        %v6635 = vsel %vm535, %v6598, %v6606
        %v6636 = vsel %vm535, %v6600, %v6608
        %v6637 = vsel %vm535, %v6618, %v6594
        %v6638 = vsel %vm535, %v6620, %v6596
        %v6639 = vsel %vm535, %v6622, %v6598
        %v6640 = vsel %vm535, %v6624, %v6600
        %v6641 = vmul.f32 %v6637, %v540
        %v6642 = vmul.f32 %v6633, %v541
        %v6643 = vmul.f32 %v6629, %v542
        %v6644 = vmul.f32 %v6625, %v543
        %v6645 = vmul.f32 %v6638, %v540
        %v6646 = vmul.f32 %v6634, %v541
        %v6647 = vmul.f32 %v6630, %v542
        %v6648 = vmul.f32 %v6626, %v543
        %v6649 = vmul.f32 %v6639, %v540
        %v6650 = vmul.f32 %v6635, %v541
        %v6651 = vmul.f32 %v6631, %v542
        %v6652 = vmul.f32 %v6627, %v543
        %v6653 = vmul.f32 %v6640, %v540
        %v6654 = vmul.f32 %v6636, %v541
        %v6655 = vmul.f32 %v6632, %v542
        %v6656 = vmul.f32 %v6628, %v543
        %6657 = vrot.lane.b32.xlu0 %v6385, 127
        %v6658 = vpop.permute.xlu0 %6657
        %6659 = vrot.lane.b32.xlu0 %v6389, 127
        %v6660 = vpop.permute.xlu0 %6659
        %6661 = vrot.lane.b32.xlu0 %v6393, 127
        %v6662 = vpop.permute.xlu0 %6661
        %6663 = vrot.lane.b32.xlu0 %v6397, 127
        %v6664 = vpop.permute.xlu0 %6663
        %6665 = vrot.lane.b32.xlu0 %v6386, 127
        %v6666 = vpop.permute.xlu0 %6665
        %6667 = vrot.lane.b32.xlu0 %v6390, 127
        %v6668 = vpop.permute.xlu0 %6667
        %6669 = vrot.lane.b32.xlu0 %v6394, 127
        %v6670 = vpop.permute.xlu0 %6669
        %6671 = vrot.lane.b32.xlu0 %v6398, 127
        %v6672 = vpop.permute.xlu0 %6671
        %6673 = vrot.lane.b32.xlu0 %v6387, 127
        %v6674 = vpop.permute.xlu0 %6673
        %6675 = vrot.lane.b32.xlu0 %v6391, 127
        %v6676 = vpop.permute.xlu0 %6675
        %6677 = vrot.lane.b32.xlu0 %v6395, 127
        %v6678 = vpop.permute.xlu0 %6677
        %6679 = vrot.lane.b32.xlu0 %v6399, 127
        %v6680 = vpop.permute.xlu0 %6679
        %6681 = vrot.lane.b32.xlu0 %v6388, 127
        %v6682 = vpop.permute.xlu0 %6681
        %6683 = vrot.lane.b32.xlu0 %v6392, 127
        %v6684 = vpop.permute.xlu0 %6683
        %6685 = vrot.lane.b32.xlu0 %v6396, 127
        %v6686 = vpop.permute.xlu0 %6685
        %6687 = vrot.lane.b32.xlu0 %v6400, 127
        %v6688 = vpop.permute.xlu0 %6687
        %v6689 = vsel %vm556, %v6674, %v6682
        %v6690 = vsel %vm556, %v6676, %v6684
        %v6691 = vsel %vm556, %v6678, %v6686
        %v6692 = vsel %vm556, %v6680, %v6688
        %v6693 = vsel %vm556, %v6666, %v6674
        %v6694 = vsel %vm556, %v6668, %v6676
        %v6695 = vsel %vm556, %v6670, %v6678
        %v6696 = vsel %vm556, %v6672, %v6680
        %v6697 = vsel %vm556, %v6658, %v6666
        %v6698 = vsel %vm556, %v6660, %v6668
        %v6699 = vsel %vm556, %v6662, %v6670
        %v6700 = vsel %vm556, %v6664, %v6672
        %v6701 = vsel %vm556, %v6682, %v6658
        %v6702 = vsel %vm556, %v6684, %v6660
        %v6703 = vsel %vm556, %v6686, %v6662
        %v6704 = vsel %vm556, %v6688, %v6664
        %v6705 = vmul.f32 %v6697, %v561
        %v6706 = vmul.f32 %v6693, %v562
        %v6707 = vmul.f32 %v6689, %v563
        %v6708 = vmul.f32 %v6701, %v564
        %v6709 = vmul.f32 %v6698, %v561
        %v6710 = vmul.f32 %v6694, %v562
        %v6711 = vmul.f32 %v6690, %v563
        %v6712 = vmul.f32 %v6702, %v564
        %v6713 = vmul.f32 %v6699, %v561
        %v6714 = vmul.f32 %v6695, %v562
        %v6715 = vmul.f32 %v6691, %v563
        %v6716 = vmul.f32 %v6703, %v564
        %v6717 = vmul.f32 %v6700, %v561
        %v6718 = vmul.f32 %v6696, %v562
        %v6719 = vmul.f32 %v6692, %v563
        %v6720 = vmul.f32 %v6704, %v564
        %6721 = vrot.lane.b32.xlu0 %v6385, 113
        %v6722 = vpop.permute.xlu0 %6721
        %6723 = vrot.lane.b32.xlu0 %v6389, 113
        %v6724 = vpop.permute.xlu0 %6723
        %6725 = vrot.lane.b32.xlu0 %v6393, 113
        %v6726 = vpop.permute.xlu0 %6725
        %6727 = vrot.lane.b32.xlu0 %v6397, 113
        %v6728 = vpop.permute.xlu0 %6727
        %6729 = vrot.lane.b32.xlu0 %v6386, 113
        %v6730 = vpop.permute.xlu0 %6729
        %6731 = vrot.lane.b32.xlu0 %v6390, 113
        %v6732 = vpop.permute.xlu0 %6731
        %6733 = vrot.lane.b32.xlu0 %v6394, 113
        %v6734 = vpop.permute.xlu0 %6733
        %6735 = vrot.lane.b32.xlu0 %v6398, 113
        %v6736 = vpop.permute.xlu0 %6735
        %6737 = vrot.lane.b32.xlu0 %v6387, 113
        %v6738 = vpop.permute.xlu0 %6737
        %6739 = vrot.lane.b32.xlu0 %v6391, 113
        %v6740 = vpop.permute.xlu0 %6739
        %6741 = vrot.lane.b32.xlu0 %v6395, 113
        %v6742 = vpop.permute.xlu0 %6741
        %6743 = vrot.lane.b32.xlu0 %v6399, 113
        %v6744 = vpop.permute.xlu0 %6743
        %6745 = vrot.lane.b32.xlu0 %v6388, 113
        %v6746 = vpop.permute.xlu0 %6745
        %6747 = vrot.lane.b32.xlu0 %v6392, 113
        %v6748 = vpop.permute.xlu0 %6747
        %6749 = vrot.lane.b32.xlu0 %v6396, 113
        %v6750 = vpop.permute.xlu0 %6749
        %6751 = vrot.lane.b32.xlu0 %v6400, 113
        %v6752 = vpop.permute.xlu0 %6751
        %v6753 = vsel %vm577, %v6738, %v6746
        %v6754 = vsel %vm577, %v6740, %v6748
        %v6755 = vsel %vm577, %v6742, %v6750
        %v6756 = vsel %vm577, %v6744, %v6752
        %v6757 = vsel %vm577, %v6730, %v6738
        %v6758 = vsel %vm577, %v6732, %v6740
        %v6759 = vsel %vm577, %v6734, %v6742
        %v6760 = vsel %vm577, %v6736, %v6744
        %v6761 = vsel %vm577, %v6722, %v6730
        %v6762 = vsel %vm577, %v6724, %v6732
        %v6763 = vsel %vm577, %v6726, %v6734
        %v6764 = vsel %vm577, %v6728, %v6736
        %v6765 = vsel %vm577, %v6746, %v6722
        %v6766 = vsel %vm577, %v6748, %v6724
        %v6767 = vsel %vm577, %v6750, %v6726
        %v6768 = vsel %vm577, %v6752, %v6728
        %v6769 = vmul.f32 %v6761, %v582
        %v6770 = vmul.f32 %v6757, %v583
        %v6771 = vmul.f32 %v6753, %v584
        %v6772 = vmul.f32 %v6765, %v585
        %v6773 = vmul.f32 %v6762, %v582
        %v6774 = vmul.f32 %v6758, %v583
        %v6775 = vmul.f32 %v6754, %v584
        %v6776 = vmul.f32 %v6766, %v585
        %v6777 = vmul.f32 %v6763, %v582
        %v6778 = vmul.f32 %v6759, %v583
        %v6779 = vmul.f32 %v6755, %v584
        %v6780 = vmul.f32 %v6767, %v585
        %v6781 = vmul.f32 %v6764, %v582
        %v6782 = vmul.f32 %v6760, %v583
        %v6783 = vmul.f32 %v6756, %v584
        %v6784 = vmul.f32 %v6768, %v585
        %6785 = vrot.lane.b32.xlu0 %v6385, 112
        %v6786 = vpop.permute.xlu0 %6785
        %6787 = vrot.lane.b32.xlu0 %v6389, 112
        %v6788 = vpop.permute.xlu0 %6787
        %6789 = vrot.lane.b32.xlu0 %v6393, 112
        %v6790 = vpop.permute.xlu0 %6789
        %6791 = vrot.lane.b32.xlu0 %v6397, 112
        %v6792 = vpop.permute.xlu0 %6791
        %6793 = vrot.lane.b32.xlu0 %v6386, 112
        %v6794 = vpop.permute.xlu0 %6793
        %6795 = vrot.lane.b32.xlu0 %v6390, 112
        %v6796 = vpop.permute.xlu0 %6795
        %6797 = vrot.lane.b32.xlu0 %v6394, 112
        %v6798 = vpop.permute.xlu0 %6797
        %6799 = vrot.lane.b32.xlu0 %v6398, 112
        %v6800 = vpop.permute.xlu0 %6799
        %6801 = vrot.lane.b32.xlu0 %v6387, 112
        %v6802 = vpop.permute.xlu0 %6801
        %6803 = vrot.lane.b32.xlu0 %v6391, 112
        %v6804 = vpop.permute.xlu0 %6803
        %6805 = vrot.lane.b32.xlu0 %v6395, 112
        %v6806 = vpop.permute.xlu0 %6805
        %6807 = vrot.lane.b32.xlu0 %v6399, 112
        %v6808 = vpop.permute.xlu0 %6807
        %6809 = vrot.lane.b32.xlu0 %v6388, 112
        %v6810 = vpop.permute.xlu0 %6809
        %6811 = vrot.lane.b32.xlu0 %v6392, 112
        %v6812 = vpop.permute.xlu0 %6811
        %6813 = vrot.lane.b32.xlu0 %v6396, 112
        %v6814 = vpop.permute.xlu0 %6813
        %6815 = vrot.lane.b32.xlu0 %v6400, 112
        %v6816 = vpop.permute.xlu0 %6815
        %v6817 = vsel %vm598, %v6802, %v6810
        %v6818 = vsel %vm598, %v6804, %v6812
        %v6819 = vsel %vm598, %v6806, %v6814
        %v6820 = vsel %vm598, %v6808, %v6816
        %v6821 = vsel %vm598, %v6794, %v6802
        %v6822 = vsel %vm598, %v6796, %v6804
        %v6823 = vsel %vm598, %v6798, %v6806
        %v6824 = vsel %vm598, %v6800, %v6808
        %v6825 = vsel %vm598, %v6786, %v6794
        %v6826 = vsel %vm598, %v6788, %v6796
        %v6827 = vsel %vm598, %v6790, %v6798
        %v6828 = vsel %vm598, %v6792, %v6800
        %v6829 = vsel %vm598, %v6810, %v6786
        %v6830 = vsel %vm598, %v6812, %v6788
        %v6831 = vsel %vm598, %v6814, %v6790
        %v6832 = vsel %vm598, %v6816, %v6792
        %v6833 = vmul.f32 %v6825, %v603
        %v6834 = vmul.f32 %v6821, %v604
        %v6835 = vmul.f32 %v6817, %v605
        %v6836 = vmul.f32 %v6829, %v606
        %v6837 = vmul.f32 %v6826, %v603
        %v6838 = vmul.f32 %v6822, %v604
        %v6839 = vmul.f32 %v6818, %v605
        %v6840 = vmul.f32 %v6830, %v606
        %v6841 = vmul.f32 %v6827, %v603
        %v6842 = vmul.f32 %v6823, %v604
        %v6843 = vmul.f32 %v6819, %v605
        %v6844 = vmul.f32 %v6831, %v606
        %v6845 = vmul.f32 %v6828, %v603
        %v6846 = vmul.f32 %v6824, %v604
        %v6847 = vmul.f32 %v6820, %v605
        %v6848 = vmul.f32 %v6832, %v606
        %6849 = vrot.lane.b32.xlu0 %v6385, 111
        %v6850 = vpop.permute.xlu0 %6849
        %6851 = vrot.lane.b32.xlu0 %v6389, 111
        %v6852 = vpop.permute.xlu0 %6851
        %6853 = vrot.lane.b32.xlu0 %v6393, 111
        %v6854 = vpop.permute.xlu0 %6853
        %6855 = vrot.lane.b32.xlu0 %v6397, 111
        %v6856 = vpop.permute.xlu0 %6855
        %6857 = vrot.lane.b32.xlu0 %v6386, 111
        %v6858 = vpop.permute.xlu0 %6857
        %6859 = vrot.lane.b32.xlu0 %v6390, 111
        %v6860 = vpop.permute.xlu0 %6859
        %6861 = vrot.lane.b32.xlu0 %v6394, 111
        %v6862 = vpop.permute.xlu0 %6861
        %6863 = vrot.lane.b32.xlu0 %v6398, 111
        %v6864 = vpop.permute.xlu0 %6863
        %6865 = vrot.lane.b32.xlu0 %v6387, 111
        %v6866 = vpop.permute.xlu0 %6865
        %6867 = vrot.lane.b32.xlu0 %v6391, 111
        %v6868 = vpop.permute.xlu0 %6867
        %6869 = vrot.lane.b32.xlu0 %v6395, 111
        %v6870 = vpop.permute.xlu0 %6869
        %6871 = vrot.lane.b32.xlu0 %v6399, 111
        %v6872 = vpop.permute.xlu0 %6871
        %6873 = vrot.lane.b32.xlu0 %v6388, 111
        %v6874 = vpop.permute.xlu0 %6873
        %6875 = vrot.lane.b32.xlu0 %v6392, 111
        %v6876 = vpop.permute.xlu0 %6875
        %6877 = vrot.lane.b32.xlu0 %v6396, 111
        %v6878 = vpop.permute.xlu0 %6877
        %6879 = vrot.lane.b32.xlu0 %v6400, 111
        %v6880 = vpop.permute.xlu0 %6879
        %v6881 = vsel %vm619, %v6866, %v6874
        %v6882 = vsel %vm619, %v6868, %v6876
        %v6883 = vsel %vm619, %v6870, %v6878
        %v6884 = vsel %vm619, %v6872, %v6880
        %v6885 = vsel %vm619, %v6858, %v6866
        %v6886 = vsel %vm619, %v6860, %v6868
        %v6887 = vsel %vm619, %v6862, %v6870
        %v6888 = vsel %vm619, %v6864, %v6872
        %v6889 = vsel %vm619, %v6850, %v6858
        %v6890 = vsel %vm619, %v6852, %v6860
        %v6891 = vsel %vm619, %v6854, %v6862
        %v6892 = vsel %vm619, %v6856, %v6864
        %v6893 = vsel %vm619, %v6874, %v6850
        %v6894 = vsel %vm619, %v6876, %v6852
        %v6895 = vsel %vm619, %v6878, %v6854
        %v6896 = vsel %vm619, %v6880, %v6856
        %v6897 = vmul.f32 %v6889, %v624
        %v6898 = vmul.f32 %v6885, %v625
        %v6899 = vmul.f32 %v6881, %v626
        %v6900 = vmul.f32 %v6893, %v627
        %v6901 = vmul.f32 %v6890, %v624
        %v6902 = vmul.f32 %v6886, %v625
        %v6903 = vmul.f32 %v6882, %v626
        %v6904 = vmul.f32 %v6894, %v627
        %v6905 = vmul.f32 %v6891, %v624
        %v6906 = vmul.f32 %v6887, %v625
        %v6907 = vmul.f32 %v6883, %v626
        %v6908 = vmul.f32 %v6895, %v627
        %v6909 = vmul.f32 %v6892, %v624
        %v6910 = vmul.f32 %v6888, %v625
        %v6911 = vmul.f32 %v6884, %v626
        %v6912 = vmul.f32 %v6896, %v627
        %v6913 = vld [vmem:[%s10] sm:$0xff]
        %v6914 = vld [vmem:[%s10 + $0x8] sm:$0xf]
        %v6915 = vld [vmem:[%s10 + $0xc] sm:$0xff]
        %v6916 = vld [vmem:[%s10 + $0x14] sm:$0xf]
        %v6917 = vld [vmem:[%s10 + $0x18] sm:$0xff]
        %v6918 = vld [vmem:[%s10 + $0x20] sm:$0xf]
        %v6919 = vld [vmem:[%s10 + $0x24] sm:$0xff]
        %v6920 = vld [vmem:[%s10 + $0x2c] sm:$0xf]
        %v6921 = vpack.c.bf16 %v6453, %v6449
        %v6922 = vpack.c.bf16 %v6454, %v6450
        %v6923 = vpack.c.bf16 %v6455, %v6451
        %v6924 = vpack.c.bf16 %v6456, %v6452
        %v6925 = vpack.c.bf16 %v6461, %v6457
        %v6926 = vpack.c.bf16 %v6462, %v6458
        %v6927 = vpack.c.bf16 %v6463, %v6459
        %v6928 = vpack.c.bf16 %v6464, %v6460
        %v6929 = vpack.c.bf16 %v6513, %v481
        %v6930 = vpack.c.bf16 %v6514, %v482
        %v6931 = vpack.c.bf16 %v6515, %v483
        %v6932 = vpack.c.bf16 %v6516, %v484
        %v6933 = vpack.c.bf16 %v6521, %v6517
        %v6934 = vpack.c.bf16 %v6522, %v6518
        %v6935 = vpack.c.bf16 %v6523, %v6519
        %v6936 = vpack.c.bf16 %v6524, %v6520
        %v6937 = vpack.c.bf16 %v502, %v6525
        %v6938 = vpack.c.bf16 %v503, %v6526
        %v6939 = vpack.c.bf16 %v504, %v6527
        %v6940 = vpack.c.bf16 %v505, %v6528
        %v6941 = vpack.c.bf16 %v6581, %v6577
        %v6942 = vpack.c.bf16 %v6582, %v6578
        %v6943 = vpack.c.bf16 %v6583, %v6579
        %v6944 = vpack.c.bf16 %v6584, %v6580
        %v6945 = vpack.c.bf16 %v6589, %v6585
        %v6946 = vpack.c.bf16 %v6590, %v6586
        %v6947 = vpack.c.bf16 %v6591, %v6587
        %v6948 = vpack.c.bf16 %v6592, %v6588
        %v6949 = vpack.c.bf16 %v6641, %v523
        %v6950 = vpack.c.bf16 %v6642, %v524
        %v6951 = vpack.c.bf16 %v6643, %v525
        %v6952 = vpack.c.bf16 %v6644, %v526
        %v6953 = vpack.c.bf16 %v6649, %v6645
        %v6954 = vpack.c.bf16 %v6650, %v6646
        %v6955 = vpack.c.bf16 %v6651, %v6647
        %v6956 = vpack.c.bf16 %v6652, %v6648
        %v6957 = vpack.c.bf16 %v544, %v6653
        %v6958 = vpack.c.bf16 %v545, %v6654
        %v6959 = vpack.c.bf16 %v546, %v6655
        %v6960 = vpack.c.bf16 %v547, %v6656
        %v6961 = vpack.c.bf16 %v6389, %v6385
        %v6962 = vpack.c.bf16 %v6390, %v6386
        %v6963 = vpack.c.bf16 %v6391, %v6387
        %v6964 = vpack.c.bf16 %v6392, %v6388
        %v6965 = vpack.c.bf16 %v6397, %v6393
        %v6966 = vpack.c.bf16 %v6398, %v6394
        %v6967 = vpack.c.bf16 %v6399, %v6395
        %v6968 = vpack.c.bf16 %v6400, %v6396
        %v6969 = vpack.c.bf16 %v6705, %v458
        %v6970 = vpack.c.bf16 %v6706, %v459
        %v6971 = vpack.c.bf16 %v6707, %v460
        %v6972 = vpack.c.bf16 %v6708, %v461
        %v6973 = vpack.c.bf16 %v6713, %v6709
        %v6974 = vpack.c.bf16 %v6714, %v6710
        %v6975 = vpack.c.bf16 %v6715, %v6711
        %v6976 = vpack.c.bf16 %v6716, %v6712
        %v6977 = vpack.c.bf16 %v565, %v6717
        %v6978 = vpack.c.bf16 %v566, %v6718
        %v6979 = vpack.c.bf16 %v567, %v6719
        %v6980 = vpack.c.bf16 %v568, %v6720
        %v6981 = vpack.c.bf16 %v6773, %v6769
        %v6982 = vpack.c.bf16 %v6774, %v6770
        %v6983 = vpack.c.bf16 %v6775, %v6771
        %v6984 = vpack.c.bf16 %v6776, %v6772
        %v6985 = vpack.c.bf16 %v6781, %v6777
        %v6986 = vpack.c.bf16 %v6782, %v6778
        %v6987 = vpack.c.bf16 %v6783, %v6779
        %v6988 = vpack.c.bf16 %v6784, %v6780
        %v6989 = vpack.c.bf16 %v6833, %v586
        %v6990 = vpack.c.bf16 %v6834, %v587
        %v6991 = vpack.c.bf16 %v6835, %v588
        %v6992 = vpack.c.bf16 %v6836, %v589
        %v6993 = vpack.c.bf16 %v6841, %v6837
        %v6994 = vpack.c.bf16 %v6842, %v6838
        %v6995 = vpack.c.bf16 %v6843, %v6839
        %v6996 = vpack.c.bf16 %v6844, %v6840
        %v6997 = vpack.c.bf16 %v607, %v6845
        %v6998 = vpack.c.bf16 %v608, %v6846
        %v6999 = vpack.c.bf16 %v609, %v6847
        %v7000 = vpack.c.bf16 %v610, %v6848
        %v7001 = vpack.c.bf16 %v6901, %v6897
        %v7002 = vpack.c.bf16 %v6902, %v6898
        %v7003 = vpack.c.bf16 %v6903, %v6899
        %v7004 = vpack.c.bf16 %v6904, %v6900
        %v7005 = vpack.c.bf16 %v6909, %v6905
        %v7006 = vpack.c.bf16 %v6910, %v6906
        %v7007 = vpack.c.bf16 %v6911, %v6907
        %v7008 = vpack.c.bf16 %v6912, %v6908
        %v7017 = vunpack.c.l.b16 %v6913
        %v7018 = vunpack.c.h.b16 %v6913
        %v7019 = vunpack.c.l.b16 %v6914
        %v7020 = vunpack.c.l.b16 %v6915
        %v7021 = vunpack.c.h.b16 %v6915
        %v7022 = vunpack.c.l.b16 %v6916
        %v7023 = vunpack.c.l.b16 %v6917
        %v7024 = vunpack.c.h.b16 %v6917
        %v7025 = vunpack.c.l.b16 %v6918
        %v7026 = vunpack.c.l.b16 %v6919
        %v7027 = vunpack.c.h.b16 %v6919
        %v7028 = vunpack.c.l.b16 %v6920
        %v7029 = vpack.c.b16 %v7020, %v7017
        %v7030 = vpack.c.b16 %v7021, %v7018
        %v7031 = vpack.c.b16 %v7022, %v7019
        %v7032 = vpack.c.b16 %v7026, %v7023
        %v7033 = vpack.c.b16 %v7027, %v7024
        %v7034 = vpack.c.b16 %v7028, %v7025
        %vm7039 = vcmask 850944
        %v7041 = vsel %vm7039, %v7031, 0
        %v7044 = vsel %vm7039, %v7034, 0
        %7046 = vmatpush.bf16.msra.mxu0 %v6949
        %7047 = vmatpush.bf16.msra.mxu0 %v6945
        %7048 = vmatpush.bf16.msra.mxu0 %v6941
        %7049 = vmatpush.bf16.msra.mxu0 %v6937
        %7050 = vmatpush.bf16.msra.mxu0 %v6933
        %7051 = vmatpush.bf16.msra.mxu0 %v6929
        %7052 = vmatpush.bf16.msra.mxu0 %v6925
        %7053 = vmatpush.bf16.msra.mxu0 %v6921
        %7054 = vmatmul.bf16.gmra.mxu0 %v7029
        %v7055 = vpop.f32.mrf.mxu0
        %v7056 = vadd.f32 0.0, %v7055
        %v7057 = vpop.f32.mrf.mxu0
        %v7058 = vadd.f32 0.0, %v7057
        %7059 = vmatmul.bf16.gmra.mxu0 %v7032
        %v7060 = vpop.f32.mrf.mxu0
        %v7061 = vadd.f32 0.0, %v7060
        %v7062 = vpop.f32.mrf.mxu0
        %v7063 = vadd.f32 0.0, %v7062
        %7064 = vdwg.mxu0
        %7065 = vmatpush.bf16.msra.mxu0 %v6981
        %7066 = vmatpush.bf16.msra.mxu0 %v6977
        %7067 = vmatpush.bf16.msra.mxu0 %v6973
        %7068 = vmatpush.bf16.msra.mxu0 %v6969
        %7069 = vmatpush.bf16.msra.mxu0 %v6965
        %7070 = vmatpush.bf16.msra.mxu0 %v6961
        %7071 = vmatpush.bf16.msra.mxu0 %v6957
        %7072 = vmatpush.bf16.msra.mxu0 %v6953
        %7073 = vmatmul.bf16.gmra.mxu0 %v7030
        %v7074 = vpop.f32.mrf.mxu0
        %v7075 = vadd.f32 %v7056, %v7074
        %v7076 = vpop.f32.mrf.mxu0
        %v7077 = vadd.f32 %v7058, %v7076
        %7078 = vmatmul.bf16.gmra.mxu0 %v7033
        %v7079 = vpop.f32.mrf.mxu0
        %v7080 = vadd.f32 %v7061, %v7079
        %v7081 = vpop.f32.mrf.mxu0
        %v7082 = vadd.f32 %v7063, %v7081
        %7083 = vdwg.mxu0
        %7084 = vmatpush.bf16.msra.mxu0 0
        %7085 = vmatpush.bf16.msra.mxu0 %v665
        %7086 = vmatpush.bf16.msra.mxu0 %v7005
        %7087 = vmatpush.bf16.msra.mxu0 %v7001
        %7088 = vmatpush.bf16.msra.mxu0 %v6997
        %7089 = vmatpush.bf16.msra.mxu0 %v6993
        %7090 = vmatpush.bf16.msra.mxu0 %v6989
        %7091 = vmatpush.bf16.msra.mxu0 %v6985
        %7092 = vmatmul.bf16.gmra.mxu0 %v7041
        %v7093 = vpop.f32.mrf.mxu0
        %v7094 = vadd.f32 %v7075, %v7093
        %v7095 = vpop.f32.mrf.mxu0
        %v7096 = vadd.f32 %v7077, %v7095
        %7097 = vmatmul.bf16.gmra.mxu0 %v7044
        %v7098 = vpop.f32.mrf.mxu0
        %v7099 = vadd.f32 %v7080, %v7098
        %v7100 = vpop.f32.mrf.mxu0
        %v7101 = vadd.f32 %v7082, %v7100
        %7102 = vdwg.mxu0
        %7103 = vmatpush.bf16.msra.mxu0 %v6950
        %7104 = vmatpush.bf16.msra.mxu0 %v6946
        %7105 = vmatpush.bf16.msra.mxu0 %v6942
        %7106 = vmatpush.bf16.msra.mxu0 %v6938
        %7107 = vmatpush.bf16.msra.mxu0 %v6934
        %7108 = vmatpush.bf16.msra.mxu0 %v6930
        %7109 = vmatpush.bf16.msra.mxu0 %v6926
        %7110 = vmatpush.bf16.msra.mxu0 %v6922
        %7111 = vmatmul.bf16.gmra.mxu0 %v7029
        %v7112 = vpop.f32.mrf.mxu0
        %v7113 = vadd.f32 0.0, %v7112
        %v7114 = vpop.f32.mrf.mxu0
        %v7115 = vadd.f32 0.0, %v7114
        %7116 = vmatmul.bf16.gmra.mxu0 %v7032
        %v7117 = vpop.f32.mrf.mxu0
        %v7118 = vadd.f32 0.0, %v7117
        %v7119 = vpop.f32.mrf.mxu0
        %v7120 = vadd.f32 0.0, %v7119
        %7121 = vdwg.mxu0
        %7122 = vmatpush.bf16.msra.mxu0 %v6982
        %7123 = vmatpush.bf16.msra.mxu0 %v6978
        %7124 = vmatpush.bf16.msra.mxu0 %v6974
        %7125 = vmatpush.bf16.msra.mxu0 %v6970
        %7126 = vmatpush.bf16.msra.mxu0 %v6966
        %7127 = vmatpush.bf16.msra.mxu0 %v6962
        %7128 = vmatpush.bf16.msra.mxu0 %v6958
        %7129 = vmatpush.bf16.msra.mxu0 %v6954
        %7130 = vmatmul.bf16.gmra.mxu0 %v7030
        %v7131 = vpop.f32.mrf.mxu0
        %v7132 = vadd.f32 %v7113, %v7131
        %v7133 = vpop.f32.mrf.mxu0
        %v7134 = vadd.f32 %v7115, %v7133
        %7135 = vmatmul.bf16.gmra.mxu0 %v7033
        %v7136 = vpop.f32.mrf.mxu0
        %v7137 = vadd.f32 %v7118, %v7136
        %v7138 = vpop.f32.mrf.mxu0
        %v7139 = vadd.f32 %v7120, %v7138
        %7140 = vdwg.mxu0
        %7141 = vmatpush.bf16.msra.mxu0 0
        %7142 = vmatpush.bf16.msra.mxu0 %v668
        %7143 = vmatpush.bf16.msra.mxu0 %v7006
        %7144 = vmatpush.bf16.msra.mxu0 %v7002
        %7145 = vmatpush.bf16.msra.mxu0 %v6998
        %7146 = vmatpush.bf16.msra.mxu0 %v6994
        %7147 = vmatpush.bf16.msra.mxu0 %v6990
        %7148 = vmatpush.bf16.msra.mxu0 %v6986
        %7149 = vmatmul.bf16.gmra.mxu0 %v7041
        %v7150 = vpop.f32.mrf.mxu0
        %v7151 = vadd.f32 %v7132, %v7150
        %v7152 = vpop.f32.mrf.mxu0
        %v7153 = vadd.f32 %v7134, %v7152
        %7154 = vmatmul.bf16.gmra.mxu0 %v7044
        %v7155 = vpop.f32.mrf.mxu0
        %v7156 = vadd.f32 %v7137, %v7155
        %v7157 = vpop.f32.mrf.mxu0
        %v7158 = vadd.f32 %v7139, %v7157
        %7159 = vdwg.mxu0
        %7160 = vmatpush.bf16.msra.mxu0 %v6951
        %7161 = vmatpush.bf16.msra.mxu0 %v6947
        %7162 = vmatpush.bf16.msra.mxu0 %v6943
        %7163 = vmatpush.bf16.msra.mxu0 %v6939
        %7164 = vmatpush.bf16.msra.mxu0 %v6935
        %7165 = vmatpush.bf16.msra.mxu0 %v6931
        %7166 = vmatpush.bf16.msra.mxu0 %v6927
        %7167 = vmatpush.bf16.msra.mxu0 %v6923
        %7168 = vmatmul.bf16.gmra.mxu0 %v7029
        %v7169 = vpop.f32.mrf.mxu0
        %v7170 = vadd.f32 0.0, %v7169
        %v7171 = vpop.f32.mrf.mxu0
        %v7172 = vadd.f32 0.0, %v7171
        %7173 = vmatmul.bf16.gmra.mxu0 %v7032
        %v7174 = vpop.f32.mrf.mxu0
        %v7175 = vadd.f32 0.0, %v7174
        %v7176 = vpop.f32.mrf.mxu0
        %v7177 = vadd.f32 0.0, %v7176
        %7178 = vdwg.mxu0
        %7179 = vmatpush.bf16.msra.mxu0 %v6983
        %7180 = vmatpush.bf16.msra.mxu0 %v6979
        %7181 = vmatpush.bf16.msra.mxu0 %v6975
        %7182 = vmatpush.bf16.msra.mxu0 %v6971
        %7183 = vmatpush.bf16.msra.mxu0 %v6967
        %7184 = vmatpush.bf16.msra.mxu0 %v6963
        %7185 = vmatpush.bf16.msra.mxu0 %v6959
        %7186 = vmatpush.bf16.msra.mxu0 %v6955
        %7187 = vmatmul.bf16.gmra.mxu0 %v7030
        %v7188 = vpop.f32.mrf.mxu0
        %v7189 = vadd.f32 %v7170, %v7188
        %v7190 = vpop.f32.mrf.mxu0
        %v7191 = vadd.f32 %v7172, %v7190
        %7192 = vmatmul.bf16.gmra.mxu0 %v7033
        %v7193 = vpop.f32.mrf.mxu0
        %v7194 = vadd.f32 %v7175, %v7193
        %v7195 = vpop.f32.mrf.mxu0
        %v7196 = vadd.f32 %v7177, %v7195
        %7197 = vdwg.mxu0
        %7198 = vmatpush.bf16.msra.mxu0 0
        %7199 = vmatpush.bf16.msra.mxu0 %v671
        %7200 = vmatpush.bf16.msra.mxu0 %v7007
        %7201 = vmatpush.bf16.msra.mxu0 %v7003
        %7202 = vmatpush.bf16.msra.mxu0 %v6999
        %7203 = vmatpush.bf16.msra.mxu0 %v6995
        %7204 = vmatpush.bf16.msra.mxu0 %v6991
        %7205 = vmatpush.bf16.msra.mxu0 %v6987
        %7206 = vmatmul.bf16.gmra.mxu0 %v7041
        %v7207 = vpop.f32.mrf.mxu0
        %v7208 = vadd.f32 %v7189, %v7207
        %v7209 = vpop.f32.mrf.mxu0
        %v7210 = vadd.f32 %v7191, %v7209
        %7211 = vmatmul.bf16.gmra.mxu0 %v7044
        %v7212 = vpop.f32.mrf.mxu0
        %v7213 = vadd.f32 %v7194, %v7212
        %v7214 = vpop.f32.mrf.mxu0
        %v7215 = vadd.f32 %v7196, %v7214
        %7216 = vdwg.mxu0
        %7217 = vmatpush.bf16.msra.mxu0 %v6952
        %7218 = vmatpush.bf16.msra.mxu0 %v6948
        %7219 = vmatpush.bf16.msra.mxu0 %v6944
        %7220 = vmatpush.bf16.msra.mxu0 %v6940
        %7221 = vmatpush.bf16.msra.mxu0 %v6936
        %7222 = vmatpush.bf16.msra.mxu0 %v6932
        %7223 = vmatpush.bf16.msra.mxu0 %v6928
        %7224 = vmatpush.bf16.msra.mxu0 %v6924
        %7225 = vmatmul.bf16.gmra.mxu0 %v7029
        %v7226 = vpop.f32.mrf.mxu0
        %v7227 = vadd.f32 0.0, %v7226
        %v7228 = vpop.f32.mrf.mxu0
        %v7229 = vadd.f32 0.0, %v7228
        %7230 = vmatmul.bf16.gmra.mxu0 %v7032
        %v7231 = vpop.f32.mrf.mxu0
        %v7232 = vadd.f32 0.0, %v7231
        %v7233 = vpop.f32.mrf.mxu0
        %v7234 = vadd.f32 0.0, %v7233
        %7235 = vdwg.mxu0
        %7236 = vmatpush.bf16.msra.mxu0 %v6984
        %7237 = vmatpush.bf16.msra.mxu0 %v6980
        %7238 = vmatpush.bf16.msra.mxu0 %v6976
        %7239 = vmatpush.bf16.msra.mxu0 %v6972
        %7240 = vmatpush.bf16.msra.mxu0 %v6968
        %7241 = vmatpush.bf16.msra.mxu0 %v6964
        %7242 = vmatpush.bf16.msra.mxu0 %v6960
        %7243 = vmatpush.bf16.msra.mxu0 %v6956
        %7244 = vmatmul.bf16.gmra.mxu0 %v7030
        %v7245 = vpop.f32.mrf.mxu0
        %v7246 = vadd.f32 %v7227, %v7245
        %v7247 = vpop.f32.mrf.mxu0
        %v7248 = vadd.f32 %v7229, %v7247
        %7249 = vmatmul.bf16.gmra.mxu0 %v7033
        %v7250 = vpop.f32.mrf.mxu0
        %v7251 = vadd.f32 %v7232, %v7250
        %v7252 = vpop.f32.mrf.mxu0
        %v7253 = vadd.f32 %v7234, %v7252
        %7254 = vdwg.mxu0
        %7255 = vmatpush.bf16.msra.mxu0 0
        %7256 = vmatpush.bf16.msra.mxu0 %v674
        %7257 = vmatpush.bf16.msra.mxu0 %v7008
        %7258 = vmatpush.bf16.msra.mxu0 %v7004
        %7259 = vmatpush.bf16.msra.mxu0 %v7000
        %7260 = vmatpush.bf16.msra.mxu0 %v6996
        %7261 = vmatpush.bf16.msra.mxu0 %v6992
        %7262 = vmatpush.bf16.msra.mxu0 %v6988
        %7263 = vmatmul.bf16.gmra.mxu0 %v7041
        %v7264 = vpop.f32.mrf.mxu0
        %v7265 = vadd.f32 %v7246, %v7264
        %v7266 = vpop.f32.mrf.mxu0
        %v7267 = vadd.f32 %v7248, %v7266
        %7268 = vmatmul.bf16.gmra.mxu0 %v7044
        %v7269 = vpop.f32.mrf.mxu0
        %v7270 = vadd.f32 %v7251, %v7269
        %v7271 = vpop.f32.mrf.mxu0
        %v7272 = vadd.f32 %v7253, %v7271
        %7273 = vdwg.mxu0
        %7274 = vmatpush.msra.mxu0 %v408
        %7275 = vmatpush.msra.mxu0 %v407
        %7276 = vmatpush.msra.mxu0 %v406
        %7277 = vmatpush.msra.mxu0 %v405
        %7278 = vmatpush.msra.mxu0 %v404
        %7279 = vmatpush.msra.mxu0 %v403
        %7280 = vmatpush.msra.mxu0 %v402
        %7281 = vmatpush.msra.mxu0 %v401
        %7282 = vmatpush.msra.mxu0 %v400
        %7283 = vmatpush.msra.mxu0 %v399
        %7284 = vmatpush.msra.mxu0 %v398
        %7285 = vmatpush.msra.mxu0 %v397
        %7286 = vmatpush.msra.mxu0 %v396
        %7287 = vmatpush.msra.mxu0 %v395
        %7288 = vmatpush.msra.mxu0 %v394
        %7289 = vmatpush.msra.mxu0 %v393
        %7290 = vmatmul.f32.gmra.mxu0 %v7094
        %v7291 = vpop.f32.mrf.mxu0
        %v7292 = vadd.f32 0.0, %v7291
        %7293 = vmatmul.f32.gmra.mxu0 %v7096
        %v7294 = vpop.f32.mrf.mxu0
        %v7295 = vadd.f32 0.0, %v7294
        %7296 = vmatmul.f32.gmra.mxu0 %v7099
        %v7297 = vpop.f32.mrf.mxu0
        %v7298 = vadd.f32 0.0, %v7297
        %7299 = vmatmul.f32.gmra.mxu0 %v7101
        %v7300 = vpop.f32.mrf.mxu0
        %v7301 = vadd.f32 0.0, %v7300
        %7302 = vdwg.mxu0
        %7303 = vmatpush.msra.mxu0 %v424
        %7304 = vmatpush.msra.mxu0 %v423
        %7305 = vmatpush.msra.mxu0 %v422
        %7306 = vmatpush.msra.mxu0 %v421
        %7307 = vmatpush.msra.mxu0 %v420
        %7308 = vmatpush.msra.mxu0 %v419
        %7309 = vmatpush.msra.mxu0 %v418
        %7310 = vmatpush.msra.mxu0 %v417
        %7311 = vmatpush.msra.mxu0 %v416
        %7312 = vmatpush.msra.mxu0 %v415
        %7313 = vmatpush.msra.mxu0 %v414
        %7314 = vmatpush.msra.mxu0 %v413
        %7315 = vmatpush.msra.mxu0 %v412
        %7316 = vmatpush.msra.mxu0 %v411
        %7317 = vmatpush.msra.mxu0 %v410
        %7318 = vmatpush.msra.mxu0 %v409
        %7319 = vmatmul.f32.gmra.mxu0 %v7151
        %v7320 = vpop.f32.mrf.mxu0
        %v7321 = vadd.f32 %v7292, %v7320
        %7322 = vmatmul.f32.gmra.mxu0 %v7153
        %v7323 = vpop.f32.mrf.mxu0
        %v7324 = vadd.f32 %v7295, %v7323
        %7325 = vmatmul.f32.gmra.mxu0 %v7156
        %v7326 = vpop.f32.mrf.mxu0
        %v7327 = vadd.f32 %v7298, %v7326
        %7328 = vmatmul.f32.gmra.mxu0 %v7158
        %v7329 = vpop.f32.mrf.mxu0
        %v7330 = vadd.f32 %v7301, %v7329
        %7331 = vdwg.mxu0
        %7332 = vmatpush.msra.mxu0 %v440
        %7333 = vmatpush.msra.mxu0 %v439
        %7334 = vmatpush.msra.mxu0 %v438
        %7335 = vmatpush.msra.mxu0 %v437
        %7336 = vmatpush.msra.mxu0 %v436
        %7337 = vmatpush.msra.mxu0 %v435
        %7338 = vmatpush.msra.mxu0 %v434
        %7339 = vmatpush.msra.mxu0 %v433
        %7340 = vmatpush.msra.mxu0 %v432
        %7341 = vmatpush.msra.mxu0 %v431
        %7342 = vmatpush.msra.mxu0 %v430
        %7343 = vmatpush.msra.mxu0 %v429
        %7344 = vmatpush.msra.mxu0 %v428
        %7345 = vmatpush.msra.mxu0 %v427
        %7346 = vmatpush.msra.mxu0 %v426
        %7347 = vmatpush.msra.mxu0 %v425
        %7348 = vmatmul.f32.gmra.mxu0 %v7208
        %v7349 = vpop.f32.mrf.mxu0
        %v7350 = vadd.f32 %v7321, %v7349
        %7351 = vmatmul.f32.gmra.mxu0 %v7210
        %v7352 = vpop.f32.mrf.mxu0
        %v7353 = vadd.f32 %v7324, %v7352
        %7354 = vmatmul.f32.gmra.mxu0 %v7213
        %v7355 = vpop.f32.mrf.mxu0
        %v7356 = vadd.f32 %v7327, %v7355
        %7357 = vmatmul.f32.gmra.mxu0 %v7215
        %v7358 = vpop.f32.mrf.mxu0
        %v7359 = vadd.f32 %v7330, %v7358
        %7360 = vdwg.mxu0
        %7361 = vmatpush.msra.mxu0 %v456
        %7362 = vmatpush.msra.mxu0 %v455
        %7363 = vmatpush.msra.mxu0 %v454
        %7364 = vmatpush.msra.mxu0 %v453
        %7365 = vmatpush.msra.mxu0 %v452
        %7366 = vmatpush.msra.mxu0 %v451
        %7367 = vmatpush.msra.mxu0 %v450
        %7368 = vmatpush.msra.mxu0 %v449
        %7369 = vmatpush.msra.mxu0 %v448
        %7370 = vmatpush.msra.mxu0 %v447
        %7371 = vmatpush.msra.mxu0 %v446
        %7372 = vmatpush.msra.mxu0 %v445
        %7373 = vmatpush.msra.mxu0 %v444
        %7374 = vmatpush.msra.mxu0 %v443
        %7375 = vmatpush.msra.mxu0 %v442
        %7376 = vmatpush.msra.mxu0 %v441
        %7377 = vmatmul.f32.gmra.mxu0 %v7265
        %v7378 = vpop.f32.mrf.mxu0
        %v7379 = vadd.f32 %v7350, %v7378
        %7380 = vmatmul.f32.gmra.mxu0 %v7267
        %v7381 = vpop.f32.mrf.mxu0
        %v7382 = vadd.f32 %v7353, %v7381
        %7383 = vmatmul.f32.gmra.mxu0 %v7270
        %v7384 = vpop.f32.mrf.mxu0
        %v7385 = vadd.f32 %v7356, %v7384
        %7386 = vmatmul.f32.gmra.mxu0 %v7272
        %v7387 = vpop.f32.mrf.mxu0
        %v7388 = vadd.f32 %v7359, %v7387
        %7389 = vdwg.mxu0
        %v7390 = vmul.f32 %v7094, %v7094
        %v7391 = vmul.f32 %v7151, %v7151
        %v7392 = vmul.f32 %v7208, %v7208
        %v7393 = vmul.f32 %v7265, %v7265
        %v7394 = vmul.f32 %v7096, %v7096
        %v7395 = vmul.f32 %v7153, %v7153
        %v7396 = vmul.f32 %v7210, %v7210
        %v7397 = vmul.f32 %v7267, %v7267
        %v7398 = vmul.f32 %v7099, %v7099
        %v7399 = vmul.f32 %v7156, %v7156
        %v7400 = vmul.f32 %v7213, %v7213
        %v7401 = vmul.f32 %v7270, %v7270
        %v7402 = vmul.f32 %v7101, %v7101
        %v7403 = vmul.f32 %v7158, %v7158
        %v7404 = vmul.f32 %v7215, %v7215
        %v7405 = vmul.f32 %v7272, %v7272
        %7406 = vmatpush.msra.mxu0 %v408
        %7407 = vmatpush.msra.mxu0 %v407
        %7408 = vmatpush.msra.mxu0 %v406
        %7409 = vmatpush.msra.mxu0 %v405
        %7410 = vmatpush.msra.mxu0 %v404
        %7411 = vmatpush.msra.mxu0 %v403
        %7412 = vmatpush.msra.mxu0 %v402
        %7413 = vmatpush.msra.mxu0 %v401
        %7414 = vmatpush.msra.mxu0 %v400
        %7415 = vmatpush.msra.mxu0 %v399
        %7416 = vmatpush.msra.mxu0 %v398
        %7417 = vmatpush.msra.mxu0 %v397
        %7418 = vmatpush.msra.mxu0 %v396
        %7419 = vmatpush.msra.mxu0 %v395
        %7420 = vmatpush.msra.mxu0 %v394
        %7421 = vmatpush.msra.mxu0 %v393
        %7422 = vmatmul.f32.gmra.mxu0 %v7390
        %v7423 = vpop.f32.mrf.mxu0
        %v7424 = vadd.f32 0.0, %v7423
        %7425 = vmatmul.f32.gmra.mxu0 %v7394
        %v7426 = vpop.f32.mrf.mxu0
        %v7427 = vadd.f32 0.0, %v7426
        %7428 = vmatmul.f32.gmra.mxu0 %v7398
        %v7429 = vpop.f32.mrf.mxu0
        %v7430 = vadd.f32 0.0, %v7429
        %7431 = vmatmul.f32.gmra.mxu0 %v7402
        %v7432 = vpop.f32.mrf.mxu0
        %v7433 = vadd.f32 0.0, %v7432
        %7434 = vdwg.mxu0
        %7435 = vmatpush.msra.mxu0 %v424
        %7436 = vmatpush.msra.mxu0 %v423
        %7437 = vmatpush.msra.mxu0 %v422
        %7438 = vmatpush.msra.mxu0 %v421
        %7439 = vmatpush.msra.mxu0 %v420
        %7440 = vmatpush.msra.mxu0 %v419
        %7441 = vmatpush.msra.mxu0 %v418
        %7442 = vmatpush.msra.mxu0 %v417
        %7443 = vmatpush.msra.mxu0 %v416
        %7444 = vmatpush.msra.mxu0 %v415
        %7445 = vmatpush.msra.mxu0 %v414
        %7446 = vmatpush.msra.mxu0 %v413
        %7447 = vmatpush.msra.mxu0 %v412
        %7448 = vmatpush.msra.mxu0 %v411
        %7449 = vmatpush.msra.mxu0 %v410
        %7450 = vmatpush.msra.mxu0 %v409
        %7451 = vmatmul.f32.gmra.mxu0 %v7391
        %v7452 = vpop.f32.mrf.mxu0
        %v7453 = vadd.f32 %v7424, %v7452
        %7454 = vmatmul.f32.gmra.mxu0 %v7395
        %v7455 = vpop.f32.mrf.mxu0
        %v7456 = vadd.f32 %v7427, %v7455
        %7457 = vmatmul.f32.gmra.mxu0 %v7399
        %v7458 = vpop.f32.mrf.mxu0
        %v7459 = vadd.f32 %v7430, %v7458
        %7460 = vmatmul.f32.gmra.mxu0 %v7403
        %v7461 = vpop.f32.mrf.mxu0
        %v7462 = vadd.f32 %v7433, %v7461
        %7463 = vdwg.mxu0
        %7464 = vmatpush.msra.mxu0 %v440
        %7465 = vmatpush.msra.mxu0 %v439
        %7466 = vmatpush.msra.mxu0 %v438
        %7467 = vmatpush.msra.mxu0 %v437
        %7468 = vmatpush.msra.mxu0 %v436
        %7469 = vmatpush.msra.mxu0 %v435
        %7470 = vmatpush.msra.mxu0 %v434
        %7471 = vmatpush.msra.mxu0 %v433
        %7472 = vmatpush.msra.mxu0 %v432
        %7473 = vmatpush.msra.mxu0 %v431
        %7474 = vmatpush.msra.mxu0 %v430
        %7475 = vmatpush.msra.mxu0 %v429
        %7476 = vmatpush.msra.mxu0 %v428
        %7477 = vmatpush.msra.mxu0 %v427
        %7478 = vmatpush.msra.mxu0 %v426
        %7479 = vmatpush.msra.mxu0 %v425
        %7480 = vmatmul.f32.gmra.mxu0 %v7392
        %v7481 = vpop.f32.mrf.mxu0
        %v7482 = vadd.f32 %v7453, %v7481
        %7483 = vmatmul.f32.gmra.mxu0 %v7396
        %v7484 = vpop.f32.mrf.mxu0
        %v7485 = vadd.f32 %v7456, %v7484
        %7486 = vmatmul.f32.gmra.mxu0 %v7400
        %v7487 = vpop.f32.mrf.mxu0
        %v7488 = vadd.f32 %v7459, %v7487
        %7489 = vmatmul.f32.gmra.mxu0 %v7404
        %v7490 = vpop.f32.mrf.mxu0
        %v7491 = vadd.f32 %v7462, %v7490
        %7492 = vdwg.mxu0
        %7493 = vmatpush.msra.mxu0 %v456
        %7494 = vmatpush.msra.mxu0 %v455
        %7495 = vmatpush.msra.mxu0 %v454
        %7496 = vmatpush.msra.mxu0 %v453
        %7497 = vmatpush.msra.mxu0 %v452
        %7498 = vmatpush.msra.mxu0 %v451
        %7499 = vmatpush.msra.mxu0 %v450
        %7500 = vmatpush.msra.mxu0 %v449
        %7501 = vmatpush.msra.mxu0 %v448
        %7502 = vmatpush.msra.mxu0 %v447
        %7503 = vmatpush.msra.mxu0 %v446
        %7504 = vmatpush.msra.mxu0 %v445
        %7505 = vmatpush.msra.mxu0 %v444
        %7506 = vmatpush.msra.mxu0 %v443
        %7507 = vmatpush.msra.mxu0 %v442
        %7508 = vmatpush.msra.mxu0 %v441
        %7509 = vmatmul.f32.gmra.mxu0 %v7393
        %v7510 = vpop.f32.mrf.mxu0
        %v7511 = vadd.f32 %v7482, %v7510
        %7512 = vmatmul.f32.gmra.mxu0 %v7397
        %v7513 = vpop.f32.mrf.mxu0
        %v7514 = vadd.f32 %v7485, %v7513
        %7515 = vmatmul.f32.gmra.mxu0 %v7401
        %v7516 = vpop.f32.mrf.mxu0
        %v7517 = vadd.f32 %v7488, %v7516
        %7518 = vmatmul.f32.gmra.mxu0 %v7405
        %v7519 = vpop.f32.mrf.mxu0
        %v7520 = vadd.f32 %v7491, %v7519
        %7521 = vdwg.mxu0
        %v7522 = vmul.f32 %v7379, 0.00390625
        %v7523 = vmul.f32 %v7382, 0.00390625
        %v7524 = vmul.f32 %v7385, 0.00390625
        %v7525 = vmul.f32 %v7388, 0.00390625
        %v7526 = vmul.f32 %v7511, 0.00390625
        %v7527 = vmul.f32 %v7514, 0.00390625
        %v7528 = vmul.f32 %v7517, 0.00390625
        %v7529 = vmul.f32 %v7520, 0.00390625
        %v7530 = vmul.f32 %v7522, %v7522
        %v7531 = vmul.f32 %v7523, %v7523
        %v7532 = vmul.f32 %v7524, %v7524
        %v7533 = vmul.f32 %v7525, %v7525
        %v7534 = vsub.f32 %v7526, %v7530
        %v7535 = vsub.f32 %v7527, %v7531
        %v7536 = vsub.f32 %v7528, %v7532
        %v7537 = vsub.f32 %v7529, %v7533
        %v7538 = vmax.f32 %v7534, 0.0
        %v7539 = vmax.f32 %v7535, 0.0
        %v7540 = vmax.f32 %v7536, 0.0
        %v7541 = vmax.f32 %v7537, 0.0
        %v7542 = vadd.f32 %v7538, 1e-05
        %v7543 = vadd.f32 %v7539, 1e-05
        %v7544 = vadd.f32 %v7540, 1e-05
        %v7545 = vadd.f32 %v7541, 1e-05
        %v7546 = vrsqrt.pop %v7542
        %v7547 = vmul.f32 %v7546, %v7542
        %v7548 = vmul.f32 %v7547, %v7546
        %v7549 = vmul.f32 0.5, %v7548
        %v7550 = vsub.f32 1.5, %v7549
        %v7551 = vmul.f32 %v7546, %v7550
        %vm7552 = vweird.f32 %v7542
        %vm7553 = vweird.f32 %v7546
        %vm7554 = vmor %vm7552, %vm7553
        %v7555 = vsel %vm7554, %v7546, %v7551
        %v7556 = vrsqrt.pop %v7543
        %v7557 = vmul.f32 %v7556, %v7543
        %v7558 = vmul.f32 %v7557, %v7556
        %v7559 = vmul.f32 0.5, %v7558
        %v7560 = vsub.f32 1.5, %v7559
        %v7561 = vmul.f32 %v7556, %v7560
        %vm7562 = vweird.f32 %v7543
        %vm7563 = vweird.f32 %v7556
        %vm7564 = vmor %vm7562, %vm7563
        %v7565 = vsel %vm7564, %v7556, %v7561
        %v7566 = vrsqrt.pop %v7544
        %v7567 = vmul.f32 %v7566, %v7544
        %v7568 = vmul.f32 %v7567, %v7566
        %v7569 = vmul.f32 0.5, %v7568
        %v7570 = vsub.f32 1.5, %v7569
        %v7571 = vmul.f32 %v7566, %v7570
        %vm7572 = vweird.f32 %v7544
        %vm7573 = vweird.f32 %v7566
        %vm7574 = vmor %vm7572, %vm7573
        %v7575 = vsel %vm7574, %v7566, %v7571
        %v7576 = vrsqrt.pop %v7545
        %v7577 = vmul.f32 %v7576, %v7545
        %v7578 = vmul.f32 %v7577, %v7576
        %v7579 = vmul.f32 0.5, %v7578
        %v7580 = vsub.f32 1.5, %v7579
        %v7581 = vmul.f32 %v7576, %v7580
        %vm7582 = vweird.f32 %v7545
        %vm7583 = vweird.f32 %v7576
        %vm7584 = vmor %vm7582, %vm7583
        %v7585 = vsel %vm7584, %v7576, %v7581
        %7586 = vst [vmem:[#allocation1] ss:$4 sm:$0xff] %v457
        %v7587 = vld.sshfl [vmem:[#allocation1] sm:$0xff pattern:$0x73625140]
        %v7588 = vld.sshfl [vmem:[#allocation1 + $0x8] sm:$0xff pattern:$0x73625140]
        %v7589 = vld.sshfl [vmem:[#allocation1 + $0x10] sm:$0xff pattern:$0x73625140]
        %v7590 = vld.sshfl [vmem:[#allocation1 + $0x18] sm:$0xff pattern:$0x73625140]
        %v7592 = vsel %vm962, %v7555, 0
        %v7595 = vsel %vm962, %v7565, 0
        %v7598 = vsel %vm962, %v7575, 0
        %v7601 = vsel %vm962, %v7585, 0
        %v7603 = vsel %vm969, %v7587, 0
        %v7605 = vsel %vm969, %v7588, 0
        %v7607 = vsel %vm969, %v7589, 0
        %v7609 = vsel %vm969, %v7590, 0
        %7611 = vmatpush.msra.mxu0 0.0
        %7612 = vmatpush.msra.mxu0 0.0
        %7613 = vmatpush.msra.mxu0 0.0
        %7614 = vmatpush.msra.mxu0 0.0
        %7615 = vmatpush.msra.mxu0 0.0
        %7616 = vmatpush.msra.mxu0 0.0
        %7617 = vmatpush.msra.mxu0 0.0
        %7618 = vmatpush.msra.mxu0 0.0
        %7619 = vmatpush.msra.mxu0 0.0
        %7620 = vmatpush.msra.mxu0 0.0
        %7621 = vmatpush.msra.mxu0 0.0
        %7622 = vmatpush.msra.mxu0 0.0
        %7623 = vmatpush.msra.mxu0 0.0
        %7624 = vmatpush.msra.mxu0 0.0
        %7625 = vmatpush.msra.mxu0 0.0
        %7626 = vmatpush.msra.mxu0 %v7603
        %7627 = vmatmul.f32.gmra.mxu0 %v7592
        %v7628 = vpop.f32.mrf.mxu0
        %v7629 = vadd.f32 0.0, %v7628
        %7630 = vmatmul.f32.gmra.mxu0 %v7595
        %v7631 = vpop.f32.mrf.mxu0
        %v7632 = vadd.f32 0.0, %v7631
        %7633 = vmatmul.f32.gmra.mxu0 %v7598
        %v7634 = vpop.f32.mrf.mxu0
        %v7635 = vadd.f32 0.0, %v7634
        %7636 = vmatmul.f32.gmra.mxu0 %v7601
        %v7637 = vpop.f32.mrf.mxu0
        %v7638 = vadd.f32 0.0, %v7637
        %7639 = vdwg.mxu0
        %7640 = vmatpush.msra.mxu0 0.0
        %7641 = vmatpush.msra.mxu0 0.0
        %7642 = vmatpush.msra.mxu0 0.0
        %7643 = vmatpush.msra.mxu0 0.0
        %7644 = vmatpush.msra.mxu0 0.0
        %7645 = vmatpush.msra.mxu0 0.0
        %7646 = vmatpush.msra.mxu0 0.0
        %7647 = vmatpush.msra.mxu0 0.0
        %7648 = vmatpush.msra.mxu0 0.0
        %7649 = vmatpush.msra.mxu0 0.0
        %7650 = vmatpush.msra.mxu0 0.0
        %7651 = vmatpush.msra.mxu0 0.0
        %7652 = vmatpush.msra.mxu0 0.0
        %7653 = vmatpush.msra.mxu0 0.0
        %7654 = vmatpush.msra.mxu0 0.0
        %7655 = vmatpush.msra.mxu0 %v7605
        %7656 = vmatmul.f32.gmra.mxu0 %v7592
        %v7657 = vpop.f32.mrf.mxu0
        %v7658 = vadd.f32 0.0, %v7657
        %7659 = vmatmul.f32.gmra.mxu0 %v7595
        %v7660 = vpop.f32.mrf.mxu0
        %v7661 = vadd.f32 0.0, %v7660
        %7662 = vmatmul.f32.gmra.mxu0 %v7598
        %v7663 = vpop.f32.mrf.mxu0
        %v7664 = vadd.f32 0.0, %v7663
        %7665 = vmatmul.f32.gmra.mxu0 %v7601
        %v7666 = vpop.f32.mrf.mxu0
        %v7667 = vadd.f32 0.0, %v7666
        %7668 = vdwg.mxu0
        %7669 = vmatpush.msra.mxu0 0.0
        %7670 = vmatpush.msra.mxu0 0.0
        %7671 = vmatpush.msra.mxu0 0.0
        %7672 = vmatpush.msra.mxu0 0.0
        %7673 = vmatpush.msra.mxu0 0.0
        %7674 = vmatpush.msra.mxu0 0.0
        %7675 = vmatpush.msra.mxu0 0.0
        %7676 = vmatpush.msra.mxu0 0.0
        %7677 = vmatpush.msra.mxu0 0.0
        %7678 = vmatpush.msra.mxu0 0.0
        %7679 = vmatpush.msra.mxu0 0.0
        %7680 = vmatpush.msra.mxu0 0.0
        %7681 = vmatpush.msra.mxu0 0.0
        %7682 = vmatpush.msra.mxu0 0.0
        %7683 = vmatpush.msra.mxu0 0.0
        %7684 = vmatpush.msra.mxu0 %v7607
        %7685 = vmatmul.f32.gmra.mxu0 %v7592
        %v7686 = vpop.f32.mrf.mxu0
        %v7687 = vadd.f32 0.0, %v7686
        %7688 = vmatmul.f32.gmra.mxu0 %v7595
        %v7689 = vpop.f32.mrf.mxu0
        %v7690 = vadd.f32 0.0, %v7689
        %7691 = vmatmul.f32.gmra.mxu0 %v7598
        %v7692 = vpop.f32.mrf.mxu0
        %v7693 = vadd.f32 0.0, %v7692
        %7694 = vmatmul.f32.gmra.mxu0 %v7601
        %v7695 = vpop.f32.mrf.mxu0
        %v7696 = vadd.f32 0.0, %v7695
        %7697 = vdwg.mxu0
        %7698 = vmatpush.msra.mxu0 0.0
        %7699 = vmatpush.msra.mxu0 0.0
        %7700 = vmatpush.msra.mxu0 0.0
        %7701 = vmatpush.msra.mxu0 0.0
        %7702 = vmatpush.msra.mxu0 0.0
        %7703 = vmatpush.msra.mxu0 0.0
        %7704 = vmatpush.msra.mxu0 0.0
        %7705 = vmatpush.msra.mxu0 0.0
        %7706 = vmatpush.msra.mxu0 0.0
        %7707 = vmatpush.msra.mxu0 0.0
        %7708 = vmatpush.msra.mxu0 0.0
        %7709 = vmatpush.msra.mxu0 0.0
        %7710 = vmatpush.msra.mxu0 0.0
        %7711 = vmatpush.msra.mxu0 0.0
        %7712 = vmatpush.msra.mxu0 0.0
        %7713 = vmatpush.msra.mxu0 %v7609
        %7714 = vmatmul.f32.gmra.mxu0 %v7592
        %v7715 = vpop.f32.mrf.mxu0
        %v7716 = vadd.f32 0.0, %v7715
        %7717 = vmatmul.f32.gmra.mxu0 %v7595
        %v7718 = vpop.f32.mrf.mxu0
        %v7719 = vadd.f32 0.0, %v7718
        %7720 = vmatmul.f32.gmra.mxu0 %v7598
        %v7721 = vpop.f32.mrf.mxu0
        %v7722 = vadd.f32 0.0, %v7721
        %7723 = vmatmul.f32.gmra.mxu0 %v7601
        %v7724 = vpop.f32.mrf.mxu0
        %v7725 = vadd.f32 0.0, %v7724
        %7726 = vdwg.mxu0
        %v7727 = vsub.f32 0.0, %v7522
        %v7728 = vsub.f32 0.0, %v7523
        %v7729 = vsub.f32 0.0, %v7524
        %v7730 = vsub.f32 0.0, %v7525
        %v7731 = vmul.f32 %v7727, %v7555
        %v7732 = vmul.f32 %v7728, %v7565
        %v7733 = vmul.f32 %v7729, %v7575
        %v7734 = vmul.f32 %v7730, %v7585
        %7735 = vst [vmem:[#allocation1] ss:$4 sm:$0xff] %v457
        %v7736 = vld.sshfl [vmem:[#allocation1] sm:$0xff pattern:$0x73625140]
        %v7737 = vld.sshfl [vmem:[#allocation1 + $0x8] sm:$0xff pattern:$0x73625140]
        %v7738 = vld.sshfl [vmem:[#allocation1 + $0x10] sm:$0xff pattern:$0x73625140]
        %v7739 = vld.sshfl [vmem:[#allocation1 + $0x18] sm:$0xff pattern:$0x73625140]
        %v7741 = vsel %vm962, %v7731, 0
        %v7744 = vsel %vm962, %v7732, 0
        %v7747 = vsel %vm962, %v7733, 0
        %v7750 = vsel %vm962, %v7734, 0
        %v7752 = vsel %vm969, %v7736, 0
        %v7754 = vsel %vm969, %v7737, 0
        %v7756 = vsel %vm969, %v7738, 0
        %v7758 = vsel %vm969, %v7739, 0
        %7760 = vmatpush.msra.mxu0 0.0
        %7761 = vmatpush.msra.mxu0 0.0
        %7762 = vmatpush.msra.mxu0 0.0
        %7763 = vmatpush.msra.mxu0 0.0
        %7764 = vmatpush.msra.mxu0 0.0
        %7765 = vmatpush.msra.mxu0 0.0
        %7766 = vmatpush.msra.mxu0 0.0
        %7767 = vmatpush.msra.mxu0 0.0
        %7768 = vmatpush.msra.mxu0 0.0
        %7769 = vmatpush.msra.mxu0 0.0
        %7770 = vmatpush.msra.mxu0 0.0
        %7771 = vmatpush.msra.mxu0 0.0
        %7772 = vmatpush.msra.mxu0 0.0
        %7773 = vmatpush.msra.mxu0 0.0
        %7774 = vmatpush.msra.mxu0 0.0
        %7775 = vmatpush.msra.mxu0 %v7752
        %7776 = vmatmul.f32.gmra.mxu0 %v7741
        %v7777 = vpop.f32.mrf.mxu0
        %v7778 = vadd.f32 0.0, %v7777
        %7779 = vmatmul.f32.gmra.mxu0 %v7744
        %v7780 = vpop.f32.mrf.mxu0
        %v7781 = vadd.f32 0.0, %v7780
        %7782 = vmatmul.f32.gmra.mxu0 %v7747
        %v7783 = vpop.f32.mrf.mxu0
        %v7784 = vadd.f32 0.0, %v7783
        %7785 = vmatmul.f32.gmra.mxu0 %v7750
        %v7786 = vpop.f32.mrf.mxu0
        %v7787 = vadd.f32 0.0, %v7786
        %7788 = vdwg.mxu0
        %7789 = vmatpush.msra.mxu0 0.0
        %7790 = vmatpush.msra.mxu0 0.0
        %7791 = vmatpush.msra.mxu0 0.0
        %7792 = vmatpush.msra.mxu0 0.0
        %7793 = vmatpush.msra.mxu0 0.0
        %7794 = vmatpush.msra.mxu0 0.0
        %7795 = vmatpush.msra.mxu0 0.0
        %7796 = vmatpush.msra.mxu0 0.0
        %7797 = vmatpush.msra.mxu0 0.0
        %7798 = vmatpush.msra.mxu0 0.0
        %7799 = vmatpush.msra.mxu0 0.0
        %7800 = vmatpush.msra.mxu0 0.0
        %7801 = vmatpush.msra.mxu0 0.0
        %7802 = vmatpush.msra.mxu0 0.0
        %7803 = vmatpush.msra.mxu0 0.0
        %7804 = vmatpush.msra.mxu0 %v7754
        %7805 = vmatmul.f32.gmra.mxu0 %v7741
        %v7806 = vpop.f32.mrf.mxu0
        %v7807 = vadd.f32 0.0, %v7806
        %7808 = vmatmul.f32.gmra.mxu0 %v7744
        %v7809 = vpop.f32.mrf.mxu0
        %v7810 = vadd.f32 0.0, %v7809
        %7811 = vmatmul.f32.gmra.mxu0 %v7747
        %v7812 = vpop.f32.mrf.mxu0
        %v7813 = vadd.f32 0.0, %v7812
        %7814 = vmatmul.f32.gmra.mxu0 %v7750
        %v7815 = vpop.f32.mrf.mxu0
        %v7816 = vadd.f32 0.0, %v7815
        %7817 = vdwg.mxu0
        %7818 = vmatpush.msra.mxu0 0.0
        %7819 = vmatpush.msra.mxu0 0.0
        %7820 = vmatpush.msra.mxu0 0.0
        %7821 = vmatpush.msra.mxu0 0.0
        %7822 = vmatpush.msra.mxu0 0.0
        %7823 = vmatpush.msra.mxu0 0.0
        %7824 = vmatpush.msra.mxu0 0.0
        %7825 = vmatpush.msra.mxu0 0.0
        %7826 = vmatpush.msra.mxu0 0.0
        %7827 = vmatpush.msra.mxu0 0.0
        %7828 = vmatpush.msra.mxu0 0.0
        %7829 = vmatpush.msra.mxu0 0.0
        %7830 = vmatpush.msra.mxu0 0.0
        %7831 = vmatpush.msra.mxu0 0.0
        %7832 = vmatpush.msra.mxu0 0.0
        %7833 = vmatpush.msra.mxu0 %v7756
        %7834 = vmatmul.f32.gmra.mxu0 %v7741
        %v7835 = vpop.f32.mrf.mxu0
        %v7836 = vadd.f32 0.0, %v7835
        %7837 = vmatmul.f32.gmra.mxu0 %v7744
        %v7838 = vpop.f32.mrf.mxu0
        %v7839 = vadd.f32 0.0, %v7838
        %7840 = vmatmul.f32.gmra.mxu0 %v7747
        %v7841 = vpop.f32.mrf.mxu0
        %v7842 = vadd.f32 0.0, %v7841
        %7843 = vmatmul.f32.gmra.mxu0 %v7750
        %v7844 = vpop.f32.mrf.mxu0
        %v7845 = vadd.f32 0.0, %v7844
        %7846 = vdwg.mxu0
        %7847 = vmatpush.msra.mxu0 0.0
        %7848 = vmatpush.msra.mxu0 0.0
        %7849 = vmatpush.msra.mxu0 0.0
        %7850 = vmatpush.msra.mxu0 0.0
        %7851 = vmatpush.msra.mxu0 0.0
        %7852 = vmatpush.msra.mxu0 0.0
        %7853 = vmatpush.msra.mxu0 0.0
        %7854 = vmatpush.msra.mxu0 0.0
        %7855 = vmatpush.msra.mxu0 0.0
        %7856 = vmatpush.msra.mxu0 0.0
        %7857 = vmatpush.msra.mxu0 0.0
        %7858 = vmatpush.msra.mxu0 0.0
        %7859 = vmatpush.msra.mxu0 0.0
        %7860 = vmatpush.msra.mxu0 0.0
        %7861 = vmatpush.msra.mxu0 0.0
        %7862 = vmatpush.msra.mxu0 %v7758
        %7863 = vmatmul.f32.gmra.mxu0 %v7741
        %v7864 = vpop.f32.mrf.mxu0
        %v7865 = vadd.f32 0.0, %v7864
        %7866 = vmatmul.f32.gmra.mxu0 %v7744
        %v7867 = vpop.f32.mrf.mxu0
        %v7868 = vadd.f32 0.0, %v7867
        %7869 = vmatmul.f32.gmra.mxu0 %v7747
        %v7870 = vpop.f32.mrf.mxu0
        %v7871 = vadd.f32 0.0, %v7870
        %7872 = vmatmul.f32.gmra.mxu0 %v7750
        %v7873 = vpop.f32.mrf.mxu0
        %v7874 = vadd.f32 0.0, %v7873
        %7875 = vdwg.mxu0
        %v7876 = vmul.f32 %v7094, %v7629
        %v7877 = vmul.f32 %v7151, %v7658
        %v7878 = vmul.f32 %v7208, %v7687
        %v7879 = vmul.f32 %v7265, %v7716
        %v7880 = vmul.f32 %v7096, %v7632
        %v7881 = vmul.f32 %v7153, %v7661
        %v7882 = vmul.f32 %v7210, %v7690
        %v7883 = vmul.f32 %v7267, %v7719
        %v7884 = vmul.f32 %v7099, %v7635
        %v7885 = vmul.f32 %v7156, %v7664
        %v7886 = vmul.f32 %v7213, %v7693
        %v7887 = vmul.f32 %v7270, %v7722
        %v7888 = vmul.f32 %v7101, %v7638
        %v7889 = vmul.f32 %v7158, %v7667
        %v7890 = vmul.f32 %v7215, %v7696
        %v7891 = vmul.f32 %v7272, %v7725
        %v7892 = vadd.f32 %v7876, %v7778
        %v7893 = vadd.f32 %v7877, %v7807
        %v7894 = vadd.f32 %v7878, %v7836
        %v7895 = vadd.f32 %v7879, %v7865
        %v7896 = vadd.f32 %v7880, %v7781
        %v7897 = vadd.f32 %v7881, %v7810
        %v7898 = vadd.f32 %v7882, %v7839
        %v7899 = vadd.f32 %v7883, %v7868
        %v7900 = vadd.f32 %v7884, %v7784
        %v7901 = vadd.f32 %v7885, %v7813
        %v7902 = vadd.f32 %v7886, %v7842
        %v7903 = vadd.f32 %v7887, %v7871
        %v7904 = vadd.f32 %v7888, %v7787
        %v7905 = vadd.f32 %v7889, %v7816
        %v7906 = vadd.f32 %v7890, %v7845
        %v7907 = vadd.f32 %v7891, %v7874
        %v7908 = vmax.f32 %v7892, 0.0
        %v7909 = vmax.f32 %v7893, 0.0
        %v7910 = vmax.f32 %v7894, 0.0
        %v7911 = vmax.f32 %v7895, 0.0
        %v7912 = vmax.f32 %v7896, 0.0
        %v7913 = vmax.f32 %v7897, 0.0
        %v7914 = vmax.f32 %v7898, 0.0
        %v7915 = vmax.f32 %v7899, 0.0
        %v7916 = vmax.f32 %v7900, 0.0
        %v7917 = vmax.f32 %v7901, 0.0
        %v7918 = vmax.f32 %v7902, 0.0
        %v7919 = vmax.f32 %v7903, 0.0
        %v7920 = vmax.f32 %v7904, 0.0
        %v7921 = vmax.f32 %v7905, 0.0
        %v7922 = vmax.f32 %v7906, 0.0
        %v7923 = vmax.f32 %v7907, 0.0
        %7924 = vst [vmem:[%s376] sm:$0xff] %v7908
        %7925 = vst [vmem:[%s376 + $0x8] sm:$0xff] %v7909
        %7926 = vst [vmem:[%s376 + $0x10] sm:$0xff] %v7910
        %7927 = vst [vmem:[%s376 + $0x18] sm:$0xff] %v7911
        %7928 = vst [vmem:[%s376 + $0x20] sm:$0xff] %v7912
        %7929 = vst [vmem:[%s376 + $0x28] sm:$0xff] %v7913
        %7930 = vst [vmem:[%s376 + $0x30] sm:$0xff] %v7914
        %7931 = vst [vmem:[%s376 + $0x38] sm:$0xff] %v7915
        %7932 = vst [vmem:[%s376 + $0x40] sm:$0xff] %v7916
        %7933 = vst [vmem:[%s376 + $0x48] sm:$0xff] %v7917
        %7934 = vst [vmem:[%s376 + $0x50] sm:$0xff] %v7918
        %7935 = vst [vmem:[%s376 + $0x58] sm:$0xff] %v7919
        %7936 = vst [vmem:[%s376 + $0x60] sm:$0xff] %v7920
        %7937 = vst [vmem:[%s376 + $0x68] sm:$0xff] %v7921
        %7938 = vst [vmem:[%s376 + $0x70] sm:$0xff] %v7922
        %7939 = vst [vmem:[%s376 + $0x78] sm:$0xff] %v7923
        %s7940 = sand.u32 %s266, 1
        %s7941 = sand.u32 %s266, 1
        %s7942 = smul.addr %s7941, 128
        %s7943 = scalar_lea.vmem [#allocation2], %s7942
        // Predicated region
        $region65: #{encoder_forward.1} parent=63 // pred_check
          %p7944 = pneg %p276
        $region66: #{encoder_forward.1} parent=63 // pred_check_branch
          %7946 = sbr.rel (%p7944) target = $region68
        $region67: #{encoder_forward.1} parent=63 // pred_region
          %s7947 = smul.u32 4, %s22
          %s7948 = smul.addr %s7947, 8
          %s7949 = scalar_lea.vmem %s11, %s7948
          // Predicated region
          $region69: #{encoder_forward.1} parent=67 // pred_check
            _
          $region70: #{encoder_forward.1} parent=67 // pred_check_branch
            %7951 = sbr.rel (0) target = $region72
          $region71: #{encoder_forward.1} parent=67 // pred_region
            // Predicated region
            $region73: #{encoder_forward.1} parent=71 // pred_check
              _
            $region74: #{encoder_forward.1} parent=71 // pred_check_branch
              %7953 = sbr.rel (0) target = $region76
            $region75: #{encoder_forward.1} parent=71 // pred_region
              loop: start=0, step=1, limit=1
              $region77: #{encoder_forward.1} parent=75 // loop_pre_header
                _
              $region78: #{encoder_forward.1} parent=75 // loop_header
                %s7955 = sphi 0, %s7959
                %p7956 = scmp.ge.s32.totalorder %s7955, 1
                %s7960 = sphi %s7943, %s7943
                %s7961 = sphi %s7949, %s7949
              $region79: #{encoder_forward.1} parent=75 // loop_header_branch
                %7958 = sbr.rel (%p7956) target = $region83
              $region80: #{encoder_forward.1} parent=75 // loop_body
                %v7962 = vld [vmem:[%s7960] sm:$0xff]
                %7963 = vst [vmem:[%s7961] sm:$0xff] %v7962
                %v7964 = vld [vmem:[%s7960 + $0x8] sm:$0xff]
                %7965 = vst [vmem:[%s7961 + $0x8] sm:$0xff] %v7964
                %v7966 = vld [vmem:[%s7960 + $0x10] sm:$0xff]
                %7967 = vst [vmem:[%s7961 + $0x10] sm:$0xff] %v7966
                %v7968 = vld [vmem:[%s7960 + $0x18] sm:$0xff]
                %7969 = vst [vmem:[%s7961 + $0x18] sm:$0xff] %v7968
                %v7970 = vld [vmem:[%s7960 + $0x20] sm:$0xff]
                %7971 = vst [vmem:[%s7961 + $0x40] sm:$0xff] %v7970
                %v7972 = vld [vmem:[%s7960 + $0x28] sm:$0xff]
                %7973 = vst [vmem:[%s7961 + $0x48] sm:$0xff] %v7972
                %v7974 = vld [vmem:[%s7960 + $0x30] sm:$0xff]
                %7975 = vst [vmem:[%s7961 + $0x50] sm:$0xff] %v7974
                %v7976 = vld [vmem:[%s7960 + $0x38] sm:$0xff]
                %7977 = vst [vmem:[%s7961 + $0x58] sm:$0xff] %v7976
                %v7978 = vld [vmem:[%s7960 + $0x40] sm:$0xff]
                %7979 = vst [vmem:[%s7961 + $0x80] sm:$0xff] %v7978
                %v7980 = vld [vmem:[%s7960 + $0x48] sm:$0xff]
                %7981 = vst [vmem:[%s7961 + $0x88] sm:$0xff] %v7980
                %v7982 = vld [vmem:[%s7960 + $0x50] sm:$0xff]
                %7983 = vst [vmem:[%s7961 + $0x90] sm:$0xff] %v7982
                %v7984 = vld [vmem:[%s7960 + $0x58] sm:$0xff]
                %7985 = vst [vmem:[%s7961 + $0x98] sm:$0xff] %v7984
                %v7986 = vld [vmem:[%s7960 + $0x60] sm:$0xff]
                %7987 = vst [vmem:[%s7961 + $0xc0] sm:$0xff] %v7986
                %v7988 = vld [vmem:[%s7960 + $0x68] sm:$0xff]
                %7989 = vst [vmem:[%s7961 + $0xc8] sm:$0xff] %v7988
                %v7990 = vld [vmem:[%s7960 + $0x70] sm:$0xff]
                %7991 = vst [vmem:[%s7961 + $0xd0] sm:$0xff] %v7990
                %v7992 = vld [vmem:[%s7960 + $0x78] sm:$0xff]
                %7993 = vst [vmem:[%s7961 + $0xd8] sm:$0xff] %v7992
              $region81: #{encoder_forward.1} parent=75 // loop_footer
                %s7959 = sadd.s32 1, %s7955
              $region82: #{encoder_forward.1} parent=75 // loop_footer_branch
                %7954 = sbr.rel target = $region78
              $region83: #{encoder_forward.1} parent=75 // loop_exit
                _
            $region76: #{encoder_forward.1} parent=71 // pred_fallthru
              _
            // Predicated region
            $region84: #{encoder_forward.1} parent=71 // pred_check
              _
            $region85: #{encoder_forward.1} parent=71 // pred_check_branch
              %7995 = sbr.rel target = $region87
            $region86: #{encoder_forward.1} parent=71 // pred_region
              _
            $region87: #{encoder_forward.1} parent=71 // pred_fallthru
              _
          $region72: #{encoder_forward.1} parent=67 // pred_fallthru
            _
          %7996 = vnop
        $region68: #{encoder_forward.1} parent=63 // pred_fallthru
          _
      $region64: #{encoder_forward.1} parent=5 // pred_fallthru
        _
      %p7997 = scmp.le.s32.totalorder 2, %s17
      // Predicated region
      $region88: #{encoder_forward.1} parent=5 // pred_check
        %p7998 = pneg %p7997
      $region89: #{encoder_forward.1} parent=5 // pred_check_branch
        %8000 = sbr.rel (%p7998) target = $region91
      $region90: #{encoder_forward.1} parent=5 // pred_region
        %s8001 = ssub.s32 %s17, 2
        // Predicated region
        $region92: #{encoder_forward.1} parent=90 // pred_check
          %p8002 = pneg %p282
        $region93: #{encoder_forward.1} parent=90 // pred_check_branch
          %8004 = sbr.rel (%p8002) target = $region95
        $region94: #{encoder_forward.1} parent=90 // pred_region
          %s8005 = sand.u32 %s267, 1
          %s8006 = sand.u32 %s267, 1
          %s8007 = smul.addr %s8006, 128
          %s8008 = scalar_lea.vmem [#allocation2], %s8007
        $region95: #{encoder_forward.1} parent=90 // pred_fallthru
          _
      $region91: #{encoder_forward.1} parent=5 // pred_fallthru
        _
    $region6: #{encoder_forward.1} parent=1 // loop_footer
      %s21 = sadd.s32 1, %s17
    $region7: #{encoder_forward.1} parent=1 // loop_footer_branch
      %16 = sbr.rel target = $region3
    $region8: #{encoder_forward.1} parent=1 // loop_exit
      _

</llo_original>
